<compile_context>
chip_gen: v5e
topology: v5e:2x2
jax: 0.10.0
libtpu: 0.0.40
codegen_flags: <defaults>
</compile_context>

<pallas_src>
import functools

import jax
import jax.numpy as jnp
import numpy as np
from jax import lax
from jax.experimental import pallas as pl
from jax.experimental.pallas import tpu as pltpu

EPS = 1e-6
_LANE = 128


def _round_up(x, m):
    return (x + m - 1) // m * m


def _heads_per_group(H, D, M):
    """Smallest head-group whose q/k and v lane widths are 128-aligned.

    Grouping exposes extra 'parallel' grid work (megacore) and keeps per-step
    blocks small for many-head models.  If no 128-aligned split exists, fall
    back to all heads in one group (block last dim == full array dim also
    satisfies the TPU layout constraint).
    """
    for hg in range(1, H + 1):
        if H % hg == 0 and (hg * D) % _LANE == 0 and (hg * M) % _LANE == 0:
            return hg
    return H


def _causal_linear_attn_kernel(q_ref, k_ref, v_ref, o_ref, s_ref, *,
                               heads, d, m, eps, seq_len, chunk, needs_mask):
    c = pl.program_id(2)

    # Reset the carried state at the start of each (batch, head-group) row.
    # Correct only because the sequence axis is the innermost ("arbitrary")
    # grid axis — do not reorder the grid.
    @pl.when(c == 0)
    def _():
        s_ref[...] = jnp.zeros_like(s_ref)

    # HBM traffic stays in the caller's dtype; math is f32.
    q_all = q_ref[0].astype(jnp.float32)   # (C, heads*D)
    k_all = k_ref[0].astype(jnp.float32)   # (C, heads*D)
    v_all = v_ref[0].astype(jnp.float32)   # (C, heads*M)

    # Feature map elu(x)+1 == where(x > 0, x + 1, exp(x)).
    q_all = jnp.where(q_all > 0, q_all + 1.0, jnp.exp(q_all))
    k_all = jnp.where(k_all > 0, k_all + 1.0, jnp.exp(k_all))

    C = chunk
    if needs_mask:
        # Remainder chunk: rows >= seq_len must not touch the state or the
        # denominator.  Selects (not multiplies) so OOB garbage can't leak NaN.
        valid = (c * C + lax.broadcasted_iota(jnp.int32, (C, 1), 0)) < seq_len
        k_all = jnp.where(valid, k_all, 0.0)
        v_all = jnp.where(valid, v_all, 0.0)

    row = lax.broadcasted_iota(jnp.int32, (C, C), 0)
    col = lax.broadcasted_iota(jnp.int32, (C, C), 1)
    causal = col <= row                       # hoisted, shared by all heads
    ones_col = jnp.ones((C, 1), jnp.float32)

    outs = []
    for h in range(heads):                    # static unroll; heads is small
        q_h = q_all[:, h * d:(h + 1) * d]     # (C, D)   static lane slices
        k_h = k_all[:, h * d:(h + 1) * d]     # (C, D)
        # Augmented V: a trailing ones column folds the denominator / key-sum
        # into the same MXU matmuls as the numerator (kernel-internal only,
        # never written back to HBM).
        v_h = jnp.concatenate(
            [v_all[:, h * m:(h + 1) * m], ones_col], axis=-1)   # (C, M+1)

        # Intra-chunk Q K^T via dot_general (no XLU transpose), causal select.
        scores = lax.dot_general(q_h, k_h, (((1,), (1,)), ((), ())),
                                 preferred_element_type=jnp.float32)  # (C, C)
        scores = jnp.where(causal, scores, 0.0)

        # Columns [0, M) = numerator, column M = denominator t; intra + inter.
        acc = jnp.dot(scores, v_h, preferred_element_type=jnp.float32)
        acc = acc + jnp.dot(q_h, s_ref[h], preferred_element_type=jnp.float32)

        t = acc[:, m:m + 1]
        x = t + eps
        r = pl.reciprocal(x, approx=True)     # EUP slot (nearly free)
        r = r * (2.0 - x * r)                 # one Newton step -> ~f32
        z = jnp.clip(r, -1.0, 1.0)
        outs.append(jnp.clip(acc[:, :m] * z, -16.0, 16.0))

        # Running [ sum K_j V_j^T | sum K_j ] for later chunks.
        s_ref[h] = s_ref[h] + lax.dot_general(
            k_h, v_h, (((0,), (0,)), ((), ())),
            preferred_element_type=jnp.float32)

    o_blk = outs[0] if heads == 1 else jnp.concatenate(outs, axis=-1)
    o_ref[0] = o_blk.astype(o_ref.dtype)      # lane-dense store, caller dtype


def causal_linear_attention(queries, keys, values, *, chunk=256, eps=EPS):
    """queries/keys: (N, L, H, D); values: (N, L, H, M). Returns (N, L, H, M).

    chunk=256 suits v6e / v7x (sweep 256/512); use chunk=128 on v5e, which
    sits nearer the f32 compute roofline.
    """
    N, L, H, D = queries.shape
    M = values.shape[-1]
    out_dtype = queries.dtype

    # Zero-copy head fusion into the lane dim: no transpose / cast / pad pass.
    qf = queries.reshape(N, L, H * D)
    kf = keys.reshape(N, L, H * D)
    vf = values.reshape(N, L, H * M)

    # Chunk: multiple of 8 (f32 sublane tile), never longer than the sequence.
    C = max(8, min(_round_up(chunk, 8), _round_up(L, 8)))
    num_chunks = pl.cdiv(L, C)
    needs_mask = (L % C) != 0

    Hg = _heads_per_group(H, D, M)
    G = H // Hg

    kernel = functools.partial(
        _causal_linear_attn_kernel, heads=Hg, d=D, m=M, eps=eps,
        seq_len=L, chunk=C, needs_mask=needs_mask)

    out = pl.pallas_call(
        kernel,
        out_shape=jax.ShapeDtypeStruct((N, L, H * M), out_dtype),
        grid_spec=pltpu.PrefetchScalarGridSpec(
            num_scalar_prefetch=0,
            grid=(N, G, num_chunks),
            in_specs=[
                pl.BlockSpec((1, C, Hg * D), lambda n, g, c: (n, c, g)),
                pl.BlockSpec((1, C, Hg * D), lambda n, g, c: (n, c, g)),
                pl.BlockSpec((1, C, Hg * M), lambda n, g, c: (n, c, g)),
            ],
            out_specs=pl.BlockSpec((1, C, Hg * M), lambda n, g, c: (n, c, g)),
            scratch_shapes=[
                # Per head in the group: running [ sum K_j V_j^T | sum K_j ].
                pltpu.VMEM((Hg, D, M + 1), jnp.float32),
            ],
        ),
        compiler_params=pltpu.CompilerParams(
            # Sequence axis carries state -> must stay innermost / arbitrary.
            dimension_semantics=("parallel", "parallel", "arbitrary"),
        ),
    )(qf, kf, vf)

    return out.reshape(N, L, H, M)


def causal_linear_attention_reference(queries, keys, values, eps=EPS):
    """Pure-JAX reference mirroring the PyTorch module (float32 math)."""
    Q = jax.nn.elu(queries.astype(jnp.float32)) + 1.0
    K = jax.nn.elu(keys.astype(jnp.float32)) + 1.0
    V = values.astype(jnp.float32)
    t = jnp.einsum('nlhi,nlhi->nlh', Q, jnp.cumsum(K, axis=1))
    Z = jnp.clip(1.0 / (t + eps), -1.0, 1.0)
    S = jnp.cumsum(jnp.einsum('nlhd,nlhm->nlhdm', K, V), axis=1)
    Vn = jnp.einsum('nlhd,nlhdm->nlhm', Q, S)
    ret = jnp.clip(Vn * Z[..., None], -16.0, 16.0)
    return ret.astype(queries.dtype)


if __name__ == "__main__":
    # TODO(synk): key_padding_mask / custom feature_map paths of the module are
    # not implemented (default elu feature map, no masks), matching default use.
    N, L, H, D, M = 2, 256, 4, 32, 32
    key = jax.random.PRNGKey(0)
    kq, kk, kv = jax.random.split(key, 3)
    queries = jax.random.normal(kq, (N, L, H, D), dtype=jnp.float32)
    keys = jax.random.normal(kk, (N, L, H, D), dtype=jnp.float32)
    values = jax.random.normal(kv, (N, L, H, M), dtype=jnp.float32)

    ref = causal_linear_attention_reference(queries, keys, values)

    # Default chunk (single 256-row chunk at this sequence length).
    out = jax.block_until_ready(causal_linear_attention(queries, keys, values))
    np.testing.assert_allclose(np.asarray(out), np.asarray(ref),
                               rtol=1e-3, atol=1e-3)

    # Smaller chunk exercises the carried-state (multi-chunk) path.
    out2 = jax.block_until_ready(
        causal_linear_attention(queries, keys, values, chunk=64))
    np.testing.assert_allclose(np.asarray(out2), np.asarray(ref),
                               rtol=1e-3, atol=1e-3)

    print("KERNEL_OK")
</pallas_src>

<mosaic_0001>
module attributes {stable_mosaic.version = 11 : i64} {
  func.func @_causal_linear_attn_kernel(%arg0: i32, %arg1: i32, %arg2: i32, %arg3: memref<1x256x128xf32, #tpu.memory_space<vmem>>, %arg4: memref<1x256x128xf32, #tpu.memory_space<vmem>>, %arg5: memref<1x256x128xf32, #tpu.memory_space<vmem>>, %arg6: memref<1x256x128xf32, #tpu.memory_space<vmem>>, %arg7: memref<4x32x33xf32, #tpu.memory_space<vmem>>) attributes {dimension_semantics = [#tpu.dimension_semantics<parallel>, #tpu.dimension_semantics<parallel>, #tpu.dimension_semantics<arbitrary>], iteration_bounds = array<i64: 2, 1, 1>, scalar_prefetch = 0 : i64, scratch_operands = 1 : i64, tpu.core_type = #tpu.core_type<tc>, window_params = [{transform_indices = @transform_0, window_bounds = array<i64: 1, 256, 128>}, {transform_indices = @transform_1, window_bounds = array<i64: 1, 256, 128>}, {transform_indices = @transform_2, window_bounds = array<i64: 1, 256, 128>}, {transform_indices = @transform_3, window_bounds = array<i64: 1, 256, 128>}]} {
    %c0_i32 = arith.constant 0 : i32
    %0 = arith.cmpi eq, %arg2, %c0_i32 : i32
    %1 = arith.extui %0 : i1 to i32
    %c0_i32_0 = arith.constant 0 : i32
    %2 = arith.cmpi ne, %1, %c0_i32_0 : i32
    scf.if %2 {
      %cst_93 = arith.constant 0.000000e+00 : f32
      %181 = vector.broadcast %cst_93 : f32 to vector<4x32x33xf32>
      %c0_94 = arith.constant 0 : index
      %c0_95 = arith.constant 0 : index
      %c0_96 = arith.constant 0 : index
      %182 = vector.load %arg7[%c0_94, %c0_95, %c0_96] : memref<4x32x33xf32, #tpu.memory_space<vmem>>, vector<4x32x33xf32>
      tpu.vector_store %arg7[%c0_94, %c0_95, %c0_96], %181 {strides = array<i32>} : memref<4x32x33xf32, #tpu.memory_space<vmem>>, vector<4x32x33xf32>,
    } else {
    }
    %c0 = arith.constant 0 : index
    %c0_1 = arith.constant 0 : index
    %c0_2 = arith.constant 0 : index
    %3 = vector.load %arg3[%c0, %c0_1, %c0_2] : memref<1x256x128xf32, #tpu.memory_space<vmem>>, vector<1x256x128xf32>
    %4 = vector.shape_cast %3 : vector<1x256x128xf32> to vector<256x128xf32>
    %c0_3 = arith.constant 0 : index
    %c0_4 = arith.constant 0 : index
    %c0_5 = arith.constant 0 : index
    %5 = vector.load %arg4[%c0_3, %c0_4, %c0_5] : memref<1x256x128xf32, #tpu.memory_space<vmem>>, vector<1x256x128xf32>
    %6 = vector.shape_cast %5 : vector<1x256x128xf32> to vector<256x128xf32>
    %c0_6 = arith.constant 0 : index
    %c0_7 = arith.constant 0 : index
    %c0_8 = arith.constant 0 : index
    %7 = vector.load %arg5[%c0_6, %c0_7, %c0_8] : memref<1x256x128xf32, #tpu.memory_space<vmem>>, vector<1x256x128xf32>
    %8 = vector.shape_cast %7 : vector<1x256x128xf32> to vector<256x128xf32>
    %cst = arith.constant 0.000000e+00 : f32
    %9 = vector.broadcast %cst : f32 to vector<256x128xf32>
    %10 = arith.cmpf ogt, %4, %9 : vector<256x128xf32>
    %cst_9 = arith.constant 1.000000e+00 : f32
    %11 = vector.broadcast %cst_9 : f32 to vector<256x128xf32>
    %12 = arith.addf %4, %11 : vector<256x128xf32>
    %13 = math.exp %4 : vector<256x128xf32>
    %14 = arith.select %10, %12, %13 : vector<256x128xi1>, vector<256x128xf32>
    %cst_10 = arith.constant 0.000000e+00 : f32
    %15 = vector.broadcast %cst_10 : f32 to vector<256x128xf32>
    %16 = arith.cmpf ogt, %6, %15 : vector<256x128xf32>
    %cst_11 = arith.constant 1.000000e+00 : f32
    %17 = vector.broadcast %cst_11 : f32 to vector<256x128xf32>
    %18 = arith.addf %6, %17 : vector<256x128xf32>
    %19 = math.exp %6 : vector<256x128xf32>
    %20 = arith.select %16, %18, %19 : vector<256x128xi1>, vector<256x128xf32>
    %21 = tpu.iota {dimensions = array<i32: 0>} : vector<256x256xi32>
    %22 = tpu.iota {dimensions = array<i32: 1>} : vector<256x256xi32>
    %23 = arith.cmpi sle, %22, %21 : vector<256x256xi32>
    %cst_12 = arith.constant 1.000000e+00 : f32
    %24 = vector.broadcast %cst_12 : f32 to vector<256x1xf32>
    %25 = vector.extract_strided_slice %14 {offsets = [0, 0], sizes = [256, 32], strides = [1, 1]} : vector<256x128xf32> to vector<256x32xf32>
    %26 = vector.extract_strided_slice %20 {offsets = [0, 0], sizes = [256, 32], strides = [1, 1]} : vector<256x128xf32> to vector<256x32xf32>
    %27 = vector.extract_strided_slice %8 {offsets = [0, 0], sizes = [256, 32], strides = [1, 1]} : vector<256x128xf32> to vector<256x32xf32>
    %28 = tpu.concatenate %27, %24 in 1 : vector<256x32xf32>, vector<256x1xf32> -> vector<256x33xf32>
    %cst_13 = arith.constant dense<0.000000e+00> : vector<256x256xf32>
    %29 = tpu.matmul %25, %26, %cst_13 {dimension_numbers = #tpu.dot_dimension_numbers<[1], [1], [0], [0], [0, 0, 1, 0], [], []>} : vector<256x32xf32>, vector<256x32xf32>, vector<256x256xf32> -> vector<256x256xf32>
    %cst_14 = arith.constant 0.000000e+00 : f32
    %30 = vector.broadcast %cst_14 : f32 to vector<256x256xf32>
    %31 = arith.select %23, %29, %30 : vector<256x256xi1>, vector<256x256xf32>
    %cst_15 = arith.constant dense<0.000000e+00> : vector<256x33xf32>
    %32 = tpu.matmul %31, %28, %cst_15 {dimension_numbers = #tpu.dot_dimension_numbers<[1], [0], [0], [1], [0, 0, 1, 1], [], []>} : vector<256x256xf32>, vector<256x33xf32>, vector<256x33xf32> -> vector<256x33xf32>
    %c0_16 = arith.constant 0 : index
    %c0_17 = arith.constant 0 : index
    %c0_18 = arith.constant 0 : index
    %33 = vector.load %arg7[%c0_16, %c0_17, %c0_18] : memref<4x32x33xf32, #tpu.memory_space<vmem>>, vector<1x32x33xf32>
    %34 = vector.shape_cast %33 : vector<1x32x33xf32> to vector<32x33xf32>
    %cst_19 = arith.constant dense<0.000000e+00> : vector<256x33xf32>
    %35 = tpu.matmul %25, %34, %cst_19 {dimension_numbers = #tpu.dot_dimension_numbers<[1], [0], [0], [1], [0, 0, 1, 1], [], []>} : vector<256x32xf32>, vector<32x33xf32>, vector<256x33xf32> -> vector<256x33xf32>
    %36 = arith.addf %32, %35 : vector<256x33xf32>
    %37 = vector.extract_strided_slice %36 {offsets = [0, 32], sizes = [256, 1], strides = [1, 1]} : vector<256x33xf32> to vector<256x1xf32>
    %cst_20 = arith.constant 9.99999997E-7 : f32
    %38 = vector.broadcast %cst_20 : f32 to vector<256x1xf32>
    %39 = arith.addf %37, %38 : vector<256x1xf32>
    %40 = tpu.reciprocal %39 {approx = true} : vector<256x1xf32> -> vector<256x1xf32>
    %41 = arith.mulf %39, %40 : vector<256x1xf32>
    %cst_21 = arith.constant 2.000000e+00 : f32
    %42 = vector.broadcast %cst_21 : f32 to vector<256x1xf32>
    %43 = arith.subf %42, %41 : vector<256x1xf32>
    %44 = arith.mulf %40, %43 : vector<256x1xf32>
    %cst_22 = arith.constant -1.000000e+00 : f32
    %cst_23 = arith.constant 1.000000e+00 : f32
    %45 = vector.broadcast %cst_22 : f32 to vector<256x1xf32>
    %46 = arith.maximumf %45, %44 : vector<256x1xf32>
    %47 = vector.broadcast %cst_23 : f32 to vector<256x1xf32>
    %48 = arith.minimumf %47, %46 : vector<256x1xf32>
    %49 = vector.extract_strided_slice %36 {offsets = [0, 0], sizes = [256, 32], strides = [1, 1]} : vector<256x33xf32> to vector<256x32xf32>
    %50 = vector.broadcast %48 : vector<256x1xf32> to vector<256x32xf32>
    %51 = arith.mulf %49, %50 : vector<256x32xf32>
    %cst_24 = arith.constant -1.600000e+01 : f32
    %cst_25 = arith.constant 1.600000e+01 : f32
    %52 = vector.broadcast %cst_24 : f32 to vector<256x32xf32>
    %53 = arith.maximumf %52, %51 : vector<256x32xf32>
    %54 = vector.broadcast %cst_25 : f32 to vector<256x32xf32>
    %55 = arith.minimumf %54, %53 : vector<256x32xf32>
    %c0_26 = arith.constant 0 : index
    %c0_27 = arith.constant 0 : index
    %c0_28 = arith.constant 0 : index
    %56 = vector.load %arg7[%c0_26, %c0_27, %c0_28] : memref<4x32x33xf32, #tpu.memory_space<vmem>>, vector<1x32x33xf32>
    %57 = vector.shape_cast %56 : vector<1x32x33xf32> to vector<32x33xf32>
    %cst_29 = arith.constant dense<0.000000e+00> : vector<32x33xf32>
    %58 = tpu.matmul %26, %28, %cst_29 {dimension_numbers = #tpu.dot_dimension_numbers<[0], [0], [1], [1], [0, 1, 1, 1], [], []>} : vector<256x32xf32>, vector<256x33xf32>, vector<32x33xf32> -> vector<32x33xf32>
    %59 = arith.addf %57, %58 : vector<32x33xf32>
    %c0_30 = arith.constant 0 : index
    %c0_31 = arith.constant 0 : index
    %c0_32 = arith.constant 0 : index
    %60 = vector.load %arg7[%c0_30, %c0_31, %c0_32] : memref<4x32x33xf32, #tpu.memory_space<vmem>>, vector<1x32x33xf32>
    %61 = vector.shape_cast %60 : vector<1x32x33xf32> to vector<32x33xf32>
    %62 = vector.shape_cast %59 : vector<32x33xf32> to vector<1x32x33xf32>
    tpu.vector_store %arg7[%c0_30, %c0_31, %c0_32], %62 {strides = array<i32>} : memref<4x32x33xf32, #tpu.memory_space<vmem>>, vector<1x32x33xf32>,
    %63 = vector.extract_strided_slice %14 {offsets = [0, 32], sizes = [256, 32], strides = [1, 1]} : vector<256x128xf32> to vector<256x32xf32>
    %64 = vector.extract_strided_slice %20 {offsets = [0, 32], sizes = [256, 32], strides = [1, 1]} : vector<256x128xf32> to vector<256x32xf32>
    %65 = vector.extract_strided_slice %8 {offsets = [0, 32], sizes = [256, 32], strides = [1, 1]} : vector<256x128xf32> to vector<256x32xf32>
    %66 = tpu.concatenate %65, %24 in 1 : vector<256x32xf32>, vector<256x1xf32> -> vector<256x33xf32>
    %cst_33 = arith.constant dense<0.000000e+00> : vector<256x256xf32>
    %67 = tpu.matmul %63, %64, %cst_33 {dimension_numbers = #tpu.dot_dimension_numbers<[1], [1], [0], [0], [0, 0, 1, 0], [], []>} : vector<256x32xf32>, vector<256x32xf32>, vector<256x256xf32> -> vector<256x256xf32>
    %cst_34 = arith.constant 0.000000e+00 : f32
    %68 = vector.broadcast %cst_34 : f32 to vector<256x256xf32>
    %69 = arith.select %23, %67, %68 : vector<256x256xi1>, vector<256x256xf32>
    %cst_35 = arith.constant dense<0.000000e+00> : vector<256x33xf32>
    %70 = tpu.matmul %69, %66, %cst_35 {dimension_numbers = #tpu.dot_dimension_numbers<[1], [0], [0], [1], [0, 0, 1, 1], [], []>} : vector<256x256xf32>, vector<256x33xf32>, vector<256x33xf32> -> vector<256x33xf32>
    %c1 = arith.constant 1 : index
    %c0_36 = arith.constant 0 : index
    %c0_37 = arith.constant 0 : index
    %71 = vector.load %arg7[%c1, %c0_36, %c0_37] : memref<4x32x33xf32, #tpu.memory_space<vmem>>, vector<1x32x33xf32>
    %72 = vector.shape_cast %71 : vector<1x32x33xf32> to vector<32x33xf32>
    %cst_38 = arith.constant dense<0.000000e+00> : vector<256x33xf32>
    %73 = tpu.matmul %63, %72, %cst_38 {dimension_numbers = #tpu.dot_dimension_numbers<[1], [0], [0], [1], [0, 0, 1, 1], [], []>} : vector<256x32xf32>, vector<32x33xf32>, vector<256x33xf32> -> vector<256x33xf32>
    %74 = arith.addf %70, %73 : vector<256x33xf32>
    %75 = vector.extract_strided_slice %74 {offsets = [0, 32], sizes = [256, 1], strides = [1, 1]} : vector<256x33xf32> to vector<256x1xf32>
    %cst_39 = arith.constant 9.99999997E-7 : f32
    %76 = vector.broadcast %cst_39 : f32 to vector<256x1xf32>
    %77 = arith.addf %75, %76 : vector<256x1xf32>
    %78 = tpu.reciprocal %77 {approx = true} : vector<256x1xf32> -> vector<256x1xf32>
    %79 = arith.mulf %77, %78 : vector<256x1xf32>
    %cst_40 = arith.constant 2.000000e+00 : f32
    %80 = vector.broadcast %cst_40 : f32 to vector<256x1xf32>
    %81 = arith.subf %80, %79 : vector<256x1xf32>
    %82 = arith.mulf %78, %81 : vector<256x1xf32>
    %cst_41 = arith.constant -1.000000e+00 : f32
    %cst_42 = arith.constant 1.000000e+00 : f32
    %83 = vector.broadcast %cst_41 : f32 to vector<256x1xf32>
    %84 = arith.maximumf %83, %82 : vector<256x1xf32>
    %85 = vector.broadcast %cst_42 : f32 to vector<256x1xf32>
    %86 = arith.minimumf %85, %84 : vector<256x1xf32>
    %87 = vector.extract_strided_slice %74 {offsets = [0, 0], sizes = [256, 32], strides = [1, 1]} : vector<256x33xf32> to vector<256x32xf32>
    %88 = vector.broadcast %86 : vector<256x1xf32> to vector<256x32xf32>
    %89 = arith.mulf %87, %88 : vector<256x32xf32>
    %cst_43 = arith.constant -1.600000e+01 : f32
    %cst_44 = arith.constant 1.600000e+01 : f32
    %90 = vector.broadcast %cst_43 : f32 to vector<256x32xf32>
    %91 = arith.maximumf %90, %89 : vector<256x32xf32>
    %92 = vector.broadcast %cst_44 : f32 to vector<256x32xf32>
    %93 = arith.minimumf %92, %91 : vector<256x32xf32>
    %c1_45 = arith.constant 1 : index
    %c0_46 = arith.constant 0 : index
    %c0_47 = arith.constant 0 : index
    %94 = vector.load %arg7[%c1_45, %c0_46, %c0_47] : memref<4x32x33xf32, #tpu.memory_space<vmem>>, vector<1x32x33xf32>
    %95 = vector.shape_cast %94 : vector<1x32x33xf32> to vector<32x33xf32>
    %cst_48 = arith.constant dense<0.000000e+00> : vector<32x33xf32>
    %96 = tpu.matmul %64, %66, %cst_48 {dimension_numbers = #tpu.dot_dimension_numbers<[0], [0], [1], [1], [0, 1, 1, 1], [], []>} : vector<256x32xf32>, vector<256x33xf32>, vector<32x33xf32> -> vector<32x33xf32>
    %97 = arith.addf %95, %96 : vector<32x33xf32>
    %c1_49 = arith.constant 1 : index
    %c0_50 = arith.constant 0 : index
    %c0_51 = arith.constant 0 : index
    %98 = vector.load %arg7[%c1_49, %c0_50, %c0_51] : memref<4x32x33xf32, #tpu.memory_space<vmem>>, vector<1x32x33xf32>
    %99 = vector.shape_cast %98 : vector<1x32x33xf32> to vector<32x33xf32>
    %100 = vector.shape_cast %97 : vector<32x33xf32> to vector<1x32x33xf32>
    tpu.vector_store %arg7[%c1_49, %c0_50, %c0_51], %100 {strides = array<i32>} : memref<4x32x33xf32, #tpu.memory_space<vmem>>, vector<1x32x33xf32>,
    %101 = vector.extract_strided_slice %14 {offsets = [0, 64], sizes = [256, 32], strides = [1, 1]} : vector<256x128xf32> to vector<256x32xf32>
    %102 = vector.extract_strided_slice %20 {offsets = [0, 64], sizes = [256, 32], strides = [1, 1]} : vector<256x128xf32> to vector<256x32xf32>
    %103 = vector.extract_strided_slice %8 {offsets = [0, 64], sizes = [256, 32], strides = [1, 1]} : vector<256x128xf32> to vector<256x32xf32>
    %104 = tpu.concatenate %103, %24 in 1 : vector<256x32xf32>, vector<256x1xf32> -> vector<256x33xf32>
    %cst_52 = arith.constant dense<0.000000e+00> : vector<256x256xf32>
    %105 = tpu.matmul %101, %102, %cst_52 {dimension_numbers = #tpu.dot_dimension_numbers<[1], [1], [0], [0], [0, 0, 1, 0], [], []>} : vector<256x32xf32>, vector<256x32xf32>, vector<256x256xf32> -> vector<256x256xf32>
    %cst_53 = arith.constant 0.000000e+00 : f32
    %106 = vector.broadcast %cst_53 : f32 to vector<256x256xf32>
    %107 = arith.select %23, %105, %106 : vector<256x256xi1>, vector<256x256xf32>
    %cst_54 = arith.constant dense<0.000000e+00> : vector<256x33xf32>
    %108 = tpu.matmul %107, %104, %cst_54 {dimension_numbers = #tpu.dot_dimension_numbers<[1], [0], [0], [1], [0, 0, 1, 1], [], []>} : vector<256x256xf32>, vector<256x33xf32>, vector<256x33xf32> -> vector<256x33xf32>
    %c2 = arith.constant 2 : index
    %c0_55 = arith.constant 0 : index
    %c0_56 = arith.constant 0 : index
    %109 = vector.load %arg7[%c2, %c0_55, %c0_56] : memref<4x32x33xf32, #tpu.memory_space<vmem>>, vector<1x32x33xf32>
    %110 = vector.shape_cast %109 : vector<1x32x33xf32> to vector<32x33xf32>
    %cst_57 = arith.constant dense<0.000000e+00> : vector<256x33xf32>
    %111 = tpu.matmul %101, %110, %cst_57 {dimension_numbers = #tpu.dot_dimension_numbers<[1], [0], [0], [1], [0, 0, 1, 1], [], []>} : vector<256x32xf32>, vector<32x33xf32>, vector<256x33xf32> -> vector<256x33xf32>
    %112 = arith.addf %108, %111 : vector<256x33xf32>
    %113 = vector.extract_strided_slice %112 {offsets = [0, 32], sizes = [256, 1], strides = [1, 1]} : vector<256x33xf32> to vector<256x1xf32>
    %cst_58 = arith.constant 9.99999997E-7 : f32
    %114 = vector.broadcast %cst_58 : f32 to vector<256x1xf32>
    %115 = arith.addf %113, %114 : vector<256x1xf32>
    %116 = tpu.reciprocal %115 {approx = true} : vector<256x1xf32> -> vector<256x1xf32>
    %117 = arith.mulf %115, %116 : vector<256x1xf32>
    %cst_59 = arith.constant 2.000000e+00 : f32
    %118 = vector.broadcast %cst_59 : f32 to vector<256x1xf32>
    %119 = arith.subf %118, %117 : vector<256x1xf32>
    %120 = arith.mulf %116, %119 : vector<256x1xf32>
    %cst_60 = arith.constant -1.000000e+00 : f32
    %cst_61 = arith.constant 1.000000e+00 : f32
    %121 = vector.broadcast %cst_60 : f32 to vector<256x1xf32>
    %122 = arith.maximumf %121, %120 : vector<256x1xf32>
    %123 = vector.broadcast %cst_61 : f32 to vector<256x1xf32>
    %124 = arith.minimumf %123, %122 : vector<256x1xf32>
    %125 = vector.extract_strided_slice %112 {offsets = [0, 0], sizes = [256, 32], strides = [1, 1]} : vector<256x33xf32> to vector<256x32xf32>
    %126 = vector.broadcast %124 : vector<256x1xf32> to vector<256x32xf32>
    %127 = arith.mulf %125, %126 : vector<256x32xf32>
    %cst_62 = arith.constant -1.600000e+01 : f32
    %cst_63 = arith.constant 1.600000e+01 : f32
    %128 = vector.broadcast %cst_62 : f32 to vector<256x32xf32>
    %129 = arith.maximumf %128, %127 : vector<256x32xf32>
    %130 = vector.broadcast %cst_63 : f32 to vector<256x32xf32>
    %131 = arith.minimumf %130, %129 : vector<256x32xf32>
    %c2_64 = arith.constant 2 : index
    %c0_65 = arith.constant 0 : index
    %c0_66 = arith.constant 0 : index
    %132 = vector.load %arg7[%c2_64, %c0_65, %c0_66] : memref<4x32x33xf32, #tpu.memory_space<vmem>>, vector<1x32x33xf32>
    %133 = vector.shape_cast %132 : vector<1x32x33xf32> to vector<32x33xf32>
    %cst_67 = arith.constant dense<0.000000e+00> : vector<32x33xf32>
    %134 = tpu.matmul %102, %104, %cst_67 {dimension_numbers = #tpu.dot_dimension_numbers<[0], [0], [1], [1], [0, 1, 1, 1], [], []>} : vector<256x32xf32>, vector<256x33xf32>, vector<32x33xf32> -> vector<32x33xf32>
    %135 = arith.addf %133, %134 : vector<32x33xf32>
    %c2_68 = arith.constant 2 : index
    %c0_69 = arith.constant 0 : index
    %c0_70 = arith.constant 0 : index
    %136 = vector.load %arg7[%c2_68, %c0_69, %c0_70] : memref<4x32x33xf32, #tpu.memory_space<vmem>>, vector<1x32x33xf32>
    %137 = vector.shape_cast %136 : vector<1x32x33xf32> to vector<32x33xf32>
    %138 = vector.shape_cast %135 : vector<32x33xf32> to vector<1x32x33xf32>
    tpu.vector_store %arg7[%c2_68, %c0_69, %c0_70], %138 {strides = array<i32>} : memref<4x32x33xf32, #tpu.memory_space<vmem>>, vector<1x32x33xf32>,
    %139 = vector.extract_strided_slice %14 {offsets = [0, 96], sizes = [256, 32], strides = [1, 1]} : vector<256x128xf32> to vector<256x32xf32>
    %140 = vector.extract_strided_slice %20 {offsets = [0, 96], sizes = [256, 32], strides = [1, 1]} : vector<256x128xf32> to vector<256x32xf32>
    %141 = vector.extract_strided_slice %8 {offsets = [0, 96], sizes = [256, 32], strides = [1, 1]} : vector<256x128xf32> to vector<256x32xf32>
    %142 = tpu.concatenate %141, %24 in 1 : vector<256x32xf32>, vector<256x1xf32> -> vector<256x33xf32>
    %cst_71 = arith.constant dense<0.000000e+00> : vector<256x256xf32>
    %143 = tpu.matmul %139, %140, %cst_71 {dimension_numbers = #tpu.dot_dimension_numbers<[1], [1], [0], [0], [0, 0, 1, 0], [], []>} : vector<256x32xf32>, vector<256x32xf32>, vector<256x256xf32> -> vector<256x256xf32>
    %cst_72 = arith.constant 0.000000e+00 : f32
    %144 = vector.broadcast %cst_72 : f32 to vector<256x256xf32>
    %145 = arith.select %23, %143, %144 : vector<256x256xi1>, vector<256x256xf32>
    %cst_73 = arith.constant dense<0.000000e+00> : vector<256x33xf32>
    %146 = tpu.matmul %145, %142, %cst_73 {dimension_numbers = #tpu.dot_dimension_numbers<[1], [0], [0], [1], [0, 0, 1, 1], [], []>} : vector<256x256xf32>, vector<256x33xf32>, vector<256x33xf32> -> vector<256x33xf32>
    %c3 = arith.constant 3 : index
    %c0_74 = arith.constant 0 : index
    %c0_75 = arith.constant 0 : index
    %147 = vector.load %arg7[%c3, %c0_74, %c0_75] : memref<4x32x33xf32, #tpu.memory_space<vmem>>, vector<1x32x33xf32>
    %148 = vector.shape_cast %147 : vector<1x32x33xf32> to vector<32x33xf32>
    %cst_76 = arith.constant dense<0.000000e+00> : vector<256x33xf32>
    %149 = tpu.matmul %139, %148, %cst_76 {dimension_numbers = #tpu.dot_dimension_numbers<[1], [0], [0], [1], [0, 0, 1, 1], [], []>} : vector<256x32xf32>, vector<32x33xf32>, vector<256x33xf32> -> vector<256x33xf32>
    %150 = arith.addf %146, %149 : vector<256x33xf32>
    %151 = vector.extract_strided_slice %150 {offsets = [0, 32], sizes = [256, 1], strides = [1, 1]} : vector<256x33xf32> to vector<256x1xf32>
    %cst_77 = arith.constant 9.99999997E-7 : f32
    %152 = vector.broadcast %cst_77 : f32 to vector<256x1xf32>
    %153 = arith.addf %151, %152 : vector<256x1xf32>
    %154 = tpu.reciprocal %153 {approx = true} : vector<256x1xf32> -> vector<256x1xf32>
    %155 = arith.mulf %153, %154 : vector<256x1xf32>
    %cst_78 = arith.constant 2.000000e+00 : f32
    %156 = vector.broadcast %cst_78 : f32 to vector<256x1xf32>
    %157 = arith.subf %156, %155 : vector<256x1xf32>
    %158 = arith.mulf %154, %157 : vector<256x1xf32>
    %cst_79 = arith.constant -1.000000e+00 : f32
    %cst_80 = arith.constant 1.000000e+00 : f32
    %159 = vector.broadcast %cst_79 : f32 to vector<256x1xf32>
    %160 = arith.maximumf %159, %158 : vector<256x1xf32>
    %161 = vector.broadcast %cst_80 : f32 to vector<256x1xf32>
    %162 = arith.minimumf %161, %160 : vector<256x1xf32>
    %163 = vector.extract_strided_slice %150 {offsets = [0, 0], sizes = [256, 32], strides = [1, 1]} : vector<256x33xf32> to vector<256x32xf32>
    %164 = vector.broadcast %162 : vector<256x1xf32> to vector<256x32xf32>
    %165 = arith.mulf %163, %164 : vector<256x32xf32>
    %cst_81 = arith.constant -1.600000e+01 : f32
    %cst_82 = arith.constant 1.600000e+01 : f32
    %166 = vector.broadcast %cst_81 : f32 to vector<256x32xf32>
    %167 = arith.maximumf %166, %165 : vector<256x32xf32>
    %168 = vector.broadcast %cst_82 : f32 to vector<256x32xf32>
    %169 = arith.minimumf %168, %167 : vector<256x32xf32>
    %c3_83 = arith.constant 3 : index
    %c0_84 = arith.constant 0 : index
    %c0_85 = arith.constant 0 : index
    %170 = vector.load %arg7[%c3_83, %c0_84, %c0_85] : memref<4x32x33xf32, #tpu.memory_space<vmem>>, vector<1x32x33xf32>
    %171 = vector.shape_cast %170 : vector<1x32x33xf32> to vector<32x33xf32>
    %cst_86 = arith.constant dense<0.000000e+00> : vector<32x33xf32>
    %172 = tpu.matmul %140, %142, %cst_86 {dimension_numbers = #tpu.dot_dimension_numbers<[0], [0], [1], [1], [0, 1, 1, 1], [], []>} : vector<256x32xf32>, vector<256x33xf32>, vector<32x33xf32> -> vector<32x33xf32>
    %173 = arith.addf %171, %172 : vector<32x33xf32>
    %c3_87 = arith.constant 3 : index
    %c0_88 = arith.constant 0 : index
    %c0_89 = arith.constant 0 : index
    %174 = vector.load %arg7[%c3_87, %c0_88, %c0_89] : memref<4x32x33xf32, #tpu.memory_space<vmem>>, vector<1x32x33xf32>
    %175 = vector.shape_cast %174 : vector<1x32x33xf32> to vector<32x33xf32>
    %176 = vector.shape_cast %173 : vector<32x33xf32> to vector<1x32x33xf32>
    tpu.vector_store %arg7[%c3_87, %c0_88, %c0_89], %176 {strides = array<i32>} : memref<4x32x33xf32, #tpu.memory_space<vmem>>, vector<1x32x33xf32>,
    %177 = tpu.concatenate %55, %93, %131, %169 in 1 : vector<256x32xf32>, vector<256x32xf32>, vector<256x32xf32>, vector<256x32xf32> -> vector<256x128xf32>
    %c0_90 = arith.constant 0 : index
    %c0_91 = arith.constant 0 : index
    %c0_92 = arith.constant 0 : index
    %178 = vector.load %arg6[%c0_90, %c0_91, %c0_92] : memref<1x256x128xf32, #tpu.memory_space<vmem>>, vector<1x256x128xf32>
    %179 = vector.shape_cast %178 : vector<1x256x128xf32> to vector<256x128xf32>
    %180 = vector.shape_cast %177 : vector<256x128xf32> to vector<1x256x128xf32>
    tpu.vector_store %arg6[%c0_90, %c0_91, %c0_92], %180 {strides = array<i32>} : memref<1x256x128xf32, #tpu.memory_space<vmem>>, vector<1x256x128xf32>,
    return
  }
  func.func @transform_0(%arg0: i32, %arg1: i32, %arg2: i32) -> (i32, i32, i32) {
    %c0_i32 = arith.constant 0 : i32
    return %arg0, %arg2, %arg1 : i32, i32, i32
  }
  func.func @transform_1(%arg0: i32, %arg1: i32, %arg2: i32) -> (i32, i32, i32) {
    %c0_i32 = arith.constant 0 : i32
    return %arg0, %arg2, %arg1 : i32, i32, i32
  }
  func.func @transform_2(%arg0: i32, %arg1: i32, %arg2: i32) -> (i32, i32, i32) {
    %c0_i32 = arith.constant 0 : i32
    return %arg0, %arg2, %arg1 : i32, i32, i32
  }
  func.func @transform_3(%arg0: i32, %arg1: i32, %arg2: i32) -> (i32, i32, i32) {
    %c0_i32 = arith.constant 0 : i32
    return %arg0, %arg2, %arg1 : i32, i32, i32
  }
}

</mosaic_0001>

<llo_original>
// kernel: tpu_custom_call.1
$region0: #{tpu_custom_call.1}
  #allocation0 [shape = 'u32[]', space=smem, size = 0x4, offset = 0x4, fixed_abs, tag = 'smem constant byte address 0x4 - core index']
  #allocation1 [shape = 'u32[72,128]{1,0:T(1,128)}', space=vmem, size = 0x9000, scoped, tag = 'internal scratch']
  #allocation2 [shape = 'f32[4,32,33]{2,1,0:T(8,128)}', space=vmem, size = 0x10000, scoped, tag = 'scratch operand']
  %s0 = inlined_call_operand.hbm [shape: f32[2,256,128], index: 0, kind: input, shape index: {}]
  %s1 = inlined_call_operand.hbm [shape: f32[2,256,128], index: 1, kind: input, shape index: {}]
  %s2 = inlined_call_operand.hbm [shape: f32[2,256,128], index: 2, kind: input, shape index: {}]
  %s3 = inlined_call_operand.hbm [shape: f32[2,256,128], index: 3, kind: output, shape index: {}]
  %s4 = sld [smem:[#allocation0]]
  $region61: #{tpu_custom_call.1} parent=0
    _
  %s6 = ssub.s32 1, %s4
  %s7 = scalar_select 0, %s6, %s4
  $region1: #{tpu_custom_call.1} parent=0
    #allocation3 [shape = 'u8[262144]{0}', space=vmem, size = 0x40000, scoped, tag = 'input window, operand 0']
    #allocation4 [shape = 's32[2]{0}', space=sflag, size = 0x8, scoped, tag = 'scoped memory for tpu_custom_call.1']
    #allocation5 [shape = 's32[2]{0}', space=sflag, size = 0x8, scoped, tag = 'scoped memory for tpu_custom_call.1']
    #allocation6 [shape = 'u8[262144]{0}', space=vmem, size = 0x40000, scoped, tag = 'input window, operand 1']
    #allocation7 [shape = 's32[2]{0}', space=sflag, size = 0x8, scoped, tag = 'scoped memory for tpu_custom_call.1']
    #allocation8 [shape = 'u8[262144]{0}', space=vmem, size = 0x40000, scoped, tag = 'input window, operand 2']
    #allocation9 [shape = 'u8[262144]{0}', space=vmem, size = 0x40000, scoped, tag = 'output window, operand 0']
    %8 = vsyncpa [#allocation4], 0
    %s9 = scalar_lea.sflag [#allocation4], 1
    %10 = vsyncpa %s9, 0
    %11 = vsyncpa [#allocation7], 0
    %s12 = scalar_lea.sflag [#allocation7], 1
    %13 = vsyncpa %s12, 0
    %14 = vsyncpa [#allocation5], 0
    %s15 = scalar_lea.sflag [#allocation5], 1
    %16 = vsyncpa %s15, 0
    loop: start=0, step=1, limit=4
    $region2: #{tpu_custom_call.1} parent=1 // loop_pre_header
      _
    $region3: #{tpu_custom_call.1} parent=1 // loop_header
      %s18 = sphi 0, %s22
      %p19 = scmp.ge.s32.totalorder %s18, 4
      %s25 = sphi 0, %s44
      %s26 = sphi 0, %s40
      %s27 = sphi 0, %s36
      %s28 = sphi 0, %s25
      %s29 = sphi 0, %s26
      %s30 = sphi 0, %s27
      %s31 = sphi 0, %s28
      %s32 = sphi 0, %s29
      %s33 = sphi 0, %s30
      %s51 = sphi 0, %s53
      %s54 = sphi 0, %s51
      %s55 = sphi 0, %s54
      %s71 = sphi 0, %s55
      %s81 = sphi 0, %s83
      %s84 = sphi 0, %s81
      %s85 = sphi 0, %s84
      %s101 = sphi 0, %s85
      %s111 = sphi 0, %s113
      %s114 = sphi 0, %s111
      %s115 = sphi 0, %s114
      %s131 = sphi 0, %s115
      %s141 = sphi 0, %s143
      %s144 = sphi 0, %s141
      %s145 = sphi 0, %s144
      %s161 = sphi 0, %s145
    $region4: #{tpu_custom_call.1} parent=1 // loop_header_branch
      %21 = sbr.rel (%p19) target = $region8
    $region5: #{tpu_custom_call.1} parent=1 // loop_body
      %s23 = ssub.s32 %s18, 1
      %s24 = ssub.s32 %s18, 2
      %s34 = sadd.s32 1, %s27
      %p35 = scmp.ge.s32.totalorder %s34, 1
      %s36 = scalar_select %p35, 0, %s34
      %s37 = sadd.s32 1, %s26
      %s38 = scalar_select %p35, %s37, %s26
      %p39 = scmp.ge.s32.totalorder %s38, 1
      %s40 = scalar_select %p39, 0, %s38
      %s41 = sadd.s32 1, %s25
      %s42 = scalar_select %p39, %s41, %s25
      %p43 = scmp.ge.s32.totalorder %s42, 2
      %s44 = scalar_select %p43, 0, %s42
      %s45 = ssub.s32 %s25, %s44
      %s46 = ssub.s32 %s27, %s36
      %s47 = sor.u32 %s45, %s46
      %s48 = ssub.s32 %s26, %s40
      %s49 = sor.u32 %s47, %s48
      %p50 = scmp.eq.s32.totalorder %s49, 0
      %s52 = sadd.s32 %s51, 1
      %s53 = scalar_select %p50, %s51, %s52
      %p56 = pneg %p50
      %p57 = scmp.eq.s32.totalorder %s18, 1
      %p58 = por %p56, %p57
      %p59 = scmp.ne.s32.totalorder %s51, %s54
      %p60 = scmp.eq.s32.totalorder %s18, 0
      %p61 = por %p59, %p60
      %p62 = scmp.ne.s32.totalorder %s51, %s54
      %p63 = scmp.eq.s32.totalorder %s23, 1
      %p64 = por %p62, %p63
      %p65 = scmp.ne.s32.totalorder %s54, %s55
      %p66 = scmp.eq.s32.totalorder %s23, 0
      %p67 = por %p65, %p66
      %p68 = scmp.ne.s32.totalorder %s54, %s55
      %p69 = scmp.eq.s32.totalorder %s24, 1
      %p70 = por %p68, %p69
      %p72 = scmp.ne.s32.totalorder %s55, %s71
      %p73 = scmp.eq.s32.totalorder %s24, 0
      %p74 = por %p72, %p73
      %s75 = ssub.s32 %s25, %s44
      %s76 = ssub.s32 %s27, %s36
      %s77 = sor.u32 %s75, %s76
      %s78 = ssub.s32 %s26, %s40
      %s79 = sor.u32 %s77, %s78
      %p80 = scmp.eq.s32.totalorder %s79, 0
      %s82 = sadd.s32 %s81, 1
      %s83 = scalar_select %p80, %s81, %s82
      %p86 = pneg %p80
      %p87 = scmp.eq.s32.totalorder %s18, 1
      %p88 = por %p86, %p87
      %p89 = scmp.ne.s32.totalorder %s81, %s84
      %p90 = scmp.eq.s32.totalorder %s18, 0
      %p91 = por %p89, %p90
      %p92 = scmp.ne.s32.totalorder %s81, %s84
      %p93 = scmp.eq.s32.totalorder %s23, 1
      %p94 = por %p92, %p93
      %p95 = scmp.ne.s32.totalorder %s84, %s85
      %p96 = scmp.eq.s32.totalorder %s23, 0
      %p97 = por %p95, %p96
      %p98 = scmp.ne.s32.totalorder %s84, %s85
      %p99 = scmp.eq.s32.totalorder %s24, 1
      %p100 = por %p98, %p99
      %p102 = scmp.ne.s32.totalorder %s85, %s101
      %p103 = scmp.eq.s32.totalorder %s24, 0
      %p104 = por %p102, %p103
      %s105 = ssub.s32 %s25, %s44
      %s106 = ssub.s32 %s27, %s36
      %s107 = sor.u32 %s105, %s106
      %s108 = ssub.s32 %s26, %s40
      %s109 = sor.u32 %s107, %s108
      %p110 = scmp.eq.s32.totalorder %s109, 0
      %s112 = sadd.s32 %s111, 1
      %s113 = scalar_select %p110, %s111, %s112
      %p116 = pneg %p110
      %p117 = scmp.eq.s32.totalorder %s18, 1
      %p118 = por %p116, %p117
      %p119 = scmp.ne.s32.totalorder %s111, %s114
      %p120 = scmp.eq.s32.totalorder %s18, 0
      %p121 = por %p119, %p120
      %p122 = scmp.ne.s32.totalorder %s111, %s114
      %p123 = scmp.eq.s32.totalorder %s23, 1
      %p124 = por %p122, %p123
      %p125 = scmp.ne.s32.totalorder %s114, %s115
      %p126 = scmp.eq.s32.totalorder %s23, 0
      %p127 = por %p125, %p126
      %p128 = scmp.ne.s32.totalorder %s114, %s115
      %p129 = scmp.eq.s32.totalorder %s24, 1
      %p130 = por %p128, %p129
      %p132 = scmp.ne.s32.totalorder %s115, %s131
      %p133 = scmp.eq.s32.totalorder %s24, 0
      %p134 = por %p132, %p133
      %s135 = ssub.s32 %s25, %s44
      %s136 = ssub.s32 %s27, %s36
      %s137 = sor.u32 %s135, %s136
      %s138 = ssub.s32 %s26, %s40
      %s139 = sor.u32 %s137, %s138
      %p140 = scmp.eq.s32.totalorder %s139, 0
      %s142 = sadd.s32 %s141, 1
      %s143 = scalar_select %p140, %s141, %s142
      %p146 = pneg %p140
      %p147 = scmp.eq.s32.totalorder %s18, 1
      %p148 = por %p146, %p147
      %p149 = scmp.ne.s32.totalorder %s141, %s144
      %p150 = scmp.eq.s32.totalorder %s18, 0
      %p151 = por %p149, %p150
      %p152 = scmp.ne.s32.totalorder %s141, %s144
      %p153 = scmp.eq.s32.totalorder %s23, 1
      %p154 = por %p152, %p153
      %p155 = scmp.ne.s32.totalorder %s144, %s145
      %p156 = scmp.eq.s32.totalorder %s23, 0
      %p157 = por %p155, %p156
      %p158 = scmp.ne.s32.totalorder %s144, %s145
      %p159 = scmp.eq.s32.totalorder %s24, 1
      %p160 = por %p158, %p159
      %p162 = scmp.ne.s32.totalorder %s145, %s161
      %p163 = scmp.eq.s32.totalorder %s24, 0
      %p164 = por %p162, %p163
      %p165 = scmp.le.s32.totalorder 1, %s18
      %p166 = scmp.lt.s32.totalorder %s18, 3
      %p167 = pnand %p165, %p166
      %p168 = pneg %p167
      // Predicated region
      $region9: #{tpu_custom_call.1} parent=5 // pred_check
        _
      $region10: #{tpu_custom_call.1} parent=5 // pred_check_branch
        %170 = sbr.rel (%p167) target = $region12
      $region11: #{tpu_custom_call.1} parent=5 // pred_region
        %s171 = ssub.s32 %s18, 1
      $region12: #{tpu_custom_call.1} parent=5 // pred_fallthru
        _
      %p172 = scmp.lt.s32.totalorder %s18, 2
      // Predicated region
      $region13: #{tpu_custom_call.1} parent=5 // pred_check
        %p173 = pneg %p172
      $region14: #{tpu_custom_call.1} parent=5 // pred_check_branch
        %175 = sbr.rel (%p173) target = $region16
      $region15: #{tpu_custom_call.1} parent=5 // pred_region
        // Predicated region
        $region17: #{tpu_custom_call.1} parent=15 // pred_check
          %p176 = pneg %p61
        $region18: #{tpu_custom_call.1} parent=15 // pred_check_branch
          %178 = sbr.rel (%p176) target = $region20
        $region19: #{tpu_custom_call.1} parent=15 // pred_region
          %s179 = sand.u32 %s51, 1
          %s180 = scalar_lea.sflag [#allocation4], %s179
          %s181 = sand.u32 %s51, 1
          %s182 = smul.addr %s181, 256
          %s183 = scalar_lea.vmem [#allocation3], %s182
          %s184 = smul.u32 32, %s27
          %186 = vsyncadd %s180, 0
          %s187 = sadd.s32 %s26, %s184
          %s188 = smul.addr %s25, 32
          %s189 = sadd.s32 %s187, %s188
          %s190 = smul.addr %s189, 8
          %s191 = scalar_lea.hbm %s0, %s190
          %s192 = sshll.u32 %s191, 4
          %s193 = int_to_ptr.hbm [resolvable:$true] %s192
          %s194 = sshll.u32 %s183, 4
          %s195 = int_to_ptr.vmem [resolvable:$true] %s194
          %200 = dma.hbm_to_vmem [thread:$0]  %s193, 4096, %s195, %s180, 128, 128, 8
        $region20: #{tpu_custom_call.1} parent=15 // pred_fallthru
          _
        // Predicated region
        $region21: #{tpu_custom_call.1} parent=15 // pred_check
          %p201 = pneg %p91
        $region22: #{tpu_custom_call.1} parent=15 // pred_check_branch
          %203 = sbr.rel (%p201) target = $region24
        $region23: #{tpu_custom_call.1} parent=15 // pred_region
          %s204 = sand.u32 %s18, 1
          %s205 = scalar_lea.sflag [#allocation7], %s204
          %s206 = sand.u32 %s81, 1
          %s207 = smul.addr %s206, 256
          %s208 = scalar_lea.vmem [#allocation6], %s207
          %s209 = smul.u32 32, %s27
          %211 = vsyncadd %s205, 0
          %s212 = sadd.s32 %s26, %s209
          %s213 = smul.addr %s25, 32
          %s214 = sadd.s32 %s212, %s213
          %s215 = smul.addr %s214, 8
          %s216 = scalar_lea.hbm %s1, %s215
          %s217 = sshll.u32 %s216, 4
          %s218 = int_to_ptr.hbm [resolvable:$true] %s217
          %s219 = sshll.u32 %s208, 4
          %s220 = int_to_ptr.vmem [resolvable:$true] %s219
          %225 = dma.hbm_to_vmem [thread:$0]  %s218, 4096, %s220, %s205, 128, 128, 8
        $region24: #{tpu_custom_call.1} parent=15 // pred_fallthru
          _
        // Predicated region
        $region25: #{tpu_custom_call.1} parent=15 // pred_check
          %p226 = pneg %p121
        $region26: #{tpu_custom_call.1} parent=15 // pred_check_branch
          %228 = sbr.rel (%p226) target = $region28
        $region27: #{tpu_custom_call.1} parent=15 // pred_region
          %s229 = sand.u32 %s18, 1
          %s230 = scalar_lea.sflag [#allocation7], %s229
          %s231 = sand.u32 %s111, 1
          %s232 = smul.addr %s231, 256
          %s233 = scalar_lea.vmem [#allocation8], %s232
          %s234 = smul.u32 32, %s27
          %236 = vsyncadd %s230, 0
          %s237 = sadd.s32 %s26, %s234
          %s238 = smul.addr %s25, 32
          %s239 = sadd.s32 %s237, %s238
          %s240 = smul.addr %s239, 8
          %s241 = scalar_lea.hbm %s2, %s240
          %s242 = sshll.u32 %s241, 4
          %s243 = int_to_ptr.hbm [resolvable:$true] %s242
          %s244 = sshll.u32 %s233, 4
          %s245 = int_to_ptr.vmem [resolvable:$true] %s244
          %250 = dma.hbm_to_vmem [thread:$0]  %s243, 4096, %s245, %s230, 128, 128, 8
        $region28: #{tpu_custom_call.1} parent=15 // pred_fallthru
          _
      $region16: #{tpu_custom_call.1} parent=5 // pred_fallthru
        _
      %p251 = scmp.le.s32.totalorder 1, %s18
      %p252 = scmp.lt.s32.totalorder %s18, 3
      %p253 = pnand %p251, %p252
      %p254 = pneg %p253
      // Predicated region
      $region29: #{tpu_custom_call.1} parent=5 // pred_check
        _
      $region30: #{tpu_custom_call.1} parent=5 // pred_check_branch
        %256 = sbr.rel (%p253) target = $region32
      $region31: #{tpu_custom_call.1} parent=5 // pred_region
        %s257 = ssub.s32 %s18, 1
        %s258 = sand.u32 %s54, 1
        %s259 = scalar_lea.sflag [#allocation4], %s258
        %s260 = sand.u32 %s54, 1
        %s261 = smul.addr %s260, 256
        %s262 = scalar_lea.vmem [#allocation3], %s261
        // Predicated region
        $region33: #{tpu_custom_call.1} parent=31 // pred_check
          %p263 = pneg %p67
        $region34: #{tpu_custom_call.1} parent=31 // pred_check_branch
          %265 = sbr.rel (%p263) target = $region36
        $region35: #{tpu_custom_call.1} parent=31 // pred_region
          %267 = dma.done %s259, 4096
        $region36: #{tpu_custom_call.1} parent=31 // pred_fallthru
          _
        %s268 = sand.u32 %s23, 1
        %s269 = scalar_lea.sflag [#allocation7], %s268
        %s270 = sand.u32 %s84, 1
        %s271 = smul.addr %s270, 256
        %s272 = scalar_lea.vmem [#allocation6], %s271
        // Predicated region
        $region37: #{tpu_custom_call.1} parent=31 // pred_check
          %p273 = pneg %p97
        $region38: #{tpu_custom_call.1} parent=31 // pred_check_branch
          %275 = sbr.rel (%p273) target = $region40
        $region39: #{tpu_custom_call.1} parent=31 // pred_region
          %277 = dma.done %s269, 4096
        $region40: #{tpu_custom_call.1} parent=31 // pred_fallthru
          _
        %s278 = sand.u32 %s23, 1
        %s279 = scalar_lea.sflag [#allocation7], %s278
        %s280 = sand.u32 %s114, 1
        %s281 = smul.addr %s280, 256
        %s282 = scalar_lea.vmem [#allocation8], %s281
        // Predicated region
        $region41: #{tpu_custom_call.1} parent=31 // pred_check
          %p283 = pneg %p127
        $region42: #{tpu_custom_call.1} parent=31 // pred_check_branch
          %285 = sbr.rel (%p283) target = $region44
        $region43: #{tpu_custom_call.1} parent=31 // pred_region
          %287 = dma.done %s279, 4096
        $region44: #{tpu_custom_call.1} parent=31 // pred_fallthru
          _
        %s288 = sand.u32 %s54, 1
        %s289 = scalar_lea.sflag [#allocation4], %s288
        %s290 = sand.u32 %s54, 1
        %s291 = smul.addr %s290, 256
        %s292 = scalar_lea.vmem [#allocation3], %s291
        %p293 = pneg %p67
        %p294 = pneg %p64
        %s295 = sand.u32 %s23, 1
        %s296 = scalar_lea.sflag [#allocation7], %s295
        %s297 = sand.u32 %s84, 1
        %s298 = smul.addr %s297, 256
        %s299 = scalar_lea.vmem [#allocation6], %s298
        %p300 = pneg %p97
        %p301 = pneg %p94
        %s302 = sand.u32 %s23, 1
        %s303 = scalar_lea.sflag [#allocation7], %s302
        %s304 = sand.u32 %s114, 1
        %s305 = smul.addr %s304, 256
        %s306 = scalar_lea.vmem [#allocation8], %s305
        %p307 = pneg %p127
        %p308 = pneg %p124
        %p309 = pneg %p157
        %p310 = pneg %p154
        %s311 = sand.u32 %s144, 1
        %s312 = scalar_lea.sflag [#allocation5], %s311
        %s313 = sand.u32 %s144, 1
        %s314 = smul.addr %s313, 256
        %s315 = scalar_lea.vmem [#allocation9], %s314
        %s316 = smul.u32 32, %s30
        %s317 = smul.u32 32, %s30
        %s318 = smul.u32 32, %s30
        %s319 = smul.u32 32, %s30
        %p320 = scmp.eq.s32.totalorder %s30, 0
        // Predicated region
        $region45: #{tpu_custom_call.1} parent=31 // pred_check
          %p321 = pneg %p320
        $region46: #{tpu_custom_call.1} parent=31 // pred_check_branch
          %323 = sbr.rel (%p321) target = $region48
        $region47: #{tpu_custom_call.1} parent=31 // pred_region
          %vm324 = vcmask 269312
          %325 = vst.msk [vmem:[#allocation2] sm:$0xff] %vm324, 0.0
          %326 = vst.msk [vmem:[#allocation2 + $0x8] sm:$0xff] %vm324, 0.0
          %327 = vst.msk [vmem:[#allocation2 + $0x10] sm:$0xff] %vm324, 0.0
          %328 = vst.msk [vmem:[#allocation2 + $0x18] sm:$0xff] %vm324, 0.0
          %329 = vst.msk [vmem:[#allocation2 + $0x20] sm:$0xff] %vm324, 0.0
          %330 = vst.msk [vmem:[#allocation2 + $0x28] sm:$0xff] %vm324, 0.0
          %331 = vst.msk [vmem:[#allocation2 + $0x30] sm:$0xff] %vm324, 0.0
          %332 = vst.msk [vmem:[#allocation2 + $0x38] sm:$0xff] %vm324, 0.0
          %333 = vst.msk [vmem:[#allocation2 + $0x40] sm:$0xff] %vm324, 0.0
          %334 = vst.msk [vmem:[#allocation2 + $0x48] sm:$0xff] %vm324, 0.0
          %335 = vst.msk [vmem:[#allocation2 + $0x50] sm:$0xff] %vm324, 0.0
          %336 = vst.msk [vmem:[#allocation2 + $0x58] sm:$0xff] %vm324, 0.0
          %337 = vst.msk [vmem:[#allocation2 + $0x60] sm:$0xff] %vm324, 0.0
          %338 = vst.msk [vmem:[#allocation2 + $0x68] sm:$0xff] %vm324, 0.0
          %339 = vst.msk [vmem:[#allocation2 + $0x70] sm:$0xff] %vm324, 0.0
          %340 = vst.msk [vmem:[#allocation2 + $0x78] sm:$0xff] %vm324, 0.0
        $region48: #{tpu_custom_call.1} parent=31 // pred_fallthru
          _
        %v341 = vld [vmem:[%s262] sm:$0xff]
        %v342 = vld [vmem:[%s262 + $0x8] sm:$0xff]
        %v343 = vld [vmem:[%s262 + $0x10] sm:$0xff]
        %v344 = vld [vmem:[%s262 + $0x18] sm:$0xff]
        %v345 = vld [vmem:[%s262 + $0x20] sm:$0xff]
        %v346 = vld [vmem:[%s262 + $0x28] sm:$0xff]
        %v347 = vld [vmem:[%s262 + $0x30] sm:$0xff]
        %v348 = vld [vmem:[%s262 + $0x38] sm:$0xff]
        %v349 = vld [vmem:[%s262 + $0x40] sm:$0xff]
        %v350 = vld [vmem:[%s262 + $0x48] sm:$0xff]
        %v351 = vld [vmem:[%s262 + $0x50] sm:$0xff]
        %v352 = vld [vmem:[%s262 + $0x58] sm:$0xff]
        %v353 = vld [vmem:[%s262 + $0x60] sm:$0xff]
        %v354 = vld [vmem:[%s262 + $0x68] sm:$0xff]
        %v355 = vld [vmem:[%s262 + $0x70] sm:$0xff]
        %v356 = vld [vmem:[%s262 + $0x78] sm:$0xff]
        %v357 = vld [vmem:[%s262 + $0x80] sm:$0xff]
        %v358 = vld [vmem:[%s262 + $0x88] sm:$0xff]
        %v359 = vld [vmem:[%s262 + $0x90] sm:$0xff]
        %v360 = vld [vmem:[%s262 + $0x98] sm:$0xff]
        %v361 = vld [vmem:[%s262 + $0xa0] sm:$0xff]
        %v362 = vld [vmem:[%s262 + $0xa8] sm:$0xff]
        %v363 = vld [vmem:[%s262 + $0xb0] sm:$0xff]
        %v364 = vld [vmem:[%s262 + $0xb8] sm:$0xff]
        %v365 = vld [vmem:[%s262 + $0xc0] sm:$0xff]
        %v366 = vld [vmem:[%s262 + $0xc8] sm:$0xff]
        %v367 = vld [vmem:[%s262 + $0xd0] sm:$0xff]
        %v368 = vld [vmem:[%s262 + $0xd8] sm:$0xff]
        %v369 = vld [vmem:[%s262 + $0xe0] sm:$0xff]
        %v370 = vld [vmem:[%s262 + $0xe8] sm:$0xff]
        %v371 = vld [vmem:[%s262 + $0xf0] sm:$0xff]
        %v372 = vld [vmem:[%s262 + $0xf8] sm:$0xff]
        %v373 = vld [vmem:[%s272] sm:$0xff]
        %v374 = vld [vmem:[%s272 + $0x8] sm:$0xff]
        %v375 = vld [vmem:[%s272 + $0x10] sm:$0xff]
        %v376 = vld [vmem:[%s272 + $0x18] sm:$0xff]
        %v377 = vld [vmem:[%s272 + $0x20] sm:$0xff]
        %v378 = vld [vmem:[%s272 + $0x28] sm:$0xff]
        %v379 = vld [vmem:[%s272 + $0x30] sm:$0xff]
        %v380 = vld [vmem:[%s272 + $0x38] sm:$0xff]
        %v381 = vld [vmem:[%s272 + $0x40] sm:$0xff]
        %v382 = vld [vmem:[%s272 + $0x48] sm:$0xff]
        %v383 = vld [vmem:[%s272 + $0x50] sm:$0xff]
        %v384 = vld [vmem:[%s272 + $0x58] sm:$0xff]
        %v385 = vld [vmem:[%s272 + $0x60] sm:$0xff]
        %v386 = vld [vmem:[%s272 + $0x68] sm:$0xff]
        %v387 = vld [vmem:[%s272 + $0x70] sm:$0xff]
        %v388 = vld [vmem:[%s272 + $0x78] sm:$0xff]
        %v389 = vld [vmem:[%s272 + $0x80] sm:$0xff]
        %v390 = vld [vmem:[%s272 + $0x88] sm:$0xff]
        %v391 = vld [vmem:[%s272 + $0x90] sm:$0xff]
        %v392 = vld [vmem:[%s272 + $0x98] sm:$0xff]
        %v393 = vld [vmem:[%s272 + $0xa0] sm:$0xff]
        %v394 = vld [vmem:[%s272 + $0xa8] sm:$0xff]
        %v395 = vld [vmem:[%s272 + $0xb0] sm:$0xff]
        %v396 = vld [vmem:[%s272 + $0xb8] sm:$0xff]
        %v397 = vld [vmem:[%s272 + $0xc0] sm:$0xff]
        %v398 = vld [vmem:[%s272 + $0xc8] sm:$0xff]
        %v399 = vld [vmem:[%s272 + $0xd0] sm:$0xff]
        %v400 = vld [vmem:[%s272 + $0xd8] sm:$0xff]
        %v401 = vld [vmem:[%s272 + $0xe0] sm:$0xff]
        %v402 = vld [vmem:[%s272 + $0xe8] sm:$0xff]
        %v403 = vld [vmem:[%s272 + $0xf0] sm:$0xff]
        %v404 = vld [vmem:[%s272 + $0xf8] sm:$0xff]
        %v405 = vld [vmem:[%s282] sm:$0xff]
        %v406 = vld [vmem:[%s282 + $0x8] sm:$0xff]
        %v407 = vld [vmem:[%s282 + $0x10] sm:$0xff]
        %v408 = vld [vmem:[%s282 + $0x18] sm:$0xff]
        %v409 = vld [vmem:[%s282 + $0x20] sm:$0xff]
        %v410 = vld [vmem:[%s282 + $0x28] sm:$0xff]
        %v411 = vld [vmem:[%s282 + $0x30] sm:$0xff]
        %v412 = vld [vmem:[%s282 + $0x38] sm:$0xff]
        %v413 = vld [vmem:[%s282 + $0x40] sm:$0xff]
        %v414 = vld [vmem:[%s282 + $0x48] sm:$0xff]
        %v415 = vld [vmem:[%s282 + $0x50] sm:$0xff]
        %v416 = vld [vmem:[%s282 + $0x58] sm:$0xff]
        %v417 = vld [vmem:[%s282 + $0x60] sm:$0xff]
        %v418 = vld [vmem:[%s282 + $0x68] sm:$0xff]
        %v419 = vld [vmem:[%s282 + $0x70] sm:$0xff]
        %v420 = vld [vmem:[%s282 + $0x78] sm:$0xff]
        %v421 = vld [vmem:[%s282 + $0x80] sm:$0xff]
        %v422 = vld [vmem:[%s282 + $0x88] sm:$0xff]
        %v423 = vld [vmem:[%s282 + $0x90] sm:$0xff]
        %v424 = vld [vmem:[%s282 + $0x98] sm:$0xff]
        %v425 = vld [vmem:[%s282 + $0xa0] sm:$0xff]
        %v426 = vld [vmem:[%s282 + $0xa8] sm:$0xff]
        %v427 = vld [vmem:[%s282 + $0xb0] sm:$0xff]
        %v428 = vld [vmem:[%s282 + $0xb8] sm:$0xff]
        %v429 = vld [vmem:[%s282 + $0xc0] sm:$0xff]
        %v430 = vld [vmem:[%s282 + $0xc8] sm:$0xff]
        %v431 = vld [vmem:[%s282 + $0xd0] sm:$0xff]
        %v432 = vld [vmem:[%s282 + $0xd8] sm:$0xff]
        %v433 = vld [vmem:[%s282 + $0xe0] sm:$0xff]
        %v434 = vld [vmem:[%s282 + $0xe8] sm:$0xff]
        %v435 = vld [vmem:[%s282 + $0xf0] sm:$0xff]
        %v436 = vld [vmem:[%s282 + $0xf8] sm:$0xff]
        %vm437 = vcmp.gt.f32.partialorder %v341, 0.0
        %vm438 = vcmp.gt.f32.partialorder %v342, 0.0
        %vm439 = vcmp.gt.f32.partialorder %v343, 0.0
        %vm440 = vcmp.gt.f32.partialorder %v344, 0.0
        %vm441 = vcmp.gt.f32.partialorder %v345, 0.0
        %vm442 = vcmp.gt.f32.partialorder %v346, 0.0
        %vm443 = vcmp.gt.f32.partialorder %v347, 0.0
        %vm444 = vcmp.gt.f32.partialorder %v348, 0.0
        %vm445 = vcmp.gt.f32.partialorder %v349, 0.0
        %vm446 = vcmp.gt.f32.partialorder %v350, 0.0
        %vm447 = vcmp.gt.f32.partialorder %v351, 0.0
        %vm448 = vcmp.gt.f32.partialorder %v352, 0.0
        %vm449 = vcmp.gt.f32.partialorder %v353, 0.0
        %vm450 = vcmp.gt.f32.partialorder %v354, 0.0
        %vm451 = vcmp.gt.f32.partialorder %v355, 0.0
        %vm452 = vcmp.gt.f32.partialorder %v356, 0.0
        %vm453 = vcmp.gt.f32.partialorder %v357, 0.0
        %vm454 = vcmp.gt.f32.partialorder %v358, 0.0
        %vm455 = vcmp.gt.f32.partialorder %v359, 0.0
        %vm456 = vcmp.gt.f32.partialorder %v360, 0.0
        %vm457 = vcmp.gt.f32.partialorder %v361, 0.0
        %vm458 = vcmp.gt.f32.partialorder %v362, 0.0
        %vm459 = vcmp.gt.f32.partialorder %v363, 0.0
        %vm460 = vcmp.gt.f32.partialorder %v364, 0.0
        %vm461 = vcmp.gt.f32.partialorder %v365, 0.0
        %vm462 = vcmp.gt.f32.partialorder %v366, 0.0
        %vm463 = vcmp.gt.f32.partialorder %v367, 0.0
        %vm464 = vcmp.gt.f32.partialorder %v368, 0.0
        %vm465 = vcmp.gt.f32.partialorder %v369, 0.0
        %vm466 = vcmp.gt.f32.partialorder %v370, 0.0
        %vm467 = vcmp.gt.f32.partialorder %v371, 0.0
        %vm468 = vcmp.gt.f32.partialorder %v372, 0.0
        %v469 = vadd.f32 %v341, 1.0
        %v470 = vadd.f32 %v342, 1.0
        %v471 = vadd.f32 %v343, 1.0
        %v472 = vadd.f32 %v344, 1.0
        %v473 = vadd.f32 %v345, 1.0
        %v474 = vadd.f32 %v346, 1.0
        %v475 = vadd.f32 %v347, 1.0
        %v476 = vadd.f32 %v348, 1.0
        %v477 = vadd.f32 %v349, 1.0
        %v478 = vadd.f32 %v350, 1.0
        %v479 = vadd.f32 %v351, 1.0
        %v480 = vadd.f32 %v352, 1.0
        %v481 = vadd.f32 %v353, 1.0
        %v482 = vadd.f32 %v354, 1.0
        %v483 = vadd.f32 %v355, 1.0
        %v484 = vadd.f32 %v356, 1.0
        %v485 = vadd.f32 %v357, 1.0
        %v486 = vadd.f32 %v358, 1.0
        %v487 = vadd.f32 %v359, 1.0
        %v488 = vadd.f32 %v360, 1.0
        %v489 = vadd.f32 %v361, 1.0
        %v490 = vadd.f32 %v362, 1.0
        %v491 = vadd.f32 %v363, 1.0
        %v492 = vadd.f32 %v364, 1.0
        %v493 = vadd.f32 %v365, 1.0
        %v494 = vadd.f32 %v366, 1.0
        %v495 = vadd.f32 %v367, 1.0
        %v496 = vadd.f32 %v368, 1.0
        %v497 = vadd.f32 %v369, 1.0
        %v498 = vadd.f32 %v370, 1.0
        %v499 = vadd.f32 %v371, 1.0
        %v500 = vadd.f32 %v372, 1.0
        %v501 = vmul.f32 %v341, 1.442695
        %v502 = vpow.pop %v501
        %v503 = vmul.f32 %v342, 1.442695
        %v504 = vpow.pop %v503
        %v505 = vmul.f32 %v343, 1.442695
        %v506 = vpow.pop %v505
        %v507 = vmul.f32 %v344, 1.442695
        %v508 = vpow.pop %v507
        %v509 = vmul.f32 %v345, 1.442695
        %v510 = vpow.pop %v509
        %v511 = vmul.f32 %v346, 1.442695
        %v512 = vpow.pop %v511
        %v513 = vmul.f32 %v347, 1.442695
        %v514 = vpow.pop %v513
        %v515 = vmul.f32 %v348, 1.442695
        %v516 = vpow.pop %v515
        %v517 = vmul.f32 %v349, 1.442695
        %v518 = vpow.pop %v517
        %v519 = vmul.f32 %v350, 1.442695
        %v520 = vpow.pop %v519
        %v521 = vmul.f32 %v351, 1.442695
        %v522 = vpow.pop %v521
        %v523 = vmul.f32 %v352, 1.442695
        %v524 = vpow.pop %v523
        %v525 = vmul.f32 %v353, 1.442695
        %v526 = vpow.pop %v525
        %v527 = vmul.f32 %v354, 1.442695
        %v528 = vpow.pop %v527
        %v529 = vmul.f32 %v355, 1.442695
        %v530 = vpow.pop %v529
        %v531 = vmul.f32 %v356, 1.442695
        %v532 = vpow.pop %v531
        %v533 = vmul.f32 %v357, 1.442695
        %v534 = vpow.pop %v533
        %v535 = vmul.f32 %v358, 1.442695
        %v536 = vpow.pop %v535
        %v537 = vmul.f32 %v359, 1.442695
        %v538 = vpow.pop %v537
        %v539 = vmul.f32 %v360, 1.442695
        %v540 = vpow.pop %v539
        %v541 = vmul.f32 %v361, 1.442695
        %v542 = vpow.pop %v541
        %v543 = vmul.f32 %v362, 1.442695
        %v544 = vpow.pop %v543
        %v545 = vmul.f32 %v363, 1.442695
        %v546 = vpow.pop %v545
        %v547 = vmul.f32 %v364, 1.442695
        %v548 = vpow.pop %v547
        %v549 = vmul.f32 %v365, 1.442695
        %v550 = vpow.pop %v549
        %v551 = vmul.f32 %v366, 1.442695
        %v552 = vpow.pop %v551
        %v553 = vmul.f32 %v367, 1.442695
        %v554 = vpow.pop %v553
        %v555 = vmul.f32 %v368, 1.442695
        %v556 = vpow.pop %v555
        %v557 = vmul.f32 %v369, 1.442695
        %v558 = vpow.pop %v557
        %v559 = vmul.f32 %v370, 1.442695
        %v560 = vpow.pop %v559
        %v561 = vmul.f32 %v371, 1.442695
        %v562 = vpow.pop %v561
        %v563 = vmul.f32 %v372, 1.442695
        %v564 = vpow.pop %v563
        %v565 = vsel %vm437, %v469, %v502
        %v566 = vsel %vm438, %v470, %v504
        %v567 = vsel %vm439, %v471, %v506
        %v568 = vsel %vm440, %v472, %v508
        %v569 = vsel %vm441, %v473, %v510
        %v570 = vsel %vm442, %v474, %v512
        %v571 = vsel %vm443, %v475, %v514
        %v572 = vsel %vm444, %v476, %v516
        %v573 = vsel %vm445, %v477, %v518
        %v574 = vsel %vm446, %v478, %v520
        %v575 = vsel %vm447, %v479, %v522
        %v576 = vsel %vm448, %v480, %v524
        %v577 = vsel %vm449, %v481, %v526
        %v578 = vsel %vm450, %v482, %v528
        %v579 = vsel %vm451, %v483, %v530
        %v580 = vsel %vm452, %v484, %v532
        %v581 = vsel %vm453, %v485, %v534
        %v582 = vsel %vm454, %v486, %v536
        %v583 = vsel %vm455, %v487, %v538
        %v584 = vsel %vm456, %v488, %v540
        %v585 = vsel %vm457, %v489, %v542
        %v586 = vsel %vm458, %v490, %v544
        %v587 = vsel %vm459, %v491, %v546
        %v588 = vsel %vm460, %v492, %v548
        %v589 = vsel %vm461, %v493, %v550
        %v590 = vsel %vm462, %v494, %v552
        %v591 = vsel %vm463, %v495, %v554
        %v592 = vsel %vm464, %v496, %v556
        %v593 = vsel %vm465, %v497, %v558
        %v594 = vsel %vm466, %v498, %v560
        %v595 = vsel %vm467, %v499, %v562
        %v596 = vsel %vm468, %v500, %v564
        %vm597 = vcmp.gt.f32.partialorder %v373, 0.0
        %vm598 = vcmp.gt.f32.partialorder %v374, 0.0
        %vm599 = vcmp.gt.f32.partialorder %v375, 0.0
        %vm600 = vcmp.gt.f32.partialorder %v376, 0.0
        %vm601 = vcmp.gt.f32.partialorder %v377, 0.0
        %vm602 = vcmp.gt.f32.partialorder %v378, 0.0
        %vm603 = vcmp.gt.f32.partialorder %v379, 0.0
        %vm604 = vcmp.gt.f32.partialorder %v380, 0.0
        %vm605 = vcmp.gt.f32.partialorder %v381, 0.0
        %vm606 = vcmp.gt.f32.partialorder %v382, 0.0
        %vm607 = vcmp.gt.f32.partialorder %v383, 0.0
        %vm608 = vcmp.gt.f32.partialorder %v384, 0.0
        %vm609 = vcmp.gt.f32.partialorder %v385, 0.0
        %vm610 = vcmp.gt.f32.partialorder %v386, 0.0
        %vm611 = vcmp.gt.f32.partialorder %v387, 0.0
        %vm612 = vcmp.gt.f32.partialorder %v388, 0.0
        %vm613 = vcmp.gt.f32.partialorder %v389, 0.0
        %vm614 = vcmp.gt.f32.partialorder %v390, 0.0
        %vm615 = vcmp.gt.f32.partialorder %v391, 0.0
        %vm616 = vcmp.gt.f32.partialorder %v392, 0.0
        %vm617 = vcmp.gt.f32.partialorder %v393, 0.0
        %vm618 = vcmp.gt.f32.partialorder %v394, 0.0
        %vm619 = vcmp.gt.f32.partialorder %v395, 0.0
        %vm620 = vcmp.gt.f32.partialorder %v396, 0.0
        %vm621 = vcmp.gt.f32.partialorder %v397, 0.0
        %vm622 = vcmp.gt.f32.partialorder %v398, 0.0
        %vm623 = vcmp.gt.f32.partialorder %v399, 0.0
        %vm624 = vcmp.gt.f32.partialorder %v400, 0.0
        %vm625 = vcmp.gt.f32.partialorder %v401, 0.0
        %vm626 = vcmp.gt.f32.partialorder %v402, 0.0
        %vm627 = vcmp.gt.f32.partialorder %v403, 0.0
        %vm628 = vcmp.gt.f32.partialorder %v404, 0.0
        %v629 = vadd.f32 %v373, 1.0
        %v630 = vadd.f32 %v374, 1.0
        %v631 = vadd.f32 %v375, 1.0
        %v632 = vadd.f32 %v376, 1.0
        %v633 = vadd.f32 %v377, 1.0
        %v634 = vadd.f32 %v378, 1.0
        %v635 = vadd.f32 %v379, 1.0
        %v636 = vadd.f32 %v380, 1.0
        %v637 = vadd.f32 %v381, 1.0
        %v638 = vadd.f32 %v382, 1.0
        %v639 = vadd.f32 %v383, 1.0
        %v640 = vadd.f32 %v384, 1.0
        %v641 = vadd.f32 %v385, 1.0
        %v642 = vadd.f32 %v386, 1.0
        %v643 = vadd.f32 %v387, 1.0
        %v644 = vadd.f32 %v388, 1.0
        %v645 = vadd.f32 %v389, 1.0
        %v646 = vadd.f32 %v390, 1.0
        %v647 = vadd.f32 %v391, 1.0
        %v648 = vadd.f32 %v392, 1.0
        %v649 = vadd.f32 %v393, 1.0
        %v650 = vadd.f32 %v394, 1.0
        %v651 = vadd.f32 %v395, 1.0
        %v652 = vadd.f32 %v396, 1.0
        %v653 = vadd.f32 %v397, 1.0
        %v654 = vadd.f32 %v398, 1.0
        %v655 = vadd.f32 %v399, 1.0
        %v656 = vadd.f32 %v400, 1.0
        %v657 = vadd.f32 %v401, 1.0
        %v658 = vadd.f32 %v402, 1.0
        %v659 = vadd.f32 %v403, 1.0
        %v660 = vadd.f32 %v404, 1.0
        %v661 = vmul.f32 %v373, 1.442695
        %v662 = vpow.pop %v661
        %v663 = vmul.f32 %v374, 1.442695
        %v664 = vpow.pop %v663
        %v665 = vmul.f32 %v375, 1.442695
        %v666 = vpow.pop %v665
        %v667 = vmul.f32 %v376, 1.442695
        %v668 = vpow.pop %v667
        %v669 = vmul.f32 %v377, 1.442695
        %v670 = vpow.pop %v669
        %v671 = vmul.f32 %v378, 1.442695
        %v672 = vpow.pop %v671
        %v673 = vmul.f32 %v379, 1.442695
        %v674 = vpow.pop %v673
        %v675 = vmul.f32 %v380, 1.442695
        %v676 = vpow.pop %v675
        %v677 = vmul.f32 %v381, 1.442695
        %v678 = vpow.pop %v677
        %v679 = vmul.f32 %v382, 1.442695
        %v680 = vpow.pop %v679
        %v681 = vmul.f32 %v383, 1.442695
        %v682 = vpow.pop %v681
        %v683 = vmul.f32 %v384, 1.442695
        %v684 = vpow.pop %v683
        %v685 = vmul.f32 %v385, 1.442695
        %v686 = vpow.pop %v685
        %v687 = vmul.f32 %v386, 1.442695
        %v688 = vpow.pop %v687
        %v689 = vmul.f32 %v387, 1.442695
        %v690 = vpow.pop %v689
        %v691 = vmul.f32 %v388, 1.442695
        %v692 = vpow.pop %v691
        %v693 = vmul.f32 %v389, 1.442695
        %v694 = vpow.pop %v693
        %v695 = vmul.f32 %v390, 1.442695
        %v696 = vpow.pop %v695
        %v697 = vmul.f32 %v391, 1.442695
        %v698 = vpow.pop %v697
        %v699 = vmul.f32 %v392, 1.442695
        %v700 = vpow.pop %v699
        %v701 = vmul.f32 %v393, 1.442695
        %v702 = vpow.pop %v701
        %v703 = vmul.f32 %v394, 1.442695
        %v704 = vpow.pop %v703
        %v705 = vmul.f32 %v395, 1.442695
        %v706 = vpow.pop %v705
        %v707 = vmul.f32 %v396, 1.442695
        %v708 = vpow.pop %v707
        %v709 = vmul.f32 %v397, 1.442695
        %v710 = vpow.pop %v709
        %v711 = vmul.f32 %v398, 1.442695
        %v712 = vpow.pop %v711
        %v713 = vmul.f32 %v399, 1.442695
        %v714 = vpow.pop %v713
        %v715 = vmul.f32 %v400, 1.442695
        %v716 = vpow.pop %v715
        %v717 = vmul.f32 %v401, 1.442695
        %v718 = vpow.pop %v717
        %v719 = vmul.f32 %v402, 1.442695
        %v720 = vpow.pop %v719
        %v721 = vmul.f32 %v403, 1.442695
        %v722 = vpow.pop %v721
        %v723 = vmul.f32 %v404, 1.442695
        %v724 = vpow.pop %v723
        %v725 = vsel %vm597, %v629, %v662
        %v726 = vsel %vm598, %v630, %v664
        %v727 = vsel %vm599, %v631, %v666
        %v728 = vsel %vm600, %v632, %v668
        %v729 = vsel %vm601, %v633, %v670
        %v730 = vsel %vm602, %v634, %v672
        %v731 = vsel %vm603, %v635, %v674
        %v732 = vsel %vm604, %v636, %v676
        %v733 = vsel %vm605, %v637, %v678
        %v734 = vsel %vm606, %v638, %v680
        %v735 = vsel %vm607, %v639, %v682
        %v736 = vsel %vm608, %v640, %v684
        %v737 = vsel %vm609, %v641, %v686
        %v738 = vsel %vm610, %v642, %v688
        %v739 = vsel %vm611, %v643, %v690
        %v740 = vsel %vm612, %v644, %v692
        %v741 = vsel %vm613, %v645, %v694
        %v742 = vsel %vm614, %v646, %v696
        %v743 = vsel %vm615, %v647, %v698
        %v744 = vsel %vm616, %v648, %v700
        %v745 = vsel %vm617, %v649, %v702
        %v746 = vsel %vm618, %v650, %v704
        %v747 = vsel %vm619, %v651, %v706
        %v748 = vsel %vm620, %v652, %v708
        %v749 = vsel %vm621, %v653, %v710
        %v750 = vsel %vm622, %v654, %v712
        %v751 = vsel %vm623, %v655, %v714
        %v752 = vsel %vm624, %v656, %v716
        %v753 = vsel %vm625, %v657, %v718
        %v754 = vsel %vm626, %v658, %v720
        %v755 = vsel %vm627, %v659, %v722
        %v756 = vsel %vm628, %v660, %v724
        %v757 = vlaneseq
        %v758 = vshrl.u32 %v757, 7
        %v759 = vadd.s32 %v758, 8
        %v760 = vadd.s32 %v758, 16
        %v761 = vadd.s32 %v758, 24
        %v762 = vadd.s32 %v758, 32
        %v763 = vadd.s32 %v758, 40
        %v764 = vadd.s32 %v758, 48
        %v765 = vadd.s32 %v758, 56
        %v766 = vadd.s32 %v758, 64
        %v767 = vadd.s32 %v758, 72
        %v768 = vadd.s32 %v758, 80
        %v769 = vadd.s32 %v758, 88
        %v770 = vadd.s32 %v758, 96
        %v771 = vadd.s32 %v758, 104
        %v772 = vadd.s32 %v758, 112
        %v773 = vadd.s32 %v758, 120
        %v774 = vadd.s32 %v758, 128
        %v775 = vadd.s32 %v758, 136
        %v776 = vadd.s32 %v758, 144
        %v777 = vadd.s32 %v758, 152
        %v778 = vadd.s32 %v758, 160
        %v779 = vadd.s32 %v758, 168
        %v780 = vadd.s32 %v758, 176
        %v781 = vadd.s32 %v758, 184
        %v782 = vadd.s32 %v758, 192
        %v783 = vadd.s32 %v758, 200
        %v784 = vadd.s32 %v758, 208
        %v785 = vadd.s32 %v758, 216
        %v786 = vadd.s32 %v758, 224
        %v787 = vadd.s32 %v758, 232
        %v788 = vadd.s32 %v758, 240
        %v789 = vadd.s32 %v758, 248
        %v790 = vlaneseq
        %v791 = vand.u32 %v790, 127
        %v792 = vadd.s32 %v791, 128
        %vm793 = vcmp.le.s32.totalorder %v791, %v758
        %vm794 = vcmp.le.s32.totalorder %v792, %v758
        %vm795 = vcmp.le.s32.totalorder %v791, %v759
        %vm796 = vcmp.le.s32.totalorder %v792, %v759
        %vm797 = vcmp.le.s32.totalorder %v791, %v760
        %vm798 = vcmp.le.s32.totalorder %v792, %v760
        %vm799 = vcmp.le.s32.totalorder %v791, %v761
        %vm800 = vcmp.le.s32.totalorder %v792, %v761
        %vm801 = vcmp.le.s32.totalorder %v791, %v762
        %vm802 = vcmp.le.s32.totalorder %v792, %v762
        %vm803 = vcmp.le.s32.totalorder %v791, %v763
        %vm804 = vcmp.le.s32.totalorder %v792, %v763
        %vm805 = vcmp.le.s32.totalorder %v791, %v764
        %vm806 = vcmp.le.s32.totalorder %v792, %v764
        %vm807 = vcmp.le.s32.totalorder %v791, %v765
        %vm808 = vcmp.le.s32.totalorder %v792, %v765
        %vm809 = vcmp.le.s32.totalorder %v791, %v766
        %vm810 = vcmp.le.s32.totalorder %v792, %v766
        %vm811 = vcmp.le.s32.totalorder %v791, %v767
        %vm812 = vcmp.le.s32.totalorder %v792, %v767
        %vm813 = vcmp.le.s32.totalorder %v791, %v768
        %vm814 = vcmp.le.s32.totalorder %v792, %v768
        %vm815 = vcmp.le.s32.totalorder %v791, %v769
        %vm816 = vcmp.le.s32.totalorder %v792, %v769
        %vm817 = vcmp.le.s32.totalorder %v791, %v770
        %vm818 = vcmp.le.s32.totalorder %v792, %v770
        %vm819 = vcmp.le.s32.totalorder %v791, %v771
        %vm820 = vcmp.le.s32.totalorder %v792, %v771
        %vm821 = vcmp.le.s32.totalorder %v791, %v772
        %vm822 = vcmp.le.s32.totalorder %v792, %v772
        %vm823 = vcmp.le.s32.totalorder %v791, %v773
        %vm824 = vcmp.le.s32.totalorder %v792, %v773
        %vm825 = vcmp.le.s32.totalorder %v791, %v774
        %vm826 = vcmp.le.s32.totalorder %v792, %v774
        %vm827 = vcmp.le.s32.totalorder %v791, %v775
        %vm828 = vcmp.le.s32.totalorder %v792, %v775
        %vm829 = vcmp.le.s32.totalorder %v791, %v776
        %vm830 = vcmp.le.s32.totalorder %v792, %v776
        %vm831 = vcmp.le.s32.totalorder %v791, %v777
        %vm832 = vcmp.le.s32.totalorder %v792, %v777
        %vm833 = vcmp.le.s32.totalorder %v791, %v778
        %vm834 = vcmp.le.s32.totalorder %v792, %v778
        %vm835 = vcmp.le.s32.totalorder %v791, %v779
        %vm836 = vcmp.le.s32.totalorder %v792, %v779
        %vm837 = vcmp.le.s32.totalorder %v791, %v780
        %vm838 = vcmp.le.s32.totalorder %v792, %v780
        %vm839 = vcmp.le.s32.totalorder %v791, %v781
        %vm840 = vcmp.le.s32.totalorder %v792, %v781
        %vm841 = vcmp.le.s32.totalorder %v791, %v782
        %vm842 = vcmp.le.s32.totalorder %v792, %v782
        %vm843 = vcmp.le.s32.totalorder %v791, %v783
        %vm844 = vcmp.le.s32.totalorder %v792, %v783
        %vm845 = vcmp.le.s32.totalorder %v791, %v784
        %vm846 = vcmp.le.s32.totalorder %v792, %v784
        %vm847 = vcmp.le.s32.totalorder %v791, %v785
        %vm848 = vcmp.le.s32.totalorder %v792, %v785
        %vm849 = vcmp.le.s32.totalorder %v791, %v786
        %vm850 = vcmp.le.s32.totalorder %v792, %v786
        %vm851 = vcmp.le.s32.totalorder %v791, %v787
        %vm852 = vcmp.le.s32.totalorder %v792, %v787
        %vm853 = vcmp.le.s32.totalorder %v791, %v788
        %vm854 = vcmp.le.s32.totalorder %v792, %v788
        %vm855 = vcmp.le.s32.totalorder %v791, %v789
        %vm856 = vcmp.le.s32.totalorder %v792, %v789
        %vm857 = vcmask 261120
        %v858 = vsel %vm857, %v405, 1.0
        %v859 = vsel %vm857, %v406, 1.0
        %v860 = vsel %vm857, %v407, 1.0
        %v861 = vsel %vm857, %v408, 1.0
        %v862 = vsel %vm857, %v409, 1.0
        %v863 = vsel %vm857, %v410, 1.0
        %v864 = vsel %vm857, %v411, 1.0
        %v865 = vsel %vm857, %v412, 1.0
        %v866 = vsel %vm857, %v413, 1.0
        %v867 = vsel %vm857, %v414, 1.0
        %v868 = vsel %vm857, %v415, 1.0
        %v869 = vsel %vm857, %v416, 1.0
        %v870 = vsel %vm857, %v417, 1.0
        %v871 = vsel %vm857, %v418, 1.0
        %v872 = vsel %vm857, %v419, 1.0
        %v873 = vsel %vm857, %v420, 1.0
        %v874 = vsel %vm857, %v421, 1.0
        %v875 = vsel %vm857, %v422, 1.0
        %v876 = vsel %vm857, %v423, 1.0
        %v877 = vsel %vm857, %v424, 1.0
        %v878 = vsel %vm857, %v425, 1.0
        %v879 = vsel %vm857, %v426, 1.0
        %v880 = vsel %vm857, %v427, 1.0
        %v881 = vsel %vm857, %v428, 1.0
        %v882 = vsel %vm857, %v429, 1.0
        %v883 = vsel %vm857, %v430, 1.0
        %v884 = vsel %vm857, %v431, 1.0
        %v885 = vsel %vm857, %v432, 1.0
        %v886 = vsel %vm857, %v433, 1.0
        %v887 = vsel %vm857, %v434, 1.0
        %v888 = vsel %vm857, %v435, 1.0
        %v889 = vsel %vm857, %v436, 1.0
        %v891 = vsel %vm857, %v565, 0
        %v894 = vsel %vm857, %v566, 0
        %v897 = vsel %vm857, %v567, 0
        %v900 = vsel %vm857, %v568, 0
        %v903 = vsel %vm857, %v569, 0
        %v906 = vsel %vm857, %v570, 0
        %v909 = vsel %vm857, %v571, 0
        %v912 = vsel %vm857, %v572, 0
        %v915 = vsel %vm857, %v573, 0
        %v918 = vsel %vm857, %v574, 0
        %v921 = vsel %vm857, %v575, 0
        %v924 = vsel %vm857, %v576, 0
        %v927 = vsel %vm857, %v577, 0
        %v930 = vsel %vm857, %v578, 0
        %v933 = vsel %vm857, %v579, 0
        %v936 = vsel %vm857, %v580, 0
        %v939 = vsel %vm857, %v581, 0
        %v942 = vsel %vm857, %v582, 0
        %v945 = vsel %vm857, %v583, 0
        %v948 = vsel %vm857, %v584, 0
        %v951 = vsel %vm857, %v585, 0
        %v954 = vsel %vm857, %v586, 0
        %v957 = vsel %vm857, %v587, 0
        %v960 = vsel %vm857, %v588, 0
        %v963 = vsel %vm857, %v589, 0
        %v966 = vsel %vm857, %v590, 0
        %v969 = vsel %vm857, %v591, 0
        %v972 = vsel %vm857, %v592, 0
        %v975 = vsel %vm857, %v593, 0
        %v978 = vsel %vm857, %v594, 0
        %v981 = vsel %vm857, %v595, 0
        %v984 = vsel %vm857, %v596, 0
        %v987 = vsel %vm857, %v725, 0
        %v990 = vsel %vm857, %v726, 0
        %v993 = vsel %vm857, %v727, 0
        %v996 = vsel %vm857, %v728, 0
        %v999 = vsel %vm857, %v729, 0
        %v1002 = vsel %vm857, %v730, 0
        %v1005 = vsel %vm857, %v731, 0
        %v1008 = vsel %vm857, %v732, 0
        %v1011 = vsel %vm857, %v733, 0
        %v1014 = vsel %vm857, %v734, 0
        %v1017 = vsel %vm857, %v735, 0
        %v1020 = vsel %vm857, %v736, 0
        %v1023 = vsel %vm857, %v737, 0
        %v1026 = vsel %vm857, %v738, 0
        %v1029 = vsel %vm857, %v739, 0
        %v1032 = vsel %vm857, %v740, 0
        %v1035 = vsel %vm857, %v741, 0
        %v1038 = vsel %vm857, %v742, 0
        %v1041 = vsel %vm857, %v743, 0
        %v1044 = vsel %vm857, %v744, 0
        %v1047 = vsel %vm857, %v745, 0
        %v1050 = vsel %vm857, %v746, 0
        %v1053 = vsel %vm857, %v747, 0
        %v1056 = vsel %vm857, %v748, 0
        %v1059 = vsel %vm857, %v749, 0
        %v1062 = vsel %vm857, %v750, 0
        %v1065 = vsel %vm857, %v751, 0
        %v1068 = vsel %vm857, %v752, 0
        %v1071 = vsel %vm857, %v753, 0
        %v1074 = vsel %vm857, %v754, 0
        %v1077 = vsel %vm857, %v755, 0
        %v1080 = vsel %vm857, %v756, 0
        %1082 = vmatpush.xpose.msra.mxu0 %v1032
        %1083 = vmatpush.xpose.msra.mxu0 %v1029
        %1084 = vmatpush.xpose.msra.mxu0 %v1026
        %1085 = vmatpush.xpose.msra.mxu0 %v1023
        %1086 = vmatpush.xpose.msra.mxu0 %v1020
        %1087 = vmatpush.xpose.msra.mxu0 %v1017
        %1088 = vmatpush.xpose.msra.mxu0 %v1014
        %1089 = vmatpush.xpose.msra.mxu0 %v1011
        %1090 = vmatpush.xpose.msra.mxu0 %v1008
        %1091 = vmatpush.xpose.msra.mxu0 %v1005
        %1092 = vmatpush.xpose.msra.mxu0 %v1002
        %1093 = vmatpush.xpose.msra.mxu0 %v999
        %1094 = vmatpush.xpose.msra.mxu0 %v996
        %1095 = vmatpush.xpose.msra.mxu0 %v993
        %1096 = vmatpush.xpose.msra.mxu0 %v990
        %1097 = vmatpush.xpose.msra.mxu0 %v987
        %1098 = vmatmul.f32.gmra.mxu0 %v891
        %v1099 = vpop.f32.mrf.mxu0
        %v1100 = vadd.f32 0.0, %v1099
        %1101 = vmatmul.f32.gmra.mxu0 %v894
        %v1102 = vpop.f32.mrf.mxu0
        %v1103 = vadd.f32 0.0, %v1102
        %1104 = vmatmul.f32.gmra.mxu0 %v897
        %v1105 = vpop.f32.mrf.mxu0
        %v1106 = vadd.f32 0.0, %v1105
        %1107 = vmatmul.f32.gmra.mxu0 %v900
        %v1108 = vpop.f32.mrf.mxu0
        %v1109 = vadd.f32 0.0, %v1108
        %1110 = vmatmul.f32.gmra.mxu0 %v903
        %v1111 = vpop.f32.mrf.mxu0
        %v1112 = vadd.f32 0.0, %v1111
        %1113 = vmatmul.f32.gmra.mxu0 %v906
        %v1114 = vpop.f32.mrf.mxu0
        %v1115 = vadd.f32 0.0, %v1114
        %1116 = vmatmul.f32.gmra.mxu0 %v909
        %v1117 = vpop.f32.mrf.mxu0
        %v1118 = vadd.f32 0.0, %v1117
        %1119 = vmatmul.f32.gmra.mxu0 %v912
        %v1120 = vpop.f32.mrf.mxu0
        %v1121 = vadd.f32 0.0, %v1120
        %1122 = vmatmul.f32.gmra.mxu0 %v915
        %v1123 = vpop.f32.mrf.mxu0
        %v1124 = vadd.f32 0.0, %v1123
        %1125 = vmatmul.f32.gmra.mxu0 %v918
        %v1126 = vpop.f32.mrf.mxu0
        %v1127 = vadd.f32 0.0, %v1126
        %1128 = vmatmul.f32.gmra.mxu0 %v921
        %v1129 = vpop.f32.mrf.mxu0
        %v1130 = vadd.f32 0.0, %v1129
        %1131 = vmatmul.f32.gmra.mxu0 %v924
        %v1132 = vpop.f32.mrf.mxu0
        %v1133 = vadd.f32 0.0, %v1132
        %1134 = vmatmul.f32.gmra.mxu0 %v927
        %v1135 = vpop.f32.mrf.mxu0
        %v1136 = vadd.f32 0.0, %v1135
        %1137 = vmatmul.f32.gmra.mxu0 %v930
        %v1138 = vpop.f32.mrf.mxu0
        %v1139 = vadd.f32 0.0, %v1138
        %1140 = vmatmul.f32.gmra.mxu0 %v933
        %v1141 = vpop.f32.mrf.mxu0
        %v1142 = vadd.f32 0.0, %v1141
        %1143 = vmatmul.f32.gmra.mxu0 %v936
        %v1144 = vpop.f32.mrf.mxu0
        %v1145 = vadd.f32 0.0, %v1144
        %1146 = vmatmul.f32.gmra.mxu0 %v939
        %v1147 = vpop.f32.mrf.mxu0
        %v1148 = vadd.f32 0.0, %v1147
        %1149 = vmatmul.f32.gmra.mxu0 %v942
        %v1150 = vpop.f32.mrf.mxu0
        %v1151 = vadd.f32 0.0, %v1150
        %1152 = vmatmul.f32.gmra.mxu0 %v945
        %v1153 = vpop.f32.mrf.mxu0
        %v1154 = vadd.f32 0.0, %v1153
        %1155 = vmatmul.f32.gmra.mxu0 %v948
        %v1156 = vpop.f32.mrf.mxu0
        %v1157 = vadd.f32 0.0, %v1156
        %1158 = vmatmul.f32.gmra.mxu0 %v951
        %v1159 = vpop.f32.mrf.mxu0
        %v1160 = vadd.f32 0.0, %v1159
        %1161 = vmatmul.f32.gmra.mxu0 %v954
        %v1162 = vpop.f32.mrf.mxu0
        %v1163 = vadd.f32 0.0, %v1162
        %1164 = vmatmul.f32.gmra.mxu0 %v957
        %v1165 = vpop.f32.mrf.mxu0
        %v1166 = vadd.f32 0.0, %v1165
        %1167 = vmatmul.f32.gmra.mxu0 %v960
        %v1168 = vpop.f32.mrf.mxu0
        %v1169 = vadd.f32 0.0, %v1168
        %1170 = vmatmul.f32.gmra.mxu0 %v963
        %v1171 = vpop.f32.mrf.mxu0
        %v1172 = vadd.f32 0.0, %v1171
        %1173 = vmatmul.f32.gmra.mxu0 %v966
        %v1174 = vpop.f32.mrf.mxu0
        %v1175 = vadd.f32 0.0, %v1174
        %1176 = vmatmul.f32.gmra.mxu0 %v969
        %v1177 = vpop.f32.mrf.mxu0
        %v1178 = vadd.f32 0.0, %v1177
        %1179 = vmatmul.f32.gmra.mxu0 %v972
        %v1180 = vpop.f32.mrf.mxu0
        %v1181 = vadd.f32 0.0, %v1180
        %1182 = vmatmul.f32.gmra.mxu0 %v975
        %v1183 = vpop.f32.mrf.mxu0
        %v1184 = vadd.f32 0.0, %v1183
        %1185 = vmatmul.f32.gmra.mxu0 %v978
        %v1186 = vpop.f32.mrf.mxu0
        %v1187 = vadd.f32 0.0, %v1186
        %1188 = vmatmul.f32.gmra.mxu0 %v981
        %v1189 = vpop.f32.mrf.mxu0
        %v1190 = vadd.f32 0.0, %v1189
        %1191 = vmatmul.f32.gmra.mxu0 %v984
        %v1192 = vpop.f32.mrf.mxu0
        %v1193 = vadd.f32 0.0, %v1192
        %1194 = vdwg.mxu0
        %1195 = vmatpush.xpose.msra.mxu0 %v1080
        %1196 = vmatpush.xpose.msra.mxu0 %v1077
        %1197 = vmatpush.xpose.msra.mxu0 %v1074
        %1198 = vmatpush.xpose.msra.mxu0 %v1071
        %1199 = vmatpush.xpose.msra.mxu0 %v1068
        %1200 = vmatpush.xpose.msra.mxu0 %v1065
        %1201 = vmatpush.xpose.msra.mxu0 %v1062
        %1202 = vmatpush.xpose.msra.mxu0 %v1059
        %1203 = vmatpush.xpose.msra.mxu0 %v1056
        %1204 = vmatpush.xpose.msra.mxu0 %v1053
        %1205 = vmatpush.xpose.msra.mxu0 %v1050
        %1206 = vmatpush.xpose.msra.mxu0 %v1047
        %1207 = vmatpush.xpose.msra.mxu0 %v1044
        %1208 = vmatpush.xpose.msra.mxu0 %v1041
        %1209 = vmatpush.xpose.msra.mxu0 %v1038
        %1210 = vmatpush.xpose.msra.mxu0 %v1035
        %1211 = vmatmul.f32.gmra.mxu0 %v891
        %v1212 = vpop.f32.mrf.mxu0
        %v1213 = vadd.f32 0.0, %v1212
        %1214 = vmatmul.f32.gmra.mxu0 %v894
        %v1215 = vpop.f32.mrf.mxu0
        %v1216 = vadd.f32 0.0, %v1215
        %1217 = vmatmul.f32.gmra.mxu0 %v897
        %v1218 = vpop.f32.mrf.mxu0
        %v1219 = vadd.f32 0.0, %v1218
        %1220 = vmatmul.f32.gmra.mxu0 %v900
        %v1221 = vpop.f32.mrf.mxu0
        %v1222 = vadd.f32 0.0, %v1221
        %1223 = vmatmul.f32.gmra.mxu0 %v903
        %v1224 = vpop.f32.mrf.mxu0
        %v1225 = vadd.f32 0.0, %v1224
        %1226 = vmatmul.f32.gmra.mxu0 %v906
        %v1227 = vpop.f32.mrf.mxu0
        %v1228 = vadd.f32 0.0, %v1227
        %1229 = vmatmul.f32.gmra.mxu0 %v909
        %v1230 = vpop.f32.mrf.mxu0
        %v1231 = vadd.f32 0.0, %v1230
        %1232 = vmatmul.f32.gmra.mxu0 %v912
        %v1233 = vpop.f32.mrf.mxu0
        %v1234 = vadd.f32 0.0, %v1233
        %1235 = vmatmul.f32.gmra.mxu0 %v915
        %v1236 = vpop.f32.mrf.mxu0
        %v1237 = vadd.f32 0.0, %v1236
        %1238 = vmatmul.f32.gmra.mxu0 %v918
        %v1239 = vpop.f32.mrf.mxu0
        %v1240 = vadd.f32 0.0, %v1239
        %1241 = vmatmul.f32.gmra.mxu0 %v921
        %v1242 = vpop.f32.mrf.mxu0
        %v1243 = vadd.f32 0.0, %v1242
        %1244 = vmatmul.f32.gmra.mxu0 %v924
        %v1245 = vpop.f32.mrf.mxu0
        %v1246 = vadd.f32 0.0, %v1245
        %1247 = vmatmul.f32.gmra.mxu0 %v927
        %v1248 = vpop.f32.mrf.mxu0
        %v1249 = vadd.f32 0.0, %v1248
        %1250 = vmatmul.f32.gmra.mxu0 %v930
        %v1251 = vpop.f32.mrf.mxu0
        %v1252 = vadd.f32 0.0, %v1251
        %1253 = vmatmul.f32.gmra.mxu0 %v933
        %v1254 = vpop.f32.mrf.mxu0
        %v1255 = vadd.f32 0.0, %v1254
        %1256 = vmatmul.f32.gmra.mxu0 %v936
        %v1257 = vpop.f32.mrf.mxu0
        %v1258 = vadd.f32 0.0, %v1257
        %1259 = vmatmul.f32.gmra.mxu0 %v939
        %v1260 = vpop.f32.mrf.mxu0
        %v1261 = vadd.f32 0.0, %v1260
        %1262 = vmatmul.f32.gmra.mxu0 %v942
        %v1263 = vpop.f32.mrf.mxu0
        %v1264 = vadd.f32 0.0, %v1263
        %1265 = vmatmul.f32.gmra.mxu0 %v945
        %v1266 = vpop.f32.mrf.mxu0
        %v1267 = vadd.f32 0.0, %v1266
        %1268 = vmatmul.f32.gmra.mxu0 %v948
        %v1269 = vpop.f32.mrf.mxu0
        %v1270 = vadd.f32 0.0, %v1269
        %1271 = vmatmul.f32.gmra.mxu0 %v951
        %v1272 = vpop.f32.mrf.mxu0
        %v1273 = vadd.f32 0.0, %v1272
        %1274 = vmatmul.f32.gmra.mxu0 %v954
        %v1275 = vpop.f32.mrf.mxu0
        %v1276 = vadd.f32 0.0, %v1275
        %1277 = vmatmul.f32.gmra.mxu0 %v957
        %v1278 = vpop.f32.mrf.mxu0
        %v1279 = vadd.f32 0.0, %v1278
        %1280 = vmatmul.f32.gmra.mxu0 %v960
        %v1281 = vpop.f32.mrf.mxu0
        %v1282 = vadd.f32 0.0, %v1281
        %1283 = vmatmul.f32.gmra.mxu0 %v963
        %v1284 = vpop.f32.mrf.mxu0
        %v1285 = vadd.f32 0.0, %v1284
        %1286 = vmatmul.f32.gmra.mxu0 %v966
        %v1287 = vpop.f32.mrf.mxu0
        %v1288 = vadd.f32 0.0, %v1287
        %1289 = vmatmul.f32.gmra.mxu0 %v969
        %v1290 = vpop.f32.mrf.mxu0
        %v1291 = vadd.f32 0.0, %v1290
        %1292 = vmatmul.f32.gmra.mxu0 %v972
        %v1293 = vpop.f32.mrf.mxu0
        %v1294 = vadd.f32 0.0, %v1293
        %1295 = vmatmul.f32.gmra.mxu0 %v975
        %v1296 = vpop.f32.mrf.mxu0
        %v1297 = vadd.f32 0.0, %v1296
        %1298 = vmatmul.f32.gmra.mxu0 %v978
        %v1299 = vpop.f32.mrf.mxu0
        %v1300 = vadd.f32 0.0, %v1299
        %1301 = vmatmul.f32.gmra.mxu0 %v981
        %v1302 = vpop.f32.mrf.mxu0
        %v1303 = vadd.f32 0.0, %v1302
        %1304 = vmatmul.f32.gmra.mxu0 %v984
        %v1305 = vpop.f32.mrf.mxu0
        %v1306 = vadd.f32 0.0, %v1305
        %1307 = vdwg.mxu0
        %v1308 = vsel %vm793, %v1100, 0.0
        %v1309 = vsel %vm794, %v1213, 0.0
        %v1310 = vsel %vm795, %v1103, 0.0
        %v1311 = vsel %vm796, %v1216, 0.0
        %v1312 = vsel %vm797, %v1106, 0.0
        %v1313 = vsel %vm798, %v1219, 0.0
        %v1314 = vsel %vm799, %v1109, 0.0
        %v1315 = vsel %vm800, %v1222, 0.0
        %v1316 = vsel %vm801, %v1112, 0.0
        %v1317 = vsel %vm802, %v1225, 0.0
        %v1318 = vsel %vm803, %v1115, 0.0
        %v1319 = vsel %vm804, %v1228, 0.0
        %v1320 = vsel %vm805, %v1118, 0.0
        %v1321 = vsel %vm806, %v1231, 0.0
        %v1322 = vsel %vm807, %v1121, 0.0
        %v1323 = vsel %vm808, %v1234, 0.0
        %v1324 = vsel %vm809, %v1124, 0.0
        %v1325 = vsel %vm810, %v1237, 0.0
        %v1326 = vsel %vm811, %v1127, 0.0
        %v1327 = vsel %vm812, %v1240, 0.0
        %v1328 = vsel %vm813, %v1130, 0.0
        %v1329 = vsel %vm814, %v1243, 0.0
        %v1330 = vsel %vm815, %v1133, 0.0
        %v1331 = vsel %vm816, %v1246, 0.0
        %v1332 = vsel %vm817, %v1136, 0.0
        %v1333 = vsel %vm818, %v1249, 0.0
        %v1334 = vsel %vm819, %v1139, 0.0
        %v1335 = vsel %vm820, %v1252, 0.0
        %v1336 = vsel %vm821, %v1142, 0.0
        %v1337 = vsel %vm822, %v1255, 0.0
        %v1338 = vsel %vm823, %v1145, 0.0
        %v1339 = vsel %vm824, %v1258, 0.0
        %v1340 = vsel %vm825, %v1148, 0.0
        %v1341 = vsel %vm826, %v1261, 0.0
        %v1342 = vsel %vm827, %v1151, 0.0
        %v1343 = vsel %vm828, %v1264, 0.0
        %v1344 = vsel %vm829, %v1154, 0.0
        %v1345 = vsel %vm830, %v1267, 0.0
        %v1346 = vsel %vm831, %v1157, 0.0
        %v1347 = vsel %vm832, %v1270, 0.0
        %v1348 = vsel %vm833, %v1160, 0.0
        %v1349 = vsel %vm834, %v1273, 0.0
        %v1350 = vsel %vm835, %v1163, 0.0
        %v1351 = vsel %vm836, %v1276, 0.0
        %v1352 = vsel %vm837, %v1166, 0.0
        %v1353 = vsel %vm838, %v1279, 0.0
        %v1354 = vsel %vm839, %v1169, 0.0
        %v1355 = vsel %vm840, %v1282, 0.0
        %v1356 = vsel %vm841, %v1172, 0.0
        %v1357 = vsel %vm842, %v1285, 0.0
        %v1358 = vsel %vm843, %v1175, 0.0
        %v1359 = vsel %vm844, %v1288, 0.0
        %v1360 = vsel %vm845, %v1178, 0.0
        %v1361 = vsel %vm846, %v1291, 0.0
        %v1362 = vsel %vm847, %v1181, 0.0
        %v1363 = vsel %vm848, %v1294, 0.0
        %v1364 = vsel %vm849, %v1184, 0.0
        %v1365 = vsel %vm850, %v1297, 0.0
        %v1366 = vsel %vm851, %v1187, 0.0
        %v1367 = vsel %vm852, %v1300, 0.0
        %v1368 = vsel %vm853, %v1190, 0.0
        %v1369 = vsel %vm854, %v1303, 0.0
        %v1370 = vsel %vm855, %v1193, 0.0
        %v1371 = vsel %vm856, %v1306, 0.0
        %v1372 = vld [vmem:[#allocation2] sm:$0xff]
        %v1373 = vld [vmem:[#allocation2 + $0x8] sm:$0xff]
        %v1374 = vld [vmem:[#allocation2 + $0x10] sm:$0xff]
        %v1375 = vld [vmem:[#allocation2 + $0x18] sm:$0xff]
        %1376 = vmatpush.msra.mxu0 0.0
        %1377 = vmatpush.msra.mxu0 0.0
        %1378 = vmatpush.msra.mxu0 0.0
        %1379 = vmatpush.msra.mxu0 0.0
        %1380 = vmatpush.msra.mxu0 0.0
        %1381 = vmatpush.msra.mxu0 0.0
        %1382 = vmatpush.msra.mxu0 0.0
        %1383 = vmatpush.msra.mxu0 0.0
        %1384 = vmatpush.msra.mxu0 0.0
        %1385 = vmatpush.msra.mxu0 0.0
        %1386 = vmatpush.msra.mxu0 0.0
        %1387 = vmatpush.msra.mxu0 0.0
        %1388 = vmatpush.msra.mxu0 %v1375
        %1389 = vmatpush.msra.mxu0 %v1374
        %1390 = vmatpush.msra.mxu0 %v1373
        %1391 = vmatpush.msra.mxu0 %v1372
        %1392 = vmatmul.f32.gmra.mxu0 %v891
        %v1393 = vpop.f32.mrf.mxu0
        %v1394 = vadd.f32 0.0, %v1393
        %1395 = vmatmul.f32.gmra.mxu0 %v894
        %v1396 = vpop.f32.mrf.mxu0
        %v1397 = vadd.f32 0.0, %v1396
        %1398 = vmatmul.f32.gmra.mxu0 %v897
        %v1399 = vpop.f32.mrf.mxu0
        %v1400 = vadd.f32 0.0, %v1399
        %1401 = vmatmul.f32.gmra.mxu0 %v900
        %v1402 = vpop.f32.mrf.mxu0
        %v1403 = vadd.f32 0.0, %v1402
        %1404 = vmatmul.f32.gmra.mxu0 %v903
        %v1405 = vpop.f32.mrf.mxu0
        %v1406 = vadd.f32 0.0, %v1405
        %1407 = vmatmul.f32.gmra.mxu0 %v906
        %v1408 = vpop.f32.mrf.mxu0
        %v1409 = vadd.f32 0.0, %v1408
        %1410 = vmatmul.f32.gmra.mxu0 %v909
        %v1411 = vpop.f32.mrf.mxu0
        %v1412 = vadd.f32 0.0, %v1411
        %1413 = vmatmul.f32.gmra.mxu0 %v912
        %v1414 = vpop.f32.mrf.mxu0
        %v1415 = vadd.f32 0.0, %v1414
        %1416 = vmatmul.f32.gmra.mxu0 %v915
        %v1417 = vpop.f32.mrf.mxu0
        %v1418 = vadd.f32 0.0, %v1417
        %1419 = vmatmul.f32.gmra.mxu0 %v918
        %v1420 = vpop.f32.mrf.mxu0
        %v1421 = vadd.f32 0.0, %v1420
        %1422 = vmatmul.f32.gmra.mxu0 %v921
        %v1423 = vpop.f32.mrf.mxu0
        %v1424 = vadd.f32 0.0, %v1423
        %1425 = vmatmul.f32.gmra.mxu0 %v924
        %v1426 = vpop.f32.mrf.mxu0
        %v1427 = vadd.f32 0.0, %v1426
        %1428 = vmatmul.f32.gmra.mxu0 %v927
        %v1429 = vpop.f32.mrf.mxu0
        %v1430 = vadd.f32 0.0, %v1429
        %1431 = vmatmul.f32.gmra.mxu0 %v930
        %v1432 = vpop.f32.mrf.mxu0
        %v1433 = vadd.f32 0.0, %v1432
        %1434 = vmatmul.f32.gmra.mxu0 %v933
        %v1435 = vpop.f32.mrf.mxu0
        %v1436 = vadd.f32 0.0, %v1435
        %1437 = vmatmul.f32.gmra.mxu0 %v936
        %v1438 = vpop.f32.mrf.mxu0
        %v1439 = vadd.f32 0.0, %v1438
        %1440 = vmatmul.f32.gmra.mxu0 %v939
        %v1441 = vpop.f32.mrf.mxu0
        %v1442 = vadd.f32 0.0, %v1441
        %1443 = vmatmul.f32.gmra.mxu0 %v942
        %v1444 = vpop.f32.mrf.mxu0
        %v1445 = vadd.f32 0.0, %v1444
        %1446 = vmatmul.f32.gmra.mxu0 %v945
        %v1447 = vpop.f32.mrf.mxu0
        %v1448 = vadd.f32 0.0, %v1447
        %1449 = vmatmul.f32.gmra.mxu0 %v948
        %v1450 = vpop.f32.mrf.mxu0
        %v1451 = vadd.f32 0.0, %v1450
        %1452 = vmatmul.f32.gmra.mxu0 %v951
        %v1453 = vpop.f32.mrf.mxu0
        %v1454 = vadd.f32 0.0, %v1453
        %1455 = vmatmul.f32.gmra.mxu0 %v954
        %v1456 = vpop.f32.mrf.mxu0
        %v1457 = vadd.f32 0.0, %v1456
        %1458 = vmatmul.f32.gmra.mxu0 %v957
        %v1459 = vpop.f32.mrf.mxu0
        %v1460 = vadd.f32 0.0, %v1459
        %1461 = vmatmul.f32.gmra.mxu0 %v960
        %v1462 = vpop.f32.mrf.mxu0
        %v1463 = vadd.f32 0.0, %v1462
        %1464 = vmatmul.f32.gmra.mxu0 %v963
        %v1465 = vpop.f32.mrf.mxu0
        %v1466 = vadd.f32 0.0, %v1465
        %1467 = vmatmul.f32.gmra.mxu0 %v966
        %v1468 = vpop.f32.mrf.mxu0
        %v1469 = vadd.f32 0.0, %v1468
        %1470 = vmatmul.f32.gmra.mxu0 %v969
        %v1471 = vpop.f32.mrf.mxu0
        %v1472 = vadd.f32 0.0, %v1471
        %1473 = vmatmul.f32.gmra.mxu0 %v972
        %v1474 = vpop.f32.mrf.mxu0
        %v1475 = vadd.f32 0.0, %v1474
        %1476 = vmatmul.f32.gmra.mxu0 %v975
        %v1477 = vpop.f32.mrf.mxu0
        %v1478 = vadd.f32 0.0, %v1477
        %1479 = vmatmul.f32.gmra.mxu0 %v978
        %v1480 = vpop.f32.mrf.mxu0
        %v1481 = vadd.f32 0.0, %v1480
        %1482 = vmatmul.f32.gmra.mxu0 %v981
        %v1483 = vpop.f32.mrf.mxu0
        %v1484 = vadd.f32 0.0, %v1483
        %1485 = vmatmul.f32.gmra.mxu0 %v984
        %v1486 = vpop.f32.mrf.mxu0
        %v1487 = vadd.f32 0.0, %v1486
        %1488 = vdwg.mxu0
        %1489 = vmatpush.msra.mxu0 %v873
        %1490 = vmatpush.msra.mxu0 %v872
        %1491 = vmatpush.msra.mxu0 %v871
        %1492 = vmatpush.msra.mxu0 %v870
        %1493 = vmatpush.msra.mxu0 %v869
        %1494 = vmatpush.msra.mxu0 %v868
        %1495 = vmatpush.msra.mxu0 %v867
        %1496 = vmatpush.msra.mxu0 %v866
        %1497 = vmatpush.msra.mxu0 %v865
        %1498 = vmatpush.msra.mxu0 %v864
        %1499 = vmatpush.msra.mxu0 %v863
        %1500 = vmatpush.msra.mxu0 %v862
        %1501 = vmatpush.msra.mxu0 %v861
        %1502 = vmatpush.msra.mxu0 %v860
        %1503 = vmatpush.msra.mxu0 %v859
        %1504 = vmatpush.msra.mxu0 %v858
        %1505 = vmatmul.f32.gmra.mxu0 %v1308
        %v1506 = vpop.f32.mrf.mxu0
        %v1507 = vadd.f32 %v1394, %v1506
        %1508 = vmatmul.f32.gmra.mxu0 %v1310
        %v1509 = vpop.f32.mrf.mxu0
        %v1510 = vadd.f32 %v1397, %v1509
        %1511 = vmatmul.f32.gmra.mxu0 %v1312
        %v1512 = vpop.f32.mrf.mxu0
        %v1513 = vadd.f32 %v1400, %v1512
        %1514 = vmatmul.f32.gmra.mxu0 %v1314
        %v1515 = vpop.f32.mrf.mxu0
        %v1516 = vadd.f32 %v1403, %v1515
        %1517 = vmatmul.f32.gmra.mxu0 %v1316
        %v1518 = vpop.f32.mrf.mxu0
        %v1519 = vadd.f32 %v1406, %v1518
        %1520 = vmatmul.f32.gmra.mxu0 %v1318
        %v1521 = vpop.f32.mrf.mxu0
        %v1522 = vadd.f32 %v1409, %v1521
        %1523 = vmatmul.f32.gmra.mxu0 %v1320
        %v1524 = vpop.f32.mrf.mxu0
        %v1525 = vadd.f32 %v1412, %v1524
        %1526 = vmatmul.f32.gmra.mxu0 %v1322
        %v1527 = vpop.f32.mrf.mxu0
        %v1528 = vadd.f32 %v1415, %v1527
        %1529 = vmatmul.f32.gmra.mxu0 %v1324
        %v1530 = vpop.f32.mrf.mxu0
        %v1531 = vadd.f32 %v1418, %v1530
        %1532 = vmatmul.f32.gmra.mxu0 %v1326
        %v1533 = vpop.f32.mrf.mxu0
        %v1534 = vadd.f32 %v1421, %v1533
        %1535 = vmatmul.f32.gmra.mxu0 %v1328
        %v1536 = vpop.f32.mrf.mxu0
        %v1537 = vadd.f32 %v1424, %v1536
        %1538 = vmatmul.f32.gmra.mxu0 %v1330
        %v1539 = vpop.f32.mrf.mxu0
        %v1540 = vadd.f32 %v1427, %v1539
        %1541 = vmatmul.f32.gmra.mxu0 %v1332
        %v1542 = vpop.f32.mrf.mxu0
        %v1543 = vadd.f32 %v1430, %v1542
        %1544 = vmatmul.f32.gmra.mxu0 %v1334
        %v1545 = vpop.f32.mrf.mxu0
        %v1546 = vadd.f32 %v1433, %v1545
        %1547 = vmatmul.f32.gmra.mxu0 %v1336
        %v1548 = vpop.f32.mrf.mxu0
        %v1549 = vadd.f32 %v1436, %v1548
        %1550 = vmatmul.f32.gmra.mxu0 %v1338
        %v1551 = vpop.f32.mrf.mxu0
        %v1552 = vadd.f32 %v1439, %v1551
        %1553 = vmatmul.f32.gmra.mxu0 %v1340
        %v1554 = vpop.f32.mrf.mxu0
        %v1555 = vadd.f32 %v1442, %v1554
        %1556 = vmatmul.f32.gmra.mxu0 %v1342
        %v1557 = vpop.f32.mrf.mxu0
        %v1558 = vadd.f32 %v1445, %v1557
        %1559 = vmatmul.f32.gmra.mxu0 %v1344
        %v1560 = vpop.f32.mrf.mxu0
        %v1561 = vadd.f32 %v1448, %v1560
        %1562 = vmatmul.f32.gmra.mxu0 %v1346
        %v1563 = vpop.f32.mrf.mxu0
        %v1564 = vadd.f32 %v1451, %v1563
        %1565 = vmatmul.f32.gmra.mxu0 %v1348
        %v1566 = vpop.f32.mrf.mxu0
        %v1567 = vadd.f32 %v1454, %v1566
        %1568 = vmatmul.f32.gmra.mxu0 %v1350
        %v1569 = vpop.f32.mrf.mxu0
        %v1570 = vadd.f32 %v1457, %v1569
        %1571 = vmatmul.f32.gmra.mxu0 %v1352
        %v1572 = vpop.f32.mrf.mxu0
        %v1573 = vadd.f32 %v1460, %v1572
        %1574 = vmatmul.f32.gmra.mxu0 %v1354
        %v1575 = vpop.f32.mrf.mxu0
        %v1576 = vadd.f32 %v1463, %v1575
        %1577 = vmatmul.f32.gmra.mxu0 %v1356
        %v1578 = vpop.f32.mrf.mxu0
        %v1579 = vadd.f32 %v1466, %v1578
        %1580 = vmatmul.f32.gmra.mxu0 %v1358
        %v1581 = vpop.f32.mrf.mxu0
        %v1582 = vadd.f32 %v1469, %v1581
        %1583 = vmatmul.f32.gmra.mxu0 %v1360
        %v1584 = vpop.f32.mrf.mxu0
        %v1585 = vadd.f32 %v1472, %v1584
        %1586 = vmatmul.f32.gmra.mxu0 %v1362
        %v1587 = vpop.f32.mrf.mxu0
        %v1588 = vadd.f32 %v1475, %v1587
        %1589 = vmatmul.f32.gmra.mxu0 %v1364
        %v1590 = vpop.f32.mrf.mxu0
        %v1591 = vadd.f32 %v1478, %v1590
        %1592 = vmatmul.f32.gmra.mxu0 %v1366
        %v1593 = vpop.f32.mrf.mxu0
        %v1594 = vadd.f32 %v1481, %v1593
        %1595 = vmatmul.f32.gmra.mxu0 %v1368
        %v1596 = vpop.f32.mrf.mxu0
        %v1597 = vadd.f32 %v1484, %v1596
        %1598 = vmatmul.f32.gmra.mxu0 %v1370
        %v1599 = vpop.f32.mrf.mxu0
        %v1600 = vadd.f32 %v1487, %v1599
        %1601 = vdwg.mxu0
        %1602 = vmatpush.msra.mxu0 %v889
        %1603 = vmatpush.msra.mxu0 %v888
        %1604 = vmatpush.msra.mxu0 %v887
        %1605 = vmatpush.msra.mxu0 %v886
        %1606 = vmatpush.msra.mxu0 %v885
        %1607 = vmatpush.msra.mxu0 %v884
        %1608 = vmatpush.msra.mxu0 %v883
        %1609 = vmatpush.msra.mxu0 %v882
        %1610 = vmatpush.msra.mxu0 %v881
        %1611 = vmatpush.msra.mxu0 %v880
        %1612 = vmatpush.msra.mxu0 %v879
        %1613 = vmatpush.msra.mxu0 %v878
        %1614 = vmatpush.msra.mxu0 %v877
        %1615 = vmatpush.msra.mxu0 %v876
        %1616 = vmatpush.msra.mxu0 %v875
        %1617 = vmatpush.msra.mxu0 %v874
        %1618 = vmatmul.f32.gmra.mxu0 %v1309
        %v1619 = vpop.f32.mrf.mxu0
        %v1620 = vadd.f32 %v1507, %v1619
        %1621 = vmatmul.f32.gmra.mxu0 %v1311
        %v1622 = vpop.f32.mrf.mxu0
        %v1623 = vadd.f32 %v1510, %v1622
        %1624 = vmatmul.f32.gmra.mxu0 %v1313
        %v1625 = vpop.f32.mrf.mxu0
        %v1626 = vadd.f32 %v1513, %v1625
        %1627 = vmatmul.f32.gmra.mxu0 %v1315
        %v1628 = vpop.f32.mrf.mxu0
        %v1629 = vadd.f32 %v1516, %v1628
        %1630 = vmatmul.f32.gmra.mxu0 %v1317
        %v1631 = vpop.f32.mrf.mxu0
        %v1632 = vadd.f32 %v1519, %v1631
        %1633 = vmatmul.f32.gmra.mxu0 %v1319
        %v1634 = vpop.f32.mrf.mxu0
        %v1635 = vadd.f32 %v1522, %v1634
        %1636 = vmatmul.f32.gmra.mxu0 %v1321
        %v1637 = vpop.f32.mrf.mxu0
        %v1638 = vadd.f32 %v1525, %v1637
        %1639 = vmatmul.f32.gmra.mxu0 %v1323
        %v1640 = vpop.f32.mrf.mxu0
        %v1641 = vadd.f32 %v1528, %v1640
        %1642 = vmatmul.f32.gmra.mxu0 %v1325
        %v1643 = vpop.f32.mrf.mxu0
        %v1644 = vadd.f32 %v1531, %v1643
        %1645 = vmatmul.f32.gmra.mxu0 %v1327
        %v1646 = vpop.f32.mrf.mxu0
        %v1647 = vadd.f32 %v1534, %v1646
        %1648 = vmatmul.f32.gmra.mxu0 %v1329
        %v1649 = vpop.f32.mrf.mxu0
        %v1650 = vadd.f32 %v1537, %v1649
        %1651 = vmatmul.f32.gmra.mxu0 %v1331
        %v1652 = vpop.f32.mrf.mxu0
        %v1653 = vadd.f32 %v1540, %v1652
        %1654 = vmatmul.f32.gmra.mxu0 %v1333
        %v1655 = vpop.f32.mrf.mxu0
        %v1656 = vadd.f32 %v1543, %v1655
        %1657 = vmatmul.f32.gmra.mxu0 %v1335
        %v1658 = vpop.f32.mrf.mxu0
        %v1659 = vadd.f32 %v1546, %v1658
        %1660 = vmatmul.f32.gmra.mxu0 %v1337
        %v1661 = vpop.f32.mrf.mxu0
        %v1662 = vadd.f32 %v1549, %v1661
        %1663 = vmatmul.f32.gmra.mxu0 %v1339
        %v1664 = vpop.f32.mrf.mxu0
        %v1665 = vadd.f32 %v1552, %v1664
        %1666 = vmatmul.f32.gmra.mxu0 %v1341
        %v1667 = vpop.f32.mrf.mxu0
        %v1668 = vadd.f32 %v1555, %v1667
        %1669 = vmatmul.f32.gmra.mxu0 %v1343
        %v1670 = vpop.f32.mrf.mxu0
        %v1671 = vadd.f32 %v1558, %v1670
        %1672 = vmatmul.f32.gmra.mxu0 %v1345
        %v1673 = vpop.f32.mrf.mxu0
        %v1674 = vadd.f32 %v1561, %v1673
        %1675 = vmatmul.f32.gmra.mxu0 %v1347
        %v1676 = vpop.f32.mrf.mxu0
        %v1677 = vadd.f32 %v1564, %v1676
        %1678 = vmatmul.f32.gmra.mxu0 %v1349
        %v1679 = vpop.f32.mrf.mxu0
        %v1680 = vadd.f32 %v1567, %v1679
        %1681 = vmatmul.f32.gmra.mxu0 %v1351
        %v1682 = vpop.f32.mrf.mxu0
        %v1683 = vadd.f32 %v1570, %v1682
        %1684 = vmatmul.f32.gmra.mxu0 %v1353
        %v1685 = vpop.f32.mrf.mxu0
        %v1686 = vadd.f32 %v1573, %v1685
        %1687 = vmatmul.f32.gmra.mxu0 %v1355
        %v1688 = vpop.f32.mrf.mxu0
        %v1689 = vadd.f32 %v1576, %v1688
        %1690 = vmatmul.f32.gmra.mxu0 %v1357
        %v1691 = vpop.f32.mrf.mxu0
        %v1692 = vadd.f32 %v1579, %v1691
        %1693 = vmatmul.f32.gmra.mxu0 %v1359
        %v1694 = vpop.f32.mrf.mxu0
        %v1695 = vadd.f32 %v1582, %v1694
        %1696 = vmatmul.f32.gmra.mxu0 %v1361
        %v1697 = vpop.f32.mrf.mxu0
        %v1698 = vadd.f32 %v1585, %v1697
        %1699 = vmatmul.f32.gmra.mxu0 %v1363
        %v1700 = vpop.f32.mrf.mxu0
        %v1701 = vadd.f32 %v1588, %v1700
        %1702 = vmatmul.f32.gmra.mxu0 %v1365
        %v1703 = vpop.f32.mrf.mxu0
        %v1704 = vadd.f32 %v1591, %v1703
        %1705 = vmatmul.f32.gmra.mxu0 %v1367
        %v1706 = vpop.f32.mrf.mxu0
        %v1707 = vadd.f32 %v1594, %v1706
        %1708 = vmatmul.f32.gmra.mxu0 %v1369
        %v1709 = vpop.f32.mrf.mxu0
        %v1710 = vadd.f32 %v1597, %v1709
        %1711 = vmatmul.f32.gmra.mxu0 %v1371
        %v1712 = vpop.f32.mrf.mxu0
        %v1713 = vadd.f32 %v1600, %v1712
        %1714 = vdwg.mxu0
        %v1715 = vadd.f32 %v1620, 1e-06
        %v1716 = vadd.f32 %v1623, 1e-06
        %v1717 = vadd.f32 %v1626, 1e-06
        %v1718 = vadd.f32 %v1629, 1e-06
        %v1719 = vadd.f32 %v1632, 1e-06
        %v1720 = vadd.f32 %v1635, 1e-06
        %v1721 = vadd.f32 %v1638, 1e-06
        %v1722 = vadd.f32 %v1641, 1e-06
        %v1723 = vadd.f32 %v1644, 1e-06
        %v1724 = vadd.f32 %v1647, 1e-06
        %v1725 = vadd.f32 %v1650, 1e-06
        %v1726 = vadd.f32 %v1653, 1e-06
        %v1727 = vadd.f32 %v1656, 1e-06
        %v1728 = vadd.f32 %v1659, 1e-06
        %v1729 = vadd.f32 %v1662, 1e-06
        %v1730 = vadd.f32 %v1665, 1e-06
        %v1731 = vadd.f32 %v1668, 1e-06
        %v1732 = vadd.f32 %v1671, 1e-06
        %v1733 = vadd.f32 %v1674, 1e-06
        %v1734 = vadd.f32 %v1677, 1e-06
        %v1735 = vadd.f32 %v1680, 1e-06
        %v1736 = vadd.f32 %v1683, 1e-06
        %v1737 = vadd.f32 %v1686, 1e-06
        %v1738 = vadd.f32 %v1689, 1e-06
        %v1739 = vadd.f32 %v1692, 1e-06
        %v1740 = vadd.f32 %v1695, 1e-06
        %v1741 = vadd.f32 %v1698, 1e-06
        %v1742 = vadd.f32 %v1701, 1e-06
        %v1743 = vadd.f32 %v1704, 1e-06
        %v1744 = vadd.f32 %v1707, 1e-06
        %v1745 = vadd.f32 %v1710, 1e-06
        %v1746 = vadd.f32 %v1713, 1e-06
        %v1747 = vrcp.pop %v1715
        %v1748 = vrcp.pop %v1716
        %v1749 = vrcp.pop %v1717
        %v1750 = vrcp.pop %v1718
        %v1751 = vrcp.pop %v1719
        %v1752 = vrcp.pop %v1720
        %v1753 = vrcp.pop %v1721
        %v1754 = vrcp.pop %v1722
        %v1755 = vrcp.pop %v1723
        %v1756 = vrcp.pop %v1724
        %v1757 = vrcp.pop %v1725
        %v1758 = vrcp.pop %v1726
        %v1759 = vrcp.pop %v1727
        %v1760 = vrcp.pop %v1728
        %v1761 = vrcp.pop %v1729
        %v1762 = vrcp.pop %v1730
        %v1763 = vrcp.pop %v1731
        %v1764 = vrcp.pop %v1732
        %v1765 = vrcp.pop %v1733
        %v1766 = vrcp.pop %v1734
        %v1767 = vrcp.pop %v1735
        %v1768 = vrcp.pop %v1736
        %v1769 = vrcp.pop %v1737
        %v1770 = vrcp.pop %v1738
        %v1771 = vrcp.pop %v1739
        %v1772 = vrcp.pop %v1740
        %v1773 = vrcp.pop %v1741
        %v1774 = vrcp.pop %v1742
        %v1775 = vrcp.pop %v1743
        %v1776 = vrcp.pop %v1744
        %v1777 = vrcp.pop %v1745
        %v1778 = vrcp.pop %v1746
        %v1779 = vmul.f32 %v1715, %v1747
        %v1780 = vmul.f32 %v1716, %v1748
        %v1781 = vmul.f32 %v1717, %v1749
        %v1782 = vmul.f32 %v1718, %v1750
        %v1783 = vmul.f32 %v1719, %v1751
        %v1784 = vmul.f32 %v1720, %v1752
        %v1785 = vmul.f32 %v1721, %v1753
        %v1786 = vmul.f32 %v1722, %v1754
        %v1787 = vmul.f32 %v1723, %v1755
        %v1788 = vmul.f32 %v1724, %v1756
        %v1789 = vmul.f32 %v1725, %v1757
        %v1790 = vmul.f32 %v1726, %v1758
        %v1791 = vmul.f32 %v1727, %v1759
        %v1792 = vmul.f32 %v1728, %v1760
        %v1793 = vmul.f32 %v1729, %v1761
        %v1794 = vmul.f32 %v1730, %v1762
        %v1795 = vmul.f32 %v1731, %v1763
        %v1796 = vmul.f32 %v1732, %v1764
        %v1797 = vmul.f32 %v1733, %v1765
        %v1798 = vmul.f32 %v1734, %v1766
        %v1799 = vmul.f32 %v1735, %v1767
        %v1800 = vmul.f32 %v1736, %v1768
        %v1801 = vmul.f32 %v1737, %v1769
        %v1802 = vmul.f32 %v1738, %v1770
        %v1803 = vmul.f32 %v1739, %v1771
        %v1804 = vmul.f32 %v1740, %v1772
        %v1805 = vmul.f32 %v1741, %v1773
        %v1806 = vmul.f32 %v1742, %v1774
        %v1807 = vmul.f32 %v1743, %v1775
        %v1808 = vmul.f32 %v1744, %v1776
        %v1809 = vmul.f32 %v1745, %v1777
        %v1810 = vmul.f32 %v1746, %v1778
        %v1811 = vsub.f32 2.0, %v1779
        %v1812 = vsub.f32 2.0, %v1780
        %v1813 = vsub.f32 2.0, %v1781
        %v1814 = vsub.f32 2.0, %v1782
        %v1815 = vsub.f32 2.0, %v1783
        %v1816 = vsub.f32 2.0, %v1784
        %v1817 = vsub.f32 2.0, %v1785
        %v1818 = vsub.f32 2.0, %v1786
        %v1819 = vsub.f32 2.0, %v1787
        %v1820 = vsub.f32 2.0, %v1788
        %v1821 = vsub.f32 2.0, %v1789
        %v1822 = vsub.f32 2.0, %v1790
        %v1823 = vsub.f32 2.0, %v1791
        %v1824 = vsub.f32 2.0, %v1792
        %v1825 = vsub.f32 2.0, %v1793
        %v1826 = vsub.f32 2.0, %v1794
        %v1827 = vsub.f32 2.0, %v1795
        %v1828 = vsub.f32 2.0, %v1796
        %v1829 = vsub.f32 2.0, %v1797
        %v1830 = vsub.f32 2.0, %v1798
        %v1831 = vsub.f32 2.0, %v1799
        %v1832 = vsub.f32 2.0, %v1800
        %v1833 = vsub.f32 2.0, %v1801
        %v1834 = vsub.f32 2.0, %v1802
        %v1835 = vsub.f32 2.0, %v1803
        %v1836 = vsub.f32 2.0, %v1804
        %v1837 = vsub.f32 2.0, %v1805
        %v1838 = vsub.f32 2.0, %v1806
        %v1839 = vsub.f32 2.0, %v1807
        %v1840 = vsub.f32 2.0, %v1808
        %v1841 = vsub.f32 2.0, %v1809
        %v1842 = vsub.f32 2.0, %v1810
        %v1843 = vmul.f32 %v1747, %v1811
        %v1844 = vmul.f32 %v1748, %v1812
        %v1845 = vmul.f32 %v1749, %v1813
        %v1846 = vmul.f32 %v1750, %v1814
        %v1847 = vmul.f32 %v1751, %v1815
        %v1848 = vmul.f32 %v1752, %v1816
        %v1849 = vmul.f32 %v1753, %v1817
        %v1850 = vmul.f32 %v1754, %v1818
        %v1851 = vmul.f32 %v1755, %v1819
        %v1852 = vmul.f32 %v1756, %v1820
        %v1853 = vmul.f32 %v1757, %v1821
        %v1854 = vmul.f32 %v1758, %v1822
        %v1855 = vmul.f32 %v1759, %v1823
        %v1856 = vmul.f32 %v1760, %v1824
        %v1857 = vmul.f32 %v1761, %v1825
        %v1858 = vmul.f32 %v1762, %v1826
        %v1859 = vmul.f32 %v1763, %v1827
        %v1860 = vmul.f32 %v1764, %v1828
        %v1861 = vmul.f32 %v1765, %v1829
        %v1862 = vmul.f32 %v1766, %v1830
        %v1863 = vmul.f32 %v1767, %v1831
        %v1864 = vmul.f32 %v1768, %v1832
        %v1865 = vmul.f32 %v1769, %v1833
        %v1866 = vmul.f32 %v1770, %v1834
        %v1867 = vmul.f32 %v1771, %v1835
        %v1868 = vmul.f32 %v1772, %v1836
        %v1869 = vmul.f32 %v1773, %v1837
        %v1870 = vmul.f32 %v1774, %v1838
        %v1871 = vmul.f32 %v1775, %v1839
        %v1872 = vmul.f32 %v1776, %v1840
        %v1873 = vmul.f32 %v1777, %v1841
        %v1874 = vmul.f32 %v1778, %v1842
        %v1875 = vmax.f32 %v1843, -1.0
        %v1876 = vmax.f32 %v1844, -1.0
        %v1877 = vmax.f32 %v1845, -1.0
        %v1878 = vmax.f32 %v1846, -1.0
        %v1879 = vmax.f32 %v1847, -1.0
        %v1880 = vmax.f32 %v1848, -1.0
        %v1881 = vmax.f32 %v1849, -1.0
        %v1882 = vmax.f32 %v1850, -1.0
        %v1883 = vmax.f32 %v1851, -1.0
        %v1884 = vmax.f32 %v1852, -1.0
        %v1885 = vmax.f32 %v1853, -1.0
        %v1886 = vmax.f32 %v1854, -1.0
        %v1887 = vmax.f32 %v1855, -1.0
        %v1888 = vmax.f32 %v1856, -1.0
        %v1889 = vmax.f32 %v1857, -1.0
        %v1890 = vmax.f32 %v1858, -1.0
        %v1891 = vmax.f32 %v1859, -1.0
        %v1892 = vmax.f32 %v1860, -1.0
        %v1893 = vmax.f32 %v1861, -1.0
        %v1894 = vmax.f32 %v1862, -1.0
        %v1895 = vmax.f32 %v1863, -1.0
        %v1896 = vmax.f32 %v1864, -1.0
        %v1897 = vmax.f32 %v1865, -1.0
        %v1898 = vmax.f32 %v1866, -1.0
        %v1899 = vmax.f32 %v1867, -1.0
        %v1900 = vmax.f32 %v1868, -1.0
        %v1901 = vmax.f32 %v1869, -1.0
        %v1902 = vmax.f32 %v1870, -1.0
        %v1903 = vmax.f32 %v1871, -1.0
        %v1904 = vmax.f32 %v1872, -1.0
        %v1905 = vmax.f32 %v1873, -1.0
        %v1906 = vmax.f32 %v1874, -1.0
        %v1907 = vmin.f32 %v1875, 1.0
        %v1908 = vmin.f32 %v1876, 1.0
        %v1909 = vmin.f32 %v1877, 1.0
        %v1910 = vmin.f32 %v1878, 1.0
        %v1911 = vmin.f32 %v1879, 1.0
        %v1912 = vmin.f32 %v1880, 1.0
        %v1913 = vmin.f32 %v1881, 1.0
        %v1914 = vmin.f32 %v1882, 1.0
        %v1915 = vmin.f32 %v1883, 1.0
        %v1916 = vmin.f32 %v1884, 1.0
        %v1917 = vmin.f32 %v1885, 1.0
        %v1918 = vmin.f32 %v1886, 1.0
        %v1919 = vmin.f32 %v1887, 1.0
        %v1920 = vmin.f32 %v1888, 1.0
        %v1921 = vmin.f32 %v1889, 1.0
        %v1922 = vmin.f32 %v1890, 1.0
        %v1923 = vmin.f32 %v1891, 1.0
        %v1924 = vmin.f32 %v1892, 1.0
        %v1925 = vmin.f32 %v1893, 1.0
        %v1926 = vmin.f32 %v1894, 1.0
        %v1927 = vmin.f32 %v1895, 1.0
        %v1928 = vmin.f32 %v1896, 1.0
        %v1929 = vmin.f32 %v1897, 1.0
        %v1930 = vmin.f32 %v1898, 1.0
        %v1931 = vmin.f32 %v1899, 1.0
        %v1932 = vmin.f32 %v1900, 1.0
        %v1933 = vmin.f32 %v1901, 1.0
        %v1934 = vmin.f32 %v1902, 1.0
        %v1935 = vmin.f32 %v1903, 1.0
        %v1936 = vmin.f32 %v1904, 1.0
        %v1937 = vmin.f32 %v1905, 1.0
        %v1938 = vmin.f32 %v1906, 1.0
        %1940 = vset.pattern.permute.xlu0 32
        %1941 = vperm.xlu0 %1940, %v1907
        %v1942 = vpop.permute.xlu0 %1941
        %1945 = vset.pattern.permute.xlu0 32
        %1946 = vperm.xlu0 %1945, %v1908
        %v1947 = vpop.permute.xlu0 %1946
        %1950 = vset.pattern.permute.xlu0 32
        %1951 = vperm.xlu0 %1950, %v1909
        %v1952 = vpop.permute.xlu0 %1951
        %1955 = vset.pattern.permute.xlu0 32
        %1956 = vperm.xlu0 %1955, %v1910
        %v1957 = vpop.permute.xlu0 %1956
        %1960 = vset.pattern.permute.xlu0 32
        %1961 = vperm.xlu0 %1960, %v1911
        %v1962 = vpop.permute.xlu0 %1961
        %1965 = vset.pattern.permute.xlu0 32
        %1966 = vperm.xlu0 %1965, %v1912
        %v1967 = vpop.permute.xlu0 %1966
        %1970 = vset.pattern.permute.xlu0 32
        %1971 = vperm.xlu0 %1970, %v1913
        %v1972 = vpop.permute.xlu0 %1971
        %1975 = vset.pattern.permute.xlu0 32
        %1976 = vperm.xlu0 %1975, %v1914
        %v1977 = vpop.permute.xlu0 %1976
        %1980 = vset.pattern.permute.xlu0 32
        %1981 = vperm.xlu0 %1980, %v1915
        %v1982 = vpop.permute.xlu0 %1981
        %1985 = vset.pattern.permute.xlu0 32
        %1986 = vperm.xlu0 %1985, %v1916
        %v1987 = vpop.permute.xlu0 %1986
        %1990 = vset.pattern.permute.xlu0 32
        %1991 = vperm.xlu0 %1990, %v1917
        %v1992 = vpop.permute.xlu0 %1991
        %1995 = vset.pattern.permute.xlu0 32
        %1996 = vperm.xlu0 %1995, %v1918
        %v1997 = vpop.permute.xlu0 %1996
        %2000 = vset.pattern.permute.xlu0 32
        %2001 = vperm.xlu0 %2000, %v1919
        %v2002 = vpop.permute.xlu0 %2001
        %2005 = vset.pattern.permute.xlu0 32
        %2006 = vperm.xlu0 %2005, %v1920
        %v2007 = vpop.permute.xlu0 %2006
        %2010 = vset.pattern.permute.xlu0 32
        %2011 = vperm.xlu0 %2010, %v1921
        %v2012 = vpop.permute.xlu0 %2011
        %2015 = vset.pattern.permute.xlu0 32
        %2016 = vperm.xlu0 %2015, %v1922
        %v2017 = vpop.permute.xlu0 %2016
        %2020 = vset.pattern.permute.xlu0 32
        %2021 = vperm.xlu0 %2020, %v1923
        %v2022 = vpop.permute.xlu0 %2021
        %2025 = vset.pattern.permute.xlu0 32
        %2026 = vperm.xlu0 %2025, %v1924
        %v2027 = vpop.permute.xlu0 %2026
        %2030 = vset.pattern.permute.xlu0 32
        %2031 = vperm.xlu0 %2030, %v1925
        %v2032 = vpop.permute.xlu0 %2031
        %2035 = vset.pattern.permute.xlu0 32
        %2036 = vperm.xlu0 %2035, %v1926
        %v2037 = vpop.permute.xlu0 %2036
        %2040 = vset.pattern.permute.xlu0 32
        %2041 = vperm.xlu0 %2040, %v1927
        %v2042 = vpop.permute.xlu0 %2041
        %2045 = vset.pattern.permute.xlu0 32
        %2046 = vperm.xlu0 %2045, %v1928
        %v2047 = vpop.permute.xlu0 %2046
        %2050 = vset.pattern.permute.xlu0 32
        %2051 = vperm.xlu0 %2050, %v1929
        %v2052 = vpop.permute.xlu0 %2051
        %2055 = vset.pattern.permute.xlu0 32
        %2056 = vperm.xlu0 %2055, %v1930
        %v2057 = vpop.permute.xlu0 %2056
        %2060 = vset.pattern.permute.xlu0 32
        %2061 = vperm.xlu0 %2060, %v1931
        %v2062 = vpop.permute.xlu0 %2061
        %2065 = vset.pattern.permute.xlu0 32
        %2066 = vperm.xlu0 %2065, %v1932
        %v2067 = vpop.permute.xlu0 %2066
        %2070 = vset.pattern.permute.xlu0 32
        %2071 = vperm.xlu0 %2070, %v1933
        %v2072 = vpop.permute.xlu0 %2071
        %2075 = vset.pattern.permute.xlu0 32
        %2076 = vperm.xlu0 %2075, %v1934
        %v2077 = vpop.permute.xlu0 %2076
        %2080 = vset.pattern.permute.xlu0 32
        %2081 = vperm.xlu0 %2080, %v1935
        %v2082 = vpop.permute.xlu0 %2081
        %2085 = vset.pattern.permute.xlu0 32
        %2086 = vperm.xlu0 %2085, %v1936
        %v2087 = vpop.permute.xlu0 %2086
        %2090 = vset.pattern.permute.xlu0 32
        %2091 = vperm.xlu0 %2090, %v1937
        %v2092 = vpop.permute.xlu0 %2091
        %2095 = vset.pattern.permute.xlu0 32
        %2096 = vperm.xlu0 %2095, %v1938
        %v2097 = vpop.permute.xlu0 %2096
        %v2099 = vmul.f32 %v1620, %v1942
        %v2100 = vmul.f32 %v1623, %v1947
        %v2101 = vmul.f32 %v1626, %v1952
        %v2102 = vmul.f32 %v1629, %v1957
        %v2103 = vmul.f32 %v1632, %v1962
        %v2104 = vmul.f32 %v1635, %v1967
        %v2105 = vmul.f32 %v1638, %v1972
        %v2106 = vmul.f32 %v1641, %v1977
        %v2107 = vmul.f32 %v1644, %v1982
        %v2108 = vmul.f32 %v1647, %v1987
        %v2109 = vmul.f32 %v1650, %v1992
        %v2110 = vmul.f32 %v1653, %v1997
        %v2111 = vmul.f32 %v1656, %v2002
        %v2112 = vmul.f32 %v1659, %v2007
        %v2113 = vmul.f32 %v1662, %v2012
        %v2114 = vmul.f32 %v1665, %v2017
        %v2115 = vmul.f32 %v1668, %v2022
        %v2116 = vmul.f32 %v1671, %v2027
        %v2117 = vmul.f32 %v1674, %v2032
        %v2118 = vmul.f32 %v1677, %v2037
        %v2119 = vmul.f32 %v1680, %v2042
        %v2120 = vmul.f32 %v1683, %v2047
        %v2121 = vmul.f32 %v1686, %v2052
        %v2122 = vmul.f32 %v1689, %v2057
        %v2123 = vmul.f32 %v1692, %v2062
        %v2124 = vmul.f32 %v1695, %v2067
        %v2125 = vmul.f32 %v1698, %v2072
        %v2126 = vmul.f32 %v1701, %v2077
        %v2127 = vmul.f32 %v1704, %v2082
        %v2128 = vmul.f32 %v1707, %v2087
        %v2129 = vmul.f32 %v1710, %v2092
        %v2130 = vmul.f32 %v1713, %v2097
        %v2131 = vmax.f32 %v2099, -16.0
        %v2132 = vmax.f32 %v2100, -16.0
        %v2133 = vmax.f32 %v2101, -16.0
        %v2134 = vmax.f32 %v2102, -16.0
        %v2135 = vmax.f32 %v2103, -16.0
        %v2136 = vmax.f32 %v2104, -16.0
        %v2137 = vmax.f32 %v2105, -16.0
        %v2138 = vmax.f32 %v2106, -16.0
        %v2139 = vmax.f32 %v2107, -16.0
        %v2140 = vmax.f32 %v2108, -16.0
        %v2141 = vmax.f32 %v2109, -16.0
        %v2142 = vmax.f32 %v2110, -16.0
        %v2143 = vmax.f32 %v2111, -16.0
        %v2144 = vmax.f32 %v2112, -16.0
        %v2145 = vmax.f32 %v2113, -16.0
        %v2146 = vmax.f32 %v2114, -16.0
        %v2147 = vmax.f32 %v2115, -16.0
        %v2148 = vmax.f32 %v2116, -16.0
        %v2149 = vmax.f32 %v2117, -16.0
        %v2150 = vmax.f32 %v2118, -16.0
        %v2151 = vmax.f32 %v2119, -16.0
        %v2152 = vmax.f32 %v2120, -16.0
        %v2153 = vmax.f32 %v2121, -16.0
        %v2154 = vmax.f32 %v2122, -16.0
        %v2155 = vmax.f32 %v2123, -16.0
        %v2156 = vmax.f32 %v2124, -16.0
        %v2157 = vmax.f32 %v2125, -16.0
        %v2158 = vmax.f32 %v2126, -16.0
        %v2159 = vmax.f32 %v2127, -16.0
        %v2160 = vmax.f32 %v2128, -16.0
        %v2161 = vmax.f32 %v2129, -16.0
        %v2162 = vmax.f32 %v2130, -16.0
        %v2163 = vmin.f32 %v2131, 16.0
        %v2164 = vmin.f32 %v2132, 16.0
        %v2165 = vmin.f32 %v2133, 16.0
        %v2166 = vmin.f32 %v2134, 16.0
        %v2167 = vmin.f32 %v2135, 16.0
        %v2168 = vmin.f32 %v2136, 16.0
        %v2169 = vmin.f32 %v2137, 16.0
        %v2170 = vmin.f32 %v2138, 16.0
        %v2171 = vmin.f32 %v2139, 16.0
        %v2172 = vmin.f32 %v2140, 16.0
        %v2173 = vmin.f32 %v2141, 16.0
        %v2174 = vmin.f32 %v2142, 16.0
        %v2175 = vmin.f32 %v2143, 16.0
        %v2176 = vmin.f32 %v2144, 16.0
        %v2177 = vmin.f32 %v2145, 16.0
        %v2178 = vmin.f32 %v2146, 16.0
        %v2179 = vmin.f32 %v2147, 16.0
        %v2180 = vmin.f32 %v2148, 16.0
        %v2181 = vmin.f32 %v2149, 16.0
        %v2182 = vmin.f32 %v2150, 16.0
        %v2183 = vmin.f32 %v2151, 16.0
        %v2184 = vmin.f32 %v2152, 16.0
        %v2185 = vmin.f32 %v2153, 16.0
        %v2186 = vmin.f32 %v2154, 16.0
        %v2187 = vmin.f32 %v2155, 16.0
        %v2188 = vmin.f32 %v2156, 16.0
        %v2189 = vmin.f32 %v2157, 16.0
        %v2190 = vmin.f32 %v2158, 16.0
        %v2191 = vmin.f32 %v2159, 16.0
        %v2192 = vmin.f32 %v2160, 16.0
        %v2193 = vmin.f32 %v2161, 16.0
        %v2194 = vmin.f32 %v2162, 16.0
        %2195 = vxpose.xlu0.b32.start [1/16] %v725, 128
        %2196 = vxpose.xlu0.b32.cont [2/16] %v726, 128
        %2197 = vxpose.xlu0.b32.cont [3/16] %v727, 128
        %2198 = vxpose.xlu0.b32.cont [4/16] %v728, 128
        %2199 = vxpose.xlu0.b32.cont [5/16] %v729, 128
        %2200 = vxpose.xlu0.b32.cont [6/16] %v730, 128
        %2201 = vxpose.xlu0.b32.cont [7/16] %v731, 128
        %2202 = vxpose.xlu0.b32.cont [8/16] %v732, 128
        %2203 = vxpose.xlu0.b32.cont [9/16] %v733, 128
        %2204 = vxpose.xlu0.b32.cont [10/16] %v734, 128
        %2205 = vxpose.xlu0.b32.cont [11/16] %v735, 128
        %2206 = vxpose.xlu0.b32.cont [12/16] %v736, 128
        %2207 = vxpose.xlu0.b32.cont [13/16] %v737, 128
        %2208 = vxpose.xlu0.b32.cont [14/16] %v738, 128
        %2209 = vxpose.xlu0.b32.cont [15/16] %v739, 128
        %2210 = vxpose.xlu0.b32.end [16/16] %v740, 128
        %v2211 = vpop.trf.xlu0
        %v2212 = vpop.trf.xlu0
        %v2213 = vpop.trf.xlu0
        %v2214 = vpop.trf.xlu0
        %v2215 = vpop.trf.xlu0
        %v2216 = vpop.trf.xlu0
        %v2217 = vpop.trf.xlu0
        %v2218 = vpop.trf.xlu0
        %v2219 = vpop.trf.xlu0
        %v2220 = vpop.trf.xlu0
        %v2221 = vpop.trf.xlu0
        %v2222 = vpop.trf.xlu0
        %v2223 = vpop.trf.xlu0
        %v2224 = vpop.trf.xlu0
        %v2225 = vpop.trf.xlu0
        %v2226 = vpop.trf.xlu0
        %2227 = vxpose.xlu0.b32.start [1/16] %v741, 128
        %2228 = vxpose.xlu0.b32.cont [2/16] %v742, 128
        %2229 = vxpose.xlu0.b32.cont [3/16] %v743, 128
        %2230 = vxpose.xlu0.b32.cont [4/16] %v744, 128
        %2231 = vxpose.xlu0.b32.cont [5/16] %v745, 128
        %2232 = vxpose.xlu0.b32.cont [6/16] %v746, 128
        %2233 = vxpose.xlu0.b32.cont [7/16] %v747, 128
        %2234 = vxpose.xlu0.b32.cont [8/16] %v748, 128
        %2235 = vxpose.xlu0.b32.cont [9/16] %v749, 128
        %2236 = vxpose.xlu0.b32.cont [10/16] %v750, 128
        %2237 = vxpose.xlu0.b32.cont [11/16] %v751, 128
        %2238 = vxpose.xlu0.b32.cont [12/16] %v752, 128
        %2239 = vxpose.xlu0.b32.cont [13/16] %v753, 128
        %2240 = vxpose.xlu0.b32.cont [14/16] %v754, 128
        %2241 = vxpose.xlu0.b32.cont [15/16] %v755, 128
        %2242 = vxpose.xlu0.b32.end [16/16] %v756, 128
        %v2243 = vpop.trf.xlu0
        %v2244 = vpop.trf.xlu0
        %v2245 = vpop.trf.xlu0
        %v2246 = vpop.trf.xlu0
        %v2247 = vpop.trf.xlu0
        %v2248 = vpop.trf.xlu0
        %v2249 = vpop.trf.xlu0
        %v2250 = vpop.trf.xlu0
        %v2251 = vpop.trf.xlu0
        %v2252 = vpop.trf.xlu0
        %v2253 = vpop.trf.xlu0
        %v2254 = vpop.trf.xlu0
        %v2255 = vpop.trf.xlu0
        %v2256 = vpop.trf.xlu0
        %v2257 = vpop.trf.xlu0
        %v2258 = vpop.trf.xlu0
        %2259 = vmatpush.msra.mxu0 %v873
        %2260 = vmatpush.msra.mxu0 %v872
        %2261 = vmatpush.msra.mxu0 %v871
        %2262 = vmatpush.msra.mxu0 %v870
        %2263 = vmatpush.msra.mxu0 %v869
        %2264 = vmatpush.msra.mxu0 %v868
        %2265 = vmatpush.msra.mxu0 %v867
        %2266 = vmatpush.msra.mxu0 %v866
        %2267 = vmatpush.msra.mxu0 %v865
        %2268 = vmatpush.msra.mxu0 %v864
        %2269 = vmatpush.msra.mxu0 %v863
        %2270 = vmatpush.msra.mxu0 %v862
        %2271 = vmatpush.msra.mxu0 %v861
        %2272 = vmatpush.msra.mxu0 %v860
        %2273 = vmatpush.msra.mxu0 %v859
        %2274 = vmatpush.msra.mxu0 %v858
        %2275 = vmatmul.f32.gmra.mxu0 %v2211
        %v2276 = vpop.f32.mrf.mxu0
        %v2277 = vadd.f32 0.0, %v2276
        %2278 = vmatmul.f32.gmra.mxu0 %v2212
        %v2279 = vpop.f32.mrf.mxu0
        %v2280 = vadd.f32 0.0, %v2279
        %2281 = vmatmul.f32.gmra.mxu0 %v2213
        %v2282 = vpop.f32.mrf.mxu0
        %v2283 = vadd.f32 0.0, %v2282
        %2284 = vmatmul.f32.gmra.mxu0 %v2214
        %v2285 = vpop.f32.mrf.mxu0
        %v2286 = vadd.f32 0.0, %v2285
        %2287 = vdwg.mxu0
        %2288 = vmatpush.msra.mxu0 %v889
        %2289 = vmatpush.msra.mxu0 %v888
        %2290 = vmatpush.msra.mxu0 %v887
        %2291 = vmatpush.msra.mxu0 %v886
        %2292 = vmatpush.msra.mxu0 %v885
        %2293 = vmatpush.msra.mxu0 %v884
        %2294 = vmatpush.msra.mxu0 %v883
        %2295 = vmatpush.msra.mxu0 %v882
        %2296 = vmatpush.msra.mxu0 %v881
        %2297 = vmatpush.msra.mxu0 %v880
        %2298 = vmatpush.msra.mxu0 %v879
        %2299 = vmatpush.msra.mxu0 %v878
        %2300 = vmatpush.msra.mxu0 %v877
        %2301 = vmatpush.msra.mxu0 %v876
        %2302 = vmatpush.msra.mxu0 %v875
        %2303 = vmatpush.msra.mxu0 %v874
        %2304 = vmatmul.f32.gmra.mxu0 %v2243
        %v2305 = vpop.f32.mrf.mxu0
        %v2306 = vadd.f32 %v2277, %v2305
        %2307 = vmatmul.f32.gmra.mxu0 %v2244
        %v2308 = vpop.f32.mrf.mxu0
        %v2309 = vadd.f32 %v2280, %v2308
        %2310 = vmatmul.f32.gmra.mxu0 %v2245
        %v2311 = vpop.f32.mrf.mxu0
        %v2312 = vadd.f32 %v2283, %v2311
        %2313 = vmatmul.f32.gmra.mxu0 %v2246
        %v2314 = vpop.f32.mrf.mxu0
        %v2315 = vadd.f32 %v2286, %v2314
        %2316 = vdwg.mxu0
        %v2317 = vadd.f32 %v1372, %v2306
        %v2318 = vadd.f32 %v1373, %v2309
        %v2319 = vadd.f32 %v1374, %v2312
        %v2320 = vadd.f32 %v1375, %v2315
        %vm2321 = vcmask 269312
        %2322 = vst.msk [vmem:[#allocation2] sm:$0xff] %vm2321, %v2317
        %2323 = vst.msk [vmem:[#allocation2 + $0x8] sm:$0xff] %vm2321, %v2318
        %2324 = vst.msk [vmem:[#allocation2 + $0x10] sm:$0xff] %vm2321, %v2319
        %2325 = vst.msk [vmem:[#allocation2 + $0x18] sm:$0xff] %vm2321, %v2320
        %2358 = vrot.lane.b32.xlu0 %v405, 96
        %v2359 = vpop.permute.xlu0 %2358
        %2360 = vrot.lane.b32.xlu0 %v406, 96
        %v2361 = vpop.permute.xlu0 %2360
        %2362 = vrot.lane.b32.xlu0 %v407, 96
        %v2363 = vpop.permute.xlu0 %2362
        %2364 = vrot.lane.b32.xlu0 %v408, 96
        %v2365 = vpop.permute.xlu0 %2364
        %2366 = vrot.lane.b32.xlu0 %v409, 96
        %v2367 = vpop.permute.xlu0 %2366
        %2368 = vrot.lane.b32.xlu0 %v410, 96
        %v2369 = vpop.permute.xlu0 %2368
        %2370 = vrot.lane.b32.xlu0 %v411, 96
        %v2371 = vpop.permute.xlu0 %2370
        %2372 = vrot.lane.b32.xlu0 %v412, 96
        %v2373 = vpop.permute.xlu0 %2372
        %2374 = vrot.lane.b32.xlu0 %v413, 96
        %v2375 = vpop.permute.xlu0 %2374
        %2376 = vrot.lane.b32.xlu0 %v414, 96
        %v2377 = vpop.permute.xlu0 %2376
        %2378 = vrot.lane.b32.xlu0 %v415, 96
        %v2379 = vpop.permute.xlu0 %2378
        %2380 = vrot.lane.b32.xlu0 %v416, 96
        %v2381 = vpop.permute.xlu0 %2380
        %2382 = vrot.lane.b32.xlu0 %v417, 96
        %v2383 = vpop.permute.xlu0 %2382
        %2384 = vrot.lane.b32.xlu0 %v418, 96
        %v2385 = vpop.permute.xlu0 %2384
        %2386 = vrot.lane.b32.xlu0 %v419, 96
        %v2387 = vpop.permute.xlu0 %2386
        %2388 = vrot.lane.b32.xlu0 %v420, 96
        %v2389 = vpop.permute.xlu0 %2388
        %2390 = vrot.lane.b32.xlu0 %v421, 96
        %v2391 = vpop.permute.xlu0 %2390
        %2392 = vrot.lane.b32.xlu0 %v422, 96
        %v2393 = vpop.permute.xlu0 %2392
        %2394 = vrot.lane.b32.xlu0 %v423, 96
        %v2395 = vpop.permute.xlu0 %2394
        %2396 = vrot.lane.b32.xlu0 %v424, 96
        %v2397 = vpop.permute.xlu0 %2396
        %2398 = vrot.lane.b32.xlu0 %v425, 96
        %v2399 = vpop.permute.xlu0 %2398
        %2400 = vrot.lane.b32.xlu0 %v426, 96
        %v2401 = vpop.permute.xlu0 %2400
        %2402 = vrot.lane.b32.xlu0 %v427, 96
        %v2403 = vpop.permute.xlu0 %2402
        %2404 = vrot.lane.b32.xlu0 %v428, 96
        %v2405 = vpop.permute.xlu0 %2404
        %2406 = vrot.lane.b32.xlu0 %v429, 96
        %v2407 = vpop.permute.xlu0 %2406
        %2408 = vrot.lane.b32.xlu0 %v430, 96
        %v2409 = vpop.permute.xlu0 %2408
        %2410 = vrot.lane.b32.xlu0 %v431, 96
        %v2411 = vpop.permute.xlu0 %2410
        %2412 = vrot.lane.b32.xlu0 %v432, 96
        %v2413 = vpop.permute.xlu0 %2412
        %2414 = vrot.lane.b32.xlu0 %v433, 96
        %v2415 = vpop.permute.xlu0 %2414
        %2416 = vrot.lane.b32.xlu0 %v434, 96
        %v2417 = vpop.permute.xlu0 %2416
        %2418 = vrot.lane.b32.xlu0 %v435, 96
        %v2419 = vpop.permute.xlu0 %2418
        %2420 = vrot.lane.b32.xlu0 %v436, 96
        %v2421 = vpop.permute.xlu0 %2420
        %v2454 = vsel %vm857, %v2359, 1.0
        %v2455 = vsel %vm857, %v2361, 1.0
        %v2456 = vsel %vm857, %v2363, 1.0
        %v2457 = vsel %vm857, %v2365, 1.0
        %v2458 = vsel %vm857, %v2367, 1.0
        %v2459 = vsel %vm857, %v2369, 1.0
        %v2460 = vsel %vm857, %v2371, 1.0
        %v2461 = vsel %vm857, %v2373, 1.0
        %v2462 = vsel %vm857, %v2375, 1.0
        %v2463 = vsel %vm857, %v2377, 1.0
        %v2464 = vsel %vm857, %v2379, 1.0
        %v2465 = vsel %vm857, %v2381, 1.0
        %v2466 = vsel %vm857, %v2383, 1.0
        %v2467 = vsel %vm857, %v2385, 1.0
        %v2468 = vsel %vm857, %v2387, 1.0
        %v2469 = vsel %vm857, %v2389, 1.0
        %v2470 = vsel %vm857, %v2391, 1.0
        %v2471 = vsel %vm857, %v2393, 1.0
        %v2472 = vsel %vm857, %v2395, 1.0
        %v2473 = vsel %vm857, %v2397, 1.0
        %v2474 = vsel %vm857, %v2399, 1.0
        %v2475 = vsel %vm857, %v2401, 1.0
        %v2476 = vsel %vm857, %v2403, 1.0
        %v2477 = vsel %vm857, %v2405, 1.0
        %v2478 = vsel %vm857, %v2407, 1.0
        %v2479 = vsel %vm857, %v2409, 1.0
        %v2480 = vsel %vm857, %v2411, 1.0
        %v2481 = vsel %vm857, %v2413, 1.0
        %v2482 = vsel %vm857, %v2415, 1.0
        %v2483 = vsel %vm857, %v2417, 1.0
        %v2484 = vsel %vm857, %v2419, 1.0
        %v2485 = vsel %vm857, %v2421, 1.0
        %2486 = vrot.lane.b32.xlu0 %v565, 96
        %v2487 = vpop.permute.xlu0 %2486
        %2488 = vrot.lane.b32.xlu0 %v566, 96
        %v2489 = vpop.permute.xlu0 %2488
        %2490 = vrot.lane.b32.xlu0 %v567, 96
        %v2491 = vpop.permute.xlu0 %2490
        %2492 = vrot.lane.b32.xlu0 %v568, 96
        %v2493 = vpop.permute.xlu0 %2492
        %2494 = vrot.lane.b32.xlu0 %v569, 96
        %v2495 = vpop.permute.xlu0 %2494
        %2496 = vrot.lane.b32.xlu0 %v570, 96
        %v2497 = vpop.permute.xlu0 %2496
        %2498 = vrot.lane.b32.xlu0 %v571, 96
        %v2499 = vpop.permute.xlu0 %2498
        %2500 = vrot.lane.b32.xlu0 %v572, 96
        %v2501 = vpop.permute.xlu0 %2500
        %2502 = vrot.lane.b32.xlu0 %v573, 96
        %v2503 = vpop.permute.xlu0 %2502
        %2504 = vrot.lane.b32.xlu0 %v574, 96
        %v2505 = vpop.permute.xlu0 %2504
        %2506 = vrot.lane.b32.xlu0 %v575, 96
        %v2507 = vpop.permute.xlu0 %2506
        %2508 = vrot.lane.b32.xlu0 %v576, 96
        %v2509 = vpop.permute.xlu0 %2508
        %2510 = vrot.lane.b32.xlu0 %v577, 96
        %v2511 = vpop.permute.xlu0 %2510
        %2512 = vrot.lane.b32.xlu0 %v578, 96
        %v2513 = vpop.permute.xlu0 %2512
        %2514 = vrot.lane.b32.xlu0 %v579, 96
        %v2515 = vpop.permute.xlu0 %2514
        %2516 = vrot.lane.b32.xlu0 %v580, 96
        %v2517 = vpop.permute.xlu0 %2516
        %2518 = vrot.lane.b32.xlu0 %v581, 96
        %v2519 = vpop.permute.xlu0 %2518
        %2520 = vrot.lane.b32.xlu0 %v582, 96
        %v2521 = vpop.permute.xlu0 %2520
        %2522 = vrot.lane.b32.xlu0 %v583, 96
        %v2523 = vpop.permute.xlu0 %2522
        %2524 = vrot.lane.b32.xlu0 %v584, 96
        %v2525 = vpop.permute.xlu0 %2524
        %2526 = vrot.lane.b32.xlu0 %v585, 96
        %v2527 = vpop.permute.xlu0 %2526
        %2528 = vrot.lane.b32.xlu0 %v586, 96
        %v2529 = vpop.permute.xlu0 %2528
        %2530 = vrot.lane.b32.xlu0 %v587, 96
        %v2531 = vpop.permute.xlu0 %2530
        %2532 = vrot.lane.b32.xlu0 %v588, 96
        %v2533 = vpop.permute.xlu0 %2532
        %2534 = vrot.lane.b32.xlu0 %v589, 96
        %v2535 = vpop.permute.xlu0 %2534
        %2536 = vrot.lane.b32.xlu0 %v590, 96
        %v2537 = vpop.permute.xlu0 %2536
        %2538 = vrot.lane.b32.xlu0 %v591, 96
        %v2539 = vpop.permute.xlu0 %2538
        %2540 = vrot.lane.b32.xlu0 %v592, 96
        %v2541 = vpop.permute.xlu0 %2540
        %2542 = vrot.lane.b32.xlu0 %v593, 96
        %v2543 = vpop.permute.xlu0 %2542
        %2544 = vrot.lane.b32.xlu0 %v594, 96
        %v2545 = vpop.permute.xlu0 %2544
        %2546 = vrot.lane.b32.xlu0 %v595, 96
        %v2547 = vpop.permute.xlu0 %2546
        %2548 = vrot.lane.b32.xlu0 %v596, 96
        %v2549 = vpop.permute.xlu0 %2548
        %2550 = vrot.lane.b32.xlu0 %v725, 96
        %v2551 = vpop.permute.xlu0 %2550
        %2552 = vrot.lane.b32.xlu0 %v726, 96
        %v2553 = vpop.permute.xlu0 %2552
        %2554 = vrot.lane.b32.xlu0 %v727, 96
        %v2555 = vpop.permute.xlu0 %2554
        %2556 = vrot.lane.b32.xlu0 %v728, 96
        %v2557 = vpop.permute.xlu0 %2556
        %2558 = vrot.lane.b32.xlu0 %v729, 96
        %v2559 = vpop.permute.xlu0 %2558
        %2560 = vrot.lane.b32.xlu0 %v730, 96
        %v2561 = vpop.permute.xlu0 %2560
        %2562 = vrot.lane.b32.xlu0 %v731, 96
        %v2563 = vpop.permute.xlu0 %2562
        %2564 = vrot.lane.b32.xlu0 %v732, 96
        %v2565 = vpop.permute.xlu0 %2564
        %2566 = vrot.lane.b32.xlu0 %v733, 96
        %v2567 = vpop.permute.xlu0 %2566
        %2568 = vrot.lane.b32.xlu0 %v734, 96
        %v2569 = vpop.permute.xlu0 %2568
        %2570 = vrot.lane.b32.xlu0 %v735, 96
        %v2571 = vpop.permute.xlu0 %2570
        %2572 = vrot.lane.b32.xlu0 %v736, 96
        %v2573 = vpop.permute.xlu0 %2572
        %2574 = vrot.lane.b32.xlu0 %v737, 96
        %v2575 = vpop.permute.xlu0 %2574
        %2576 = vrot.lane.b32.xlu0 %v738, 96
        %v2577 = vpop.permute.xlu0 %2576
        %2578 = vrot.lane.b32.xlu0 %v739, 96
        %v2579 = vpop.permute.xlu0 %2578
        %2580 = vrot.lane.b32.xlu0 %v740, 96
        %v2581 = vpop.permute.xlu0 %2580
        %2582 = vrot.lane.b32.xlu0 %v741, 96
        %v2583 = vpop.permute.xlu0 %2582
        %2584 = vrot.lane.b32.xlu0 %v742, 96
        %v2585 = vpop.permute.xlu0 %2584
        %2586 = vrot.lane.b32.xlu0 %v743, 96
        %v2587 = vpop.permute.xlu0 %2586
        %2588 = vrot.lane.b32.xlu0 %v744, 96
        %v2589 = vpop.permute.xlu0 %2588
        %2590 = vrot.lane.b32.xlu0 %v745, 96
        %v2591 = vpop.permute.xlu0 %2590
        %2592 = vrot.lane.b32.xlu0 %v746, 96
        %v2593 = vpop.permute.xlu0 %2592
        %2594 = vrot.lane.b32.xlu0 %v747, 96
        %v2595 = vpop.permute.xlu0 %2594
        %2596 = vrot.lane.b32.xlu0 %v748, 96
        %v2597 = vpop.permute.xlu0 %2596
        %2598 = vrot.lane.b32.xlu0 %v749, 96
        %v2599 = vpop.permute.xlu0 %2598
        %2600 = vrot.lane.b32.xlu0 %v750, 96
        %v2601 = vpop.permute.xlu0 %2600
        %2602 = vrot.lane.b32.xlu0 %v751, 96
        %v2603 = vpop.permute.xlu0 %2602
        %2604 = vrot.lane.b32.xlu0 %v752, 96
        %v2605 = vpop.permute.xlu0 %2604
        %2606 = vrot.lane.b32.xlu0 %v753, 96
        %v2607 = vpop.permute.xlu0 %2606
        %2608 = vrot.lane.b32.xlu0 %v754, 96
        %v2609 = vpop.permute.xlu0 %2608
        %2610 = vrot.lane.b32.xlu0 %v755, 96
        %v2611 = vpop.permute.xlu0 %2610
        %2612 = vrot.lane.b32.xlu0 %v756, 96
        %v2613 = vpop.permute.xlu0 %2612
        %v2614 = vsel %vm857, %v2487, 0
        %v2616 = vsel %vm857, %v2489, 0
        %v2618 = vsel %vm857, %v2491, 0
        %v2620 = vsel %vm857, %v2493, 0
        %v2622 = vsel %vm857, %v2495, 0
        %v2624 = vsel %vm857, %v2497, 0
        %v2626 = vsel %vm857, %v2499, 0
        %v2628 = vsel %vm857, %v2501, 0
        %v2630 = vsel %vm857, %v2503, 0
        %v2632 = vsel %vm857, %v2505, 0
        %v2634 = vsel %vm857, %v2507, 0
        %v2636 = vsel %vm857, %v2509, 0
        %v2638 = vsel %vm857, %v2511, 0
        %v2640 = vsel %vm857, %v2513, 0
        %v2642 = vsel %vm857, %v2515, 0
        %v2644 = vsel %vm857, %v2517, 0
        %v2646 = vsel %vm857, %v2519, 0
        %v2648 = vsel %vm857, %v2521, 0
        %v2650 = vsel %vm857, %v2523, 0
        %v2652 = vsel %vm857, %v2525, 0
        %v2654 = vsel %vm857, %v2527, 0
        %v2656 = vsel %vm857, %v2529, 0
        %v2658 = vsel %vm857, %v2531, 0
        %v2660 = vsel %vm857, %v2533, 0
        %v2662 = vsel %vm857, %v2535, 0
        %v2664 = vsel %vm857, %v2537, 0
        %v2666 = vsel %vm857, %v2539, 0
        %v2668 = vsel %vm857, %v2541, 0
        %v2670 = vsel %vm857, %v2543, 0
        %v2672 = vsel %vm857, %v2545, 0
        %v2674 = vsel %vm857, %v2547, 0
        %v2676 = vsel %vm857, %v2549, 0
        %v2678 = vsel %vm857, %v2551, 0
        %v2680 = vsel %vm857, %v2553, 0
        %v2682 = vsel %vm857, %v2555, 0
        %v2684 = vsel %vm857, %v2557, 0
        %v2686 = vsel %vm857, %v2559, 0
        %v2688 = vsel %vm857, %v2561, 0
        %v2690 = vsel %vm857, %v2563, 0
        %v2692 = vsel %vm857, %v2565, 0
        %v2694 = vsel %vm857, %v2567, 0
        %v2696 = vsel %vm857, %v2569, 0
        %v2698 = vsel %vm857, %v2571, 0
        %v2700 = vsel %vm857, %v2573, 0
        %v2702 = vsel %vm857, %v2575, 0
        %v2704 = vsel %vm857, %v2577, 0
        %v2706 = vsel %vm857, %v2579, 0
        %v2708 = vsel %vm857, %v2581, 0
        %v2710 = vsel %vm857, %v2583, 0
        %v2712 = vsel %vm857, %v2585, 0
        %v2714 = vsel %vm857, %v2587, 0
        %v2716 = vsel %vm857, %v2589, 0
        %v2718 = vsel %vm857, %v2591, 0
        %v2720 = vsel %vm857, %v2593, 0
        %v2722 = vsel %vm857, %v2595, 0
        %v2724 = vsel %vm857, %v2597, 0
        %v2726 = vsel %vm857, %v2599, 0
        %v2728 = vsel %vm857, %v2601, 0
        %v2730 = vsel %vm857, %v2603, 0
        %v2732 = vsel %vm857, %v2605, 0
        %v2734 = vsel %vm857, %v2607, 0
        %v2736 = vsel %vm857, %v2609, 0
        %v2738 = vsel %vm857, %v2611, 0
        %v2740 = vsel %vm857, %v2613, 0
        %2742 = vmatpush.xpose.msra.mxu0 %v2708
        %2743 = vmatpush.xpose.msra.mxu0 %v2706
        %2744 = vmatpush.xpose.msra.mxu0 %v2704
        %2745 = vmatpush.xpose.msra.mxu0 %v2702
        %2746 = vmatpush.xpose.msra.mxu0 %v2700
        %2747 = vmatpush.xpose.msra.mxu0 %v2698
        %2748 = vmatpush.xpose.msra.mxu0 %v2696
        %2749 = vmatpush.xpose.msra.mxu0 %v2694
        %2750 = vmatpush.xpose.msra.mxu0 %v2692
        %2751 = vmatpush.xpose.msra.mxu0 %v2690
        %2752 = vmatpush.xpose.msra.mxu0 %v2688
        %2753 = vmatpush.xpose.msra.mxu0 %v2686
        %2754 = vmatpush.xpose.msra.mxu0 %v2684
        %2755 = vmatpush.xpose.msra.mxu0 %v2682
        %2756 = vmatpush.xpose.msra.mxu0 %v2680
        %2757 = vmatpush.xpose.msra.mxu0 %v2678
        %2758 = vmatmul.f32.gmra.mxu0 %v2614
        %v2759 = vpop.f32.mrf.mxu0
        %v2760 = vadd.f32 0.0, %v2759
        %2761 = vmatmul.f32.gmra.mxu0 %v2616
        %v2762 = vpop.f32.mrf.mxu0
        %v2763 = vadd.f32 0.0, %v2762
        %2764 = vmatmul.f32.gmra.mxu0 %v2618
        %v2765 = vpop.f32.mrf.mxu0
        %v2766 = vadd.f32 0.0, %v2765
        %2767 = vmatmul.f32.gmra.mxu0 %v2620
        %v2768 = vpop.f32.mrf.mxu0
        %v2769 = vadd.f32 0.0, %v2768
        %2770 = vmatmul.f32.gmra.mxu0 %v2622
        %v2771 = vpop.f32.mrf.mxu0
        %v2772 = vadd.f32 0.0, %v2771
        %2773 = vmatmul.f32.gmra.mxu0 %v2624
        %v2774 = vpop.f32.mrf.mxu0
        %v2775 = vadd.f32 0.0, %v2774
        %2776 = vmatmul.f32.gmra.mxu0 %v2626
        %v2777 = vpop.f32.mrf.mxu0
        %v2778 = vadd.f32 0.0, %v2777
        %2779 = vmatmul.f32.gmra.mxu0 %v2628
        %v2780 = vpop.f32.mrf.mxu0
        %v2781 = vadd.f32 0.0, %v2780
        %2782 = vmatmul.f32.gmra.mxu0 %v2630
        %v2783 = vpop.f32.mrf.mxu0
        %v2784 = vadd.f32 0.0, %v2783
        %2785 = vmatmul.f32.gmra.mxu0 %v2632
        %v2786 = vpop.f32.mrf.mxu0
        %v2787 = vadd.f32 0.0, %v2786
        %2788 = vmatmul.f32.gmra.mxu0 %v2634
        %v2789 = vpop.f32.mrf.mxu0
        %v2790 = vadd.f32 0.0, %v2789
        %2791 = vmatmul.f32.gmra.mxu0 %v2636
        %v2792 = vpop.f32.mrf.mxu0
        %v2793 = vadd.f32 0.0, %v2792
        %2794 = vmatmul.f32.gmra.mxu0 %v2638
        %v2795 = vpop.f32.mrf.mxu0
        %v2796 = vadd.f32 0.0, %v2795
        %2797 = vmatmul.f32.gmra.mxu0 %v2640
        %v2798 = vpop.f32.mrf.mxu0
        %v2799 = vadd.f32 0.0, %v2798
        %2800 = vmatmul.f32.gmra.mxu0 %v2642
        %v2801 = vpop.f32.mrf.mxu0
        %v2802 = vadd.f32 0.0, %v2801
        %2803 = vmatmul.f32.gmra.mxu0 %v2644
        %v2804 = vpop.f32.mrf.mxu0
        %v2805 = vadd.f32 0.0, %v2804
        %2806 = vmatmul.f32.gmra.mxu0 %v2646
        %v2807 = vpop.f32.mrf.mxu0
        %v2808 = vadd.f32 0.0, %v2807
        %2809 = vmatmul.f32.gmra.mxu0 %v2648
        %v2810 = vpop.f32.mrf.mxu0
        %v2811 = vadd.f32 0.0, %v2810
        %2812 = vmatmul.f32.gmra.mxu0 %v2650
        %v2813 = vpop.f32.mrf.mxu0
        %v2814 = vadd.f32 0.0, %v2813
        %2815 = vmatmul.f32.gmra.mxu0 %v2652
        %v2816 = vpop.f32.mrf.mxu0
        %v2817 = vadd.f32 0.0, %v2816
        %2818 = vmatmul.f32.gmra.mxu0 %v2654
        %v2819 = vpop.f32.mrf.mxu0
        %v2820 = vadd.f32 0.0, %v2819
        %2821 = vmatmul.f32.gmra.mxu0 %v2656
        %v2822 = vpop.f32.mrf.mxu0
        %v2823 = vadd.f32 0.0, %v2822
        %2824 = vmatmul.f32.gmra.mxu0 %v2658
        %v2825 = vpop.f32.mrf.mxu0
        %v2826 = vadd.f32 0.0, %v2825
        %2827 = vmatmul.f32.gmra.mxu0 %v2660
        %v2828 = vpop.f32.mrf.mxu0
        %v2829 = vadd.f32 0.0, %v2828
        %2830 = vmatmul.f32.gmra.mxu0 %v2662
        %v2831 = vpop.f32.mrf.mxu0
        %v2832 = vadd.f32 0.0, %v2831
        %2833 = vmatmul.f32.gmra.mxu0 %v2664
        %v2834 = vpop.f32.mrf.mxu0
        %v2835 = vadd.f32 0.0, %v2834
        %2836 = vmatmul.f32.gmra.mxu0 %v2666
        %v2837 = vpop.f32.mrf.mxu0
        %v2838 = vadd.f32 0.0, %v2837
        %2839 = vmatmul.f32.gmra.mxu0 %v2668
        %v2840 = vpop.f32.mrf.mxu0
        %v2841 = vadd.f32 0.0, %v2840
        %2842 = vmatmul.f32.gmra.mxu0 %v2670
        %v2843 = vpop.f32.mrf.mxu0
        %v2844 = vadd.f32 0.0, %v2843
        %2845 = vmatmul.f32.gmra.mxu0 %v2672
        %v2846 = vpop.f32.mrf.mxu0
        %v2847 = vadd.f32 0.0, %v2846
        %2848 = vmatmul.f32.gmra.mxu0 %v2674
        %v2849 = vpop.f32.mrf.mxu0
        %v2850 = vadd.f32 0.0, %v2849
        %2851 = vmatmul.f32.gmra.mxu0 %v2676
        %v2852 = vpop.f32.mrf.mxu0
        %v2853 = vadd.f32 0.0, %v2852
        %2854 = vdwg.mxu0
        %2855 = vmatpush.xpose.msra.mxu0 %v2740
        %2856 = vmatpush.xpose.msra.mxu0 %v2738
        %2857 = vmatpush.xpose.msra.mxu0 %v2736
        %2858 = vmatpush.xpose.msra.mxu0 %v2734
        %2859 = vmatpush.xpose.msra.mxu0 %v2732
        %2860 = vmatpush.xpose.msra.mxu0 %v2730
        %2861 = vmatpush.xpose.msra.mxu0 %v2728
        %2862 = vmatpush.xpose.msra.mxu0 %v2726
        %2863 = vmatpush.xpose.msra.mxu0 %v2724
        %2864 = vmatpush.xpose.msra.mxu0 %v2722
        %2865 = vmatpush.xpose.msra.mxu0 %v2720
        %2866 = vmatpush.xpose.msra.mxu0 %v2718
        %2867 = vmatpush.xpose.msra.mxu0 %v2716
        %2868 = vmatpush.xpose.msra.mxu0 %v2714
        %2869 = vmatpush.xpose.msra.mxu0 %v2712
        %2870 = vmatpush.xpose.msra.mxu0 %v2710
        %2871 = vmatmul.f32.gmra.mxu0 %v2614
        %v2872 = vpop.f32.mrf.mxu0
        %v2873 = vadd.f32 0.0, %v2872
        %2874 = vmatmul.f32.gmra.mxu0 %v2616
        %v2875 = vpop.f32.mrf.mxu0
        %v2876 = vadd.f32 0.0, %v2875
        %2877 = vmatmul.f32.gmra.mxu0 %v2618
        %v2878 = vpop.f32.mrf.mxu0
        %v2879 = vadd.f32 0.0, %v2878
        %2880 = vmatmul.f32.gmra.mxu0 %v2620
        %v2881 = vpop.f32.mrf.mxu0
        %v2882 = vadd.f32 0.0, %v2881
        %2883 = vmatmul.f32.gmra.mxu0 %v2622
        %v2884 = vpop.f32.mrf.mxu0
        %v2885 = vadd.f32 0.0, %v2884
        %2886 = vmatmul.f32.gmra.mxu0 %v2624
        %v2887 = vpop.f32.mrf.mxu0
        %v2888 = vadd.f32 0.0, %v2887
        %2889 = vmatmul.f32.gmra.mxu0 %v2626
        %v2890 = vpop.f32.mrf.mxu0
        %v2891 = vadd.f32 0.0, %v2890
        %2892 = vmatmul.f32.gmra.mxu0 %v2628
        %v2893 = vpop.f32.mrf.mxu0
        %v2894 = vadd.f32 0.0, %v2893
        %2895 = vmatmul.f32.gmra.mxu0 %v2630
        %v2896 = vpop.f32.mrf.mxu0
        %v2897 = vadd.f32 0.0, %v2896
        %2898 = vmatmul.f32.gmra.mxu0 %v2632
        %v2899 = vpop.f32.mrf.mxu0
        %v2900 = vadd.f32 0.0, %v2899
        %2901 = vmatmul.f32.gmra.mxu0 %v2634
        %v2902 = vpop.f32.mrf.mxu0
        %v2903 = vadd.f32 0.0, %v2902
        %2904 = vmatmul.f32.gmra.mxu0 %v2636
        %v2905 = vpop.f32.mrf.mxu0
        %v2906 = vadd.f32 0.0, %v2905
        %2907 = vmatmul.f32.gmra.mxu0 %v2638
        %v2908 = vpop.f32.mrf.mxu0
        %v2909 = vadd.f32 0.0, %v2908
        %2910 = vmatmul.f32.gmra.mxu0 %v2640
        %v2911 = vpop.f32.mrf.mxu0
        %v2912 = vadd.f32 0.0, %v2911
        %2913 = vmatmul.f32.gmra.mxu0 %v2642
        %v2914 = vpop.f32.mrf.mxu0
        %v2915 = vadd.f32 0.0, %v2914
        %2916 = vmatmul.f32.gmra.mxu0 %v2644
        %v2917 = vpop.f32.mrf.mxu0
        %v2918 = vadd.f32 0.0, %v2917
        %2919 = vmatmul.f32.gmra.mxu0 %v2646
        %v2920 = vpop.f32.mrf.mxu0
        %v2921 = vadd.f32 0.0, %v2920
        %2922 = vmatmul.f32.gmra.mxu0 %v2648
        %v2923 = vpop.f32.mrf.mxu0
        %v2924 = vadd.f32 0.0, %v2923
        %2925 = vmatmul.f32.gmra.mxu0 %v2650
        %v2926 = vpop.f32.mrf.mxu0
        %v2927 = vadd.f32 0.0, %v2926
        %2928 = vmatmul.f32.gmra.mxu0 %v2652
        %v2929 = vpop.f32.mrf.mxu0
        %v2930 = vadd.f32 0.0, %v2929
        %2931 = vmatmul.f32.gmra.mxu0 %v2654
        %v2932 = vpop.f32.mrf.mxu0
        %v2933 = vadd.f32 0.0, %v2932
        %2934 = vmatmul.f32.gmra.mxu0 %v2656
        %v2935 = vpop.f32.mrf.mxu0
        %v2936 = vadd.f32 0.0, %v2935
        %2937 = vmatmul.f32.gmra.mxu0 %v2658
        %v2938 = vpop.f32.mrf.mxu0
        %v2939 = vadd.f32 0.0, %v2938
        %2940 = vmatmul.f32.gmra.mxu0 %v2660
        %v2941 = vpop.f32.mrf.mxu0
        %v2942 = vadd.f32 0.0, %v2941
        %2943 = vmatmul.f32.gmra.mxu0 %v2662
        %v2944 = vpop.f32.mrf.mxu0
        %v2945 = vadd.f32 0.0, %v2944
        %2946 = vmatmul.f32.gmra.mxu0 %v2664
        %v2947 = vpop.f32.mrf.mxu0
        %v2948 = vadd.f32 0.0, %v2947
        %2949 = vmatmul.f32.gmra.mxu0 %v2666
        %v2950 = vpop.f32.mrf.mxu0
        %v2951 = vadd.f32 0.0, %v2950
        %2952 = vmatmul.f32.gmra.mxu0 %v2668
        %v2953 = vpop.f32.mrf.mxu0
        %v2954 = vadd.f32 0.0, %v2953
        %2955 = vmatmul.f32.gmra.mxu0 %v2670
        %v2956 = vpop.f32.mrf.mxu0
        %v2957 = vadd.f32 0.0, %v2956
        %2958 = vmatmul.f32.gmra.mxu0 %v2672
        %v2959 = vpop.f32.mrf.mxu0
        %v2960 = vadd.f32 0.0, %v2959
        %2961 = vmatmul.f32.gmra.mxu0 %v2674
        %v2962 = vpop.f32.mrf.mxu0
        %v2963 = vadd.f32 0.0, %v2962
        %2964 = vmatmul.f32.gmra.mxu0 %v2676
        %v2965 = vpop.f32.mrf.mxu0
        %v2966 = vadd.f32 0.0, %v2965
        %2967 = vdwg.mxu0
        %v2968 = vsel %vm793, %v2760, 0.0
        %v2969 = vsel %vm794, %v2873, 0.0
        %v2970 = vsel %vm795, %v2763, 0.0
        %v2971 = vsel %vm796, %v2876, 0.0
        %v2972 = vsel %vm797, %v2766, 0.0
        %v2973 = vsel %vm798, %v2879, 0.0
        %v2974 = vsel %vm799, %v2769, 0.0
        %v2975 = vsel %vm800, %v2882, 0.0
        %v2976 = vsel %vm801, %v2772, 0.0
        %v2977 = vsel %vm802, %v2885, 0.0
        %v2978 = vsel %vm803, %v2775, 0.0
        %v2979 = vsel %vm804, %v2888, 0.0
        %v2980 = vsel %vm805, %v2778, 0.0
        %v2981 = vsel %vm806, %v2891, 0.0
        %v2982 = vsel %vm807, %v2781, 0.0
        %v2983 = vsel %vm808, %v2894, 0.0
        %v2984 = vsel %vm809, %v2784, 0.0
        %v2985 = vsel %vm810, %v2897, 0.0
        %v2986 = vsel %vm811, %v2787, 0.0
        %v2987 = vsel %vm812, %v2900, 0.0
        %v2988 = vsel %vm813, %v2790, 0.0
        %v2989 = vsel %vm814, %v2903, 0.0
        %v2990 = vsel %vm815, %v2793, 0.0
        %v2991 = vsel %vm816, %v2906, 0.0
        %v2992 = vsel %vm817, %v2796, 0.0
        %v2993 = vsel %vm818, %v2909, 0.0
        %v2994 = vsel %vm819, %v2799, 0.0
        %v2995 = vsel %vm820, %v2912, 0.0
        %v2996 = vsel %vm821, %v2802, 0.0
        %v2997 = vsel %vm822, %v2915, 0.0
        %v2998 = vsel %vm823, %v2805, 0.0
        %v2999 = vsel %vm824, %v2918, 0.0
        %v3000 = vsel %vm825, %v2808, 0.0
        %v3001 = vsel %vm826, %v2921, 0.0
        %v3002 = vsel %vm827, %v2811, 0.0
        %v3003 = vsel %vm828, %v2924, 0.0
        %v3004 = vsel %vm829, %v2814, 0.0
        %v3005 = vsel %vm830, %v2927, 0.0
        %v3006 = vsel %vm831, %v2817, 0.0
        %v3007 = vsel %vm832, %v2930, 0.0
        %v3008 = vsel %vm833, %v2820, 0.0
        %v3009 = vsel %vm834, %v2933, 0.0
        %v3010 = vsel %vm835, %v2823, 0.0
        %v3011 = vsel %vm836, %v2936, 0.0
        %v3012 = vsel %vm837, %v2826, 0.0
        %v3013 = vsel %vm838, %v2939, 0.0
        %v3014 = vsel %vm839, %v2829, 0.0
        %v3015 = vsel %vm840, %v2942, 0.0
        %v3016 = vsel %vm841, %v2832, 0.0
        %v3017 = vsel %vm842, %v2945, 0.0
        %v3018 = vsel %vm843, %v2835, 0.0
        %v3019 = vsel %vm844, %v2948, 0.0
        %v3020 = vsel %vm845, %v2838, 0.0
        %v3021 = vsel %vm846, %v2951, 0.0
        %v3022 = vsel %vm847, %v2841, 0.0
        %v3023 = vsel %vm848, %v2954, 0.0
        %v3024 = vsel %vm849, %v2844, 0.0
        %v3025 = vsel %vm850, %v2957, 0.0
        %v3026 = vsel %vm851, %v2847, 0.0
        %v3027 = vsel %vm852, %v2960, 0.0
        %v3028 = vsel %vm853, %v2850, 0.0
        %v3029 = vsel %vm854, %v2963, 0.0
        %v3030 = vsel %vm855, %v2853, 0.0
        %v3031 = vsel %vm856, %v2966, 0.0
        %s3032 = scalar_lea.vmem [#allocation2], 32
        %v3033 = vld [vmem:[%s3032] sm:$0xff]
        %v3034 = vld [vmem:[%s3032 + $0x8] sm:$0xff]
        %v3035 = vld [vmem:[%s3032 + $0x10] sm:$0xff]
        %v3036 = vld [vmem:[%s3032 + $0x18] sm:$0xff]
        %3037 = vmatpush.msra.mxu0 0.0
        %3038 = vmatpush.msra.mxu0 0.0
        %3039 = vmatpush.msra.mxu0 0.0
        %3040 = vmatpush.msra.mxu0 0.0
        %3041 = vmatpush.msra.mxu0 0.0
        %3042 = vmatpush.msra.mxu0 0.0
        %3043 = vmatpush.msra.mxu0 0.0
        %3044 = vmatpush.msra.mxu0 0.0
        %3045 = vmatpush.msra.mxu0 0.0
        %3046 = vmatpush.msra.mxu0 0.0
        %3047 = vmatpush.msra.mxu0 0.0
        %3048 = vmatpush.msra.mxu0 0.0
        %3049 = vmatpush.msra.mxu0 %v3036
        %3050 = vmatpush.msra.mxu0 %v3035
        %3051 = vmatpush.msra.mxu0 %v3034
        %3052 = vmatpush.msra.mxu0 %v3033
        %3053 = vmatmul.f32.gmra.mxu0 %v2614
        %v3054 = vpop.f32.mrf.mxu0
        %v3055 = vadd.f32 0.0, %v3054
        %3056 = vmatmul.f32.gmra.mxu0 %v2616
        %v3057 = vpop.f32.mrf.mxu0
        %v3058 = vadd.f32 0.0, %v3057
        %3059 = vmatmul.f32.gmra.mxu0 %v2618
        %v3060 = vpop.f32.mrf.mxu0
        %v3061 = vadd.f32 0.0, %v3060
        %3062 = vmatmul.f32.gmra.mxu0 %v2620
        %v3063 = vpop.f32.mrf.mxu0
        %v3064 = vadd.f32 0.0, %v3063
        %3065 = vmatmul.f32.gmra.mxu0 %v2622
        %v3066 = vpop.f32.mrf.mxu0
        %v3067 = vadd.f32 0.0, %v3066
        %3068 = vmatmul.f32.gmra.mxu0 %v2624
        %v3069 = vpop.f32.mrf.mxu0
        %v3070 = vadd.f32 0.0, %v3069
        %3071 = vmatmul.f32.gmra.mxu0 %v2626
        %v3072 = vpop.f32.mrf.mxu0
        %v3073 = vadd.f32 0.0, %v3072
        %3074 = vmatmul.f32.gmra.mxu0 %v2628
        %v3075 = vpop.f32.mrf.mxu0
        %v3076 = vadd.f32 0.0, %v3075
        %3077 = vmatmul.f32.gmra.mxu0 %v2630
        %v3078 = vpop.f32.mrf.mxu0
        %v3079 = vadd.f32 0.0, %v3078
        %3080 = vmatmul.f32.gmra.mxu0 %v2632
        %v3081 = vpop.f32.mrf.mxu0
        %v3082 = vadd.f32 0.0, %v3081
        %3083 = vmatmul.f32.gmra.mxu0 %v2634
        %v3084 = vpop.f32.mrf.mxu0
        %v3085 = vadd.f32 0.0, %v3084
        %3086 = vmatmul.f32.gmra.mxu0 %v2636
        %v3087 = vpop.f32.mrf.mxu0
        %v3088 = vadd.f32 0.0, %v3087
        %3089 = vmatmul.f32.gmra.mxu0 %v2638
        %v3090 = vpop.f32.mrf.mxu0
        %v3091 = vadd.f32 0.0, %v3090
        %3092 = vmatmul.f32.gmra.mxu0 %v2640
        %v3093 = vpop.f32.mrf.mxu0
        %v3094 = vadd.f32 0.0, %v3093
        %3095 = vmatmul.f32.gmra.mxu0 %v2642
        %v3096 = vpop.f32.mrf.mxu0
        %v3097 = vadd.f32 0.0, %v3096
        %3098 = vmatmul.f32.gmra.mxu0 %v2644
        %v3099 = vpop.f32.mrf.mxu0
        %v3100 = vadd.f32 0.0, %v3099
        %3101 = vmatmul.f32.gmra.mxu0 %v2646
        %v3102 = vpop.f32.mrf.mxu0
        %v3103 = vadd.f32 0.0, %v3102
        %3104 = vmatmul.f32.gmra.mxu0 %v2648
        %v3105 = vpop.f32.mrf.mxu0
        %v3106 = vadd.f32 0.0, %v3105
        %3107 = vmatmul.f32.gmra.mxu0 %v2650
        %v3108 = vpop.f32.mrf.mxu0
        %v3109 = vadd.f32 0.0, %v3108
        %3110 = vmatmul.f32.gmra.mxu0 %v2652
        %v3111 = vpop.f32.mrf.mxu0
        %v3112 = vadd.f32 0.0, %v3111
        %3113 = vmatmul.f32.gmra.mxu0 %v2654
        %v3114 = vpop.f32.mrf.mxu0
        %v3115 = vadd.f32 0.0, %v3114
        %3116 = vmatmul.f32.gmra.mxu0 %v2656
        %v3117 = vpop.f32.mrf.mxu0
        %v3118 = vadd.f32 0.0, %v3117
        %3119 = vmatmul.f32.gmra.mxu0 %v2658
        %v3120 = vpop.f32.mrf.mxu0
        %v3121 = vadd.f32 0.0, %v3120
        %3122 = vmatmul.f32.gmra.mxu0 %v2660
        %v3123 = vpop.f32.mrf.mxu0
        %v3124 = vadd.f32 0.0, %v3123
        %3125 = vmatmul.f32.gmra.mxu0 %v2662
        %v3126 = vpop.f32.mrf.mxu0
        %v3127 = vadd.f32 0.0, %v3126
        %3128 = vmatmul.f32.gmra.mxu0 %v2664
        %v3129 = vpop.f32.mrf.mxu0
        %v3130 = vadd.f32 0.0, %v3129
        %3131 = vmatmul.f32.gmra.mxu0 %v2666
        %v3132 = vpop.f32.mrf.mxu0
        %v3133 = vadd.f32 0.0, %v3132
        %3134 = vmatmul.f32.gmra.mxu0 %v2668
        %v3135 = vpop.f32.mrf.mxu0
        %v3136 = vadd.f32 0.0, %v3135
        %3137 = vmatmul.f32.gmra.mxu0 %v2670
        %v3138 = vpop.f32.mrf.mxu0
        %v3139 = vadd.f32 0.0, %v3138
        %3140 = vmatmul.f32.gmra.mxu0 %v2672
        %v3141 = vpop.f32.mrf.mxu0
        %v3142 = vadd.f32 0.0, %v3141
        %3143 = vmatmul.f32.gmra.mxu0 %v2674
        %v3144 = vpop.f32.mrf.mxu0
        %v3145 = vadd.f32 0.0, %v3144
        %3146 = vmatmul.f32.gmra.mxu0 %v2676
        %v3147 = vpop.f32.mrf.mxu0
        %v3148 = vadd.f32 0.0, %v3147
        %3149 = vdwg.mxu0
        %3150 = vmatpush.msra.mxu0 %v2469
        %3151 = vmatpush.msra.mxu0 %v2468
        %3152 = vmatpush.msra.mxu0 %v2467
        %3153 = vmatpush.msra.mxu0 %v2466
        %3154 = vmatpush.msra.mxu0 %v2465
        %3155 = vmatpush.msra.mxu0 %v2464
        %3156 = vmatpush.msra.mxu0 %v2463
        %3157 = vmatpush.msra.mxu0 %v2462
        %3158 = vmatpush.msra.mxu0 %v2461
        %3159 = vmatpush.msra.mxu0 %v2460
        %3160 = vmatpush.msra.mxu0 %v2459
        %3161 = vmatpush.msra.mxu0 %v2458
        %3162 = vmatpush.msra.mxu0 %v2457
        %3163 = vmatpush.msra.mxu0 %v2456
        %3164 = vmatpush.msra.mxu0 %v2455
        %3165 = vmatpush.msra.mxu0 %v2454
        %3166 = vmatmul.f32.gmra.mxu0 %v2968
        %v3167 = vpop.f32.mrf.mxu0
        %v3168 = vadd.f32 %v3055, %v3167
        %3169 = vmatmul.f32.gmra.mxu0 %v2970
        %v3170 = vpop.f32.mrf.mxu0
        %v3171 = vadd.f32 %v3058, %v3170
        %3172 = vmatmul.f32.gmra.mxu0 %v2972
        %v3173 = vpop.f32.mrf.mxu0
        %v3174 = vadd.f32 %v3061, %v3173
        %3175 = vmatmul.f32.gmra.mxu0 %v2974
        %v3176 = vpop.f32.mrf.mxu0
        %v3177 = vadd.f32 %v3064, %v3176
        %3178 = vmatmul.f32.gmra.mxu0 %v2976
        %v3179 = vpop.f32.mrf.mxu0
        %v3180 = vadd.f32 %v3067, %v3179
        %3181 = vmatmul.f32.gmra.mxu0 %v2978
        %v3182 = vpop.f32.mrf.mxu0
        %v3183 = vadd.f32 %v3070, %v3182
        %3184 = vmatmul.f32.gmra.mxu0 %v2980
        %v3185 = vpop.f32.mrf.mxu0
        %v3186 = vadd.f32 %v3073, %v3185
        %3187 = vmatmul.f32.gmra.mxu0 %v2982
        %v3188 = vpop.f32.mrf.mxu0
        %v3189 = vadd.f32 %v3076, %v3188
        %3190 = vmatmul.f32.gmra.mxu0 %v2984
        %v3191 = vpop.f32.mrf.mxu0
        %v3192 = vadd.f32 %v3079, %v3191
        %3193 = vmatmul.f32.gmra.mxu0 %v2986
        %v3194 = vpop.f32.mrf.mxu0
        %v3195 = vadd.f32 %v3082, %v3194
        %3196 = vmatmul.f32.gmra.mxu0 %v2988
        %v3197 = vpop.f32.mrf.mxu0
        %v3198 = vadd.f32 %v3085, %v3197
        %3199 = vmatmul.f32.gmra.mxu0 %v2990
        %v3200 = vpop.f32.mrf.mxu0
        %v3201 = vadd.f32 %v3088, %v3200
        %3202 = vmatmul.f32.gmra.mxu0 %v2992
        %v3203 = vpop.f32.mrf.mxu0
        %v3204 = vadd.f32 %v3091, %v3203
        %3205 = vmatmul.f32.gmra.mxu0 %v2994
        %v3206 = vpop.f32.mrf.mxu0
        %v3207 = vadd.f32 %v3094, %v3206
        %3208 = vmatmul.f32.gmra.mxu0 %v2996
        %v3209 = vpop.f32.mrf.mxu0
        %v3210 = vadd.f32 %v3097, %v3209
        %3211 = vmatmul.f32.gmra.mxu0 %v2998
        %v3212 = vpop.f32.mrf.mxu0
        %v3213 = vadd.f32 %v3100, %v3212
        %3214 = vmatmul.f32.gmra.mxu0 %v3000
        %v3215 = vpop.f32.mrf.mxu0
        %v3216 = vadd.f32 %v3103, %v3215
        %3217 = vmatmul.f32.gmra.mxu0 %v3002
        %v3218 = vpop.f32.mrf.mxu0
        %v3219 = vadd.f32 %v3106, %v3218
        %3220 = vmatmul.f32.gmra.mxu0 %v3004
        %v3221 = vpop.f32.mrf.mxu0
        %v3222 = vadd.f32 %v3109, %v3221
        %3223 = vmatmul.f32.gmra.mxu0 %v3006
        %v3224 = vpop.f32.mrf.mxu0
        %v3225 = vadd.f32 %v3112, %v3224
        %3226 = vmatmul.f32.gmra.mxu0 %v3008
        %v3227 = vpop.f32.mrf.mxu0
        %v3228 = vadd.f32 %v3115, %v3227
        %3229 = vmatmul.f32.gmra.mxu0 %v3010
        %v3230 = vpop.f32.mrf.mxu0
        %v3231 = vadd.f32 %v3118, %v3230
        %3232 = vmatmul.f32.gmra.mxu0 %v3012
        %v3233 = vpop.f32.mrf.mxu0
        %v3234 = vadd.f32 %v3121, %v3233
        %3235 = vmatmul.f32.gmra.mxu0 %v3014
        %v3236 = vpop.f32.mrf.mxu0
        %v3237 = vadd.f32 %v3124, %v3236
        %3238 = vmatmul.f32.gmra.mxu0 %v3016
        %v3239 = vpop.f32.mrf.mxu0
        %v3240 = vadd.f32 %v3127, %v3239
        %3241 = vmatmul.f32.gmra.mxu0 %v3018
        %v3242 = vpop.f32.mrf.mxu0
        %v3243 = vadd.f32 %v3130, %v3242
        %3244 = vmatmul.f32.gmra.mxu0 %v3020
        %v3245 = vpop.f32.mrf.mxu0
        %v3246 = vadd.f32 %v3133, %v3245
        %3247 = vmatmul.f32.gmra.mxu0 %v3022
        %v3248 = vpop.f32.mrf.mxu0
        %v3249 = vadd.f32 %v3136, %v3248
        %3250 = vmatmul.f32.gmra.mxu0 %v3024
        %v3251 = vpop.f32.mrf.mxu0
        %v3252 = vadd.f32 %v3139, %v3251
        %3253 = vmatmul.f32.gmra.mxu0 %v3026
        %v3254 = vpop.f32.mrf.mxu0
        %v3255 = vadd.f32 %v3142, %v3254
        %3256 = vmatmul.f32.gmra.mxu0 %v3028
        %v3257 = vpop.f32.mrf.mxu0
        %v3258 = vadd.f32 %v3145, %v3257
        %3259 = vmatmul.f32.gmra.mxu0 %v3030
        %v3260 = vpop.f32.mrf.mxu0
        %v3261 = vadd.f32 %v3148, %v3260
        %3262 = vdwg.mxu0
        %3263 = vmatpush.msra.mxu0 %v2485
        %3264 = vmatpush.msra.mxu0 %v2484
        %3265 = vmatpush.msra.mxu0 %v2483
        %3266 = vmatpush.msra.mxu0 %v2482
        %3267 = vmatpush.msra.mxu0 %v2481
        %3268 = vmatpush.msra.mxu0 %v2480
        %3269 = vmatpush.msra.mxu0 %v2479
        %3270 = vmatpush.msra.mxu0 %v2478
        %3271 = vmatpush.msra.mxu0 %v2477
        %3272 = vmatpush.msra.mxu0 %v2476
        %3273 = vmatpush.msra.mxu0 %v2475
        %3274 = vmatpush.msra.mxu0 %v2474
        %3275 = vmatpush.msra.mxu0 %v2473
        %3276 = vmatpush.msra.mxu0 %v2472
        %3277 = vmatpush.msra.mxu0 %v2471
        %3278 = vmatpush.msra.mxu0 %v2470
        %3279 = vmatmul.f32.gmra.mxu0 %v2969
        %v3280 = vpop.f32.mrf.mxu0
        %v3281 = vadd.f32 %v3168, %v3280
        %3282 = vmatmul.f32.gmra.mxu0 %v2971
        %v3283 = vpop.f32.mrf.mxu0
        %v3284 = vadd.f32 %v3171, %v3283
        %3285 = vmatmul.f32.gmra.mxu0 %v2973
        %v3286 = vpop.f32.mrf.mxu0
        %v3287 = vadd.f32 %v3174, %v3286
        %3288 = vmatmul.f32.gmra.mxu0 %v2975
        %v3289 = vpop.f32.mrf.mxu0
        %v3290 = vadd.f32 %v3177, %v3289
        %3291 = vmatmul.f32.gmra.mxu0 %v2977
        %v3292 = vpop.f32.mrf.mxu0
        %v3293 = vadd.f32 %v3180, %v3292
        %3294 = vmatmul.f32.gmra.mxu0 %v2979
        %v3295 = vpop.f32.mrf.mxu0
        %v3296 = vadd.f32 %v3183, %v3295
        %3297 = vmatmul.f32.gmra.mxu0 %v2981
        %v3298 = vpop.f32.mrf.mxu0
        %v3299 = vadd.f32 %v3186, %v3298
        %3300 = vmatmul.f32.gmra.mxu0 %v2983
        %v3301 = vpop.f32.mrf.mxu0
        %v3302 = vadd.f32 %v3189, %v3301
        %3303 = vmatmul.f32.gmra.mxu0 %v2985
        %v3304 = vpop.f32.mrf.mxu0
        %v3305 = vadd.f32 %v3192, %v3304
        %3306 = vmatmul.f32.gmra.mxu0 %v2987
        %v3307 = vpop.f32.mrf.mxu0
        %v3308 = vadd.f32 %v3195, %v3307
        %3309 = vmatmul.f32.gmra.mxu0 %v2989
        %v3310 = vpop.f32.mrf.mxu0
        %v3311 = vadd.f32 %v3198, %v3310
        %3312 = vmatmul.f32.gmra.mxu0 %v2991
        %v3313 = vpop.f32.mrf.mxu0
        %v3314 = vadd.f32 %v3201, %v3313
        %3315 = vmatmul.f32.gmra.mxu0 %v2993
        %v3316 = vpop.f32.mrf.mxu0
        %v3317 = vadd.f32 %v3204, %v3316
        %3318 = vmatmul.f32.gmra.mxu0 %v2995
        %v3319 = vpop.f32.mrf.mxu0
        %v3320 = vadd.f32 %v3207, %v3319
        %3321 = vmatmul.f32.gmra.mxu0 %v2997
        %v3322 = vpop.f32.mrf.mxu0
        %v3323 = vadd.f32 %v3210, %v3322
        %3324 = vmatmul.f32.gmra.mxu0 %v2999
        %v3325 = vpop.f32.mrf.mxu0
        %v3326 = vadd.f32 %v3213, %v3325
        %3327 = vmatmul.f32.gmra.mxu0 %v3001
        %v3328 = vpop.f32.mrf.mxu0
        %v3329 = vadd.f32 %v3216, %v3328
        %3330 = vmatmul.f32.gmra.mxu0 %v3003
        %v3331 = vpop.f32.mrf.mxu0
        %v3332 = vadd.f32 %v3219, %v3331
        %3333 = vmatmul.f32.gmra.mxu0 %v3005
        %v3334 = vpop.f32.mrf.mxu0
        %v3335 = vadd.f32 %v3222, %v3334
        %3336 = vmatmul.f32.gmra.mxu0 %v3007
        %v3337 = vpop.f32.mrf.mxu0
        %v3338 = vadd.f32 %v3225, %v3337
        %3339 = vmatmul.f32.gmra.mxu0 %v3009
        %v3340 = vpop.f32.mrf.mxu0
        %v3341 = vadd.f32 %v3228, %v3340
        %3342 = vmatmul.f32.gmra.mxu0 %v3011
        %v3343 = vpop.f32.mrf.mxu0
        %v3344 = vadd.f32 %v3231, %v3343
        %3345 = vmatmul.f32.gmra.mxu0 %v3013
        %v3346 = vpop.f32.mrf.mxu0
        %v3347 = vadd.f32 %v3234, %v3346
        %3348 = vmatmul.f32.gmra.mxu0 %v3015
        %v3349 = vpop.f32.mrf.mxu0
        %v3350 = vadd.f32 %v3237, %v3349
        %3351 = vmatmul.f32.gmra.mxu0 %v3017
        %v3352 = vpop.f32.mrf.mxu0
        %v3353 = vadd.f32 %v3240, %v3352
        %3354 = vmatmul.f32.gmra.mxu0 %v3019
        %v3355 = vpop.f32.mrf.mxu0
        %v3356 = vadd.f32 %v3243, %v3355
        %3357 = vmatmul.f32.gmra.mxu0 %v3021
        %v3358 = vpop.f32.mrf.mxu0
        %v3359 = vadd.f32 %v3246, %v3358
        %3360 = vmatmul.f32.gmra.mxu0 %v3023
        %v3361 = vpop.f32.mrf.mxu0
        %v3362 = vadd.f32 %v3249, %v3361
        %3363 = vmatmul.f32.gmra.mxu0 %v3025
        %v3364 = vpop.f32.mrf.mxu0
        %v3365 = vadd.f32 %v3252, %v3364
        %3366 = vmatmul.f32.gmra.mxu0 %v3027
        %v3367 = vpop.f32.mrf.mxu0
        %v3368 = vadd.f32 %v3255, %v3367
        %3369 = vmatmul.f32.gmra.mxu0 %v3029
        %v3370 = vpop.f32.mrf.mxu0
        %v3371 = vadd.f32 %v3258, %v3370
        %3372 = vmatmul.f32.gmra.mxu0 %v3031
        %v3373 = vpop.f32.mrf.mxu0
        %v3374 = vadd.f32 %v3261, %v3373
        %3375 = vdwg.mxu0
        %v3376 = vadd.f32 %v3281, 1e-06
        %v3377 = vadd.f32 %v3284, 1e-06
        %v3378 = vadd.f32 %v3287, 1e-06
        %v3379 = vadd.f32 %v3290, 1e-06
        %v3380 = vadd.f32 %v3293, 1e-06
        %v3381 = vadd.f32 %v3296, 1e-06
        %v3382 = vadd.f32 %v3299, 1e-06
        %v3383 = vadd.f32 %v3302, 1e-06
        %v3384 = vadd.f32 %v3305, 1e-06
        %v3385 = vadd.f32 %v3308, 1e-06
        %v3386 = vadd.f32 %v3311, 1e-06
        %v3387 = vadd.f32 %v3314, 1e-06
        %v3388 = vadd.f32 %v3317, 1e-06
        %v3389 = vadd.f32 %v3320, 1e-06
        %v3390 = vadd.f32 %v3323, 1e-06
        %v3391 = vadd.f32 %v3326, 1e-06
        %v3392 = vadd.f32 %v3329, 1e-06
        %v3393 = vadd.f32 %v3332, 1e-06
        %v3394 = vadd.f32 %v3335, 1e-06
        %v3395 = vadd.f32 %v3338, 1e-06
        %v3396 = vadd.f32 %v3341, 1e-06
        %v3397 = vadd.f32 %v3344, 1e-06
        %v3398 = vadd.f32 %v3347, 1e-06
        %v3399 = vadd.f32 %v3350, 1e-06
        %v3400 = vadd.f32 %v3353, 1e-06
        %v3401 = vadd.f32 %v3356, 1e-06
        %v3402 = vadd.f32 %v3359, 1e-06
        %v3403 = vadd.f32 %v3362, 1e-06
        %v3404 = vadd.f32 %v3365, 1e-06
        %v3405 = vadd.f32 %v3368, 1e-06
        %v3406 = vadd.f32 %v3371, 1e-06
        %v3407 = vadd.f32 %v3374, 1e-06
        %v3408 = vrcp.pop %v3376
        %v3409 = vrcp.pop %v3377
        %v3410 = vrcp.pop %v3378
        %v3411 = vrcp.pop %v3379
        %v3412 = vrcp.pop %v3380
        %v3413 = vrcp.pop %v3381
        %v3414 = vrcp.pop %v3382
        %v3415 = vrcp.pop %v3383
        %v3416 = vrcp.pop %v3384
        %v3417 = vrcp.pop %v3385
        %v3418 = vrcp.pop %v3386
        %v3419 = vrcp.pop %v3387
        %v3420 = vrcp.pop %v3388
        %v3421 = vrcp.pop %v3389
        %v3422 = vrcp.pop %v3390
        %v3423 = vrcp.pop %v3391
        %v3424 = vrcp.pop %v3392
        %v3425 = vrcp.pop %v3393
        %v3426 = vrcp.pop %v3394
        %v3427 = vrcp.pop %v3395
        %v3428 = vrcp.pop %v3396
        %v3429 = vrcp.pop %v3397
        %v3430 = vrcp.pop %v3398
        %v3431 = vrcp.pop %v3399
        %v3432 = vrcp.pop %v3400
        %v3433 = vrcp.pop %v3401
        %v3434 = vrcp.pop %v3402
        %v3435 = vrcp.pop %v3403
        %v3436 = vrcp.pop %v3404
        %v3437 = vrcp.pop %v3405
        %v3438 = vrcp.pop %v3406
        %v3439 = vrcp.pop %v3407
        %v3440 = vmul.f32 %v3376, %v3408
        %v3441 = vmul.f32 %v3377, %v3409
        %v3442 = vmul.f32 %v3378, %v3410
        %v3443 = vmul.f32 %v3379, %v3411
        %v3444 = vmul.f32 %v3380, %v3412
        %v3445 = vmul.f32 %v3381, %v3413
        %v3446 = vmul.f32 %v3382, %v3414
        %v3447 = vmul.f32 %v3383, %v3415
        %v3448 = vmul.f32 %v3384, %v3416
        %v3449 = vmul.f32 %v3385, %v3417
        %v3450 = vmul.f32 %v3386, %v3418
        %v3451 = vmul.f32 %v3387, %v3419
        %v3452 = vmul.f32 %v3388, %v3420
        %v3453 = vmul.f32 %v3389, %v3421
        %v3454 = vmul.f32 %v3390, %v3422
        %v3455 = vmul.f32 %v3391, %v3423
        %v3456 = vmul.f32 %v3392, %v3424
        %v3457 = vmul.f32 %v3393, %v3425
        %v3458 = vmul.f32 %v3394, %v3426
        %v3459 = vmul.f32 %v3395, %v3427
        %v3460 = vmul.f32 %v3396, %v3428
        %v3461 = vmul.f32 %v3397, %v3429
        %v3462 = vmul.f32 %v3398, %v3430
        %v3463 = vmul.f32 %v3399, %v3431
        %v3464 = vmul.f32 %v3400, %v3432
        %v3465 = vmul.f32 %v3401, %v3433
        %v3466 = vmul.f32 %v3402, %v3434
        %v3467 = vmul.f32 %v3403, %v3435
        %v3468 = vmul.f32 %v3404, %v3436
        %v3469 = vmul.f32 %v3405, %v3437
        %v3470 = vmul.f32 %v3406, %v3438
        %v3471 = vmul.f32 %v3407, %v3439
        %v3472 = vsub.f32 2.0, %v3440
        %v3473 = vsub.f32 2.0, %v3441
        %v3474 = vsub.f32 2.0, %v3442
        %v3475 = vsub.f32 2.0, %v3443
        %v3476 = vsub.f32 2.0, %v3444
        %v3477 = vsub.f32 2.0, %v3445
        %v3478 = vsub.f32 2.0, %v3446
        %v3479 = vsub.f32 2.0, %v3447
        %v3480 = vsub.f32 2.0, %v3448
        %v3481 = vsub.f32 2.0, %v3449
        %v3482 = vsub.f32 2.0, %v3450
        %v3483 = vsub.f32 2.0, %v3451
        %v3484 = vsub.f32 2.0, %v3452
        %v3485 = vsub.f32 2.0, %v3453
        %v3486 = vsub.f32 2.0, %v3454
        %v3487 = vsub.f32 2.0, %v3455
        %v3488 = vsub.f32 2.0, %v3456
        %v3489 = vsub.f32 2.0, %v3457
        %v3490 = vsub.f32 2.0, %v3458
        %v3491 = vsub.f32 2.0, %v3459
        %v3492 = vsub.f32 2.0, %v3460
        %v3493 = vsub.f32 2.0, %v3461
        %v3494 = vsub.f32 2.0, %v3462
        %v3495 = vsub.f32 2.0, %v3463
        %v3496 = vsub.f32 2.0, %v3464
        %v3497 = vsub.f32 2.0, %v3465
        %v3498 = vsub.f32 2.0, %v3466
        %v3499 = vsub.f32 2.0, %v3467
        %v3500 = vsub.f32 2.0, %v3468
        %v3501 = vsub.f32 2.0, %v3469
        %v3502 = vsub.f32 2.0, %v3470
        %v3503 = vsub.f32 2.0, %v3471
        %v3504 = vmul.f32 %v3408, %v3472
        %v3505 = vmul.f32 %v3409, %v3473
        %v3506 = vmul.f32 %v3410, %v3474
        %v3507 = vmul.f32 %v3411, %v3475
        %v3508 = vmul.f32 %v3412, %v3476
        %v3509 = vmul.f32 %v3413, %v3477
        %v3510 = vmul.f32 %v3414, %v3478
        %v3511 = vmul.f32 %v3415, %v3479
        %v3512 = vmul.f32 %v3416, %v3480
        %v3513 = vmul.f32 %v3417, %v3481
        %v3514 = vmul.f32 %v3418, %v3482
        %v3515 = vmul.f32 %v3419, %v3483
        %v3516 = vmul.f32 %v3420, %v3484
        %v3517 = vmul.f32 %v3421, %v3485
        %v3518 = vmul.f32 %v3422, %v3486
        %v3519 = vmul.f32 %v3423, %v3487
        %v3520 = vmul.f32 %v3424, %v3488
        %v3521 = vmul.f32 %v3425, %v3489
        %v3522 = vmul.f32 %v3426, %v3490
        %v3523 = vmul.f32 %v3427, %v3491
        %v3524 = vmul.f32 %v3428, %v3492
        %v3525 = vmul.f32 %v3429, %v3493
        %v3526 = vmul.f32 %v3430, %v3494
        %v3527 = vmul.f32 %v3431, %v3495
        %v3528 = vmul.f32 %v3432, %v3496
        %v3529 = vmul.f32 %v3433, %v3497
        %v3530 = vmul.f32 %v3434, %v3498
        %v3531 = vmul.f32 %v3435, %v3499
        %v3532 = vmul.f32 %v3436, %v3500
        %v3533 = vmul.f32 %v3437, %v3501
        %v3534 = vmul.f32 %v3438, %v3502
        %v3535 = vmul.f32 %v3439, %v3503
        %v3536 = vmax.f32 %v3504, -1.0
        %v3537 = vmax.f32 %v3505, -1.0
        %v3538 = vmax.f32 %v3506, -1.0
        %v3539 = vmax.f32 %v3507, -1.0
        %v3540 = vmax.f32 %v3508, -1.0
        %v3541 = vmax.f32 %v3509, -1.0
        %v3542 = vmax.f32 %v3510, -1.0
        %v3543 = vmax.f32 %v3511, -1.0
        %v3544 = vmax.f32 %v3512, -1.0
        %v3545 = vmax.f32 %v3513, -1.0
        %v3546 = vmax.f32 %v3514, -1.0
        %v3547 = vmax.f32 %v3515, -1.0
        %v3548 = vmax.f32 %v3516, -1.0
        %v3549 = vmax.f32 %v3517, -1.0
        %v3550 = vmax.f32 %v3518, -1.0
        %v3551 = vmax.f32 %v3519, -1.0
        %v3552 = vmax.f32 %v3520, -1.0
        %v3553 = vmax.f32 %v3521, -1.0
        %v3554 = vmax.f32 %v3522, -1.0
        %v3555 = vmax.f32 %v3523, -1.0
        %v3556 = vmax.f32 %v3524, -1.0
        %v3557 = vmax.f32 %v3525, -1.0
        %v3558 = vmax.f32 %v3526, -1.0
        %v3559 = vmax.f32 %v3527, -1.0
        %v3560 = vmax.f32 %v3528, -1.0
        %v3561 = vmax.f32 %v3529, -1.0
        %v3562 = vmax.f32 %v3530, -1.0
        %v3563 = vmax.f32 %v3531, -1.0
        %v3564 = vmax.f32 %v3532, -1.0
        %v3565 = vmax.f32 %v3533, -1.0
        %v3566 = vmax.f32 %v3534, -1.0
        %v3567 = vmax.f32 %v3535, -1.0
        %v3568 = vmin.f32 %v3536, 1.0
        %v3569 = vmin.f32 %v3537, 1.0
        %v3570 = vmin.f32 %v3538, 1.0
        %v3571 = vmin.f32 %v3539, 1.0
        %v3572 = vmin.f32 %v3540, 1.0
        %v3573 = vmin.f32 %v3541, 1.0
        %v3574 = vmin.f32 %v3542, 1.0
        %v3575 = vmin.f32 %v3543, 1.0
        %v3576 = vmin.f32 %v3544, 1.0
        %v3577 = vmin.f32 %v3545, 1.0
        %v3578 = vmin.f32 %v3546, 1.0
        %v3579 = vmin.f32 %v3547, 1.0
        %v3580 = vmin.f32 %v3548, 1.0
        %v3581 = vmin.f32 %v3549, 1.0
        %v3582 = vmin.f32 %v3550, 1.0
        %v3583 = vmin.f32 %v3551, 1.0
        %v3584 = vmin.f32 %v3552, 1.0
        %v3585 = vmin.f32 %v3553, 1.0
        %v3586 = vmin.f32 %v3554, 1.0
        %v3587 = vmin.f32 %v3555, 1.0
        %v3588 = vmin.f32 %v3556, 1.0
        %v3589 = vmin.f32 %v3557, 1.0
        %v3590 = vmin.f32 %v3558, 1.0
        %v3591 = vmin.f32 %v3559, 1.0
        %v3592 = vmin.f32 %v3560, 1.0
        %v3593 = vmin.f32 %v3561, 1.0
        %v3594 = vmin.f32 %v3562, 1.0
        %v3595 = vmin.f32 %v3563, 1.0
        %v3596 = vmin.f32 %v3564, 1.0
        %v3597 = vmin.f32 %v3565, 1.0
        %v3598 = vmin.f32 %v3566, 1.0
        %v3599 = vmin.f32 %v3567, 1.0
        %3601 = vset.pattern.permute.xlu0 32
        %3602 = vperm.xlu0 %3601, %v3568
        %v3603 = vpop.permute.xlu0 %3602
        %3606 = vset.pattern.permute.xlu0 32
        %3607 = vperm.xlu0 %3606, %v3569
        %v3608 = vpop.permute.xlu0 %3607
        %3611 = vset.pattern.permute.xlu0 32
        %3612 = vperm.xlu0 %3611, %v3570
        %v3613 = vpop.permute.xlu0 %3612
        %3616 = vset.pattern.permute.xlu0 32
        %3617 = vperm.xlu0 %3616, %v3571
        %v3618 = vpop.permute.xlu0 %3617
        %3621 = vset.pattern.permute.xlu0 32
        %3622 = vperm.xlu0 %3621, %v3572
        %v3623 = vpop.permute.xlu0 %3622
        %3626 = vset.pattern.permute.xlu0 32
        %3627 = vperm.xlu0 %3626, %v3573
        %v3628 = vpop.permute.xlu0 %3627
        %3631 = vset.pattern.permute.xlu0 32
        %3632 = vperm.xlu0 %3631, %v3574
        %v3633 = vpop.permute.xlu0 %3632
        %3636 = vset.pattern.permute.xlu0 32
        %3637 = vperm.xlu0 %3636, %v3575
        %v3638 = vpop.permute.xlu0 %3637
        %3641 = vset.pattern.permute.xlu0 32
        %3642 = vperm.xlu0 %3641, %v3576
        %v3643 = vpop.permute.xlu0 %3642
        %3646 = vset.pattern.permute.xlu0 32
        %3647 = vperm.xlu0 %3646, %v3577
        %v3648 = vpop.permute.xlu0 %3647
        %3651 = vset.pattern.permute.xlu0 32
        %3652 = vperm.xlu0 %3651, %v3578
        %v3653 = vpop.permute.xlu0 %3652
        %3656 = vset.pattern.permute.xlu0 32
        %3657 = vperm.xlu0 %3656, %v3579
        %v3658 = vpop.permute.xlu0 %3657
        %3661 = vset.pattern.permute.xlu0 32
        %3662 = vperm.xlu0 %3661, %v3580
        %v3663 = vpop.permute.xlu0 %3662
        %3666 = vset.pattern.permute.xlu0 32
        %3667 = vperm.xlu0 %3666, %v3581
        %v3668 = vpop.permute.xlu0 %3667
        %3671 = vset.pattern.permute.xlu0 32
        %3672 = vperm.xlu0 %3671, %v3582
        %v3673 = vpop.permute.xlu0 %3672
        %3676 = vset.pattern.permute.xlu0 32
        %3677 = vperm.xlu0 %3676, %v3583
        %v3678 = vpop.permute.xlu0 %3677
        %3681 = vset.pattern.permute.xlu0 32
        %3682 = vperm.xlu0 %3681, %v3584
        %v3683 = vpop.permute.xlu0 %3682
        %3686 = vset.pattern.permute.xlu0 32
        %3687 = vperm.xlu0 %3686, %v3585
        %v3688 = vpop.permute.xlu0 %3687
        %3691 = vset.pattern.permute.xlu0 32
        %3692 = vperm.xlu0 %3691, %v3586
        %v3693 = vpop.permute.xlu0 %3692
        %3696 = vset.pattern.permute.xlu0 32
        %3697 = vperm.xlu0 %3696, %v3587
        %v3698 = vpop.permute.xlu0 %3697
        %3701 = vset.pattern.permute.xlu0 32
        %3702 = vperm.xlu0 %3701, %v3588
        %v3703 = vpop.permute.xlu0 %3702
        %3706 = vset.pattern.permute.xlu0 32
        %3707 = vperm.xlu0 %3706, %v3589
        %v3708 = vpop.permute.xlu0 %3707
        %3711 = vset.pattern.permute.xlu0 32
        %3712 = vperm.xlu0 %3711, %v3590
        %v3713 = vpop.permute.xlu0 %3712
        %3716 = vset.pattern.permute.xlu0 32
        %3717 = vperm.xlu0 %3716, %v3591
        %v3718 = vpop.permute.xlu0 %3717
        %3721 = vset.pattern.permute.xlu0 32
        %3722 = vperm.xlu0 %3721, %v3592
        %v3723 = vpop.permute.xlu0 %3722
        %3726 = vset.pattern.permute.xlu0 32
        %3727 = vperm.xlu0 %3726, %v3593
        %v3728 = vpop.permute.xlu0 %3727
        %3731 = vset.pattern.permute.xlu0 32
        %3732 = vperm.xlu0 %3731, %v3594
        %v3733 = vpop.permute.xlu0 %3732
        %3736 = vset.pattern.permute.xlu0 32
        %3737 = vperm.xlu0 %3736, %v3595
        %v3738 = vpop.permute.xlu0 %3737
        %3741 = vset.pattern.permute.xlu0 32
        %3742 = vperm.xlu0 %3741, %v3596
        %v3743 = vpop.permute.xlu0 %3742
        %3746 = vset.pattern.permute.xlu0 32
        %3747 = vperm.xlu0 %3746, %v3597
        %v3748 = vpop.permute.xlu0 %3747
        %3751 = vset.pattern.permute.xlu0 32
        %3752 = vperm.xlu0 %3751, %v3598
        %v3753 = vpop.permute.xlu0 %3752
        %3756 = vset.pattern.permute.xlu0 32
        %3757 = vperm.xlu0 %3756, %v3599
        %v3758 = vpop.permute.xlu0 %3757
        %v3760 = vmul.f32 %v3281, %v3603
        %v3761 = vmul.f32 %v3284, %v3608
        %v3762 = vmul.f32 %v3287, %v3613
        %v3763 = vmul.f32 %v3290, %v3618
        %v3764 = vmul.f32 %v3293, %v3623
        %v3765 = vmul.f32 %v3296, %v3628
        %v3766 = vmul.f32 %v3299, %v3633
        %v3767 = vmul.f32 %v3302, %v3638
        %v3768 = vmul.f32 %v3305, %v3643
        %v3769 = vmul.f32 %v3308, %v3648
        %v3770 = vmul.f32 %v3311, %v3653
        %v3771 = vmul.f32 %v3314, %v3658
        %v3772 = vmul.f32 %v3317, %v3663
        %v3773 = vmul.f32 %v3320, %v3668
        %v3774 = vmul.f32 %v3323, %v3673
        %v3775 = vmul.f32 %v3326, %v3678
        %v3776 = vmul.f32 %v3329, %v3683
        %v3777 = vmul.f32 %v3332, %v3688
        %v3778 = vmul.f32 %v3335, %v3693
        %v3779 = vmul.f32 %v3338, %v3698
        %v3780 = vmul.f32 %v3341, %v3703
        %v3781 = vmul.f32 %v3344, %v3708
        %v3782 = vmul.f32 %v3347, %v3713
        %v3783 = vmul.f32 %v3350, %v3718
        %v3784 = vmul.f32 %v3353, %v3723
        %v3785 = vmul.f32 %v3356, %v3728
        %v3786 = vmul.f32 %v3359, %v3733
        %v3787 = vmul.f32 %v3362, %v3738
        %v3788 = vmul.f32 %v3365, %v3743
        %v3789 = vmul.f32 %v3368, %v3748
        %v3790 = vmul.f32 %v3371, %v3753
        %v3791 = vmul.f32 %v3374, %v3758
        %v3792 = vmax.f32 %v3760, -16.0
        %v3793 = vmax.f32 %v3761, -16.0
        %v3794 = vmax.f32 %v3762, -16.0
        %v3795 = vmax.f32 %v3763, -16.0
        %v3796 = vmax.f32 %v3764, -16.0
        %v3797 = vmax.f32 %v3765, -16.0
        %v3798 = vmax.f32 %v3766, -16.0
        %v3799 = vmax.f32 %v3767, -16.0
        %v3800 = vmax.f32 %v3768, -16.0
        %v3801 = vmax.f32 %v3769, -16.0
        %v3802 = vmax.f32 %v3770, -16.0
        %v3803 = vmax.f32 %v3771, -16.0
        %v3804 = vmax.f32 %v3772, -16.0
        %v3805 = vmax.f32 %v3773, -16.0
        %v3806 = vmax.f32 %v3774, -16.0
        %v3807 = vmax.f32 %v3775, -16.0
        %v3808 = vmax.f32 %v3776, -16.0
        %v3809 = vmax.f32 %v3777, -16.0
        %v3810 = vmax.f32 %v3778, -16.0
        %v3811 = vmax.f32 %v3779, -16.0
        %v3812 = vmax.f32 %v3780, -16.0
        %v3813 = vmax.f32 %v3781, -16.0
        %v3814 = vmax.f32 %v3782, -16.0
        %v3815 = vmax.f32 %v3783, -16.0
        %v3816 = vmax.f32 %v3784, -16.0
        %v3817 = vmax.f32 %v3785, -16.0
        %v3818 = vmax.f32 %v3786, -16.0
        %v3819 = vmax.f32 %v3787, -16.0
        %v3820 = vmax.f32 %v3788, -16.0
        %v3821 = vmax.f32 %v3789, -16.0
        %v3822 = vmax.f32 %v3790, -16.0
        %v3823 = vmax.f32 %v3791, -16.0
        %v3824 = vmin.f32 %v3792, 16.0
        %v3825 = vmin.f32 %v3793, 16.0
        %v3826 = vmin.f32 %v3794, 16.0
        %v3827 = vmin.f32 %v3795, 16.0
        %v3828 = vmin.f32 %v3796, 16.0
        %v3829 = vmin.f32 %v3797, 16.0
        %v3830 = vmin.f32 %v3798, 16.0
        %v3831 = vmin.f32 %v3799, 16.0
        %v3832 = vmin.f32 %v3800, 16.0
        %v3833 = vmin.f32 %v3801, 16.0
        %v3834 = vmin.f32 %v3802, 16.0
        %v3835 = vmin.f32 %v3803, 16.0
        %v3836 = vmin.f32 %v3804, 16.0
        %v3837 = vmin.f32 %v3805, 16.0
        %v3838 = vmin.f32 %v3806, 16.0
        %v3839 = vmin.f32 %v3807, 16.0
        %v3840 = vmin.f32 %v3808, 16.0
        %v3841 = vmin.f32 %v3809, 16.0
        %v3842 = vmin.f32 %v3810, 16.0
        %v3843 = vmin.f32 %v3811, 16.0
        %v3844 = vmin.f32 %v3812, 16.0
        %v3845 = vmin.f32 %v3813, 16.0
        %v3846 = vmin.f32 %v3814, 16.0
        %v3847 = vmin.f32 %v3815, 16.0
        %v3848 = vmin.f32 %v3816, 16.0
        %v3849 = vmin.f32 %v3817, 16.0
        %v3850 = vmin.f32 %v3818, 16.0
        %v3851 = vmin.f32 %v3819, 16.0
        %v3852 = vmin.f32 %v3820, 16.0
        %v3853 = vmin.f32 %v3821, 16.0
        %v3854 = vmin.f32 %v3822, 16.0
        %v3855 = vmin.f32 %v3823, 16.0
        %3888 = vxpose.xlu0.b32.start [1/16] %v2551, 128
        %3889 = vxpose.xlu0.b32.cont [2/16] %v2553, 128
        %3890 = vxpose.xlu0.b32.cont [3/16] %v2555, 128
        %3891 = vxpose.xlu0.b32.cont [4/16] %v2557, 128
        %3892 = vxpose.xlu0.b32.cont [5/16] %v2559, 128
        %3893 = vxpose.xlu0.b32.cont [6/16] %v2561, 128
        %3894 = vxpose.xlu0.b32.cont [7/16] %v2563, 128
        %3895 = vxpose.xlu0.b32.cont [8/16] %v2565, 128
        %3896 = vxpose.xlu0.b32.cont [9/16] %v2567, 128
        %3897 = vxpose.xlu0.b32.cont [10/16] %v2569, 128
        %3898 = vxpose.xlu0.b32.cont [11/16] %v2571, 128
        %3899 = vxpose.xlu0.b32.cont [12/16] %v2573, 128
        %3900 = vxpose.xlu0.b32.cont [13/16] %v2575, 128
        %3901 = vxpose.xlu0.b32.cont [14/16] %v2577, 128
        %3902 = vxpose.xlu0.b32.cont [15/16] %v2579, 128
        %3903 = vxpose.xlu0.b32.end [16/16] %v2581, 128
        %v3904 = vpop.trf.xlu0
        %v3905 = vpop.trf.xlu0
        %v3906 = vpop.trf.xlu0
        %v3907 = vpop.trf.xlu0
        %v3908 = vpop.trf.xlu0
        %v3909 = vpop.trf.xlu0
        %v3910 = vpop.trf.xlu0
        %v3911 = vpop.trf.xlu0
        %v3912 = vpop.trf.xlu0
        %v3913 = vpop.trf.xlu0
        %v3914 = vpop.trf.xlu0
        %v3915 = vpop.trf.xlu0
        %v3916 = vpop.trf.xlu0
        %v3917 = vpop.trf.xlu0
        %v3918 = vpop.trf.xlu0
        %v3919 = vpop.trf.xlu0
        %3920 = vxpose.xlu0.b32.start [1/16] %v2583, 128
        %3921 = vxpose.xlu0.b32.cont [2/16] %v2585, 128
        %3922 = vxpose.xlu0.b32.cont [3/16] %v2587, 128
        %3923 = vxpose.xlu0.b32.cont [4/16] %v2589, 128
        %3924 = vxpose.xlu0.b32.cont [5/16] %v2591, 128
        %3925 = vxpose.xlu0.b32.cont [6/16] %v2593, 128
        %3926 = vxpose.xlu0.b32.cont [7/16] %v2595, 128
        %3927 = vxpose.xlu0.b32.cont [8/16] %v2597, 128
        %3928 = vxpose.xlu0.b32.cont [9/16] %v2599, 128
        %3929 = vxpose.xlu0.b32.cont [10/16] %v2601, 128
        %3930 = vxpose.xlu0.b32.cont [11/16] %v2603, 128
        %3931 = vxpose.xlu0.b32.cont [12/16] %v2605, 128
        %3932 = vxpose.xlu0.b32.cont [13/16] %v2607, 128
        %3933 = vxpose.xlu0.b32.cont [14/16] %v2609, 128
        %3934 = vxpose.xlu0.b32.cont [15/16] %v2611, 128
        %3935 = vxpose.xlu0.b32.end [16/16] %v2613, 128
        %v3936 = vpop.trf.xlu0
        %v3937 = vpop.trf.xlu0
        %v3938 = vpop.trf.xlu0
        %v3939 = vpop.trf.xlu0
        %v3940 = vpop.trf.xlu0
        %v3941 = vpop.trf.xlu0
        %v3942 = vpop.trf.xlu0
        %v3943 = vpop.trf.xlu0
        %v3944 = vpop.trf.xlu0
        %v3945 = vpop.trf.xlu0
        %v3946 = vpop.trf.xlu0
        %v3947 = vpop.trf.xlu0
        %v3948 = vpop.trf.xlu0
        %v3949 = vpop.trf.xlu0
        %v3950 = vpop.trf.xlu0
        %v3951 = vpop.trf.xlu0
        %3952 = vmatpush.msra.mxu0 %v2469
        %3953 = vmatpush.msra.mxu0 %v2468
        %3954 = vmatpush.msra.mxu0 %v2467
        %3955 = vmatpush.msra.mxu0 %v2466
        %3956 = vmatpush.msra.mxu0 %v2465
        %3957 = vmatpush.msra.mxu0 %v2464
        %3958 = vmatpush.msra.mxu0 %v2463
        %3959 = vmatpush.msra.mxu0 %v2462
        %3960 = vmatpush.msra.mxu0 %v2461
        %3961 = vmatpush.msra.mxu0 %v2460
        %3962 = vmatpush.msra.mxu0 %v2459
        %3963 = vmatpush.msra.mxu0 %v2458
        %3964 = vmatpush.msra.mxu0 %v2457
        %3965 = vmatpush.msra.mxu0 %v2456
        %3966 = vmatpush.msra.mxu0 %v2455
        %3967 = vmatpush.msra.mxu0 %v2454
        %3968 = vmatmul.f32.gmra.mxu0 %v3904
        %v3969 = vpop.f32.mrf.mxu0
        %v3970 = vadd.f32 0.0, %v3969
        %3971 = vmatmul.f32.gmra.mxu0 %v3905
        %v3972 = vpop.f32.mrf.mxu0
        %v3973 = vadd.f32 0.0, %v3972
        %3974 = vmatmul.f32.gmra.mxu0 %v3906
        %v3975 = vpop.f32.mrf.mxu0
        %v3976 = vadd.f32 0.0, %v3975
        %3977 = vmatmul.f32.gmra.mxu0 %v3907
        %v3978 = vpop.f32.mrf.mxu0
        %v3979 = vadd.f32 0.0, %v3978
        %3980 = vdwg.mxu0
        %3981 = vmatpush.msra.mxu0 %v2485
        %3982 = vmatpush.msra.mxu0 %v2484
        %3983 = vmatpush.msra.mxu0 %v2483
        %3984 = vmatpush.msra.mxu0 %v2482
        %3985 = vmatpush.msra.mxu0 %v2481
        %3986 = vmatpush.msra.mxu0 %v2480
        %3987 = vmatpush.msra.mxu0 %v2479
        %3988 = vmatpush.msra.mxu0 %v2478
        %3989 = vmatpush.msra.mxu0 %v2477
        %3990 = vmatpush.msra.mxu0 %v2476
        %3991 = vmatpush.msra.mxu0 %v2475
        %3992 = vmatpush.msra.mxu0 %v2474
        %3993 = vmatpush.msra.mxu0 %v2473
        %3994 = vmatpush.msra.mxu0 %v2472
        %3995 = vmatpush.msra.mxu0 %v2471
        %3996 = vmatpush.msra.mxu0 %v2470
        %3997 = vmatmul.f32.gmra.mxu0 %v3936
        %v3998 = vpop.f32.mrf.mxu0
        %v3999 = vadd.f32 %v3970, %v3998
        %4000 = vmatmul.f32.gmra.mxu0 %v3937
        %v4001 = vpop.f32.mrf.mxu0
        %v4002 = vadd.f32 %v3973, %v4001
        %4003 = vmatmul.f32.gmra.mxu0 %v3938
        %v4004 = vpop.f32.mrf.mxu0
        %v4005 = vadd.f32 %v3976, %v4004
        %4006 = vmatmul.f32.gmra.mxu0 %v3939
        %v4007 = vpop.f32.mrf.mxu0
        %v4008 = vadd.f32 %v3979, %v4007
        %4009 = vdwg.mxu0
        %v4010 = vadd.f32 %v3033, %v3999
        %v4011 = vadd.f32 %v3034, %v4002
        %v4012 = vadd.f32 %v3035, %v4005
        %v4013 = vadd.f32 %v3036, %v4008
        %4014 = vst.msk [vmem:[%s3032] sm:$0xff] %vm2321, %v4010
        %4015 = vst.msk [vmem:[%s3032 + $0x8] sm:$0xff] %vm2321, %v4011
        %4016 = vst.msk [vmem:[%s3032 + $0x10] sm:$0xff] %vm2321, %v4012
        %4017 = vst.msk [vmem:[%s3032 + $0x18] sm:$0xff] %vm2321, %v4013
        %4018 = vrot.lane.b32.xlu0 %v405, 64
        %v4019 = vpop.permute.xlu0 %4018
        %4020 = vrot.lane.b32.xlu0 %v406, 64
        %v4021 = vpop.permute.xlu0 %4020
        %4022 = vrot.lane.b32.xlu0 %v407, 64
        %v4023 = vpop.permute.xlu0 %4022
        %4024 = vrot.lane.b32.xlu0 %v408, 64
        %v4025 = vpop.permute.xlu0 %4024
        %4026 = vrot.lane.b32.xlu0 %v409, 64
        %v4027 = vpop.permute.xlu0 %4026
        %4028 = vrot.lane.b32.xlu0 %v410, 64
        %v4029 = vpop.permute.xlu0 %4028
        %4030 = vrot.lane.b32.xlu0 %v411, 64
        %v4031 = vpop.permute.xlu0 %4030
        %4032 = vrot.lane.b32.xlu0 %v412, 64
        %v4033 = vpop.permute.xlu0 %4032
        %4034 = vrot.lane.b32.xlu0 %v413, 64
        %v4035 = vpop.permute.xlu0 %4034
        %4036 = vrot.lane.b32.xlu0 %v414, 64
        %v4037 = vpop.permute.xlu0 %4036
        %4038 = vrot.lane.b32.xlu0 %v415, 64
        %v4039 = vpop.permute.xlu0 %4038
        %4040 = vrot.lane.b32.xlu0 %v416, 64
        %v4041 = vpop.permute.xlu0 %4040
        %4042 = vrot.lane.b32.xlu0 %v417, 64
        %v4043 = vpop.permute.xlu0 %4042
        %4044 = vrot.lane.b32.xlu0 %v418, 64
        %v4045 = vpop.permute.xlu0 %4044
        %4046 = vrot.lane.b32.xlu0 %v419, 64
        %v4047 = vpop.permute.xlu0 %4046
        %4048 = vrot.lane.b32.xlu0 %v420, 64
        %v4049 = vpop.permute.xlu0 %4048
        %4050 = vrot.lane.b32.xlu0 %v421, 64
        %v4051 = vpop.permute.xlu0 %4050
        %4052 = vrot.lane.b32.xlu0 %v422, 64
        %v4053 = vpop.permute.xlu0 %4052
        %4054 = vrot.lane.b32.xlu0 %v423, 64
        %v4055 = vpop.permute.xlu0 %4054
        %4056 = vrot.lane.b32.xlu0 %v424, 64
        %v4057 = vpop.permute.xlu0 %4056
        %4058 = vrot.lane.b32.xlu0 %v425, 64
        %v4059 = vpop.permute.xlu0 %4058
        %4060 = vrot.lane.b32.xlu0 %v426, 64
        %v4061 = vpop.permute.xlu0 %4060
        %4062 = vrot.lane.b32.xlu0 %v427, 64
        %v4063 = vpop.permute.xlu0 %4062
        %4064 = vrot.lane.b32.xlu0 %v428, 64
        %v4065 = vpop.permute.xlu0 %4064
        %4066 = vrot.lane.b32.xlu0 %v429, 64
        %v4067 = vpop.permute.xlu0 %4066
        %4068 = vrot.lane.b32.xlu0 %v430, 64
        %v4069 = vpop.permute.xlu0 %4068
        %4070 = vrot.lane.b32.xlu0 %v431, 64
        %v4071 = vpop.permute.xlu0 %4070
        %4072 = vrot.lane.b32.xlu0 %v432, 64
        %v4073 = vpop.permute.xlu0 %4072
        %4074 = vrot.lane.b32.xlu0 %v433, 64
        %v4075 = vpop.permute.xlu0 %4074
        %4076 = vrot.lane.b32.xlu0 %v434, 64
        %v4077 = vpop.permute.xlu0 %4076
        %4078 = vrot.lane.b32.xlu0 %v435, 64
        %v4079 = vpop.permute.xlu0 %4078
        %4080 = vrot.lane.b32.xlu0 %v436, 64
        %v4081 = vpop.permute.xlu0 %4080
        %v4114 = vsel %vm857, %v4019, 1.0
        %v4115 = vsel %vm857, %v4021, 1.0
        %v4116 = vsel %vm857, %v4023, 1.0
        %v4117 = vsel %vm857, %v4025, 1.0
        %v4118 = vsel %vm857, %v4027, 1.0
        %v4119 = vsel %vm857, %v4029, 1.0
        %v4120 = vsel %vm857, %v4031, 1.0
        %v4121 = vsel %vm857, %v4033, 1.0
        %v4122 = vsel %vm857, %v4035, 1.0
        %v4123 = vsel %vm857, %v4037, 1.0
        %v4124 = vsel %vm857, %v4039, 1.0
        %v4125 = vsel %vm857, %v4041, 1.0
        %v4126 = vsel %vm857, %v4043, 1.0
        %v4127 = vsel %vm857, %v4045, 1.0
        %v4128 = vsel %vm857, %v4047, 1.0
        %v4129 = vsel %vm857, %v4049, 1.0
        %v4130 = vsel %vm857, %v4051, 1.0
        %v4131 = vsel %vm857, %v4053, 1.0
        %v4132 = vsel %vm857, %v4055, 1.0
        %v4133 = vsel %vm857, %v4057, 1.0
        %v4134 = vsel %vm857, %v4059, 1.0
        %v4135 = vsel %vm857, %v4061, 1.0
        %v4136 = vsel %vm857, %v4063, 1.0
        %v4137 = vsel %vm857, %v4065, 1.0
        %v4138 = vsel %vm857, %v4067, 1.0
        %v4139 = vsel %vm857, %v4069, 1.0
        %v4140 = vsel %vm857, %v4071, 1.0
        %v4141 = vsel %vm857, %v4073, 1.0
        %v4142 = vsel %vm857, %v4075, 1.0
        %v4143 = vsel %vm857, %v4077, 1.0
        %v4144 = vsel %vm857, %v4079, 1.0
        %v4145 = vsel %vm857, %v4081, 1.0
        %4146 = vrot.lane.b32.xlu0 %v565, 64
        %v4147 = vpop.permute.xlu0 %4146
        %4148 = vrot.lane.b32.xlu0 %v566, 64
        %v4149 = vpop.permute.xlu0 %4148
        %4150 = vrot.lane.b32.xlu0 %v567, 64
        %v4151 = vpop.permute.xlu0 %4150
        %4152 = vrot.lane.b32.xlu0 %v568, 64
        %v4153 = vpop.permute.xlu0 %4152
        %4154 = vrot.lane.b32.xlu0 %v569, 64
        %v4155 = vpop.permute.xlu0 %4154
        %4156 = vrot.lane.b32.xlu0 %v570, 64
        %v4157 = vpop.permute.xlu0 %4156
        %4158 = vrot.lane.b32.xlu0 %v571, 64
        %v4159 = vpop.permute.xlu0 %4158
        %4160 = vrot.lane.b32.xlu0 %v572, 64
        %v4161 = vpop.permute.xlu0 %4160
        %4162 = vrot.lane.b32.xlu0 %v573, 64
        %v4163 = vpop.permute.xlu0 %4162
        %4164 = vrot.lane.b32.xlu0 %v574, 64
        %v4165 = vpop.permute.xlu0 %4164
        %4166 = vrot.lane.b32.xlu0 %v575, 64
        %v4167 = vpop.permute.xlu0 %4166
        %4168 = vrot.lane.b32.xlu0 %v576, 64
        %v4169 = vpop.permute.xlu0 %4168
        %4170 = vrot.lane.b32.xlu0 %v577, 64
        %v4171 = vpop.permute.xlu0 %4170
        %4172 = vrot.lane.b32.xlu0 %v578, 64
        %v4173 = vpop.permute.xlu0 %4172
        %4174 = vrot.lane.b32.xlu0 %v579, 64
        %v4175 = vpop.permute.xlu0 %4174
        %4176 = vrot.lane.b32.xlu0 %v580, 64
        %v4177 = vpop.permute.xlu0 %4176
        %4178 = vrot.lane.b32.xlu0 %v581, 64
        %v4179 = vpop.permute.xlu0 %4178
        %4180 = vrot.lane.b32.xlu0 %v582, 64
        %v4181 = vpop.permute.xlu0 %4180
        %4182 = vrot.lane.b32.xlu0 %v583, 64
        %v4183 = vpop.permute.xlu0 %4182
        %4184 = vrot.lane.b32.xlu0 %v584, 64
        %v4185 = vpop.permute.xlu0 %4184
        %4186 = vrot.lane.b32.xlu0 %v585, 64
        %v4187 = vpop.permute.xlu0 %4186
        %4188 = vrot.lane.b32.xlu0 %v586, 64
        %v4189 = vpop.permute.xlu0 %4188
        %4190 = vrot.lane.b32.xlu0 %v587, 64
        %v4191 = vpop.permute.xlu0 %4190
        %4192 = vrot.lane.b32.xlu0 %v588, 64
        %v4193 = vpop.permute.xlu0 %4192
        %4194 = vrot.lane.b32.xlu0 %v589, 64
        %v4195 = vpop.permute.xlu0 %4194
        %4196 = vrot.lane.b32.xlu0 %v590, 64
        %v4197 = vpop.permute.xlu0 %4196
        %4198 = vrot.lane.b32.xlu0 %v591, 64
        %v4199 = vpop.permute.xlu0 %4198
        %4200 = vrot.lane.b32.xlu0 %v592, 64
        %v4201 = vpop.permute.xlu0 %4200
        %4202 = vrot.lane.b32.xlu0 %v593, 64
        %v4203 = vpop.permute.xlu0 %4202
        %4204 = vrot.lane.b32.xlu0 %v594, 64
        %v4205 = vpop.permute.xlu0 %4204
        %4206 = vrot.lane.b32.xlu0 %v595, 64
        %v4207 = vpop.permute.xlu0 %4206
        %4208 = vrot.lane.b32.xlu0 %v596, 64
        %v4209 = vpop.permute.xlu0 %4208
        %4210 = vrot.lane.b32.xlu0 %v725, 64
        %v4211 = vpop.permute.xlu0 %4210
        %4212 = vrot.lane.b32.xlu0 %v726, 64
        %v4213 = vpop.permute.xlu0 %4212
        %4214 = vrot.lane.b32.xlu0 %v727, 64
        %v4215 = vpop.permute.xlu0 %4214
        %4216 = vrot.lane.b32.xlu0 %v728, 64
        %v4217 = vpop.permute.xlu0 %4216
        %4218 = vrot.lane.b32.xlu0 %v729, 64
        %v4219 = vpop.permute.xlu0 %4218
        %4220 = vrot.lane.b32.xlu0 %v730, 64
        %v4221 = vpop.permute.xlu0 %4220
        %4222 = vrot.lane.b32.xlu0 %v731, 64
        %v4223 = vpop.permute.xlu0 %4222
        %4224 = vrot.lane.b32.xlu0 %v732, 64
        %v4225 = vpop.permute.xlu0 %4224
        %4226 = vrot.lane.b32.xlu0 %v733, 64
        %v4227 = vpop.permute.xlu0 %4226
        %4228 = vrot.lane.b32.xlu0 %v734, 64
        %v4229 = vpop.permute.xlu0 %4228
        %4230 = vrot.lane.b32.xlu0 %v735, 64
        %v4231 = vpop.permute.xlu0 %4230
        %4232 = vrot.lane.b32.xlu0 %v736, 64
        %v4233 = vpop.permute.xlu0 %4232
        %4234 = vrot.lane.b32.xlu0 %v737, 64
        %v4235 = vpop.permute.xlu0 %4234
        %4236 = vrot.lane.b32.xlu0 %v738, 64
        %v4237 = vpop.permute.xlu0 %4236
        %4238 = vrot.lane.b32.xlu0 %v739, 64
        %v4239 = vpop.permute.xlu0 %4238
        %4240 = vrot.lane.b32.xlu0 %v740, 64
        %v4241 = vpop.permute.xlu0 %4240
        %4242 = vrot.lane.b32.xlu0 %v741, 64
        %v4243 = vpop.permute.xlu0 %4242
        %4244 = vrot.lane.b32.xlu0 %v742, 64
        %v4245 = vpop.permute.xlu0 %4244
        %4246 = vrot.lane.b32.xlu0 %v743, 64
        %v4247 = vpop.permute.xlu0 %4246
        %4248 = vrot.lane.b32.xlu0 %v744, 64
        %v4249 = vpop.permute.xlu0 %4248
        %4250 = vrot.lane.b32.xlu0 %v745, 64
        %v4251 = vpop.permute.xlu0 %4250
        %4252 = vrot.lane.b32.xlu0 %v746, 64
        %v4253 = vpop.permute.xlu0 %4252
        %4254 = vrot.lane.b32.xlu0 %v747, 64
        %v4255 = vpop.permute.xlu0 %4254
        %4256 = vrot.lane.b32.xlu0 %v748, 64
        %v4257 = vpop.permute.xlu0 %4256
        %4258 = vrot.lane.b32.xlu0 %v749, 64
        %v4259 = vpop.permute.xlu0 %4258
        %4260 = vrot.lane.b32.xlu0 %v750, 64
        %v4261 = vpop.permute.xlu0 %4260
        %4262 = vrot.lane.b32.xlu0 %v751, 64
        %v4263 = vpop.permute.xlu0 %4262
        %4264 = vrot.lane.b32.xlu0 %v752, 64
        %v4265 = vpop.permute.xlu0 %4264
        %4266 = vrot.lane.b32.xlu0 %v753, 64
        %v4267 = vpop.permute.xlu0 %4266
        %4268 = vrot.lane.b32.xlu0 %v754, 64
        %v4269 = vpop.permute.xlu0 %4268
        %4270 = vrot.lane.b32.xlu0 %v755, 64
        %v4271 = vpop.permute.xlu0 %4270
        %4272 = vrot.lane.b32.xlu0 %v756, 64
        %v4273 = vpop.permute.xlu0 %4272
        %v4274 = vsel %vm857, %v4147, 0
        %v4276 = vsel %vm857, %v4149, 0
        %v4278 = vsel %vm857, %v4151, 0
        %v4280 = vsel %vm857, %v4153, 0
        %v4282 = vsel %vm857, %v4155, 0
        %v4284 = vsel %vm857, %v4157, 0
        %v4286 = vsel %vm857, %v4159, 0
        %v4288 = vsel %vm857, %v4161, 0
        %v4290 = vsel %vm857, %v4163, 0
        %v4292 = vsel %vm857, %v4165, 0
        %v4294 = vsel %vm857, %v4167, 0
        %v4296 = vsel %vm857, %v4169, 0
        %v4298 = vsel %vm857, %v4171, 0
        %v4300 = vsel %vm857, %v4173, 0
        %v4302 = vsel %vm857, %v4175, 0
        %v4304 = vsel %vm857, %v4177, 0
        %v4306 = vsel %vm857, %v4179, 0
        %v4308 = vsel %vm857, %v4181, 0
        %v4310 = vsel %vm857, %v4183, 0
        %v4312 = vsel %vm857, %v4185, 0
        %v4314 = vsel %vm857, %v4187, 0
        %v4316 = vsel %vm857, %v4189, 0
        %v4318 = vsel %vm857, %v4191, 0
        %v4320 = vsel %vm857, %v4193, 0
        %v4322 = vsel %vm857, %v4195, 0
        %v4324 = vsel %vm857, %v4197, 0
        %v4326 = vsel %vm857, %v4199, 0
        %v4328 = vsel %vm857, %v4201, 0
        %v4330 = vsel %vm857, %v4203, 0
        %v4332 = vsel %vm857, %v4205, 0
        %v4334 = vsel %vm857, %v4207, 0
        %v4336 = vsel %vm857, %v4209, 0
        %v4338 = vsel %vm857, %v4211, 0
        %v4340 = vsel %vm857, %v4213, 0
        %v4342 = vsel %vm857, %v4215, 0
        %v4344 = vsel %vm857, %v4217, 0
        %v4346 = vsel %vm857, %v4219, 0
        %v4348 = vsel %vm857, %v4221, 0
        %v4350 = vsel %vm857, %v4223, 0
        %v4352 = vsel %vm857, %v4225, 0
        %v4354 = vsel %vm857, %v4227, 0
        %v4356 = vsel %vm857, %v4229, 0
        %v4358 = vsel %vm857, %v4231, 0
        %v4360 = vsel %vm857, %v4233, 0
        %v4362 = vsel %vm857, %v4235, 0
        %v4364 = vsel %vm857, %v4237, 0
        %v4366 = vsel %vm857, %v4239, 0
        %v4368 = vsel %vm857, %v4241, 0
        %v4370 = vsel %vm857, %v4243, 0
        %v4372 = vsel %vm857, %v4245, 0
        %v4374 = vsel %vm857, %v4247, 0
        %v4376 = vsel %vm857, %v4249, 0
        %v4378 = vsel %vm857, %v4251, 0
        %v4380 = vsel %vm857, %v4253, 0
        %v4382 = vsel %vm857, %v4255, 0
        %v4384 = vsel %vm857, %v4257, 0
        %v4386 = vsel %vm857, %v4259, 0
        %v4388 = vsel %vm857, %v4261, 0
        %v4390 = vsel %vm857, %v4263, 0
        %v4392 = vsel %vm857, %v4265, 0
        %v4394 = vsel %vm857, %v4267, 0
        %v4396 = vsel %vm857, %v4269, 0
        %v4398 = vsel %vm857, %v4271, 0
        %v4400 = vsel %vm857, %v4273, 0
        %4402 = vmatpush.xpose.msra.mxu0 %v4368
        %4403 = vmatpush.xpose.msra.mxu0 %v4366
        %4404 = vmatpush.xpose.msra.mxu0 %v4364
        %4405 = vmatpush.xpose.msra.mxu0 %v4362
        %4406 = vmatpush.xpose.msra.mxu0 %v4360
        %4407 = vmatpush.xpose.msra.mxu0 %v4358
        %4408 = vmatpush.xpose.msra.mxu0 %v4356
        %4409 = vmatpush.xpose.msra.mxu0 %v4354
        %4410 = vmatpush.xpose.msra.mxu0 %v4352
        %4411 = vmatpush.xpose.msra.mxu0 %v4350
        %4412 = vmatpush.xpose.msra.mxu0 %v4348
        %4413 = vmatpush.xpose.msra.mxu0 %v4346
        %4414 = vmatpush.xpose.msra.mxu0 %v4344
        %4415 = vmatpush.xpose.msra.mxu0 %v4342
        %4416 = vmatpush.xpose.msra.mxu0 %v4340
        %4417 = vmatpush.xpose.msra.mxu0 %v4338
        %4418 = vmatmul.f32.gmra.mxu0 %v4274
        %v4419 = vpop.f32.mrf.mxu0
        %v4420 = vadd.f32 0.0, %v4419
        %4421 = vmatmul.f32.gmra.mxu0 %v4276
        %v4422 = vpop.f32.mrf.mxu0
        %v4423 = vadd.f32 0.0, %v4422
        %4424 = vmatmul.f32.gmra.mxu0 %v4278
        %v4425 = vpop.f32.mrf.mxu0
        %v4426 = vadd.f32 0.0, %v4425
        %4427 = vmatmul.f32.gmra.mxu0 %v4280
        %v4428 = vpop.f32.mrf.mxu0
        %v4429 = vadd.f32 0.0, %v4428
        %4430 = vmatmul.f32.gmra.mxu0 %v4282
        %v4431 = vpop.f32.mrf.mxu0
        %v4432 = vadd.f32 0.0, %v4431
        %4433 = vmatmul.f32.gmra.mxu0 %v4284
        %v4434 = vpop.f32.mrf.mxu0
        %v4435 = vadd.f32 0.0, %v4434
        %4436 = vmatmul.f32.gmra.mxu0 %v4286
        %v4437 = vpop.f32.mrf.mxu0
        %v4438 = vadd.f32 0.0, %v4437
        %4439 = vmatmul.f32.gmra.mxu0 %v4288
        %v4440 = vpop.f32.mrf.mxu0
        %v4441 = vadd.f32 0.0, %v4440
        %4442 = vmatmul.f32.gmra.mxu0 %v4290
        %v4443 = vpop.f32.mrf.mxu0
        %v4444 = vadd.f32 0.0, %v4443
        %4445 = vmatmul.f32.gmra.mxu0 %v4292
        %v4446 = vpop.f32.mrf.mxu0
        %v4447 = vadd.f32 0.0, %v4446
        %4448 = vmatmul.f32.gmra.mxu0 %v4294
        %v4449 = vpop.f32.mrf.mxu0
        %v4450 = vadd.f32 0.0, %v4449
        %4451 = vmatmul.f32.gmra.mxu0 %v4296
        %v4452 = vpop.f32.mrf.mxu0
        %v4453 = vadd.f32 0.0, %v4452
        %4454 = vmatmul.f32.gmra.mxu0 %v4298
        %v4455 = vpop.f32.mrf.mxu0
        %v4456 = vadd.f32 0.0, %v4455
        %4457 = vmatmul.f32.gmra.mxu0 %v4300
        %v4458 = vpop.f32.mrf.mxu0
        %v4459 = vadd.f32 0.0, %v4458
        %4460 = vmatmul.f32.gmra.mxu0 %v4302
        %v4461 = vpop.f32.mrf.mxu0
        %v4462 = vadd.f32 0.0, %v4461
        %4463 = vmatmul.f32.gmra.mxu0 %v4304
        %v4464 = vpop.f32.mrf.mxu0
        %v4465 = vadd.f32 0.0, %v4464
        %4466 = vmatmul.f32.gmra.mxu0 %v4306
        %v4467 = vpop.f32.mrf.mxu0
        %v4468 = vadd.f32 0.0, %v4467
        %4469 = vmatmul.f32.gmra.mxu0 %v4308
        %v4470 = vpop.f32.mrf.mxu0
        %v4471 = vadd.f32 0.0, %v4470
        %4472 = vmatmul.f32.gmra.mxu0 %v4310
        %v4473 = vpop.f32.mrf.mxu0
        %v4474 = vadd.f32 0.0, %v4473
        %4475 = vmatmul.f32.gmra.mxu0 %v4312
        %v4476 = vpop.f32.mrf.mxu0
        %v4477 = vadd.f32 0.0, %v4476
        %4478 = vmatmul.f32.gmra.mxu0 %v4314
        %v4479 = vpop.f32.mrf.mxu0
        %v4480 = vadd.f32 0.0, %v4479
        %4481 = vmatmul.f32.gmra.mxu0 %v4316
        %v4482 = vpop.f32.mrf.mxu0
        %v4483 = vadd.f32 0.0, %v4482
        %4484 = vmatmul.f32.gmra.mxu0 %v4318
        %v4485 = vpop.f32.mrf.mxu0
        %v4486 = vadd.f32 0.0, %v4485
        %4487 = vmatmul.f32.gmra.mxu0 %v4320
        %v4488 = vpop.f32.mrf.mxu0
        %v4489 = vadd.f32 0.0, %v4488
        %4490 = vmatmul.f32.gmra.mxu0 %v4322
        %v4491 = vpop.f32.mrf.mxu0
        %v4492 = vadd.f32 0.0, %v4491
        %4493 = vmatmul.f32.gmra.mxu0 %v4324
        %v4494 = vpop.f32.mrf.mxu0
        %v4495 = vadd.f32 0.0, %v4494
        %4496 = vmatmul.f32.gmra.mxu0 %v4326
        %v4497 = vpop.f32.mrf.mxu0
        %v4498 = vadd.f32 0.0, %v4497
        %4499 = vmatmul.f32.gmra.mxu0 %v4328
        %v4500 = vpop.f32.mrf.mxu0
        %v4501 = vadd.f32 0.0, %v4500
        %4502 = vmatmul.f32.gmra.mxu0 %v4330
        %v4503 = vpop.f32.mrf.mxu0
        %v4504 = vadd.f32 0.0, %v4503
        %4505 = vmatmul.f32.gmra.mxu0 %v4332
        %v4506 = vpop.f32.mrf.mxu0
        %v4507 = vadd.f32 0.0, %v4506
        %4508 = vmatmul.f32.gmra.mxu0 %v4334
        %v4509 = vpop.f32.mrf.mxu0
        %v4510 = vadd.f32 0.0, %v4509
        %4511 = vmatmul.f32.gmra.mxu0 %v4336
        %v4512 = vpop.f32.mrf.mxu0
        %v4513 = vadd.f32 0.0, %v4512
        %4514 = vdwg.mxu0
        %4515 = vmatpush.xpose.msra.mxu0 %v4400
        %4516 = vmatpush.xpose.msra.mxu0 %v4398
        %4517 = vmatpush.xpose.msra.mxu0 %v4396
        %4518 = vmatpush.xpose.msra.mxu0 %v4394
        %4519 = vmatpush.xpose.msra.mxu0 %v4392
        %4520 = vmatpush.xpose.msra.mxu0 %v4390
        %4521 = vmatpush.xpose.msra.mxu0 %v4388
        %4522 = vmatpush.xpose.msra.mxu0 %v4386
        %4523 = vmatpush.xpose.msra.mxu0 %v4384
        %4524 = vmatpush.xpose.msra.mxu0 %v4382
        %4525 = vmatpush.xpose.msra.mxu0 %v4380
        %4526 = vmatpush.xpose.msra.mxu0 %v4378
        %4527 = vmatpush.xpose.msra.mxu0 %v4376
        %4528 = vmatpush.xpose.msra.mxu0 %v4374
        %4529 = vmatpush.xpose.msra.mxu0 %v4372
        %4530 = vmatpush.xpose.msra.mxu0 %v4370
        %4531 = vmatmul.f32.gmra.mxu0 %v4274
        %v4532 = vpop.f32.mrf.mxu0
        %v4533 = vadd.f32 0.0, %v4532
        %4534 = vmatmul.f32.gmra.mxu0 %v4276
        %v4535 = vpop.f32.mrf.mxu0
        %v4536 = vadd.f32 0.0, %v4535
        %4537 = vmatmul.f32.gmra.mxu0 %v4278
        %v4538 = vpop.f32.mrf.mxu0
        %v4539 = vadd.f32 0.0, %v4538
        %4540 = vmatmul.f32.gmra.mxu0 %v4280
        %v4541 = vpop.f32.mrf.mxu0
        %v4542 = vadd.f32 0.0, %v4541
        %4543 = vmatmul.f32.gmra.mxu0 %v4282
        %v4544 = vpop.f32.mrf.mxu0
        %v4545 = vadd.f32 0.0, %v4544
        %4546 = vmatmul.f32.gmra.mxu0 %v4284
        %v4547 = vpop.f32.mrf.mxu0
        %v4548 = vadd.f32 0.0, %v4547
        %4549 = vmatmul.f32.gmra.mxu0 %v4286
        %v4550 = vpop.f32.mrf.mxu0
        %v4551 = vadd.f32 0.0, %v4550
        %4552 = vmatmul.f32.gmra.mxu0 %v4288
        %v4553 = vpop.f32.mrf.mxu0
        %v4554 = vadd.f32 0.0, %v4553
        %4555 = vmatmul.f32.gmra.mxu0 %v4290
        %v4556 = vpop.f32.mrf.mxu0
        %v4557 = vadd.f32 0.0, %v4556
        %4558 = vmatmul.f32.gmra.mxu0 %v4292
        %v4559 = vpop.f32.mrf.mxu0
        %v4560 = vadd.f32 0.0, %v4559
        %4561 = vmatmul.f32.gmra.mxu0 %v4294
        %v4562 = vpop.f32.mrf.mxu0
        %v4563 = vadd.f32 0.0, %v4562
        %4564 = vmatmul.f32.gmra.mxu0 %v4296
        %v4565 = vpop.f32.mrf.mxu0
        %v4566 = vadd.f32 0.0, %v4565
        %4567 = vmatmul.f32.gmra.mxu0 %v4298
        %v4568 = vpop.f32.mrf.mxu0
        %v4569 = vadd.f32 0.0, %v4568
        %4570 = vmatmul.f32.gmra.mxu0 %v4300
        %v4571 = vpop.f32.mrf.mxu0
        %v4572 = vadd.f32 0.0, %v4571
        %4573 = vmatmul.f32.gmra.mxu0 %v4302
        %v4574 = vpop.f32.mrf.mxu0
        %v4575 = vadd.f32 0.0, %v4574
        %4576 = vmatmul.f32.gmra.mxu0 %v4304
        %v4577 = vpop.f32.mrf.mxu0
        %v4578 = vadd.f32 0.0, %v4577
        %4579 = vmatmul.f32.gmra.mxu0 %v4306
        %v4580 = vpop.f32.mrf.mxu0
        %v4581 = vadd.f32 0.0, %v4580
        %4582 = vmatmul.f32.gmra.mxu0 %v4308
        %v4583 = vpop.f32.mrf.mxu0
        %v4584 = vadd.f32 0.0, %v4583
        %4585 = vmatmul.f32.gmra.mxu0 %v4310
        %v4586 = vpop.f32.mrf.mxu0
        %v4587 = vadd.f32 0.0, %v4586
        %4588 = vmatmul.f32.gmra.mxu0 %v4312
        %v4589 = vpop.f32.mrf.mxu0
        %v4590 = vadd.f32 0.0, %v4589
        %4591 = vmatmul.f32.gmra.mxu0 %v4314
        %v4592 = vpop.f32.mrf.mxu0
        %v4593 = vadd.f32 0.0, %v4592
        %4594 = vmatmul.f32.gmra.mxu0 %v4316
        %v4595 = vpop.f32.mrf.mxu0
        %v4596 = vadd.f32 0.0, %v4595
        %4597 = vmatmul.f32.gmra.mxu0 %v4318
        %v4598 = vpop.f32.mrf.mxu0
        %v4599 = vadd.f32 0.0, %v4598
        %4600 = vmatmul.f32.gmra.mxu0 %v4320
        %v4601 = vpop.f32.mrf.mxu0
        %v4602 = vadd.f32 0.0, %v4601
        %4603 = vmatmul.f32.gmra.mxu0 %v4322
        %v4604 = vpop.f32.mrf.mxu0
        %v4605 = vadd.f32 0.0, %v4604
        %4606 = vmatmul.f32.gmra.mxu0 %v4324
        %v4607 = vpop.f32.mrf.mxu0
        %v4608 = vadd.f32 0.0, %v4607
        %4609 = vmatmul.f32.gmra.mxu0 %v4326
        %v4610 = vpop.f32.mrf.mxu0
        %v4611 = vadd.f32 0.0, %v4610
        %4612 = vmatmul.f32.gmra.mxu0 %v4328
        %v4613 = vpop.f32.mrf.mxu0
        %v4614 = vadd.f32 0.0, %v4613
        %4615 = vmatmul.f32.gmra.mxu0 %v4330
        %v4616 = vpop.f32.mrf.mxu0
        %v4617 = vadd.f32 0.0, %v4616
        %4618 = vmatmul.f32.gmra.mxu0 %v4332
        %v4619 = vpop.f32.mrf.mxu0
        %v4620 = vadd.f32 0.0, %v4619
        %4621 = vmatmul.f32.gmra.mxu0 %v4334
        %v4622 = vpop.f32.mrf.mxu0
        %v4623 = vadd.f32 0.0, %v4622
        %4624 = vmatmul.f32.gmra.mxu0 %v4336
        %v4625 = vpop.f32.mrf.mxu0
        %v4626 = vadd.f32 0.0, %v4625
        %4627 = vdwg.mxu0
        %v4628 = vsel %vm793, %v4420, 0.0
        %v4629 = vsel %vm794, %v4533, 0.0
        %v4630 = vsel %vm795, %v4423, 0.0
        %v4631 = vsel %vm796, %v4536, 0.0
        %v4632 = vsel %vm797, %v4426, 0.0
        %v4633 = vsel %vm798, %v4539, 0.0
        %v4634 = vsel %vm799, %v4429, 0.0
        %v4635 = vsel %vm800, %v4542, 0.0
        %v4636 = vsel %vm801, %v4432, 0.0
        %v4637 = vsel %vm802, %v4545, 0.0
        %v4638 = vsel %vm803, %v4435, 0.0
        %v4639 = vsel %vm804, %v4548, 0.0
        %v4640 = vsel %vm805, %v4438, 0.0
        %v4641 = vsel %vm806, %v4551, 0.0
        %v4642 = vsel %vm807, %v4441, 0.0
        %v4643 = vsel %vm808, %v4554, 0.0
        %v4644 = vsel %vm809, %v4444, 0.0
        %v4645 = vsel %vm810, %v4557, 0.0
        %v4646 = vsel %vm811, %v4447, 0.0
        %v4647 = vsel %vm812, %v4560, 0.0
        %v4648 = vsel %vm813, %v4450, 0.0
        %v4649 = vsel %vm814, %v4563, 0.0
        %v4650 = vsel %vm815, %v4453, 0.0
        %v4651 = vsel %vm816, %v4566, 0.0
        %v4652 = vsel %vm817, %v4456, 0.0
        %v4653 = vsel %vm818, %v4569, 0.0
        %v4654 = vsel %vm819, %v4459, 0.0
        %v4655 = vsel %vm820, %v4572, 0.0
        %v4656 = vsel %vm821, %v4462, 0.0
        %v4657 = vsel %vm822, %v4575, 0.0
        %v4658 = vsel %vm823, %v4465, 0.0
        %v4659 = vsel %vm824, %v4578, 0.0
        %v4660 = vsel %vm825, %v4468, 0.0
        %v4661 = vsel %vm826, %v4581, 0.0
        %v4662 = vsel %vm827, %v4471, 0.0
        %v4663 = vsel %vm828, %v4584, 0.0
        %v4664 = vsel %vm829, %v4474, 0.0
        %v4665 = vsel %vm830, %v4587, 0.0
        %v4666 = vsel %vm831, %v4477, 0.0
        %v4667 = vsel %vm832, %v4590, 0.0
        %v4668 = vsel %vm833, %v4480, 0.0
        %v4669 = vsel %vm834, %v4593, 0.0
        %v4670 = vsel %vm835, %v4483, 0.0
        %v4671 = vsel %vm836, %v4596, 0.0
        %v4672 = vsel %vm837, %v4486, 0.0
        %v4673 = vsel %vm838, %v4599, 0.0
        %v4674 = vsel %vm839, %v4489, 0.0
        %v4675 = vsel %vm840, %v4602, 0.0
        %v4676 = vsel %vm841, %v4492, 0.0
        %v4677 = vsel %vm842, %v4605, 0.0
        %v4678 = vsel %vm843, %v4495, 0.0
        %v4679 = vsel %vm844, %v4608, 0.0
        %v4680 = vsel %vm845, %v4498, 0.0
        %v4681 = vsel %vm846, %v4611, 0.0
        %v4682 = vsel %vm847, %v4501, 0.0
        %v4683 = vsel %vm848, %v4614, 0.0
        %v4684 = vsel %vm849, %v4504, 0.0
        %v4685 = vsel %vm850, %v4617, 0.0
        %v4686 = vsel %vm851, %v4507, 0.0
        %v4687 = vsel %vm852, %v4620, 0.0
        %v4688 = vsel %vm853, %v4510, 0.0
        %v4689 = vsel %vm854, %v4623, 0.0
        %v4690 = vsel %vm855, %v4513, 0.0
        %v4691 = vsel %vm856, %v4626, 0.0
        %s4692 = scalar_lea.vmem [#allocation2], 64
        %v4693 = vld [vmem:[%s4692] sm:$0xff]
        %v4694 = vld [vmem:[%s4692 + $0x8] sm:$0xff]
        %v4695 = vld [vmem:[%s4692 + $0x10] sm:$0xff]
        %v4696 = vld [vmem:[%s4692 + $0x18] sm:$0xff]
        %4697 = vmatpush.msra.mxu0 0.0
        %4698 = vmatpush.msra.mxu0 0.0
        %4699 = vmatpush.msra.mxu0 0.0
        %4700 = vmatpush.msra.mxu0 0.0
        %4701 = vmatpush.msra.mxu0 0.0
        %4702 = vmatpush.msra.mxu0 0.0
        %4703 = vmatpush.msra.mxu0 0.0
        %4704 = vmatpush.msra.mxu0 0.0
        %4705 = vmatpush.msra.mxu0 0.0
        %4706 = vmatpush.msra.mxu0 0.0
        %4707 = vmatpush.msra.mxu0 0.0
        %4708 = vmatpush.msra.mxu0 0.0
        %4709 = vmatpush.msra.mxu0 %v4696
        %4710 = vmatpush.msra.mxu0 %v4695
        %4711 = vmatpush.msra.mxu0 %v4694
        %4712 = vmatpush.msra.mxu0 %v4693
        %4713 = vmatmul.f32.gmra.mxu0 %v4274
        %v4714 = vpop.f32.mrf.mxu0
        %v4715 = vadd.f32 0.0, %v4714
        %4716 = vmatmul.f32.gmra.mxu0 %v4276
        %v4717 = vpop.f32.mrf.mxu0
        %v4718 = vadd.f32 0.0, %v4717
        %4719 = vmatmul.f32.gmra.mxu0 %v4278
        %v4720 = vpop.f32.mrf.mxu0
        %v4721 = vadd.f32 0.0, %v4720
        %4722 = vmatmul.f32.gmra.mxu0 %v4280
        %v4723 = vpop.f32.mrf.mxu0
        %v4724 = vadd.f32 0.0, %v4723
        %4725 = vmatmul.f32.gmra.mxu0 %v4282
        %v4726 = vpop.f32.mrf.mxu0
        %v4727 = vadd.f32 0.0, %v4726
        %4728 = vmatmul.f32.gmra.mxu0 %v4284
        %v4729 = vpop.f32.mrf.mxu0
        %v4730 = vadd.f32 0.0, %v4729
        %4731 = vmatmul.f32.gmra.mxu0 %v4286
        %v4732 = vpop.f32.mrf.mxu0
        %v4733 = vadd.f32 0.0, %v4732
        %4734 = vmatmul.f32.gmra.mxu0 %v4288
        %v4735 = vpop.f32.mrf.mxu0
        %v4736 = vadd.f32 0.0, %v4735
        %4737 = vmatmul.f32.gmra.mxu0 %v4290
        %v4738 = vpop.f32.mrf.mxu0
        %v4739 = vadd.f32 0.0, %v4738
        %4740 = vmatmul.f32.gmra.mxu0 %v4292
        %v4741 = vpop.f32.mrf.mxu0
        %v4742 = vadd.f32 0.0, %v4741
        %4743 = vmatmul.f32.gmra.mxu0 %v4294
        %v4744 = vpop.f32.mrf.mxu0
        %v4745 = vadd.f32 0.0, %v4744
        %4746 = vmatmul.f32.gmra.mxu0 %v4296
        %v4747 = vpop.f32.mrf.mxu0
        %v4748 = vadd.f32 0.0, %v4747
        %4749 = vmatmul.f32.gmra.mxu0 %v4298
        %v4750 = vpop.f32.mrf.mxu0
        %v4751 = vadd.f32 0.0, %v4750
        %4752 = vmatmul.f32.gmra.mxu0 %v4300
        %v4753 = vpop.f32.mrf.mxu0
        %v4754 = vadd.f32 0.0, %v4753
        %4755 = vmatmul.f32.gmra.mxu0 %v4302
        %v4756 = vpop.f32.mrf.mxu0
        %v4757 = vadd.f32 0.0, %v4756
        %4758 = vmatmul.f32.gmra.mxu0 %v4304
        %v4759 = vpop.f32.mrf.mxu0
        %v4760 = vadd.f32 0.0, %v4759
        %4761 = vmatmul.f32.gmra.mxu0 %v4306
        %v4762 = vpop.f32.mrf.mxu0
        %v4763 = vadd.f32 0.0, %v4762
        %4764 = vmatmul.f32.gmra.mxu0 %v4308
        %v4765 = vpop.f32.mrf.mxu0
        %v4766 = vadd.f32 0.0, %v4765
        %4767 = vmatmul.f32.gmra.mxu0 %v4310
        %v4768 = vpop.f32.mrf.mxu0
        %v4769 = vadd.f32 0.0, %v4768
        %4770 = vmatmul.f32.gmra.mxu0 %v4312
        %v4771 = vpop.f32.mrf.mxu0
        %v4772 = vadd.f32 0.0, %v4771
        %4773 = vmatmul.f32.gmra.mxu0 %v4314
        %v4774 = vpop.f32.mrf.mxu0
        %v4775 = vadd.f32 0.0, %v4774
        %4776 = vmatmul.f32.gmra.mxu0 %v4316
        %v4777 = vpop.f32.mrf.mxu0
        %v4778 = vadd.f32 0.0, %v4777
        %4779 = vmatmul.f32.gmra.mxu0 %v4318
        %v4780 = vpop.f32.mrf.mxu0
        %v4781 = vadd.f32 0.0, %v4780
        %4782 = vmatmul.f32.gmra.mxu0 %v4320
        %v4783 = vpop.f32.mrf.mxu0
        %v4784 = vadd.f32 0.0, %v4783
        %4785 = vmatmul.f32.gmra.mxu0 %v4322
        %v4786 = vpop.f32.mrf.mxu0
        %v4787 = vadd.f32 0.0, %v4786
        %4788 = vmatmul.f32.gmra.mxu0 %v4324
        %v4789 = vpop.f32.mrf.mxu0
        %v4790 = vadd.f32 0.0, %v4789
        %4791 = vmatmul.f32.gmra.mxu0 %v4326
        %v4792 = vpop.f32.mrf.mxu0
        %v4793 = vadd.f32 0.0, %v4792
        %4794 = vmatmul.f32.gmra.mxu0 %v4328
        %v4795 = vpop.f32.mrf.mxu0
        %v4796 = vadd.f32 0.0, %v4795
        %4797 = vmatmul.f32.gmra.mxu0 %v4330
        %v4798 = vpop.f32.mrf.mxu0
        %v4799 = vadd.f32 0.0, %v4798
        %4800 = vmatmul.f32.gmra.mxu0 %v4332
        %v4801 = vpop.f32.mrf.mxu0
        %v4802 = vadd.f32 0.0, %v4801
        %4803 = vmatmul.f32.gmra.mxu0 %v4334
        %v4804 = vpop.f32.mrf.mxu0
        %v4805 = vadd.f32 0.0, %v4804
        %4806 = vmatmul.f32.gmra.mxu0 %v4336
        %v4807 = vpop.f32.mrf.mxu0
        %v4808 = vadd.f32 0.0, %v4807
        %4809 = vdwg.mxu0
        %4810 = vmatpush.msra.mxu0 %v4129
        %4811 = vmatpush.msra.mxu0 %v4128
        %4812 = vmatpush.msra.mxu0 %v4127
        %4813 = vmatpush.msra.mxu0 %v4126
        %4814 = vmatpush.msra.mxu0 %v4125
        %4815 = vmatpush.msra.mxu0 %v4124
        %4816 = vmatpush.msra.mxu0 %v4123
        %4817 = vmatpush.msra.mxu0 %v4122
        %4818 = vmatpush.msra.mxu0 %v4121
        %4819 = vmatpush.msra.mxu0 %v4120
        %4820 = vmatpush.msra.mxu0 %v4119
        %4821 = vmatpush.msra.mxu0 %v4118
        %4822 = vmatpush.msra.mxu0 %v4117
        %4823 = vmatpush.msra.mxu0 %v4116
        %4824 = vmatpush.msra.mxu0 %v4115
        %4825 = vmatpush.msra.mxu0 %v4114
        %4826 = vmatmul.f32.gmra.mxu0 %v4628
        %v4827 = vpop.f32.mrf.mxu0
        %v4828 = vadd.f32 %v4715, %v4827
        %4829 = vmatmul.f32.gmra.mxu0 %v4630
        %v4830 = vpop.f32.mrf.mxu0
        %v4831 = vadd.f32 %v4718, %v4830
        %4832 = vmatmul.f32.gmra.mxu0 %v4632
        %v4833 = vpop.f32.mrf.mxu0
        %v4834 = vadd.f32 %v4721, %v4833
        %4835 = vmatmul.f32.gmra.mxu0 %v4634
        %v4836 = vpop.f32.mrf.mxu0
        %v4837 = vadd.f32 %v4724, %v4836
        %4838 = vmatmul.f32.gmra.mxu0 %v4636
        %v4839 = vpop.f32.mrf.mxu0
        %v4840 = vadd.f32 %v4727, %v4839
        %4841 = vmatmul.f32.gmra.mxu0 %v4638
        %v4842 = vpop.f32.mrf.mxu0
        %v4843 = vadd.f32 %v4730, %v4842
        %4844 = vmatmul.f32.gmra.mxu0 %v4640
        %v4845 = vpop.f32.mrf.mxu0
        %v4846 = vadd.f32 %v4733, %v4845
        %4847 = vmatmul.f32.gmra.mxu0 %v4642
        %v4848 = vpop.f32.mrf.mxu0
        %v4849 = vadd.f32 %v4736, %v4848
        %4850 = vmatmul.f32.gmra.mxu0 %v4644
        %v4851 = vpop.f32.mrf.mxu0
        %v4852 = vadd.f32 %v4739, %v4851
        %4853 = vmatmul.f32.gmra.mxu0 %v4646
        %v4854 = vpop.f32.mrf.mxu0
        %v4855 = vadd.f32 %v4742, %v4854
        %4856 = vmatmul.f32.gmra.mxu0 %v4648
        %v4857 = vpop.f32.mrf.mxu0
        %v4858 = vadd.f32 %v4745, %v4857
        %4859 = vmatmul.f32.gmra.mxu0 %v4650
        %v4860 = vpop.f32.mrf.mxu0
        %v4861 = vadd.f32 %v4748, %v4860
        %4862 = vmatmul.f32.gmra.mxu0 %v4652
        %v4863 = vpop.f32.mrf.mxu0
        %v4864 = vadd.f32 %v4751, %v4863
        %4865 = vmatmul.f32.gmra.mxu0 %v4654
        %v4866 = vpop.f32.mrf.mxu0
        %v4867 = vadd.f32 %v4754, %v4866
        %4868 = vmatmul.f32.gmra.mxu0 %v4656
        %v4869 = vpop.f32.mrf.mxu0
        %v4870 = vadd.f32 %v4757, %v4869
        %4871 = vmatmul.f32.gmra.mxu0 %v4658
        %v4872 = vpop.f32.mrf.mxu0
        %v4873 = vadd.f32 %v4760, %v4872
        %4874 = vmatmul.f32.gmra.mxu0 %v4660
        %v4875 = vpop.f32.mrf.mxu0
        %v4876 = vadd.f32 %v4763, %v4875
        %4877 = vmatmul.f32.gmra.mxu0 %v4662
        %v4878 = vpop.f32.mrf.mxu0
        %v4879 = vadd.f32 %v4766, %v4878
        %4880 = vmatmul.f32.gmra.mxu0 %v4664
        %v4881 = vpop.f32.mrf.mxu0
        %v4882 = vadd.f32 %v4769, %v4881
        %4883 = vmatmul.f32.gmra.mxu0 %v4666
        %v4884 = vpop.f32.mrf.mxu0
        %v4885 = vadd.f32 %v4772, %v4884
        %4886 = vmatmul.f32.gmra.mxu0 %v4668
        %v4887 = vpop.f32.mrf.mxu0
        %v4888 = vadd.f32 %v4775, %v4887
        %4889 = vmatmul.f32.gmra.mxu0 %v4670
        %v4890 = vpop.f32.mrf.mxu0
        %v4891 = vadd.f32 %v4778, %v4890
        %4892 = vmatmul.f32.gmra.mxu0 %v4672
        %v4893 = vpop.f32.mrf.mxu0
        %v4894 = vadd.f32 %v4781, %v4893
        %4895 = vmatmul.f32.gmra.mxu0 %v4674
        %v4896 = vpop.f32.mrf.mxu0
        %v4897 = vadd.f32 %v4784, %v4896
        %4898 = vmatmul.f32.gmra.mxu0 %v4676
        %v4899 = vpop.f32.mrf.mxu0
        %v4900 = vadd.f32 %v4787, %v4899
        %4901 = vmatmul.f32.gmra.mxu0 %v4678
        %v4902 = vpop.f32.mrf.mxu0
        %v4903 = vadd.f32 %v4790, %v4902
        %4904 = vmatmul.f32.gmra.mxu0 %v4680
        %v4905 = vpop.f32.mrf.mxu0
        %v4906 = vadd.f32 %v4793, %v4905
        %4907 = vmatmul.f32.gmra.mxu0 %v4682
        %v4908 = vpop.f32.mrf.mxu0
        %v4909 = vadd.f32 %v4796, %v4908
        %4910 = vmatmul.f32.gmra.mxu0 %v4684
        %v4911 = vpop.f32.mrf.mxu0
        %v4912 = vadd.f32 %v4799, %v4911
        %4913 = vmatmul.f32.gmra.mxu0 %v4686
        %v4914 = vpop.f32.mrf.mxu0
        %v4915 = vadd.f32 %v4802, %v4914
        %4916 = vmatmul.f32.gmra.mxu0 %v4688
        %v4917 = vpop.f32.mrf.mxu0
        %v4918 = vadd.f32 %v4805, %v4917
        %4919 = vmatmul.f32.gmra.mxu0 %v4690
        %v4920 = vpop.f32.mrf.mxu0
        %v4921 = vadd.f32 %v4808, %v4920
        %4922 = vdwg.mxu0
        %4923 = vmatpush.msra.mxu0 %v4145
        %4924 = vmatpush.msra.mxu0 %v4144
        %4925 = vmatpush.msra.mxu0 %v4143
        %4926 = vmatpush.msra.mxu0 %v4142
        %4927 = vmatpush.msra.mxu0 %v4141
        %4928 = vmatpush.msra.mxu0 %v4140
        %4929 = vmatpush.msra.mxu0 %v4139
        %4930 = vmatpush.msra.mxu0 %v4138
        %4931 = vmatpush.msra.mxu0 %v4137
        %4932 = vmatpush.msra.mxu0 %v4136
        %4933 = vmatpush.msra.mxu0 %v4135
        %4934 = vmatpush.msra.mxu0 %v4134
        %4935 = vmatpush.msra.mxu0 %v4133
        %4936 = vmatpush.msra.mxu0 %v4132
        %4937 = vmatpush.msra.mxu0 %v4131
        %4938 = vmatpush.msra.mxu0 %v4130
        %4939 = vmatmul.f32.gmra.mxu0 %v4629
        %v4940 = vpop.f32.mrf.mxu0
        %v4941 = vadd.f32 %v4828, %v4940
        %4942 = vmatmul.f32.gmra.mxu0 %v4631
        %v4943 = vpop.f32.mrf.mxu0
        %v4944 = vadd.f32 %v4831, %v4943
        %4945 = vmatmul.f32.gmra.mxu0 %v4633
        %v4946 = vpop.f32.mrf.mxu0
        %v4947 = vadd.f32 %v4834, %v4946
        %4948 = vmatmul.f32.gmra.mxu0 %v4635
        %v4949 = vpop.f32.mrf.mxu0
        %v4950 = vadd.f32 %v4837, %v4949
        %4951 = vmatmul.f32.gmra.mxu0 %v4637
        %v4952 = vpop.f32.mrf.mxu0
        %v4953 = vadd.f32 %v4840, %v4952
        %4954 = vmatmul.f32.gmra.mxu0 %v4639
        %v4955 = vpop.f32.mrf.mxu0
        %v4956 = vadd.f32 %v4843, %v4955
        %4957 = vmatmul.f32.gmra.mxu0 %v4641
        %v4958 = vpop.f32.mrf.mxu0
        %v4959 = vadd.f32 %v4846, %v4958
        %4960 = vmatmul.f32.gmra.mxu0 %v4643
        %v4961 = vpop.f32.mrf.mxu0
        %v4962 = vadd.f32 %v4849, %v4961
        %4963 = vmatmul.f32.gmra.mxu0 %v4645
        %v4964 = vpop.f32.mrf.mxu0
        %v4965 = vadd.f32 %v4852, %v4964
        %4966 = vmatmul.f32.gmra.mxu0 %v4647
        %v4967 = vpop.f32.mrf.mxu0
        %v4968 = vadd.f32 %v4855, %v4967
        %4969 = vmatmul.f32.gmra.mxu0 %v4649
        %v4970 = vpop.f32.mrf.mxu0
        %v4971 = vadd.f32 %v4858, %v4970
        %4972 = vmatmul.f32.gmra.mxu0 %v4651
        %v4973 = vpop.f32.mrf.mxu0
        %v4974 = vadd.f32 %v4861, %v4973
        %4975 = vmatmul.f32.gmra.mxu0 %v4653
        %v4976 = vpop.f32.mrf.mxu0
        %v4977 = vadd.f32 %v4864, %v4976
        %4978 = vmatmul.f32.gmra.mxu0 %v4655
        %v4979 = vpop.f32.mrf.mxu0
        %v4980 = vadd.f32 %v4867, %v4979
        %4981 = vmatmul.f32.gmra.mxu0 %v4657
        %v4982 = vpop.f32.mrf.mxu0
        %v4983 = vadd.f32 %v4870, %v4982
        %4984 = vmatmul.f32.gmra.mxu0 %v4659
        %v4985 = vpop.f32.mrf.mxu0
        %v4986 = vadd.f32 %v4873, %v4985
        %4987 = vmatmul.f32.gmra.mxu0 %v4661
        %v4988 = vpop.f32.mrf.mxu0
        %v4989 = vadd.f32 %v4876, %v4988
        %4990 = vmatmul.f32.gmra.mxu0 %v4663
        %v4991 = vpop.f32.mrf.mxu0
        %v4992 = vadd.f32 %v4879, %v4991
        %4993 = vmatmul.f32.gmra.mxu0 %v4665
        %v4994 = vpop.f32.mrf.mxu0
        %v4995 = vadd.f32 %v4882, %v4994
        %4996 = vmatmul.f32.gmra.mxu0 %v4667
        %v4997 = vpop.f32.mrf.mxu0
        %v4998 = vadd.f32 %v4885, %v4997
        %4999 = vmatmul.f32.gmra.mxu0 %v4669
        %v5000 = vpop.f32.mrf.mxu0
        %v5001 = vadd.f32 %v4888, %v5000
        %5002 = vmatmul.f32.gmra.mxu0 %v4671
        %v5003 = vpop.f32.mrf.mxu0
        %v5004 = vadd.f32 %v4891, %v5003
        %5005 = vmatmul.f32.gmra.mxu0 %v4673
        %v5006 = vpop.f32.mrf.mxu0
        %v5007 = vadd.f32 %v4894, %v5006
        %5008 = vmatmul.f32.gmra.mxu0 %v4675
        %v5009 = vpop.f32.mrf.mxu0
        %v5010 = vadd.f32 %v4897, %v5009
        %5011 = vmatmul.f32.gmra.mxu0 %v4677
        %v5012 = vpop.f32.mrf.mxu0
        %v5013 = vadd.f32 %v4900, %v5012
        %5014 = vmatmul.f32.gmra.mxu0 %v4679
        %v5015 = vpop.f32.mrf.mxu0
        %v5016 = vadd.f32 %v4903, %v5015
        %5017 = vmatmul.f32.gmra.mxu0 %v4681
        %v5018 = vpop.f32.mrf.mxu0
        %v5019 = vadd.f32 %v4906, %v5018
        %5020 = vmatmul.f32.gmra.mxu0 %v4683
        %v5021 = vpop.f32.mrf.mxu0
        %v5022 = vadd.f32 %v4909, %v5021
        %5023 = vmatmul.f32.gmra.mxu0 %v4685
        %v5024 = vpop.f32.mrf.mxu0
        %v5025 = vadd.f32 %v4912, %v5024
        %5026 = vmatmul.f32.gmra.mxu0 %v4687
        %v5027 = vpop.f32.mrf.mxu0
        %v5028 = vadd.f32 %v4915, %v5027
        %5029 = vmatmul.f32.gmra.mxu0 %v4689
        %v5030 = vpop.f32.mrf.mxu0
        %v5031 = vadd.f32 %v4918, %v5030
        %5032 = vmatmul.f32.gmra.mxu0 %v4691
        %v5033 = vpop.f32.mrf.mxu0
        %v5034 = vadd.f32 %v4921, %v5033
        %5035 = vdwg.mxu0
        %v5036 = vadd.f32 %v4941, 1e-06
        %v5037 = vadd.f32 %v4944, 1e-06
        %v5038 = vadd.f32 %v4947, 1e-06
        %v5039 = vadd.f32 %v4950, 1e-06
        %v5040 = vadd.f32 %v4953, 1e-06
        %v5041 = vadd.f32 %v4956, 1e-06
        %v5042 = vadd.f32 %v4959, 1e-06
        %v5043 = vadd.f32 %v4962, 1e-06
        %v5044 = vadd.f32 %v4965, 1e-06
        %v5045 = vadd.f32 %v4968, 1e-06
        %v5046 = vadd.f32 %v4971, 1e-06
        %v5047 = vadd.f32 %v4974, 1e-06
        %v5048 = vadd.f32 %v4977, 1e-06
        %v5049 = vadd.f32 %v4980, 1e-06
        %v5050 = vadd.f32 %v4983, 1e-06
        %v5051 = vadd.f32 %v4986, 1e-06
        %v5052 = vadd.f32 %v4989, 1e-06
        %v5053 = vadd.f32 %v4992, 1e-06
        %v5054 = vadd.f32 %v4995, 1e-06
        %v5055 = vadd.f32 %v4998, 1e-06
        %v5056 = vadd.f32 %v5001, 1e-06
        %v5057 = vadd.f32 %v5004, 1e-06
        %v5058 = vadd.f32 %v5007, 1e-06
        %v5059 = vadd.f32 %v5010, 1e-06
        %v5060 = vadd.f32 %v5013, 1e-06
        %v5061 = vadd.f32 %v5016, 1e-06
        %v5062 = vadd.f32 %v5019, 1e-06
        %v5063 = vadd.f32 %v5022, 1e-06
        %v5064 = vadd.f32 %v5025, 1e-06
        %v5065 = vadd.f32 %v5028, 1e-06
        %v5066 = vadd.f32 %v5031, 1e-06
        %v5067 = vadd.f32 %v5034, 1e-06
        %v5068 = vrcp.pop %v5036
        %v5069 = vrcp.pop %v5037
        %v5070 = vrcp.pop %v5038
        %v5071 = vrcp.pop %v5039
        %v5072 = vrcp.pop %v5040
        %v5073 = vrcp.pop %v5041
        %v5074 = vrcp.pop %v5042
        %v5075 = vrcp.pop %v5043
        %v5076 = vrcp.pop %v5044
        %v5077 = vrcp.pop %v5045
        %v5078 = vrcp.pop %v5046
        %v5079 = vrcp.pop %v5047
        %v5080 = vrcp.pop %v5048
        %v5081 = vrcp.pop %v5049
        %v5082 = vrcp.pop %v5050
        %v5083 = vrcp.pop %v5051
        %v5084 = vrcp.pop %v5052
        %v5085 = vrcp.pop %v5053
        %v5086 = vrcp.pop %v5054
        %v5087 = vrcp.pop %v5055
        %v5088 = vrcp.pop %v5056
        %v5089 = vrcp.pop %v5057
        %v5090 = vrcp.pop %v5058
        %v5091 = vrcp.pop %v5059
        %v5092 = vrcp.pop %v5060
        %v5093 = vrcp.pop %v5061
        %v5094 = vrcp.pop %v5062
        %v5095 = vrcp.pop %v5063
        %v5096 = vrcp.pop %v5064
        %v5097 = vrcp.pop %v5065
        %v5098 = vrcp.pop %v5066
        %v5099 = vrcp.pop %v5067
        %v5100 = vmul.f32 %v5036, %v5068
        %v5101 = vmul.f32 %v5037, %v5069
        %v5102 = vmul.f32 %v5038, %v5070
        %v5103 = vmul.f32 %v5039, %v5071
        %v5104 = vmul.f32 %v5040, %v5072
        %v5105 = vmul.f32 %v5041, %v5073
        %v5106 = vmul.f32 %v5042, %v5074
        %v5107 = vmul.f32 %v5043, %v5075
        %v5108 = vmul.f32 %v5044, %v5076
        %v5109 = vmul.f32 %v5045, %v5077
        %v5110 = vmul.f32 %v5046, %v5078
        %v5111 = vmul.f32 %v5047, %v5079
        %v5112 = vmul.f32 %v5048, %v5080
        %v5113 = vmul.f32 %v5049, %v5081
        %v5114 = vmul.f32 %v5050, %v5082
        %v5115 = vmul.f32 %v5051, %v5083
        %v5116 = vmul.f32 %v5052, %v5084
        %v5117 = vmul.f32 %v5053, %v5085
        %v5118 = vmul.f32 %v5054, %v5086
        %v5119 = vmul.f32 %v5055, %v5087
        %v5120 = vmul.f32 %v5056, %v5088
        %v5121 = vmul.f32 %v5057, %v5089
        %v5122 = vmul.f32 %v5058, %v5090
        %v5123 = vmul.f32 %v5059, %v5091
        %v5124 = vmul.f32 %v5060, %v5092
        %v5125 = vmul.f32 %v5061, %v5093
        %v5126 = vmul.f32 %v5062, %v5094
        %v5127 = vmul.f32 %v5063, %v5095
        %v5128 = vmul.f32 %v5064, %v5096
        %v5129 = vmul.f32 %v5065, %v5097
        %v5130 = vmul.f32 %v5066, %v5098
        %v5131 = vmul.f32 %v5067, %v5099
        %v5132 = vsub.f32 2.0, %v5100
        %v5133 = vsub.f32 2.0, %v5101
        %v5134 = vsub.f32 2.0, %v5102
        %v5135 = vsub.f32 2.0, %v5103
        %v5136 = vsub.f32 2.0, %v5104
        %v5137 = vsub.f32 2.0, %v5105
        %v5138 = vsub.f32 2.0, %v5106
        %v5139 = vsub.f32 2.0, %v5107
        %v5140 = vsub.f32 2.0, %v5108
        %v5141 = vsub.f32 2.0, %v5109
        %v5142 = vsub.f32 2.0, %v5110
        %v5143 = vsub.f32 2.0, %v5111
        %v5144 = vsub.f32 2.0, %v5112
        %v5145 = vsub.f32 2.0, %v5113
        %v5146 = vsub.f32 2.0, %v5114
        %v5147 = vsub.f32 2.0, %v5115
        %v5148 = vsub.f32 2.0, %v5116
        %v5149 = vsub.f32 2.0, %v5117
        %v5150 = vsub.f32 2.0, %v5118
        %v5151 = vsub.f32 2.0, %v5119
        %v5152 = vsub.f32 2.0, %v5120
        %v5153 = vsub.f32 2.0, %v5121
        %v5154 = vsub.f32 2.0, %v5122
        %v5155 = vsub.f32 2.0, %v5123
        %v5156 = vsub.f32 2.0, %v5124
        %v5157 = vsub.f32 2.0, %v5125
        %v5158 = vsub.f32 2.0, %v5126
        %v5159 = vsub.f32 2.0, %v5127
        %v5160 = vsub.f32 2.0, %v5128
        %v5161 = vsub.f32 2.0, %v5129
        %v5162 = vsub.f32 2.0, %v5130
        %v5163 = vsub.f32 2.0, %v5131
        %v5164 = vmul.f32 %v5068, %v5132
        %v5165 = vmul.f32 %v5069, %v5133
        %v5166 = vmul.f32 %v5070, %v5134
        %v5167 = vmul.f32 %v5071, %v5135
        %v5168 = vmul.f32 %v5072, %v5136
        %v5169 = vmul.f32 %v5073, %v5137
        %v5170 = vmul.f32 %v5074, %v5138
        %v5171 = vmul.f32 %v5075, %v5139
        %v5172 = vmul.f32 %v5076, %v5140
        %v5173 = vmul.f32 %v5077, %v5141
        %v5174 = vmul.f32 %v5078, %v5142
        %v5175 = vmul.f32 %v5079, %v5143
        %v5176 = vmul.f32 %v5080, %v5144
        %v5177 = vmul.f32 %v5081, %v5145
        %v5178 = vmul.f32 %v5082, %v5146
        %v5179 = vmul.f32 %v5083, %v5147
        %v5180 = vmul.f32 %v5084, %v5148
        %v5181 = vmul.f32 %v5085, %v5149
        %v5182 = vmul.f32 %v5086, %v5150
        %v5183 = vmul.f32 %v5087, %v5151
        %v5184 = vmul.f32 %v5088, %v5152
        %v5185 = vmul.f32 %v5089, %v5153
        %v5186 = vmul.f32 %v5090, %v5154
        %v5187 = vmul.f32 %v5091, %v5155
        %v5188 = vmul.f32 %v5092, %v5156
        %v5189 = vmul.f32 %v5093, %v5157
        %v5190 = vmul.f32 %v5094, %v5158
        %v5191 = vmul.f32 %v5095, %v5159
        %v5192 = vmul.f32 %v5096, %v5160
        %v5193 = vmul.f32 %v5097, %v5161
        %v5194 = vmul.f32 %v5098, %v5162
        %v5195 = vmul.f32 %v5099, %v5163
        %v5196 = vmax.f32 %v5164, -1.0
        %v5197 = vmax.f32 %v5165, -1.0
        %v5198 = vmax.f32 %v5166, -1.0
        %v5199 = vmax.f32 %v5167, -1.0
        %v5200 = vmax.f32 %v5168, -1.0
        %v5201 = vmax.f32 %v5169, -1.0
        %v5202 = vmax.f32 %v5170, -1.0
        %v5203 = vmax.f32 %v5171, -1.0
        %v5204 = vmax.f32 %v5172, -1.0
        %v5205 = vmax.f32 %v5173, -1.0
        %v5206 = vmax.f32 %v5174, -1.0
        %v5207 = vmax.f32 %v5175, -1.0
        %v5208 = vmax.f32 %v5176, -1.0
        %v5209 = vmax.f32 %v5177, -1.0
        %v5210 = vmax.f32 %v5178, -1.0
        %v5211 = vmax.f32 %v5179, -1.0
        %v5212 = vmax.f32 %v5180, -1.0
        %v5213 = vmax.f32 %v5181, -1.0
        %v5214 = vmax.f32 %v5182, -1.0
        %v5215 = vmax.f32 %v5183, -1.0
        %v5216 = vmax.f32 %v5184, -1.0
        %v5217 = vmax.f32 %v5185, -1.0
        %v5218 = vmax.f32 %v5186, -1.0
        %v5219 = vmax.f32 %v5187, -1.0
        %v5220 = vmax.f32 %v5188, -1.0
        %v5221 = vmax.f32 %v5189, -1.0
        %v5222 = vmax.f32 %v5190, -1.0
        %v5223 = vmax.f32 %v5191, -1.0
        %v5224 = vmax.f32 %v5192, -1.0
        %v5225 = vmax.f32 %v5193, -1.0
        %v5226 = vmax.f32 %v5194, -1.0
        %v5227 = vmax.f32 %v5195, -1.0
        %v5228 = vmin.f32 %v5196, 1.0
        %v5229 = vmin.f32 %v5197, 1.0
        %v5230 = vmin.f32 %v5198, 1.0
        %v5231 = vmin.f32 %v5199, 1.0
        %v5232 = vmin.f32 %v5200, 1.0
        %v5233 = vmin.f32 %v5201, 1.0
        %v5234 = vmin.f32 %v5202, 1.0
        %v5235 = vmin.f32 %v5203, 1.0
        %v5236 = vmin.f32 %v5204, 1.0
        %v5237 = vmin.f32 %v5205, 1.0
        %v5238 = vmin.f32 %v5206, 1.0
        %v5239 = vmin.f32 %v5207, 1.0
        %v5240 = vmin.f32 %v5208, 1.0
        %v5241 = vmin.f32 %v5209, 1.0
        %v5242 = vmin.f32 %v5210, 1.0
        %v5243 = vmin.f32 %v5211, 1.0
        %v5244 = vmin.f32 %v5212, 1.0
        %v5245 = vmin.f32 %v5213, 1.0
        %v5246 = vmin.f32 %v5214, 1.0
        %v5247 = vmin.f32 %v5215, 1.0
        %v5248 = vmin.f32 %v5216, 1.0
        %v5249 = vmin.f32 %v5217, 1.0
        %v5250 = vmin.f32 %v5218, 1.0
        %v5251 = vmin.f32 %v5219, 1.0
        %v5252 = vmin.f32 %v5220, 1.0
        %v5253 = vmin.f32 %v5221, 1.0
        %v5254 = vmin.f32 %v5222, 1.0
        %v5255 = vmin.f32 %v5223, 1.0
        %v5256 = vmin.f32 %v5224, 1.0
        %v5257 = vmin.f32 %v5225, 1.0
        %v5258 = vmin.f32 %v5226, 1.0
        %v5259 = vmin.f32 %v5227, 1.0
        %5261 = vset.pattern.permute.xlu0 32
        %5262 = vperm.xlu0 %5261, %v5228
        %v5263 = vpop.permute.xlu0 %5262
        %5266 = vset.pattern.permute.xlu0 32
        %5267 = vperm.xlu0 %5266, %v5229
        %v5268 = vpop.permute.xlu0 %5267
        %5271 = vset.pattern.permute.xlu0 32
        %5272 = vperm.xlu0 %5271, %v5230
        %v5273 = vpop.permute.xlu0 %5272
        %5276 = vset.pattern.permute.xlu0 32
        %5277 = vperm.xlu0 %5276, %v5231
        %v5278 = vpop.permute.xlu0 %5277
        %5281 = vset.pattern.permute.xlu0 32
        %5282 = vperm.xlu0 %5281, %v5232
        %v5283 = vpop.permute.xlu0 %5282
        %5286 = vset.pattern.permute.xlu0 32
        %5287 = vperm.xlu0 %5286, %v5233
        %v5288 = vpop.permute.xlu0 %5287
        %5291 = vset.pattern.permute.xlu0 32
        %5292 = vperm.xlu0 %5291, %v5234
        %v5293 = vpop.permute.xlu0 %5292
        %5296 = vset.pattern.permute.xlu0 32
        %5297 = vperm.xlu0 %5296, %v5235
        %v5298 = vpop.permute.xlu0 %5297
        %5301 = vset.pattern.permute.xlu0 32
        %5302 = vperm.xlu0 %5301, %v5236
        %v5303 = vpop.permute.xlu0 %5302
        %5306 = vset.pattern.permute.xlu0 32
        %5307 = vperm.xlu0 %5306, %v5237
        %v5308 = vpop.permute.xlu0 %5307
        %5311 = vset.pattern.permute.xlu0 32
        %5312 = vperm.xlu0 %5311, %v5238
        %v5313 = vpop.permute.xlu0 %5312
        %5316 = vset.pattern.permute.xlu0 32
        %5317 = vperm.xlu0 %5316, %v5239
        %v5318 = vpop.permute.xlu0 %5317
        %5321 = vset.pattern.permute.xlu0 32
        %5322 = vperm.xlu0 %5321, %v5240
        %v5323 = vpop.permute.xlu0 %5322
        %5326 = vset.pattern.permute.xlu0 32
        %5327 = vperm.xlu0 %5326, %v5241
        %v5328 = vpop.permute.xlu0 %5327
        %5331 = vset.pattern.permute.xlu0 32
        %5332 = vperm.xlu0 %5331, %v5242
        %v5333 = vpop.permute.xlu0 %5332
        %5336 = vset.pattern.permute.xlu0 32
        %5337 = vperm.xlu0 %5336, %v5243
        %v5338 = vpop.permute.xlu0 %5337
        %5341 = vset.pattern.permute.xlu0 32
        %5342 = vperm.xlu0 %5341, %v5244
        %v5343 = vpop.permute.xlu0 %5342
        %5346 = vset.pattern.permute.xlu0 32
        %5347 = vperm.xlu0 %5346, %v5245
        %v5348 = vpop.permute.xlu0 %5347
        %5351 = vset.pattern.permute.xlu0 32
        %5352 = vperm.xlu0 %5351, %v5246
        %v5353 = vpop.permute.xlu0 %5352
        %5356 = vset.pattern.permute.xlu0 32
        %5357 = vperm.xlu0 %5356, %v5247
        %v5358 = vpop.permute.xlu0 %5357
        %5361 = vset.pattern.permute.xlu0 32
        %5362 = vperm.xlu0 %5361, %v5248
        %v5363 = vpop.permute.xlu0 %5362
        %5366 = vset.pattern.permute.xlu0 32
        %5367 = vperm.xlu0 %5366, %v5249
        %v5368 = vpop.permute.xlu0 %5367
        %5371 = vset.pattern.permute.xlu0 32
        %5372 = vperm.xlu0 %5371, %v5250
        %v5373 = vpop.permute.xlu0 %5372
        %5376 = vset.pattern.permute.xlu0 32
        %5377 = vperm.xlu0 %5376, %v5251
        %v5378 = vpop.permute.xlu0 %5377
        %5381 = vset.pattern.permute.xlu0 32
        %5382 = vperm.xlu0 %5381, %v5252
        %v5383 = vpop.permute.xlu0 %5382
        %5386 = vset.pattern.permute.xlu0 32
        %5387 = vperm.xlu0 %5386, %v5253
        %v5388 = vpop.permute.xlu0 %5387
        %5391 = vset.pattern.permute.xlu0 32
        %5392 = vperm.xlu0 %5391, %v5254
        %v5393 = vpop.permute.xlu0 %5392
        %5396 = vset.pattern.permute.xlu0 32
        %5397 = vperm.xlu0 %5396, %v5255
        %v5398 = vpop.permute.xlu0 %5397
        %5401 = vset.pattern.permute.xlu0 32
        %5402 = vperm.xlu0 %5401, %v5256
        %v5403 = vpop.permute.xlu0 %5402
        %5406 = vset.pattern.permute.xlu0 32
        %5407 = vperm.xlu0 %5406, %v5257
        %v5408 = vpop.permute.xlu0 %5407
        %5411 = vset.pattern.permute.xlu0 32
        %5412 = vperm.xlu0 %5411, %v5258
        %v5413 = vpop.permute.xlu0 %5412
        %5416 = vset.pattern.permute.xlu0 32
        %5417 = vperm.xlu0 %5416, %v5259
        %v5418 = vpop.permute.xlu0 %5417
        %v5420 = vmul.f32 %v4941, %v5263
        %v5421 = vmul.f32 %v4944, %v5268
        %v5422 = vmul.f32 %v4947, %v5273
        %v5423 = vmul.f32 %v4950, %v5278
        %v5424 = vmul.f32 %v4953, %v5283
        %v5425 = vmul.f32 %v4956, %v5288
        %v5426 = vmul.f32 %v4959, %v5293
        %v5427 = vmul.f32 %v4962, %v5298
        %v5428 = vmul.f32 %v4965, %v5303
        %v5429 = vmul.f32 %v4968, %v5308
        %v5430 = vmul.f32 %v4971, %v5313
        %v5431 = vmul.f32 %v4974, %v5318
        %v5432 = vmul.f32 %v4977, %v5323
        %v5433 = vmul.f32 %v4980, %v5328
        %v5434 = vmul.f32 %v4983, %v5333
        %v5435 = vmul.f32 %v4986, %v5338
        %v5436 = vmul.f32 %v4989, %v5343
        %v5437 = vmul.f32 %v4992, %v5348
        %v5438 = vmul.f32 %v4995, %v5353
        %v5439 = vmul.f32 %v4998, %v5358
        %v5440 = vmul.f32 %v5001, %v5363
        %v5441 = vmul.f32 %v5004, %v5368
        %v5442 = vmul.f32 %v5007, %v5373
        %v5443 = vmul.f32 %v5010, %v5378
        %v5444 = vmul.f32 %v5013, %v5383
        %v5445 = vmul.f32 %v5016, %v5388
        %v5446 = vmul.f32 %v5019, %v5393
        %v5447 = vmul.f32 %v5022, %v5398
        %v5448 = vmul.f32 %v5025, %v5403
        %v5449 = vmul.f32 %v5028, %v5408
        %v5450 = vmul.f32 %v5031, %v5413
        %v5451 = vmul.f32 %v5034, %v5418
        %v5452 = vmax.f32 %v5420, -16.0
        %v5453 = vmax.f32 %v5421, -16.0
        %v5454 = vmax.f32 %v5422, -16.0
        %v5455 = vmax.f32 %v5423, -16.0
        %v5456 = vmax.f32 %v5424, -16.0
        %v5457 = vmax.f32 %v5425, -16.0
        %v5458 = vmax.f32 %v5426, -16.0
        %v5459 = vmax.f32 %v5427, -16.0
        %v5460 = vmax.f32 %v5428, -16.0
        %v5461 = vmax.f32 %v5429, -16.0
        %v5462 = vmax.f32 %v5430, -16.0
        %v5463 = vmax.f32 %v5431, -16.0
        %v5464 = vmax.f32 %v5432, -16.0
        %v5465 = vmax.f32 %v5433, -16.0
        %v5466 = vmax.f32 %v5434, -16.0
        %v5467 = vmax.f32 %v5435, -16.0
        %v5468 = vmax.f32 %v5436, -16.0
        %v5469 = vmax.f32 %v5437, -16.0
        %v5470 = vmax.f32 %v5438, -16.0
        %v5471 = vmax.f32 %v5439, -16.0
        %v5472 = vmax.f32 %v5440, -16.0
        %v5473 = vmax.f32 %v5441, -16.0
        %v5474 = vmax.f32 %v5442, -16.0
        %v5475 = vmax.f32 %v5443, -16.0
        %v5476 = vmax.f32 %v5444, -16.0
        %v5477 = vmax.f32 %v5445, -16.0
        %v5478 = vmax.f32 %v5446, -16.0
        %v5479 = vmax.f32 %v5447, -16.0
        %v5480 = vmax.f32 %v5448, -16.0
        %v5481 = vmax.f32 %v5449, -16.0
        %v5482 = vmax.f32 %v5450, -16.0
        %v5483 = vmax.f32 %v5451, -16.0
        %v5484 = vmin.f32 %v5452, 16.0
        %v5485 = vmin.f32 %v5453, 16.0
        %v5486 = vmin.f32 %v5454, 16.0
        %v5487 = vmin.f32 %v5455, 16.0
        %v5488 = vmin.f32 %v5456, 16.0
        %v5489 = vmin.f32 %v5457, 16.0
        %v5490 = vmin.f32 %v5458, 16.0
        %v5491 = vmin.f32 %v5459, 16.0
        %v5492 = vmin.f32 %v5460, 16.0
        %v5493 = vmin.f32 %v5461, 16.0
        %v5494 = vmin.f32 %v5462, 16.0
        %v5495 = vmin.f32 %v5463, 16.0
        %v5496 = vmin.f32 %v5464, 16.0
        %v5497 = vmin.f32 %v5465, 16.0
        %v5498 = vmin.f32 %v5466, 16.0
        %v5499 = vmin.f32 %v5467, 16.0
        %v5500 = vmin.f32 %v5468, 16.0
        %v5501 = vmin.f32 %v5469, 16.0
        %v5502 = vmin.f32 %v5470, 16.0
        %v5503 = vmin.f32 %v5471, 16.0
        %v5504 = vmin.f32 %v5472, 16.0
        %v5505 = vmin.f32 %v5473, 16.0
        %v5506 = vmin.f32 %v5474, 16.0
        %v5507 = vmin.f32 %v5475, 16.0
        %v5508 = vmin.f32 %v5476, 16.0
        %v5509 = vmin.f32 %v5477, 16.0
        %v5510 = vmin.f32 %v5478, 16.0
        %v5511 = vmin.f32 %v5479, 16.0
        %v5512 = vmin.f32 %v5480, 16.0
        %v5513 = vmin.f32 %v5481, 16.0
        %v5514 = vmin.f32 %v5482, 16.0
        %v5515 = vmin.f32 %v5483, 16.0
        %5548 = vxpose.xlu0.b32.start [1/16] %v4211, 128
        %5549 = vxpose.xlu0.b32.cont [2/16] %v4213, 128
        %5550 = vxpose.xlu0.b32.cont [3/16] %v4215, 128
        %5551 = vxpose.xlu0.b32.cont [4/16] %v4217, 128
        %5552 = vxpose.xlu0.b32.cont [5/16] %v4219, 128
        %5553 = vxpose.xlu0.b32.cont [6/16] %v4221, 128
        %5554 = vxpose.xlu0.b32.cont [7/16] %v4223, 128
        %5555 = vxpose.xlu0.b32.cont [8/16] %v4225, 128
        %5556 = vxpose.xlu0.b32.cont [9/16] %v4227, 128
        %5557 = vxpose.xlu0.b32.cont [10/16] %v4229, 128
        %5558 = vxpose.xlu0.b32.cont [11/16] %v4231, 128
        %5559 = vxpose.xlu0.b32.cont [12/16] %v4233, 128
        %5560 = vxpose.xlu0.b32.cont [13/16] %v4235, 128
        %5561 = vxpose.xlu0.b32.cont [14/16] %v4237, 128
        %5562 = vxpose.xlu0.b32.cont [15/16] %v4239, 128
        %5563 = vxpose.xlu0.b32.end [16/16] %v4241, 128
        %v5564 = vpop.trf.xlu0
        %v5565 = vpop.trf.xlu0
        %v5566 = vpop.trf.xlu0
        %v5567 = vpop.trf.xlu0
        %v5568 = vpop.trf.xlu0
        %v5569 = vpop.trf.xlu0
        %v5570 = vpop.trf.xlu0
        %v5571 = vpop.trf.xlu0
        %v5572 = vpop.trf.xlu0
        %v5573 = vpop.trf.xlu0
        %v5574 = vpop.trf.xlu0
        %v5575 = vpop.trf.xlu0
        %v5576 = vpop.trf.xlu0
        %v5577 = vpop.trf.xlu0
        %v5578 = vpop.trf.xlu0
        %v5579 = vpop.trf.xlu0
        %5580 = vxpose.xlu0.b32.start [1/16] %v4243, 128
        %5581 = vxpose.xlu0.b32.cont [2/16] %v4245, 128
        %5582 = vxpose.xlu0.b32.cont [3/16] %v4247, 128
        %5583 = vxpose.xlu0.b32.cont [4/16] %v4249, 128
        %5584 = vxpose.xlu0.b32.cont [5/16] %v4251, 128
        %5585 = vxpose.xlu0.b32.cont [6/16] %v4253, 128
        %5586 = vxpose.xlu0.b32.cont [7/16] %v4255, 128
        %5587 = vxpose.xlu0.b32.cont [8/16] %v4257, 128
        %5588 = vxpose.xlu0.b32.cont [9/16] %v4259, 128
        %5589 = vxpose.xlu0.b32.cont [10/16] %v4261, 128
        %5590 = vxpose.xlu0.b32.cont [11/16] %v4263, 128
        %5591 = vxpose.xlu0.b32.cont [12/16] %v4265, 128
        %5592 = vxpose.xlu0.b32.cont [13/16] %v4267, 128
        %5593 = vxpose.xlu0.b32.cont [14/16] %v4269, 128
        %5594 = vxpose.xlu0.b32.cont [15/16] %v4271, 128
        %5595 = vxpose.xlu0.b32.end [16/16] %v4273, 128
        %v5596 = vpop.trf.xlu0
        %v5597 = vpop.trf.xlu0
        %v5598 = vpop.trf.xlu0
        %v5599 = vpop.trf.xlu0
        %v5600 = vpop.trf.xlu0
        %v5601 = vpop.trf.xlu0
        %v5602 = vpop.trf.xlu0
        %v5603 = vpop.trf.xlu0
        %v5604 = vpop.trf.xlu0
        %v5605 = vpop.trf.xlu0
        %v5606 = vpop.trf.xlu0
        %v5607 = vpop.trf.xlu0
        %v5608 = vpop.trf.xlu0
        %v5609 = vpop.trf.xlu0
        %v5610 = vpop.trf.xlu0
        %v5611 = vpop.trf.xlu0
        %5612 = vmatpush.msra.mxu0 %v4129
        %5613 = vmatpush.msra.mxu0 %v4128
        %5614 = vmatpush.msra.mxu0 %v4127
        %5615 = vmatpush.msra.mxu0 %v4126
        %5616 = vmatpush.msra.mxu0 %v4125
        %5617 = vmatpush.msra.mxu0 %v4124
        %5618 = vmatpush.msra.mxu0 %v4123
        %5619 = vmatpush.msra.mxu0 %v4122
        %5620 = vmatpush.msra.mxu0 %v4121
        %5621 = vmatpush.msra.mxu0 %v4120
        %5622 = vmatpush.msra.mxu0 %v4119
        %5623 = vmatpush.msra.mxu0 %v4118
        %5624 = vmatpush.msra.mxu0 %v4117
        %5625 = vmatpush.msra.mxu0 %v4116
        %5626 = vmatpush.msra.mxu0 %v4115
        %5627 = vmatpush.msra.mxu0 %v4114
        %5628 = vmatmul.f32.gmra.mxu0 %v5564
        %v5629 = vpop.f32.mrf.mxu0
        %v5630 = vadd.f32 0.0, %v5629
        %5631 = vmatmul.f32.gmra.mxu0 %v5565
        %v5632 = vpop.f32.mrf.mxu0
        %v5633 = vadd.f32 0.0, %v5632
        %5634 = vmatmul.f32.gmra.mxu0 %v5566
        %v5635 = vpop.f32.mrf.mxu0
        %v5636 = vadd.f32 0.0, %v5635
        %5637 = vmatmul.f32.gmra.mxu0 %v5567
        %v5638 = vpop.f32.mrf.mxu0
        %v5639 = vadd.f32 0.0, %v5638
        %5640 = vdwg.mxu0
        %5641 = vmatpush.msra.mxu0 %v4145
        %5642 = vmatpush.msra.mxu0 %v4144
        %5643 = vmatpush.msra.mxu0 %v4143
        %5644 = vmatpush.msra.mxu0 %v4142
        %5645 = vmatpush.msra.mxu0 %v4141
        %5646 = vmatpush.msra.mxu0 %v4140
        %5647 = vmatpush.msra.mxu0 %v4139
        %5648 = vmatpush.msra.mxu0 %v4138
        %5649 = vmatpush.msra.mxu0 %v4137
        %5650 = vmatpush.msra.mxu0 %v4136
        %5651 = vmatpush.msra.mxu0 %v4135
        %5652 = vmatpush.msra.mxu0 %v4134
        %5653 = vmatpush.msra.mxu0 %v4133
        %5654 = vmatpush.msra.mxu0 %v4132
        %5655 = vmatpush.msra.mxu0 %v4131
        %5656 = vmatpush.msra.mxu0 %v4130
        %5657 = vmatmul.f32.gmra.mxu0 %v5596
        %v5658 = vpop.f32.mrf.mxu0
        %v5659 = vadd.f32 %v5630, %v5658
        %5660 = vmatmul.f32.gmra.mxu0 %v5597
        %v5661 = vpop.f32.mrf.mxu0
        %v5662 = vadd.f32 %v5633, %v5661
        %5663 = vmatmul.f32.gmra.mxu0 %v5598
        %v5664 = vpop.f32.mrf.mxu0
        %v5665 = vadd.f32 %v5636, %v5664
        %5666 = vmatmul.f32.gmra.mxu0 %v5599
        %v5667 = vpop.f32.mrf.mxu0
        %v5668 = vadd.f32 %v5639, %v5667
        %5669 = vdwg.mxu0
        %v5670 = vadd.f32 %v4693, %v5659
        %v5671 = vadd.f32 %v4694, %v5662
        %v5672 = vadd.f32 %v4695, %v5665
        %v5673 = vadd.f32 %v4696, %v5668
        %5674 = vst.msk [vmem:[%s4692] sm:$0xff] %vm2321, %v5670
        %5675 = vst.msk [vmem:[%s4692 + $0x8] sm:$0xff] %vm2321, %v5671
        %5676 = vst.msk [vmem:[%s4692 + $0x10] sm:$0xff] %vm2321, %v5672
        %5677 = vst.msk [vmem:[%s4692 + $0x18] sm:$0xff] %vm2321, %v5673
        %5678 = vrot.lane.b32.xlu0 %v405, 32
        %v5679 = vpop.permute.xlu0 %5678
        %5680 = vrot.lane.b32.xlu0 %v406, 32
        %v5681 = vpop.permute.xlu0 %5680
        %5682 = vrot.lane.b32.xlu0 %v407, 32
        %v5683 = vpop.permute.xlu0 %5682
        %5684 = vrot.lane.b32.xlu0 %v408, 32
        %v5685 = vpop.permute.xlu0 %5684
        %5686 = vrot.lane.b32.xlu0 %v409, 32
        %v5687 = vpop.permute.xlu0 %5686
        %5688 = vrot.lane.b32.xlu0 %v410, 32
        %v5689 = vpop.permute.xlu0 %5688
        %5690 = vrot.lane.b32.xlu0 %v411, 32
        %v5691 = vpop.permute.xlu0 %5690
        %5692 = vrot.lane.b32.xlu0 %v412, 32
        %v5693 = vpop.permute.xlu0 %5692
        %5694 = vrot.lane.b32.xlu0 %v413, 32
        %v5695 = vpop.permute.xlu0 %5694
        %5696 = vrot.lane.b32.xlu0 %v414, 32
        %v5697 = vpop.permute.xlu0 %5696
        %5698 = vrot.lane.b32.xlu0 %v415, 32
        %v5699 = vpop.permute.xlu0 %5698
        %5700 = vrot.lane.b32.xlu0 %v416, 32
        %v5701 = vpop.permute.xlu0 %5700
        %5702 = vrot.lane.b32.xlu0 %v417, 32
        %v5703 = vpop.permute.xlu0 %5702
        %5704 = vrot.lane.b32.xlu0 %v418, 32
        %v5705 = vpop.permute.xlu0 %5704
        %5706 = vrot.lane.b32.xlu0 %v419, 32
        %v5707 = vpop.permute.xlu0 %5706
        %5708 = vrot.lane.b32.xlu0 %v420, 32
        %v5709 = vpop.permute.xlu0 %5708
        %5710 = vrot.lane.b32.xlu0 %v421, 32
        %v5711 = vpop.permute.xlu0 %5710
        %5712 = vrot.lane.b32.xlu0 %v422, 32
        %v5713 = vpop.permute.xlu0 %5712
        %5714 = vrot.lane.b32.xlu0 %v423, 32
        %v5715 = vpop.permute.xlu0 %5714
        %5716 = vrot.lane.b32.xlu0 %v424, 32
        %v5717 = vpop.permute.xlu0 %5716
        %5718 = vrot.lane.b32.xlu0 %v425, 32
        %v5719 = vpop.permute.xlu0 %5718
        %5720 = vrot.lane.b32.xlu0 %v426, 32
        %v5721 = vpop.permute.xlu0 %5720
        %5722 = vrot.lane.b32.xlu0 %v427, 32
        %v5723 = vpop.permute.xlu0 %5722
        %5724 = vrot.lane.b32.xlu0 %v428, 32
        %v5725 = vpop.permute.xlu0 %5724
        %5726 = vrot.lane.b32.xlu0 %v429, 32
        %v5727 = vpop.permute.xlu0 %5726
        %5728 = vrot.lane.b32.xlu0 %v430, 32
        %v5729 = vpop.permute.xlu0 %5728
        %5730 = vrot.lane.b32.xlu0 %v431, 32
        %v5731 = vpop.permute.xlu0 %5730
        %5732 = vrot.lane.b32.xlu0 %v432, 32
        %v5733 = vpop.permute.xlu0 %5732
        %5734 = vrot.lane.b32.xlu0 %v433, 32
        %v5735 = vpop.permute.xlu0 %5734
        %5736 = vrot.lane.b32.xlu0 %v434, 32
        %v5737 = vpop.permute.xlu0 %5736
        %5738 = vrot.lane.b32.xlu0 %v435, 32
        %v5739 = vpop.permute.xlu0 %5738
        %5740 = vrot.lane.b32.xlu0 %v436, 32
        %v5741 = vpop.permute.xlu0 %5740
        %v5774 = vsel %vm857, %v5679, 1.0
        %v5775 = vsel %vm857, %v5681, 1.0
        %v5776 = vsel %vm857, %v5683, 1.0
        %v5777 = vsel %vm857, %v5685, 1.0
        %v5778 = vsel %vm857, %v5687, 1.0
        %v5779 = vsel %vm857, %v5689, 1.0
        %v5780 = vsel %vm857, %v5691, 1.0
        %v5781 = vsel %vm857, %v5693, 1.0
        %v5782 = vsel %vm857, %v5695, 1.0
        %v5783 = vsel %vm857, %v5697, 1.0
        %v5784 = vsel %vm857, %v5699, 1.0
        %v5785 = vsel %vm857, %v5701, 1.0
        %v5786 = vsel %vm857, %v5703, 1.0
        %v5787 = vsel %vm857, %v5705, 1.0
        %v5788 = vsel %vm857, %v5707, 1.0
        %v5789 = vsel %vm857, %v5709, 1.0
        %v5790 = vsel %vm857, %v5711, 1.0
        %v5791 = vsel %vm857, %v5713, 1.0
        %v5792 = vsel %vm857, %v5715, 1.0
        %v5793 = vsel %vm857, %v5717, 1.0
        %v5794 = vsel %vm857, %v5719, 1.0
        %v5795 = vsel %vm857, %v5721, 1.0
        %v5796 = vsel %vm857, %v5723, 1.0
        %v5797 = vsel %vm857, %v5725, 1.0
        %v5798 = vsel %vm857, %v5727, 1.0
        %v5799 = vsel %vm857, %v5729, 1.0
        %v5800 = vsel %vm857, %v5731, 1.0
        %v5801 = vsel %vm857, %v5733, 1.0
        %v5802 = vsel %vm857, %v5735, 1.0
        %v5803 = vsel %vm857, %v5737, 1.0
        %v5804 = vsel %vm857, %v5739, 1.0
        %v5805 = vsel %vm857, %v5741, 1.0
        %5806 = vrot.lane.b32.xlu0 %v565, 32
        %v5807 = vpop.permute.xlu0 %5806
        %5808 = vrot.lane.b32.xlu0 %v566, 32
        %v5809 = vpop.permute.xlu0 %5808
        %5810 = vrot.lane.b32.xlu0 %v567, 32
        %v5811 = vpop.permute.xlu0 %5810
        %5812 = vrot.lane.b32.xlu0 %v568, 32
        %v5813 = vpop.permute.xlu0 %5812
        %5814 = vrot.lane.b32.xlu0 %v569, 32
        %v5815 = vpop.permute.xlu0 %5814
        %5816 = vrot.lane.b32.xlu0 %v570, 32
        %v5817 = vpop.permute.xlu0 %5816
        %5818 = vrot.lane.b32.xlu0 %v571, 32
        %v5819 = vpop.permute.xlu0 %5818
        %5820 = vrot.lane.b32.xlu0 %v572, 32
        %v5821 = vpop.permute.xlu0 %5820
        %5822 = vrot.lane.b32.xlu0 %v573, 32
        %v5823 = vpop.permute.xlu0 %5822
        %5824 = vrot.lane.b32.xlu0 %v574, 32
        %v5825 = vpop.permute.xlu0 %5824
        %5826 = vrot.lane.b32.xlu0 %v575, 32
        %v5827 = vpop.permute.xlu0 %5826
        %5828 = vrot.lane.b32.xlu0 %v576, 32
        %v5829 = vpop.permute.xlu0 %5828
        %5830 = vrot.lane.b32.xlu0 %v577, 32
        %v5831 = vpop.permute.xlu0 %5830
        %5832 = vrot.lane.b32.xlu0 %v578, 32
        %v5833 = vpop.permute.xlu0 %5832
        %5834 = vrot.lane.b32.xlu0 %v579, 32
        %v5835 = vpop.permute.xlu0 %5834
        %5836 = vrot.lane.b32.xlu0 %v580, 32
        %v5837 = vpop.permute.xlu0 %5836
        %5838 = vrot.lane.b32.xlu0 %v581, 32
        %v5839 = vpop.permute.xlu0 %5838
        %5840 = vrot.lane.b32.xlu0 %v582, 32
        %v5841 = vpop.permute.xlu0 %5840
        %5842 = vrot.lane.b32.xlu0 %v583, 32
        %v5843 = vpop.permute.xlu0 %5842
        %5844 = vrot.lane.b32.xlu0 %v584, 32
        %v5845 = vpop.permute.xlu0 %5844
        %5846 = vrot.lane.b32.xlu0 %v585, 32
        %v5847 = vpop.permute.xlu0 %5846
        %5848 = vrot.lane.b32.xlu0 %v586, 32
        %v5849 = vpop.permute.xlu0 %5848
        %5850 = vrot.lane.b32.xlu0 %v587, 32
        %v5851 = vpop.permute.xlu0 %5850
        %5852 = vrot.lane.b32.xlu0 %v588, 32
        %v5853 = vpop.permute.xlu0 %5852
        %5854 = vrot.lane.b32.xlu0 %v589, 32
        %v5855 = vpop.permute.xlu0 %5854
        %5856 = vrot.lane.b32.xlu0 %v590, 32
        %v5857 = vpop.permute.xlu0 %5856
        %5858 = vrot.lane.b32.xlu0 %v591, 32
        %v5859 = vpop.permute.xlu0 %5858
        %5860 = vrot.lane.b32.xlu0 %v592, 32
        %v5861 = vpop.permute.xlu0 %5860
        %5862 = vrot.lane.b32.xlu0 %v593, 32
        %v5863 = vpop.permute.xlu0 %5862
        %5864 = vrot.lane.b32.xlu0 %v594, 32
        %v5865 = vpop.permute.xlu0 %5864
        %5866 = vrot.lane.b32.xlu0 %v595, 32
        %v5867 = vpop.permute.xlu0 %5866
        %5868 = vrot.lane.b32.xlu0 %v596, 32
        %v5869 = vpop.permute.xlu0 %5868
        %5870 = vrot.lane.b32.xlu0 %v725, 32
        %v5871 = vpop.permute.xlu0 %5870
        %5872 = vrot.lane.b32.xlu0 %v726, 32
        %v5873 = vpop.permute.xlu0 %5872
        %5874 = vrot.lane.b32.xlu0 %v727, 32
        %v5875 = vpop.permute.xlu0 %5874
        %5876 = vrot.lane.b32.xlu0 %v728, 32
        %v5877 = vpop.permute.xlu0 %5876
        %5878 = vrot.lane.b32.xlu0 %v729, 32
        %v5879 = vpop.permute.xlu0 %5878
        %5880 = vrot.lane.b32.xlu0 %v730, 32
        %v5881 = vpop.permute.xlu0 %5880
        %5882 = vrot.lane.b32.xlu0 %v731, 32
        %v5883 = vpop.permute.xlu0 %5882
        %5884 = vrot.lane.b32.xlu0 %v732, 32
        %v5885 = vpop.permute.xlu0 %5884
        %5886 = vrot.lane.b32.xlu0 %v733, 32
        %v5887 = vpop.permute.xlu0 %5886
        %5888 = vrot.lane.b32.xlu0 %v734, 32
        %v5889 = vpop.permute.xlu0 %5888
        %5890 = vrot.lane.b32.xlu0 %v735, 32
        %v5891 = vpop.permute.xlu0 %5890
        %5892 = vrot.lane.b32.xlu0 %v736, 32
        %v5893 = vpop.permute.xlu0 %5892
        %5894 = vrot.lane.b32.xlu0 %v737, 32
        %v5895 = vpop.permute.xlu0 %5894
        %5896 = vrot.lane.b32.xlu0 %v738, 32
        %v5897 = vpop.permute.xlu0 %5896
        %5898 = vrot.lane.b32.xlu0 %v739, 32
        %v5899 = vpop.permute.xlu0 %5898
        %5900 = vrot.lane.b32.xlu0 %v740, 32
        %v5901 = vpop.permute.xlu0 %5900
        %5902 = vrot.lane.b32.xlu0 %v741, 32
        %v5903 = vpop.permute.xlu0 %5902
        %5904 = vrot.lane.b32.xlu0 %v742, 32
        %v5905 = vpop.permute.xlu0 %5904
        %5906 = vrot.lane.b32.xlu0 %v743, 32
        %v5907 = vpop.permute.xlu0 %5906
        %5908 = vrot.lane.b32.xlu0 %v744, 32
        %v5909 = vpop.permute.xlu0 %5908
        %5910 = vrot.lane.b32.xlu0 %v745, 32
        %v5911 = vpop.permute.xlu0 %5910
        %5912 = vrot.lane.b32.xlu0 %v746, 32
        %v5913 = vpop.permute.xlu0 %5912
        %5914 = vrot.lane.b32.xlu0 %v747, 32
        %v5915 = vpop.permute.xlu0 %5914
        %5916 = vrot.lane.b32.xlu0 %v748, 32
        %v5917 = vpop.permute.xlu0 %5916
        %5918 = vrot.lane.b32.xlu0 %v749, 32
        %v5919 = vpop.permute.xlu0 %5918
        %5920 = vrot.lane.b32.xlu0 %v750, 32
        %v5921 = vpop.permute.xlu0 %5920
        %5922 = vrot.lane.b32.xlu0 %v751, 32
        %v5923 = vpop.permute.xlu0 %5922
        %5924 = vrot.lane.b32.xlu0 %v752, 32
        %v5925 = vpop.permute.xlu0 %5924
        %5926 = vrot.lane.b32.xlu0 %v753, 32
        %v5927 = vpop.permute.xlu0 %5926
        %5928 = vrot.lane.b32.xlu0 %v754, 32
        %v5929 = vpop.permute.xlu0 %5928
        %5930 = vrot.lane.b32.xlu0 %v755, 32
        %v5931 = vpop.permute.xlu0 %5930
        %5932 = vrot.lane.b32.xlu0 %v756, 32
        %v5933 = vpop.permute.xlu0 %5932
        %v5934 = vsel %vm857, %v5807, 0
        %v5936 = vsel %vm857, %v5809, 0
        %v5938 = vsel %vm857, %v5811, 0
        %v5940 = vsel %vm857, %v5813, 0
        %v5942 = vsel %vm857, %v5815, 0
        %v5944 = vsel %vm857, %v5817, 0
        %v5946 = vsel %vm857, %v5819, 0
        %v5948 = vsel %vm857, %v5821, 0
        %v5950 = vsel %vm857, %v5823, 0
        %v5952 = vsel %vm857, %v5825, 0
        %v5954 = vsel %vm857, %v5827, 0
        %v5956 = vsel %vm857, %v5829, 0
        %v5958 = vsel %vm857, %v5831, 0
        %v5960 = vsel %vm857, %v5833, 0
        %v5962 = vsel %vm857, %v5835, 0
        %v5964 = vsel %vm857, %v5837, 0
        %v5966 = vsel %vm857, %v5839, 0
        %v5968 = vsel %vm857, %v5841, 0
        %v5970 = vsel %vm857, %v5843, 0
        %v5972 = vsel %vm857, %v5845, 0
        %v5974 = vsel %vm857, %v5847, 0
        %v5976 = vsel %vm857, %v5849, 0
        %v5978 = vsel %vm857, %v5851, 0
        %v5980 = vsel %vm857, %v5853, 0
        %v5982 = vsel %vm857, %v5855, 0
        %v5984 = vsel %vm857, %v5857, 0
        %v5986 = vsel %vm857, %v5859, 0
        %v5988 = vsel %vm857, %v5861, 0
        %v5990 = vsel %vm857, %v5863, 0
        %v5992 = vsel %vm857, %v5865, 0
        %v5994 = vsel %vm857, %v5867, 0
        %v5996 = vsel %vm857, %v5869, 0
        %v5998 = vsel %vm857, %v5871, 0
        %v6000 = vsel %vm857, %v5873, 0
        %v6002 = vsel %vm857, %v5875, 0
        %v6004 = vsel %vm857, %v5877, 0
        %v6006 = vsel %vm857, %v5879, 0
        %v6008 = vsel %vm857, %v5881, 0
        %v6010 = vsel %vm857, %v5883, 0
        %v6012 = vsel %vm857, %v5885, 0
        %v6014 = vsel %vm857, %v5887, 0
        %v6016 = vsel %vm857, %v5889, 0
        %v6018 = vsel %vm857, %v5891, 0
        %v6020 = vsel %vm857, %v5893, 0
        %v6022 = vsel %vm857, %v5895, 0
        %v6024 = vsel %vm857, %v5897, 0
        %v6026 = vsel %vm857, %v5899, 0
        %v6028 = vsel %vm857, %v5901, 0
        %v6030 = vsel %vm857, %v5903, 0
        %v6032 = vsel %vm857, %v5905, 0
        %v6034 = vsel %vm857, %v5907, 0
        %v6036 = vsel %vm857, %v5909, 0
        %v6038 = vsel %vm857, %v5911, 0
        %v6040 = vsel %vm857, %v5913, 0
        %v6042 = vsel %vm857, %v5915, 0
        %v6044 = vsel %vm857, %v5917, 0
        %v6046 = vsel %vm857, %v5919, 0
        %v6048 = vsel %vm857, %v5921, 0
        %v6050 = vsel %vm857, %v5923, 0
        %v6052 = vsel %vm857, %v5925, 0
        %v6054 = vsel %vm857, %v5927, 0
        %v6056 = vsel %vm857, %v5929, 0
        %v6058 = vsel %vm857, %v5931, 0
        %v6060 = vsel %vm857, %v5933, 0
        %6062 = vmatpush.xpose.msra.mxu0 %v6028
        %6063 = vmatpush.xpose.msra.mxu0 %v6026
        %6064 = vmatpush.xpose.msra.mxu0 %v6024
        %6065 = vmatpush.xpose.msra.mxu0 %v6022
        %6066 = vmatpush.xpose.msra.mxu0 %v6020
        %6067 = vmatpush.xpose.msra.mxu0 %v6018
        %6068 = vmatpush.xpose.msra.mxu0 %v6016
        %6069 = vmatpush.xpose.msra.mxu0 %v6014
        %6070 = vmatpush.xpose.msra.mxu0 %v6012
        %6071 = vmatpush.xpose.msra.mxu0 %v6010
        %6072 = vmatpush.xpose.msra.mxu0 %v6008
        %6073 = vmatpush.xpose.msra.mxu0 %v6006
        %6074 = vmatpush.xpose.msra.mxu0 %v6004
        %6075 = vmatpush.xpose.msra.mxu0 %v6002
        %6076 = vmatpush.xpose.msra.mxu0 %v6000
        %6077 = vmatpush.xpose.msra.mxu0 %v5998
        %6078 = vmatmul.f32.gmra.mxu0 %v5934
        %v6079 = vpop.f32.mrf.mxu0
        %v6080 = vadd.f32 0.0, %v6079
        %6081 = vmatmul.f32.gmra.mxu0 %v5936
        %v6082 = vpop.f32.mrf.mxu0
        %v6083 = vadd.f32 0.0, %v6082
        %6084 = vmatmul.f32.gmra.mxu0 %v5938
        %v6085 = vpop.f32.mrf.mxu0
        %v6086 = vadd.f32 0.0, %v6085
        %6087 = vmatmul.f32.gmra.mxu0 %v5940
        %v6088 = vpop.f32.mrf.mxu0
        %v6089 = vadd.f32 0.0, %v6088
        %6090 = vmatmul.f32.gmra.mxu0 %v5942
        %v6091 = vpop.f32.mrf.mxu0
        %v6092 = vadd.f32 0.0, %v6091
        %6093 = vmatmul.f32.gmra.mxu0 %v5944
        %v6094 = vpop.f32.mrf.mxu0
        %v6095 = vadd.f32 0.0, %v6094
        %6096 = vmatmul.f32.gmra.mxu0 %v5946
        %v6097 = vpop.f32.mrf.mxu0
        %v6098 = vadd.f32 0.0, %v6097
        %6099 = vmatmul.f32.gmra.mxu0 %v5948
        %v6100 = vpop.f32.mrf.mxu0
        %v6101 = vadd.f32 0.0, %v6100
        %6102 = vmatmul.f32.gmra.mxu0 %v5950
        %v6103 = vpop.f32.mrf.mxu0
        %v6104 = vadd.f32 0.0, %v6103
        %6105 = vmatmul.f32.gmra.mxu0 %v5952
        %v6106 = vpop.f32.mrf.mxu0
        %v6107 = vadd.f32 0.0, %v6106
        %6108 = vmatmul.f32.gmra.mxu0 %v5954
        %v6109 = vpop.f32.mrf.mxu0
        %v6110 = vadd.f32 0.0, %v6109
        %6111 = vmatmul.f32.gmra.mxu0 %v5956
        %v6112 = vpop.f32.mrf.mxu0
        %v6113 = vadd.f32 0.0, %v6112
        %6114 = vmatmul.f32.gmra.mxu0 %v5958
        %v6115 = vpop.f32.mrf.mxu0
        %v6116 = vadd.f32 0.0, %v6115
        %6117 = vmatmul.f32.gmra.mxu0 %v5960
        %v6118 = vpop.f32.mrf.mxu0
        %v6119 = vadd.f32 0.0, %v6118
        %6120 = vmatmul.f32.gmra.mxu0 %v5962
        %v6121 = vpop.f32.mrf.mxu0
        %v6122 = vadd.f32 0.0, %v6121
        %6123 = vmatmul.f32.gmra.mxu0 %v5964
        %v6124 = vpop.f32.mrf.mxu0
        %v6125 = vadd.f32 0.0, %v6124
        %6126 = vmatmul.f32.gmra.mxu0 %v5966
        %v6127 = vpop.f32.mrf.mxu0
        %v6128 = vadd.f32 0.0, %v6127
        %6129 = vmatmul.f32.gmra.mxu0 %v5968
        %v6130 = vpop.f32.mrf.mxu0
        %v6131 = vadd.f32 0.0, %v6130
        %6132 = vmatmul.f32.gmra.mxu0 %v5970
        %v6133 = vpop.f32.mrf.mxu0
        %v6134 = vadd.f32 0.0, %v6133
        %6135 = vmatmul.f32.gmra.mxu0 %v5972
        %v6136 = vpop.f32.mrf.mxu0
        %v6137 = vadd.f32 0.0, %v6136
        %6138 = vmatmul.f32.gmra.mxu0 %v5974
        %v6139 = vpop.f32.mrf.mxu0
        %v6140 = vadd.f32 0.0, %v6139
        %6141 = vmatmul.f32.gmra.mxu0 %v5976
        %v6142 = vpop.f32.mrf.mxu0
        %v6143 = vadd.f32 0.0, %v6142
        %6144 = vmatmul.f32.gmra.mxu0 %v5978
        %v6145 = vpop.f32.mrf.mxu0
        %v6146 = vadd.f32 0.0, %v6145
        %6147 = vmatmul.f32.gmra.mxu0 %v5980
        %v6148 = vpop.f32.mrf.mxu0
        %v6149 = vadd.f32 0.0, %v6148
        %6150 = vmatmul.f32.gmra.mxu0 %v5982
        %v6151 = vpop.f32.mrf.mxu0
        %v6152 = vadd.f32 0.0, %v6151
        %6153 = vmatmul.f32.gmra.mxu0 %v5984
        %v6154 = vpop.f32.mrf.mxu0
        %v6155 = vadd.f32 0.0, %v6154
        %6156 = vmatmul.f32.gmra.mxu0 %v5986
        %v6157 = vpop.f32.mrf.mxu0
        %v6158 = vadd.f32 0.0, %v6157
        %6159 = vmatmul.f32.gmra.mxu0 %v5988
        %v6160 = vpop.f32.mrf.mxu0
        %v6161 = vadd.f32 0.0, %v6160
        %6162 = vmatmul.f32.gmra.mxu0 %v5990
        %v6163 = vpop.f32.mrf.mxu0
        %v6164 = vadd.f32 0.0, %v6163
        %6165 = vmatmul.f32.gmra.mxu0 %v5992
        %v6166 = vpop.f32.mrf.mxu0
        %v6167 = vadd.f32 0.0, %v6166
        %6168 = vmatmul.f32.gmra.mxu0 %v5994
        %v6169 = vpop.f32.mrf.mxu0
        %v6170 = vadd.f32 0.0, %v6169
        %6171 = vmatmul.f32.gmra.mxu0 %v5996
        %v6172 = vpop.f32.mrf.mxu0
        %v6173 = vadd.f32 0.0, %v6172
        %6174 = vdwg.mxu0
        %6175 = vmatpush.xpose.msra.mxu0 %v6060
        %6176 = vmatpush.xpose.msra.mxu0 %v6058
        %6177 = vmatpush.xpose.msra.mxu0 %v6056
        %6178 = vmatpush.xpose.msra.mxu0 %v6054
        %6179 = vmatpush.xpose.msra.mxu0 %v6052
        %6180 = vmatpush.xpose.msra.mxu0 %v6050
        %6181 = vmatpush.xpose.msra.mxu0 %v6048
        %6182 = vmatpush.xpose.msra.mxu0 %v6046
        %6183 = vmatpush.xpose.msra.mxu0 %v6044
        %6184 = vmatpush.xpose.msra.mxu0 %v6042
        %6185 = vmatpush.xpose.msra.mxu0 %v6040
        %6186 = vmatpush.xpose.msra.mxu0 %v6038
        %6187 = vmatpush.xpose.msra.mxu0 %v6036
        %6188 = vmatpush.xpose.msra.mxu0 %v6034
        %6189 = vmatpush.xpose.msra.mxu0 %v6032
        %6190 = vmatpush.xpose.msra.mxu0 %v6030
        %6191 = vmatmul.f32.gmra.mxu0 %v5934
        %v6192 = vpop.f32.mrf.mxu0
        %v6193 = vadd.f32 0.0, %v6192
        %6194 = vmatmul.f32.gmra.mxu0 %v5936
        %v6195 = vpop.f32.mrf.mxu0
        %v6196 = vadd.f32 0.0, %v6195
        %6197 = vmatmul.f32.gmra.mxu0 %v5938
        %v6198 = vpop.f32.mrf.mxu0
        %v6199 = vadd.f32 0.0, %v6198
        %6200 = vmatmul.f32.gmra.mxu0 %v5940
        %v6201 = vpop.f32.mrf.mxu0
        %v6202 = vadd.f32 0.0, %v6201
        %6203 = vmatmul.f32.gmra.mxu0 %v5942
        %v6204 = vpop.f32.mrf.mxu0
        %v6205 = vadd.f32 0.0, %v6204
        %6206 = vmatmul.f32.gmra.mxu0 %v5944
        %v6207 = vpop.f32.mrf.mxu0
        %v6208 = vadd.f32 0.0, %v6207
        %6209 = vmatmul.f32.gmra.mxu0 %v5946
        %v6210 = vpop.f32.mrf.mxu0
        %v6211 = vadd.f32 0.0, %v6210
        %6212 = vmatmul.f32.gmra.mxu0 %v5948
        %v6213 = vpop.f32.mrf.mxu0
        %v6214 = vadd.f32 0.0, %v6213
        %6215 = vmatmul.f32.gmra.mxu0 %v5950
        %v6216 = vpop.f32.mrf.mxu0
        %v6217 = vadd.f32 0.0, %v6216
        %6218 = vmatmul.f32.gmra.mxu0 %v5952
        %v6219 = vpop.f32.mrf.mxu0
        %v6220 = vadd.f32 0.0, %v6219
        %6221 = vmatmul.f32.gmra.mxu0 %v5954
        %v6222 = vpop.f32.mrf.mxu0
        %v6223 = vadd.f32 0.0, %v6222
        %6224 = vmatmul.f32.gmra.mxu0 %v5956
        %v6225 = vpop.f32.mrf.mxu0
        %v6226 = vadd.f32 0.0, %v6225
        %6227 = vmatmul.f32.gmra.mxu0 %v5958
        %v6228 = vpop.f32.mrf.mxu0
        %v6229 = vadd.f32 0.0, %v6228
        %6230 = vmatmul.f32.gmra.mxu0 %v5960
        %v6231 = vpop.f32.mrf.mxu0
        %v6232 = vadd.f32 0.0, %v6231
        %6233 = vmatmul.f32.gmra.mxu0 %v5962
        %v6234 = vpop.f32.mrf.mxu0
        %v6235 = vadd.f32 0.0, %v6234
        %6236 = vmatmul.f32.gmra.mxu0 %v5964
        %v6237 = vpop.f32.mrf.mxu0
        %v6238 = vadd.f32 0.0, %v6237
        %6239 = vmatmul.f32.gmra.mxu0 %v5966
        %v6240 = vpop.f32.mrf.mxu0
        %v6241 = vadd.f32 0.0, %v6240
        %6242 = vmatmul.f32.gmra.mxu0 %v5968
        %v6243 = vpop.f32.mrf.mxu0
        %v6244 = vadd.f32 0.0, %v6243
        %6245 = vmatmul.f32.gmra.mxu0 %v5970
        %v6246 = vpop.f32.mrf.mxu0
        %v6247 = vadd.f32 0.0, %v6246
        %6248 = vmatmul.f32.gmra.mxu0 %v5972
        %v6249 = vpop.f32.mrf.mxu0
        %v6250 = vadd.f32 0.0, %v6249
        %6251 = vmatmul.f32.gmra.mxu0 %v5974
        %v6252 = vpop.f32.mrf.mxu0
        %v6253 = vadd.f32 0.0, %v6252
        %6254 = vmatmul.f32.gmra.mxu0 %v5976
        %v6255 = vpop.f32.mrf.mxu0
        %v6256 = vadd.f32 0.0, %v6255
        %6257 = vmatmul.f32.gmra.mxu0 %v5978
        %v6258 = vpop.f32.mrf.mxu0
        %v6259 = vadd.f32 0.0, %v6258
        %6260 = vmatmul.f32.gmra.mxu0 %v5980
        %v6261 = vpop.f32.mrf.mxu0
        %v6262 = vadd.f32 0.0, %v6261
        %6263 = vmatmul.f32.gmra.mxu0 %v5982
        %v6264 = vpop.f32.mrf.mxu0
        %v6265 = vadd.f32 0.0, %v6264
        %6266 = vmatmul.f32.gmra.mxu0 %v5984
        %v6267 = vpop.f32.mrf.mxu0
        %v6268 = vadd.f32 0.0, %v6267
        %6269 = vmatmul.f32.gmra.mxu0 %v5986
        %v6270 = vpop.f32.mrf.mxu0
        %v6271 = vadd.f32 0.0, %v6270
        %6272 = vmatmul.f32.gmra.mxu0 %v5988
        %v6273 = vpop.f32.mrf.mxu0
        %v6274 = vadd.f32 0.0, %v6273
        %6275 = vmatmul.f32.gmra.mxu0 %v5990
        %v6276 = vpop.f32.mrf.mxu0
        %v6277 = vadd.f32 0.0, %v6276
        %6278 = vmatmul.f32.gmra.mxu0 %v5992
        %v6279 = vpop.f32.mrf.mxu0
        %v6280 = vadd.f32 0.0, %v6279
        %6281 = vmatmul.f32.gmra.mxu0 %v5994
        %v6282 = vpop.f32.mrf.mxu0
        %v6283 = vadd.f32 0.0, %v6282
        %6284 = vmatmul.f32.gmra.mxu0 %v5996
        %v6285 = vpop.f32.mrf.mxu0
        %v6286 = vadd.f32 0.0, %v6285
        %6287 = vdwg.mxu0
        %v6288 = vsel %vm793, %v6080, 0.0
        %v6289 = vsel %vm794, %v6193, 0.0
        %v6290 = vsel %vm795, %v6083, 0.0
        %v6291 = vsel %vm796, %v6196, 0.0
        %v6292 = vsel %vm797, %v6086, 0.0
        %v6293 = vsel %vm798, %v6199, 0.0
        %v6294 = vsel %vm799, %v6089, 0.0
        %v6295 = vsel %vm800, %v6202, 0.0
        %v6296 = vsel %vm801, %v6092, 0.0
        %v6297 = vsel %vm802, %v6205, 0.0
        %v6298 = vsel %vm803, %v6095, 0.0
        %v6299 = vsel %vm804, %v6208, 0.0
        %v6300 = vsel %vm805, %v6098, 0.0
        %v6301 = vsel %vm806, %v6211, 0.0
        %v6302 = vsel %vm807, %v6101, 0.0
        %v6303 = vsel %vm808, %v6214, 0.0
        %v6304 = vsel %vm809, %v6104, 0.0
        %v6305 = vsel %vm810, %v6217, 0.0
        %v6306 = vsel %vm811, %v6107, 0.0
        %v6307 = vsel %vm812, %v6220, 0.0
        %v6308 = vsel %vm813, %v6110, 0.0
        %v6309 = vsel %vm814, %v6223, 0.0
        %v6310 = vsel %vm815, %v6113, 0.0
        %v6311 = vsel %vm816, %v6226, 0.0
        %v6312 = vsel %vm817, %v6116, 0.0
        %v6313 = vsel %vm818, %v6229, 0.0
        %v6314 = vsel %vm819, %v6119, 0.0
        %v6315 = vsel %vm820, %v6232, 0.0
        %v6316 = vsel %vm821, %v6122, 0.0
        %v6317 = vsel %vm822, %v6235, 0.0
        %v6318 = vsel %vm823, %v6125, 0.0
        %v6319 = vsel %vm824, %v6238, 0.0
        %v6320 = vsel %vm825, %v6128, 0.0
        %v6321 = vsel %vm826, %v6241, 0.0
        %v6322 = vsel %vm827, %v6131, 0.0
        %v6323 = vsel %vm828, %v6244, 0.0
        %v6324 = vsel %vm829, %v6134, 0.0
        %v6325 = vsel %vm830, %v6247, 0.0
        %v6326 = vsel %vm831, %v6137, 0.0
        %v6327 = vsel %vm832, %v6250, 0.0
        %v6328 = vsel %vm833, %v6140, 0.0
        %v6329 = vsel %vm834, %v6253, 0.0
        %v6330 = vsel %vm835, %v6143, 0.0
        %v6331 = vsel %vm836, %v6256, 0.0
        %v6332 = vsel %vm837, %v6146, 0.0
        %v6333 = vsel %vm838, %v6259, 0.0
        %v6334 = vsel %vm839, %v6149, 0.0
        %v6335 = vsel %vm840, %v6262, 0.0
        %v6336 = vsel %vm841, %v6152, 0.0
        %v6337 = vsel %vm842, %v6265, 0.0
        %v6338 = vsel %vm843, %v6155, 0.0
        %v6339 = vsel %vm844, %v6268, 0.0
        %v6340 = vsel %vm845, %v6158, 0.0
        %v6341 = vsel %vm846, %v6271, 0.0
        %v6342 = vsel %vm847, %v6161, 0.0
        %v6343 = vsel %vm848, %v6274, 0.0
        %v6344 = vsel %vm849, %v6164, 0.0
        %v6345 = vsel %vm850, %v6277, 0.0
        %v6346 = vsel %vm851, %v6167, 0.0
        %v6347 = vsel %vm852, %v6280, 0.0
        %v6348 = vsel %vm853, %v6170, 0.0
        %v6349 = vsel %vm854, %v6283, 0.0
        %v6350 = vsel %vm855, %v6173, 0.0
        %v6351 = vsel %vm856, %v6286, 0.0
        %s6352 = scalar_lea.vmem [#allocation2], 96
        %v6353 = vld [vmem:[%s6352] sm:$0xff]
        %v6354 = vld [vmem:[%s6352 + $0x8] sm:$0xff]
        %v6355 = vld [vmem:[%s6352 + $0x10] sm:$0xff]
        %v6356 = vld [vmem:[%s6352 + $0x18] sm:$0xff]
        %6357 = vmatpush.msra.mxu0 0.0
        %6358 = vmatpush.msra.mxu0 0.0
        %6359 = vmatpush.msra.mxu0 0.0
        %6360 = vmatpush.msra.mxu0 0.0
        %6361 = vmatpush.msra.mxu0 0.0
        %6362 = vmatpush.msra.mxu0 0.0
        %6363 = vmatpush.msra.mxu0 0.0
        %6364 = vmatpush.msra.mxu0 0.0
        %6365 = vmatpush.msra.mxu0 0.0
        %6366 = vmatpush.msra.mxu0 0.0
        %6367 = vmatpush.msra.mxu0 0.0
        %6368 = vmatpush.msra.mxu0 0.0
        %6369 = vmatpush.msra.mxu0 %v6356
        %6370 = vmatpush.msra.mxu0 %v6355
        %6371 = vmatpush.msra.mxu0 %v6354
        %6372 = vmatpush.msra.mxu0 %v6353
        %6373 = vmatmul.f32.gmra.mxu0 %v5934
        %v6374 = vpop.f32.mrf.mxu0
        %v6375 = vadd.f32 0.0, %v6374
        %6376 = vmatmul.f32.gmra.mxu0 %v5936
        %v6377 = vpop.f32.mrf.mxu0
        %v6378 = vadd.f32 0.0, %v6377
        %6379 = vmatmul.f32.gmra.mxu0 %v5938
        %v6380 = vpop.f32.mrf.mxu0
        %v6381 = vadd.f32 0.0, %v6380
        %6382 = vmatmul.f32.gmra.mxu0 %v5940
        %v6383 = vpop.f32.mrf.mxu0
        %v6384 = vadd.f32 0.0, %v6383
        %6385 = vmatmul.f32.gmra.mxu0 %v5942
        %v6386 = vpop.f32.mrf.mxu0
        %v6387 = vadd.f32 0.0, %v6386
        %6388 = vmatmul.f32.gmra.mxu0 %v5944
        %v6389 = vpop.f32.mrf.mxu0
        %v6390 = vadd.f32 0.0, %v6389
        %6391 = vmatmul.f32.gmra.mxu0 %v5946
        %v6392 = vpop.f32.mrf.mxu0
        %v6393 = vadd.f32 0.0, %v6392
        %6394 = vmatmul.f32.gmra.mxu0 %v5948
        %v6395 = vpop.f32.mrf.mxu0
        %v6396 = vadd.f32 0.0, %v6395
        %6397 = vmatmul.f32.gmra.mxu0 %v5950
        %v6398 = vpop.f32.mrf.mxu0
        %v6399 = vadd.f32 0.0, %v6398
        %6400 = vmatmul.f32.gmra.mxu0 %v5952
        %v6401 = vpop.f32.mrf.mxu0
        %v6402 = vadd.f32 0.0, %v6401
        %6403 = vmatmul.f32.gmra.mxu0 %v5954
        %v6404 = vpop.f32.mrf.mxu0
        %v6405 = vadd.f32 0.0, %v6404
        %6406 = vmatmul.f32.gmra.mxu0 %v5956
        %v6407 = vpop.f32.mrf.mxu0
        %v6408 = vadd.f32 0.0, %v6407
        %6409 = vmatmul.f32.gmra.mxu0 %v5958
        %v6410 = vpop.f32.mrf.mxu0
        %v6411 = vadd.f32 0.0, %v6410
        %6412 = vmatmul.f32.gmra.mxu0 %v5960
        %v6413 = vpop.f32.mrf.mxu0
        %v6414 = vadd.f32 0.0, %v6413
        %6415 = vmatmul.f32.gmra.mxu0 %v5962
        %v6416 = vpop.f32.mrf.mxu0
        %v6417 = vadd.f32 0.0, %v6416
        %6418 = vmatmul.f32.gmra.mxu0 %v5964
        %v6419 = vpop.f32.mrf.mxu0
        %v6420 = vadd.f32 0.0, %v6419
        %6421 = vmatmul.f32.gmra.mxu0 %v5966
        %v6422 = vpop.f32.mrf.mxu0
        %v6423 = vadd.f32 0.0, %v6422
        %6424 = vmatmul.f32.gmra.mxu0 %v5968
        %v6425 = vpop.f32.mrf.mxu0
        %v6426 = vadd.f32 0.0, %v6425
        %6427 = vmatmul.f32.gmra.mxu0 %v5970
        %v6428 = vpop.f32.mrf.mxu0
        %v6429 = vadd.f32 0.0, %v6428
        %6430 = vmatmul.f32.gmra.mxu0 %v5972
        %v6431 = vpop.f32.mrf.mxu0
        %v6432 = vadd.f32 0.0, %v6431
        %6433 = vmatmul.f32.gmra.mxu0 %v5974
        %v6434 = vpop.f32.mrf.mxu0
        %v6435 = vadd.f32 0.0, %v6434
        %6436 = vmatmul.f32.gmra.mxu0 %v5976
        %v6437 = vpop.f32.mrf.mxu0
        %v6438 = vadd.f32 0.0, %v6437
        %6439 = vmatmul.f32.gmra.mxu0 %v5978
        %v6440 = vpop.f32.mrf.mxu0
        %v6441 = vadd.f32 0.0, %v6440
        %6442 = vmatmul.f32.gmra.mxu0 %v5980
        %v6443 = vpop.f32.mrf.mxu0
        %v6444 = vadd.f32 0.0, %v6443
        %6445 = vmatmul.f32.gmra.mxu0 %v5982
        %v6446 = vpop.f32.mrf.mxu0
        %v6447 = vadd.f32 0.0, %v6446
        %6448 = vmatmul.f32.gmra.mxu0 %v5984
        %v6449 = vpop.f32.mrf.mxu0
        %v6450 = vadd.f32 0.0, %v6449
        %6451 = vmatmul.f32.gmra.mxu0 %v5986
        %v6452 = vpop.f32.mrf.mxu0
        %v6453 = vadd.f32 0.0, %v6452
        %6454 = vmatmul.f32.gmra.mxu0 %v5988
        %v6455 = vpop.f32.mrf.mxu0
        %v6456 = vadd.f32 0.0, %v6455
        %6457 = vmatmul.f32.gmra.mxu0 %v5990
        %v6458 = vpop.f32.mrf.mxu0
        %v6459 = vadd.f32 0.0, %v6458
        %6460 = vmatmul.f32.gmra.mxu0 %v5992
        %v6461 = vpop.f32.mrf.mxu0
        %v6462 = vadd.f32 0.0, %v6461
        %6463 = vmatmul.f32.gmra.mxu0 %v5994
        %v6464 = vpop.f32.mrf.mxu0
        %v6465 = vadd.f32 0.0, %v6464
        %6466 = vmatmul.f32.gmra.mxu0 %v5996
        %v6467 = vpop.f32.mrf.mxu0
        %v6468 = vadd.f32 0.0, %v6467
        %6469 = vdwg.mxu0
        %6470 = vmatpush.msra.mxu0 %v5789
        %6471 = vmatpush.msra.mxu0 %v5788
        %6472 = vmatpush.msra.mxu0 %v5787
        %6473 = vmatpush.msra.mxu0 %v5786
        %6474 = vmatpush.msra.mxu0 %v5785
        %6475 = vmatpush.msra.mxu0 %v5784
        %6476 = vmatpush.msra.mxu0 %v5783
        %6477 = vmatpush.msra.mxu0 %v5782
        %6478 = vmatpush.msra.mxu0 %v5781
        %6479 = vmatpush.msra.mxu0 %v5780
        %6480 = vmatpush.msra.mxu0 %v5779
        %6481 = vmatpush.msra.mxu0 %v5778
        %6482 = vmatpush.msra.mxu0 %v5777
        %6483 = vmatpush.msra.mxu0 %v5776
        %6484 = vmatpush.msra.mxu0 %v5775
        %6485 = vmatpush.msra.mxu0 %v5774
        %6486 = vmatmul.f32.gmra.mxu0 %v6288
        %v6487 = vpop.f32.mrf.mxu0
        %v6488 = vadd.f32 %v6375, %v6487
        %6489 = vmatmul.f32.gmra.mxu0 %v6290
        %v6490 = vpop.f32.mrf.mxu0
        %v6491 = vadd.f32 %v6378, %v6490
        %6492 = vmatmul.f32.gmra.mxu0 %v6292
        %v6493 = vpop.f32.mrf.mxu0
        %v6494 = vadd.f32 %v6381, %v6493
        %6495 = vmatmul.f32.gmra.mxu0 %v6294
        %v6496 = vpop.f32.mrf.mxu0
        %v6497 = vadd.f32 %v6384, %v6496
        %6498 = vmatmul.f32.gmra.mxu0 %v6296
        %v6499 = vpop.f32.mrf.mxu0
        %v6500 = vadd.f32 %v6387, %v6499
        %6501 = vmatmul.f32.gmra.mxu0 %v6298
        %v6502 = vpop.f32.mrf.mxu0
        %v6503 = vadd.f32 %v6390, %v6502
        %6504 = vmatmul.f32.gmra.mxu0 %v6300
        %v6505 = vpop.f32.mrf.mxu0
        %v6506 = vadd.f32 %v6393, %v6505
        %6507 = vmatmul.f32.gmra.mxu0 %v6302
        %v6508 = vpop.f32.mrf.mxu0
        %v6509 = vadd.f32 %v6396, %v6508
        %6510 = vmatmul.f32.gmra.mxu0 %v6304
        %v6511 = vpop.f32.mrf.mxu0
        %v6512 = vadd.f32 %v6399, %v6511
        %6513 = vmatmul.f32.gmra.mxu0 %v6306
        %v6514 = vpop.f32.mrf.mxu0
        %v6515 = vadd.f32 %v6402, %v6514
        %6516 = vmatmul.f32.gmra.mxu0 %v6308
        %v6517 = vpop.f32.mrf.mxu0
        %v6518 = vadd.f32 %v6405, %v6517
        %6519 = vmatmul.f32.gmra.mxu0 %v6310
        %v6520 = vpop.f32.mrf.mxu0
        %v6521 = vadd.f32 %v6408, %v6520
        %6522 = vmatmul.f32.gmra.mxu0 %v6312
        %v6523 = vpop.f32.mrf.mxu0
        %v6524 = vadd.f32 %v6411, %v6523
        %6525 = vmatmul.f32.gmra.mxu0 %v6314
        %v6526 = vpop.f32.mrf.mxu0
        %v6527 = vadd.f32 %v6414, %v6526
        %6528 = vmatmul.f32.gmra.mxu0 %v6316
        %v6529 = vpop.f32.mrf.mxu0
        %v6530 = vadd.f32 %v6417, %v6529
        %6531 = vmatmul.f32.gmra.mxu0 %v6318
        %v6532 = vpop.f32.mrf.mxu0
        %v6533 = vadd.f32 %v6420, %v6532
        %6534 = vmatmul.f32.gmra.mxu0 %v6320
        %v6535 = vpop.f32.mrf.mxu0
        %v6536 = vadd.f32 %v6423, %v6535
        %6537 = vmatmul.f32.gmra.mxu0 %v6322
        %v6538 = vpop.f32.mrf.mxu0
        %v6539 = vadd.f32 %v6426, %v6538
        %6540 = vmatmul.f32.gmra.mxu0 %v6324
        %v6541 = vpop.f32.mrf.mxu0
        %v6542 = vadd.f32 %v6429, %v6541
        %6543 = vmatmul.f32.gmra.mxu0 %v6326
        %v6544 = vpop.f32.mrf.mxu0
        %v6545 = vadd.f32 %v6432, %v6544
        %6546 = vmatmul.f32.gmra.mxu0 %v6328
        %v6547 = vpop.f32.mrf.mxu0
        %v6548 = vadd.f32 %v6435, %v6547
        %6549 = vmatmul.f32.gmra.mxu0 %v6330
        %v6550 = vpop.f32.mrf.mxu0
        %v6551 = vadd.f32 %v6438, %v6550
        %6552 = vmatmul.f32.gmra.mxu0 %v6332
        %v6553 = vpop.f32.mrf.mxu0
        %v6554 = vadd.f32 %v6441, %v6553
        %6555 = vmatmul.f32.gmra.mxu0 %v6334
        %v6556 = vpop.f32.mrf.mxu0
        %v6557 = vadd.f32 %v6444, %v6556
        %6558 = vmatmul.f32.gmra.mxu0 %v6336
        %v6559 = vpop.f32.mrf.mxu0
        %v6560 = vadd.f32 %v6447, %v6559
        %6561 = vmatmul.f32.gmra.mxu0 %v6338
        %v6562 = vpop.f32.mrf.mxu0
        %v6563 = vadd.f32 %v6450, %v6562
        %6564 = vmatmul.f32.gmra.mxu0 %v6340
        %v6565 = vpop.f32.mrf.mxu0
        %v6566 = vadd.f32 %v6453, %v6565
        %6567 = vmatmul.f32.gmra.mxu0 %v6342
        %v6568 = vpop.f32.mrf.mxu0
        %v6569 = vadd.f32 %v6456, %v6568
        %6570 = vmatmul.f32.gmra.mxu0 %v6344
        %v6571 = vpop.f32.mrf.mxu0
        %v6572 = vadd.f32 %v6459, %v6571
        %6573 = vmatmul.f32.gmra.mxu0 %v6346
        %v6574 = vpop.f32.mrf.mxu0
        %v6575 = vadd.f32 %v6462, %v6574
        %6576 = vmatmul.f32.gmra.mxu0 %v6348
        %v6577 = vpop.f32.mrf.mxu0
        %v6578 = vadd.f32 %v6465, %v6577
        %6579 = vmatmul.f32.gmra.mxu0 %v6350
        %v6580 = vpop.f32.mrf.mxu0
        %v6581 = vadd.f32 %v6468, %v6580
        %6582 = vdwg.mxu0
        %6583 = vmatpush.msra.mxu0 %v5805
        %6584 = vmatpush.msra.mxu0 %v5804
        %6585 = vmatpush.msra.mxu0 %v5803
        %6586 = vmatpush.msra.mxu0 %v5802
        %6587 = vmatpush.msra.mxu0 %v5801
        %6588 = vmatpush.msra.mxu0 %v5800
        %6589 = vmatpush.msra.mxu0 %v5799
        %6590 = vmatpush.msra.mxu0 %v5798
        %6591 = vmatpush.msra.mxu0 %v5797
        %6592 = vmatpush.msra.mxu0 %v5796
        %6593 = vmatpush.msra.mxu0 %v5795
        %6594 = vmatpush.msra.mxu0 %v5794
        %6595 = vmatpush.msra.mxu0 %v5793
        %6596 = vmatpush.msra.mxu0 %v5792
        %6597 = vmatpush.msra.mxu0 %v5791
        %6598 = vmatpush.msra.mxu0 %v5790
        %6599 = vmatmul.f32.gmra.mxu0 %v6289
        %v6600 = vpop.f32.mrf.mxu0
        %v6601 = vadd.f32 %v6488, %v6600
        %6602 = vmatmul.f32.gmra.mxu0 %v6291
        %v6603 = vpop.f32.mrf.mxu0
        %v6604 = vadd.f32 %v6491, %v6603
        %6605 = vmatmul.f32.gmra.mxu0 %v6293
        %v6606 = vpop.f32.mrf.mxu0
        %v6607 = vadd.f32 %v6494, %v6606
        %6608 = vmatmul.f32.gmra.mxu0 %v6295
        %v6609 = vpop.f32.mrf.mxu0
        %v6610 = vadd.f32 %v6497, %v6609
        %6611 = vmatmul.f32.gmra.mxu0 %v6297
        %v6612 = vpop.f32.mrf.mxu0
        %v6613 = vadd.f32 %v6500, %v6612
        %6614 = vmatmul.f32.gmra.mxu0 %v6299
        %v6615 = vpop.f32.mrf.mxu0
        %v6616 = vadd.f32 %v6503, %v6615
        %6617 = vmatmul.f32.gmra.mxu0 %v6301
        %v6618 = vpop.f32.mrf.mxu0
        %v6619 = vadd.f32 %v6506, %v6618
        %6620 = vmatmul.f32.gmra.mxu0 %v6303
        %v6621 = vpop.f32.mrf.mxu0
        %v6622 = vadd.f32 %v6509, %v6621
        %6623 = vmatmul.f32.gmra.mxu0 %v6305
        %v6624 = vpop.f32.mrf.mxu0
        %v6625 = vadd.f32 %v6512, %v6624
        %6626 = vmatmul.f32.gmra.mxu0 %v6307
        %v6627 = vpop.f32.mrf.mxu0
        %v6628 = vadd.f32 %v6515, %v6627
        %6629 = vmatmul.f32.gmra.mxu0 %v6309
        %v6630 = vpop.f32.mrf.mxu0
        %v6631 = vadd.f32 %v6518, %v6630
        %6632 = vmatmul.f32.gmra.mxu0 %v6311
        %v6633 = vpop.f32.mrf.mxu0
        %v6634 = vadd.f32 %v6521, %v6633
        %6635 = vmatmul.f32.gmra.mxu0 %v6313
        %v6636 = vpop.f32.mrf.mxu0
        %v6637 = vadd.f32 %v6524, %v6636
        %6638 = vmatmul.f32.gmra.mxu0 %v6315
        %v6639 = vpop.f32.mrf.mxu0
        %v6640 = vadd.f32 %v6527, %v6639
        %6641 = vmatmul.f32.gmra.mxu0 %v6317
        %v6642 = vpop.f32.mrf.mxu0
        %v6643 = vadd.f32 %v6530, %v6642
        %6644 = vmatmul.f32.gmra.mxu0 %v6319
        %v6645 = vpop.f32.mrf.mxu0
        %v6646 = vadd.f32 %v6533, %v6645
        %6647 = vmatmul.f32.gmra.mxu0 %v6321
        %v6648 = vpop.f32.mrf.mxu0
        %v6649 = vadd.f32 %v6536, %v6648
        %6650 = vmatmul.f32.gmra.mxu0 %v6323
        %v6651 = vpop.f32.mrf.mxu0
        %v6652 = vadd.f32 %v6539, %v6651
        %6653 = vmatmul.f32.gmra.mxu0 %v6325
        %v6654 = vpop.f32.mrf.mxu0
        %v6655 = vadd.f32 %v6542, %v6654
        %6656 = vmatmul.f32.gmra.mxu0 %v6327
        %v6657 = vpop.f32.mrf.mxu0
        %v6658 = vadd.f32 %v6545, %v6657
        %6659 = vmatmul.f32.gmra.mxu0 %v6329
        %v6660 = vpop.f32.mrf.mxu0
        %v6661 = vadd.f32 %v6548, %v6660
        %6662 = vmatmul.f32.gmra.mxu0 %v6331
        %v6663 = vpop.f32.mrf.mxu0
        %v6664 = vadd.f32 %v6551, %v6663
        %6665 = vmatmul.f32.gmra.mxu0 %v6333
        %v6666 = vpop.f32.mrf.mxu0
        %v6667 = vadd.f32 %v6554, %v6666
        %6668 = vmatmul.f32.gmra.mxu0 %v6335
        %v6669 = vpop.f32.mrf.mxu0
        %v6670 = vadd.f32 %v6557, %v6669
        %6671 = vmatmul.f32.gmra.mxu0 %v6337
        %v6672 = vpop.f32.mrf.mxu0
        %v6673 = vadd.f32 %v6560, %v6672
        %6674 = vmatmul.f32.gmra.mxu0 %v6339
        %v6675 = vpop.f32.mrf.mxu0
        %v6676 = vadd.f32 %v6563, %v6675
        %6677 = vmatmul.f32.gmra.mxu0 %v6341
        %v6678 = vpop.f32.mrf.mxu0
        %v6679 = vadd.f32 %v6566, %v6678
        %6680 = vmatmul.f32.gmra.mxu0 %v6343
        %v6681 = vpop.f32.mrf.mxu0
        %v6682 = vadd.f32 %v6569, %v6681
        %6683 = vmatmul.f32.gmra.mxu0 %v6345
        %v6684 = vpop.f32.mrf.mxu0
        %v6685 = vadd.f32 %v6572, %v6684
        %6686 = vmatmul.f32.gmra.mxu0 %v6347
        %v6687 = vpop.f32.mrf.mxu0
        %v6688 = vadd.f32 %v6575, %v6687
        %6689 = vmatmul.f32.gmra.mxu0 %v6349
        %v6690 = vpop.f32.mrf.mxu0
        %v6691 = vadd.f32 %v6578, %v6690
        %6692 = vmatmul.f32.gmra.mxu0 %v6351
        %v6693 = vpop.f32.mrf.mxu0
        %v6694 = vadd.f32 %v6581, %v6693
        %6695 = vdwg.mxu0
        %v6696 = vadd.f32 %v6601, 1e-06
        %v6697 = vadd.f32 %v6604, 1e-06
        %v6698 = vadd.f32 %v6607, 1e-06
        %v6699 = vadd.f32 %v6610, 1e-06
        %v6700 = vadd.f32 %v6613, 1e-06
        %v6701 = vadd.f32 %v6616, 1e-06
        %v6702 = vadd.f32 %v6619, 1e-06
        %v6703 = vadd.f32 %v6622, 1e-06
        %v6704 = vadd.f32 %v6625, 1e-06
        %v6705 = vadd.f32 %v6628, 1e-06
        %v6706 = vadd.f32 %v6631, 1e-06
        %v6707 = vadd.f32 %v6634, 1e-06
        %v6708 = vadd.f32 %v6637, 1e-06
        %v6709 = vadd.f32 %v6640, 1e-06
        %v6710 = vadd.f32 %v6643, 1e-06
        %v6711 = vadd.f32 %v6646, 1e-06
        %v6712 = vadd.f32 %v6649, 1e-06
        %v6713 = vadd.f32 %v6652, 1e-06
        %v6714 = vadd.f32 %v6655, 1e-06
        %v6715 = vadd.f32 %v6658, 1e-06
        %v6716 = vadd.f32 %v6661, 1e-06
        %v6717 = vadd.f32 %v6664, 1e-06
        %v6718 = vadd.f32 %v6667, 1e-06
        %v6719 = vadd.f32 %v6670, 1e-06
        %v6720 = vadd.f32 %v6673, 1e-06
        %v6721 = vadd.f32 %v6676, 1e-06
        %v6722 = vadd.f32 %v6679, 1e-06
        %v6723 = vadd.f32 %v6682, 1e-06
        %v6724 = vadd.f32 %v6685, 1e-06
        %v6725 = vadd.f32 %v6688, 1e-06
        %v6726 = vadd.f32 %v6691, 1e-06
        %v6727 = vadd.f32 %v6694, 1e-06
        %v6728 = vrcp.pop %v6696
        %v6729 = vrcp.pop %v6697
        %v6730 = vrcp.pop %v6698
        %v6731 = vrcp.pop %v6699
        %v6732 = vrcp.pop %v6700
        %v6733 = vrcp.pop %v6701
        %v6734 = vrcp.pop %v6702
        %v6735 = vrcp.pop %v6703
        %v6736 = vrcp.pop %v6704
        %v6737 = vrcp.pop %v6705
        %v6738 = vrcp.pop %v6706
        %v6739 = vrcp.pop %v6707
        %v6740 = vrcp.pop %v6708
        %v6741 = vrcp.pop %v6709
        %v6742 = vrcp.pop %v6710
        %v6743 = vrcp.pop %v6711
        %v6744 = vrcp.pop %v6712
        %v6745 = vrcp.pop %v6713
        %v6746 = vrcp.pop %v6714
        %v6747 = vrcp.pop %v6715
        %v6748 = vrcp.pop %v6716
        %v6749 = vrcp.pop %v6717
        %v6750 = vrcp.pop %v6718
        %v6751 = vrcp.pop %v6719
        %v6752 = vrcp.pop %v6720
        %v6753 = vrcp.pop %v6721
        %v6754 = vrcp.pop %v6722
        %v6755 = vrcp.pop %v6723
        %v6756 = vrcp.pop %v6724
        %v6757 = vrcp.pop %v6725
        %v6758 = vrcp.pop %v6726
        %v6759 = vrcp.pop %v6727
        %v6760 = vmul.f32 %v6696, %v6728
        %v6761 = vmul.f32 %v6697, %v6729
        %v6762 = vmul.f32 %v6698, %v6730
        %v6763 = vmul.f32 %v6699, %v6731
        %v6764 = vmul.f32 %v6700, %v6732
        %v6765 = vmul.f32 %v6701, %v6733
        %v6766 = vmul.f32 %v6702, %v6734
        %v6767 = vmul.f32 %v6703, %v6735
        %v6768 = vmul.f32 %v6704, %v6736
        %v6769 = vmul.f32 %v6705, %v6737
        %v6770 = vmul.f32 %v6706, %v6738
        %v6771 = vmul.f32 %v6707, %v6739
        %v6772 = vmul.f32 %v6708, %v6740
        %v6773 = vmul.f32 %v6709, %v6741
        %v6774 = vmul.f32 %v6710, %v6742
        %v6775 = vmul.f32 %v6711, %v6743
        %v6776 = vmul.f32 %v6712, %v6744
        %v6777 = vmul.f32 %v6713, %v6745
        %v6778 = vmul.f32 %v6714, %v6746
        %v6779 = vmul.f32 %v6715, %v6747
        %v6780 = vmul.f32 %v6716, %v6748
        %v6781 = vmul.f32 %v6717, %v6749
        %v6782 = vmul.f32 %v6718, %v6750
        %v6783 = vmul.f32 %v6719, %v6751
        %v6784 = vmul.f32 %v6720, %v6752
        %v6785 = vmul.f32 %v6721, %v6753
        %v6786 = vmul.f32 %v6722, %v6754
        %v6787 = vmul.f32 %v6723, %v6755
        %v6788 = vmul.f32 %v6724, %v6756
        %v6789 = vmul.f32 %v6725, %v6757
        %v6790 = vmul.f32 %v6726, %v6758
        %v6791 = vmul.f32 %v6727, %v6759
        %v6792 = vsub.f32 2.0, %v6760
        %v6793 = vsub.f32 2.0, %v6761
        %v6794 = vsub.f32 2.0, %v6762
        %v6795 = vsub.f32 2.0, %v6763
        %v6796 = vsub.f32 2.0, %v6764
        %v6797 = vsub.f32 2.0, %v6765
        %v6798 = vsub.f32 2.0, %v6766
        %v6799 = vsub.f32 2.0, %v6767
        %v6800 = vsub.f32 2.0, %v6768
        %v6801 = vsub.f32 2.0, %v6769
        %v6802 = vsub.f32 2.0, %v6770
        %v6803 = vsub.f32 2.0, %v6771
        %v6804 = vsub.f32 2.0, %v6772
        %v6805 = vsub.f32 2.0, %v6773
        %v6806 = vsub.f32 2.0, %v6774
        %v6807 = vsub.f32 2.0, %v6775
        %v6808 = vsub.f32 2.0, %v6776
        %v6809 = vsub.f32 2.0, %v6777
        %v6810 = vsub.f32 2.0, %v6778
        %v6811 = vsub.f32 2.0, %v6779
        %v6812 = vsub.f32 2.0, %v6780
        %v6813 = vsub.f32 2.0, %v6781
        %v6814 = vsub.f32 2.0, %v6782
        %v6815 = vsub.f32 2.0, %v6783
        %v6816 = vsub.f32 2.0, %v6784
        %v6817 = vsub.f32 2.0, %v6785
        %v6818 = vsub.f32 2.0, %v6786
        %v6819 = vsub.f32 2.0, %v6787
        %v6820 = vsub.f32 2.0, %v6788
        %v6821 = vsub.f32 2.0, %v6789
        %v6822 = vsub.f32 2.0, %v6790
        %v6823 = vsub.f32 2.0, %v6791
        %v6824 = vmul.f32 %v6728, %v6792
        %v6825 = vmul.f32 %v6729, %v6793
        %v6826 = vmul.f32 %v6730, %v6794
        %v6827 = vmul.f32 %v6731, %v6795
        %v6828 = vmul.f32 %v6732, %v6796
        %v6829 = vmul.f32 %v6733, %v6797
        %v6830 = vmul.f32 %v6734, %v6798
        %v6831 = vmul.f32 %v6735, %v6799
        %v6832 = vmul.f32 %v6736, %v6800
        %v6833 = vmul.f32 %v6737, %v6801
        %v6834 = vmul.f32 %v6738, %v6802
        %v6835 = vmul.f32 %v6739, %v6803
        %v6836 = vmul.f32 %v6740, %v6804
        %v6837 = vmul.f32 %v6741, %v6805
        %v6838 = vmul.f32 %v6742, %v6806
        %v6839 = vmul.f32 %v6743, %v6807
        %v6840 = vmul.f32 %v6744, %v6808
        %v6841 = vmul.f32 %v6745, %v6809
        %v6842 = vmul.f32 %v6746, %v6810
        %v6843 = vmul.f32 %v6747, %v6811
        %v6844 = vmul.f32 %v6748, %v6812
        %v6845 = vmul.f32 %v6749, %v6813
        %v6846 = vmul.f32 %v6750, %v6814
        %v6847 = vmul.f32 %v6751, %v6815
        %v6848 = vmul.f32 %v6752, %v6816
        %v6849 = vmul.f32 %v6753, %v6817
        %v6850 = vmul.f32 %v6754, %v6818
        %v6851 = vmul.f32 %v6755, %v6819
        %v6852 = vmul.f32 %v6756, %v6820
        %v6853 = vmul.f32 %v6757, %v6821
        %v6854 = vmul.f32 %v6758, %v6822
        %v6855 = vmul.f32 %v6759, %v6823
        %v6856 = vmax.f32 %v6824, -1.0
        %v6857 = vmax.f32 %v6825, -1.0
        %v6858 = vmax.f32 %v6826, -1.0
        %v6859 = vmax.f32 %v6827, -1.0
        %v6860 = vmax.f32 %v6828, -1.0
        %v6861 = vmax.f32 %v6829, -1.0
        %v6862 = vmax.f32 %v6830, -1.0
        %v6863 = vmax.f32 %v6831, -1.0
        %v6864 = vmax.f32 %v6832, -1.0
        %v6865 = vmax.f32 %v6833, -1.0
        %v6866 = vmax.f32 %v6834, -1.0
        %v6867 = vmax.f32 %v6835, -1.0
        %v6868 = vmax.f32 %v6836, -1.0
        %v6869 = vmax.f32 %v6837, -1.0
        %v6870 = vmax.f32 %v6838, -1.0
        %v6871 = vmax.f32 %v6839, -1.0
        %v6872 = vmax.f32 %v6840, -1.0
        %v6873 = vmax.f32 %v6841, -1.0
        %v6874 = vmax.f32 %v6842, -1.0
        %v6875 = vmax.f32 %v6843, -1.0
        %v6876 = vmax.f32 %v6844, -1.0
        %v6877 = vmax.f32 %v6845, -1.0
        %v6878 = vmax.f32 %v6846, -1.0
        %v6879 = vmax.f32 %v6847, -1.0
        %v6880 = vmax.f32 %v6848, -1.0
        %v6881 = vmax.f32 %v6849, -1.0
        %v6882 = vmax.f32 %v6850, -1.0
        %v6883 = vmax.f32 %v6851, -1.0
        %v6884 = vmax.f32 %v6852, -1.0
        %v6885 = vmax.f32 %v6853, -1.0
        %v6886 = vmax.f32 %v6854, -1.0
        %v6887 = vmax.f32 %v6855, -1.0
        %v6888 = vmin.f32 %v6856, 1.0
        %v6889 = vmin.f32 %v6857, 1.0
        %v6890 = vmin.f32 %v6858, 1.0
        %v6891 = vmin.f32 %v6859, 1.0
        %v6892 = vmin.f32 %v6860, 1.0
        %v6893 = vmin.f32 %v6861, 1.0
        %v6894 = vmin.f32 %v6862, 1.0
        %v6895 = vmin.f32 %v6863, 1.0
        %v6896 = vmin.f32 %v6864, 1.0
        %v6897 = vmin.f32 %v6865, 1.0
        %v6898 = vmin.f32 %v6866, 1.0
        %v6899 = vmin.f32 %v6867, 1.0
        %v6900 = vmin.f32 %v6868, 1.0
        %v6901 = vmin.f32 %v6869, 1.0
        %v6902 = vmin.f32 %v6870, 1.0
        %v6903 = vmin.f32 %v6871, 1.0
        %v6904 = vmin.f32 %v6872, 1.0
        %v6905 = vmin.f32 %v6873, 1.0
        %v6906 = vmin.f32 %v6874, 1.0
        %v6907 = vmin.f32 %v6875, 1.0
        %v6908 = vmin.f32 %v6876, 1.0
        %v6909 = vmin.f32 %v6877, 1.0
        %v6910 = vmin.f32 %v6878, 1.0
        %v6911 = vmin.f32 %v6879, 1.0
        %v6912 = vmin.f32 %v6880, 1.0
        %v6913 = vmin.f32 %v6881, 1.0
        %v6914 = vmin.f32 %v6882, 1.0
        %v6915 = vmin.f32 %v6883, 1.0
        %v6916 = vmin.f32 %v6884, 1.0
        %v6917 = vmin.f32 %v6885, 1.0
        %v6918 = vmin.f32 %v6886, 1.0
        %v6919 = vmin.f32 %v6887, 1.0
        %6921 = vset.pattern.permute.xlu0 32
        %6922 = vperm.xlu0 %6921, %v6888
        %v6923 = vpop.permute.xlu0 %6922
        %6926 = vset.pattern.permute.xlu0 32
        %6927 = vperm.xlu0 %6926, %v6889
        %v6928 = vpop.permute.xlu0 %6927
        %6931 = vset.pattern.permute.xlu0 32
        %6932 = vperm.xlu0 %6931, %v6890
        %v6933 = vpop.permute.xlu0 %6932
        %6936 = vset.pattern.permute.xlu0 32
        %6937 = vperm.xlu0 %6936, %v6891
        %v6938 = vpop.permute.xlu0 %6937
        %6941 = vset.pattern.permute.xlu0 32
        %6942 = vperm.xlu0 %6941, %v6892
        %v6943 = vpop.permute.xlu0 %6942
        %6946 = vset.pattern.permute.xlu0 32
        %6947 = vperm.xlu0 %6946, %v6893
        %v6948 = vpop.permute.xlu0 %6947
        %6951 = vset.pattern.permute.xlu0 32
        %6952 = vperm.xlu0 %6951, %v6894
        %v6953 = vpop.permute.xlu0 %6952
        %6956 = vset.pattern.permute.xlu0 32
        %6957 = vperm.xlu0 %6956, %v6895
        %v6958 = vpop.permute.xlu0 %6957
        %6961 = vset.pattern.permute.xlu0 32
        %6962 = vperm.xlu0 %6961, %v6896
        %v6963 = vpop.permute.xlu0 %6962
        %6966 = vset.pattern.permute.xlu0 32
        %6967 = vperm.xlu0 %6966, %v6897
        %v6968 = vpop.permute.xlu0 %6967
        %6971 = vset.pattern.permute.xlu0 32
        %6972 = vperm.xlu0 %6971, %v6898
        %v6973 = vpop.permute.xlu0 %6972
        %6976 = vset.pattern.permute.xlu0 32
        %6977 = vperm.xlu0 %6976, %v6899
        %v6978 = vpop.permute.xlu0 %6977
        %6981 = vset.pattern.permute.xlu0 32
        %6982 = vperm.xlu0 %6981, %v6900
        %v6983 = vpop.permute.xlu0 %6982
        %6986 = vset.pattern.permute.xlu0 32
        %6987 = vperm.xlu0 %6986, %v6901
        %v6988 = vpop.permute.xlu0 %6987
        %6991 = vset.pattern.permute.xlu0 32
        %6992 = vperm.xlu0 %6991, %v6902
        %v6993 = vpop.permute.xlu0 %6992
        %6996 = vset.pattern.permute.xlu0 32
        %6997 = vperm.xlu0 %6996, %v6903
        %v6998 = vpop.permute.xlu0 %6997
        %7001 = vset.pattern.permute.xlu0 32
        %7002 = vperm.xlu0 %7001, %v6904
        %v7003 = vpop.permute.xlu0 %7002
        %7006 = vset.pattern.permute.xlu0 32
        %7007 = vperm.xlu0 %7006, %v6905
        %v7008 = vpop.permute.xlu0 %7007
        %7011 = vset.pattern.permute.xlu0 32
        %7012 = vperm.xlu0 %7011, %v6906
        %v7013 = vpop.permute.xlu0 %7012
        %7016 = vset.pattern.permute.xlu0 32
        %7017 = vperm.xlu0 %7016, %v6907
        %v7018 = vpop.permute.xlu0 %7017
        %7021 = vset.pattern.permute.xlu0 32
        %7022 = vperm.xlu0 %7021, %v6908
        %v7023 = vpop.permute.xlu0 %7022
        %7026 = vset.pattern.permute.xlu0 32
        %7027 = vperm.xlu0 %7026, %v6909
        %v7028 = vpop.permute.xlu0 %7027
        %7031 = vset.pattern.permute.xlu0 32
        %7032 = vperm.xlu0 %7031, %v6910
        %v7033 = vpop.permute.xlu0 %7032
        %7036 = vset.pattern.permute.xlu0 32
        %7037 = vperm.xlu0 %7036, %v6911
        %v7038 = vpop.permute.xlu0 %7037
        %7041 = vset.pattern.permute.xlu0 32
        %7042 = vperm.xlu0 %7041, %v6912
        %v7043 = vpop.permute.xlu0 %7042
        %7046 = vset.pattern.permute.xlu0 32
        %7047 = vperm.xlu0 %7046, %v6913
        %v7048 = vpop.permute.xlu0 %7047
        %7051 = vset.pattern.permute.xlu0 32
        %7052 = vperm.xlu0 %7051, %v6914
        %v7053 = vpop.permute.xlu0 %7052
        %7056 = vset.pattern.permute.xlu0 32
        %7057 = vperm.xlu0 %7056, %v6915
        %v7058 = vpop.permute.xlu0 %7057
        %7061 = vset.pattern.permute.xlu0 32
        %7062 = vperm.xlu0 %7061, %v6916
        %v7063 = vpop.permute.xlu0 %7062
        %7066 = vset.pattern.permute.xlu0 32
        %7067 = vperm.xlu0 %7066, %v6917
        %v7068 = vpop.permute.xlu0 %7067
        %7071 = vset.pattern.permute.xlu0 32
        %7072 = vperm.xlu0 %7071, %v6918
        %v7073 = vpop.permute.xlu0 %7072
        %7076 = vset.pattern.permute.xlu0 32
        %7077 = vperm.xlu0 %7076, %v6919
        %v7078 = vpop.permute.xlu0 %7077
        %v7080 = vmul.f32 %v6601, %v6923
        %v7081 = vmul.f32 %v6604, %v6928
        %v7082 = vmul.f32 %v6607, %v6933
        %v7083 = vmul.f32 %v6610, %v6938
        %v7084 = vmul.f32 %v6613, %v6943
        %v7085 = vmul.f32 %v6616, %v6948
        %v7086 = vmul.f32 %v6619, %v6953
        %v7087 = vmul.f32 %v6622, %v6958
        %v7088 = vmul.f32 %v6625, %v6963
        %v7089 = vmul.f32 %v6628, %v6968
        %v7090 = vmul.f32 %v6631, %v6973
        %v7091 = vmul.f32 %v6634, %v6978
        %v7092 = vmul.f32 %v6637, %v6983
        %v7093 = vmul.f32 %v6640, %v6988
        %v7094 = vmul.f32 %v6643, %v6993
        %v7095 = vmul.f32 %v6646, %v6998
        %v7096 = vmul.f32 %v6649, %v7003
        %v7097 = vmul.f32 %v6652, %v7008
        %v7098 = vmul.f32 %v6655, %v7013
        %v7099 = vmul.f32 %v6658, %v7018
        %v7100 = vmul.f32 %v6661, %v7023
        %v7101 = vmul.f32 %v6664, %v7028
        %v7102 = vmul.f32 %v6667, %v7033
        %v7103 = vmul.f32 %v6670, %v7038
        %v7104 = vmul.f32 %v6673, %v7043
        %v7105 = vmul.f32 %v6676, %v7048
        %v7106 = vmul.f32 %v6679, %v7053
        %v7107 = vmul.f32 %v6682, %v7058
        %v7108 = vmul.f32 %v6685, %v7063
        %v7109 = vmul.f32 %v6688, %v7068
        %v7110 = vmul.f32 %v6691, %v7073
        %v7111 = vmul.f32 %v6694, %v7078
        %v7112 = vmax.f32 %v7080, -16.0
        %v7113 = vmax.f32 %v7081, -16.0
        %v7114 = vmax.f32 %v7082, -16.0
        %v7115 = vmax.f32 %v7083, -16.0
        %v7116 = vmax.f32 %v7084, -16.0
        %v7117 = vmax.f32 %v7085, -16.0
        %v7118 = vmax.f32 %v7086, -16.0
        %v7119 = vmax.f32 %v7087, -16.0
        %v7120 = vmax.f32 %v7088, -16.0
        %v7121 = vmax.f32 %v7089, -16.0
        %v7122 = vmax.f32 %v7090, -16.0
        %v7123 = vmax.f32 %v7091, -16.0
        %v7124 = vmax.f32 %v7092, -16.0
        %v7125 = vmax.f32 %v7093, -16.0
        %v7126 = vmax.f32 %v7094, -16.0
        %v7127 = vmax.f32 %v7095, -16.0
        %v7128 = vmax.f32 %v7096, -16.0
        %v7129 = vmax.f32 %v7097, -16.0
        %v7130 = vmax.f32 %v7098, -16.0
        %v7131 = vmax.f32 %v7099, -16.0
        %v7132 = vmax.f32 %v7100, -16.0
        %v7133 = vmax.f32 %v7101, -16.0
        %v7134 = vmax.f32 %v7102, -16.0
        %v7135 = vmax.f32 %v7103, -16.0
        %v7136 = vmax.f32 %v7104, -16.0
        %v7137 = vmax.f32 %v7105, -16.0
        %v7138 = vmax.f32 %v7106, -16.0
        %v7139 = vmax.f32 %v7107, -16.0
        %v7140 = vmax.f32 %v7108, -16.0
        %v7141 = vmax.f32 %v7109, -16.0
        %v7142 = vmax.f32 %v7110, -16.0
        %v7143 = vmax.f32 %v7111, -16.0
        %v7144 = vmin.f32 %v7112, 16.0
        %v7145 = vmin.f32 %v7113, 16.0
        %v7146 = vmin.f32 %v7114, 16.0
        %v7147 = vmin.f32 %v7115, 16.0
        %v7148 = vmin.f32 %v7116, 16.0
        %v7149 = vmin.f32 %v7117, 16.0
        %v7150 = vmin.f32 %v7118, 16.0
        %v7151 = vmin.f32 %v7119, 16.0
        %v7152 = vmin.f32 %v7120, 16.0
        %v7153 = vmin.f32 %v7121, 16.0
        %v7154 = vmin.f32 %v7122, 16.0
        %v7155 = vmin.f32 %v7123, 16.0
        %v7156 = vmin.f32 %v7124, 16.0
        %v7157 = vmin.f32 %v7125, 16.0
        %v7158 = vmin.f32 %v7126, 16.0
        %v7159 = vmin.f32 %v7127, 16.0
        %v7160 = vmin.f32 %v7128, 16.0
        %v7161 = vmin.f32 %v7129, 16.0
        %v7162 = vmin.f32 %v7130, 16.0
        %v7163 = vmin.f32 %v7131, 16.0
        %v7164 = vmin.f32 %v7132, 16.0
        %v7165 = vmin.f32 %v7133, 16.0
        %v7166 = vmin.f32 %v7134, 16.0
        %v7167 = vmin.f32 %v7135, 16.0
        %v7168 = vmin.f32 %v7136, 16.0
        %v7169 = vmin.f32 %v7137, 16.0
        %v7170 = vmin.f32 %v7138, 16.0
        %v7171 = vmin.f32 %v7139, 16.0
        %v7172 = vmin.f32 %v7140, 16.0
        %v7173 = vmin.f32 %v7141, 16.0
        %v7174 = vmin.f32 %v7142, 16.0
        %v7175 = vmin.f32 %v7143, 16.0
        %7208 = vxpose.xlu0.b32.start [1/16] %v5871, 128
        %7209 = vxpose.xlu0.b32.cont [2/16] %v5873, 128
        %7210 = vxpose.xlu0.b32.cont [3/16] %v5875, 128
        %7211 = vxpose.xlu0.b32.cont [4/16] %v5877, 128
        %7212 = vxpose.xlu0.b32.cont [5/16] %v5879, 128
        %7213 = vxpose.xlu0.b32.cont [6/16] %v5881, 128
        %7214 = vxpose.xlu0.b32.cont [7/16] %v5883, 128
        %7215 = vxpose.xlu0.b32.cont [8/16] %v5885, 128
        %7216 = vxpose.xlu0.b32.cont [9/16] %v5887, 128
        %7217 = vxpose.xlu0.b32.cont [10/16] %v5889, 128
        %7218 = vxpose.xlu0.b32.cont [11/16] %v5891, 128
        %7219 = vxpose.xlu0.b32.cont [12/16] %v5893, 128
        %7220 = vxpose.xlu0.b32.cont [13/16] %v5895, 128
        %7221 = vxpose.xlu0.b32.cont [14/16] %v5897, 128
        %7222 = vxpose.xlu0.b32.cont [15/16] %v5899, 128
        %7223 = vxpose.xlu0.b32.end [16/16] %v5901, 128
        %v7224 = vpop.trf.xlu0
        %v7225 = vpop.trf.xlu0
        %v7226 = vpop.trf.xlu0
        %v7227 = vpop.trf.xlu0
        %v7228 = vpop.trf.xlu0
        %v7229 = vpop.trf.xlu0
        %v7230 = vpop.trf.xlu0
        %v7231 = vpop.trf.xlu0
        %v7232 = vpop.trf.xlu0
        %v7233 = vpop.trf.xlu0
        %v7234 = vpop.trf.xlu0
        %v7235 = vpop.trf.xlu0
        %v7236 = vpop.trf.xlu0
        %v7237 = vpop.trf.xlu0
        %v7238 = vpop.trf.xlu0
        %v7239 = vpop.trf.xlu0
        %7240 = vxpose.xlu0.b32.start [1/16] %v5903, 128
        %7241 = vxpose.xlu0.b32.cont [2/16] %v5905, 128
        %7242 = vxpose.xlu0.b32.cont [3/16] %v5907, 128
        %7243 = vxpose.xlu0.b32.cont [4/16] %v5909, 128
        %7244 = vxpose.xlu0.b32.cont [5/16] %v5911, 128
        %7245 = vxpose.xlu0.b32.cont [6/16] %v5913, 128
        %7246 = vxpose.xlu0.b32.cont [7/16] %v5915, 128
        %7247 = vxpose.xlu0.b32.cont [8/16] %v5917, 128
        %7248 = vxpose.xlu0.b32.cont [9/16] %v5919, 128
        %7249 = vxpose.xlu0.b32.cont [10/16] %v5921, 128
        %7250 = vxpose.xlu0.b32.cont [11/16] %v5923, 128
        %7251 = vxpose.xlu0.b32.cont [12/16] %v5925, 128
        %7252 = vxpose.xlu0.b32.cont [13/16] %v5927, 128
        %7253 = vxpose.xlu0.b32.cont [14/16] %v5929, 128
        %7254 = vxpose.xlu0.b32.cont [15/16] %v5931, 128
        %7255 = vxpose.xlu0.b32.end [16/16] %v5933, 128
        %v7256 = vpop.trf.xlu0
        %v7257 = vpop.trf.xlu0
        %v7258 = vpop.trf.xlu0
        %v7259 = vpop.trf.xlu0
        %v7260 = vpop.trf.xlu0
        %v7261 = vpop.trf.xlu0
        %v7262 = vpop.trf.xlu0
        %v7263 = vpop.trf.xlu0
        %v7264 = vpop.trf.xlu0
        %v7265 = vpop.trf.xlu0
        %v7266 = vpop.trf.xlu0
        %v7267 = vpop.trf.xlu0
        %v7268 = vpop.trf.xlu0
        %v7269 = vpop.trf.xlu0
        %v7270 = vpop.trf.xlu0
        %v7271 = vpop.trf.xlu0
        %7272 = vmatpush.msra.mxu0 %v5789
        %7273 = vmatpush.msra.mxu0 %v5788
        %7274 = vmatpush.msra.mxu0 %v5787
        %7275 = vmatpush.msra.mxu0 %v5786
        %7276 = vmatpush.msra.mxu0 %v5785
        %7277 = vmatpush.msra.mxu0 %v5784
        %7278 = vmatpush.msra.mxu0 %v5783
        %7279 = vmatpush.msra.mxu0 %v5782
        %7280 = vmatpush.msra.mxu0 %v5781
        %7281 = vmatpush.msra.mxu0 %v5780
        %7282 = vmatpush.msra.mxu0 %v5779
        %7283 = vmatpush.msra.mxu0 %v5778
        %7284 = vmatpush.msra.mxu0 %v5777
        %7285 = vmatpush.msra.mxu0 %v5776
        %7286 = vmatpush.msra.mxu0 %v5775
        %7287 = vmatpush.msra.mxu0 %v5774
        %7288 = vmatmul.f32.gmra.mxu0 %v7224
        %v7289 = vpop.f32.mrf.mxu0
        %v7290 = vadd.f32 0.0, %v7289
        %7291 = vmatmul.f32.gmra.mxu0 %v7225
        %v7292 = vpop.f32.mrf.mxu0
        %v7293 = vadd.f32 0.0, %v7292
        %7294 = vmatmul.f32.gmra.mxu0 %v7226
        %v7295 = vpop.f32.mrf.mxu0
        %v7296 = vadd.f32 0.0, %v7295
        %7297 = vmatmul.f32.gmra.mxu0 %v7227
        %v7298 = vpop.f32.mrf.mxu0
        %v7299 = vadd.f32 0.0, %v7298
        %7300 = vdwg.mxu0
        %7301 = vmatpush.msra.mxu0 %v5805
        %7302 = vmatpush.msra.mxu0 %v5804
        %7303 = vmatpush.msra.mxu0 %v5803
        %7304 = vmatpush.msra.mxu0 %v5802
        %7305 = vmatpush.msra.mxu0 %v5801
        %7306 = vmatpush.msra.mxu0 %v5800
        %7307 = vmatpush.msra.mxu0 %v5799
        %7308 = vmatpush.msra.mxu0 %v5798
        %7309 = vmatpush.msra.mxu0 %v5797
        %7310 = vmatpush.msra.mxu0 %v5796
        %7311 = vmatpush.msra.mxu0 %v5795
        %7312 = vmatpush.msra.mxu0 %v5794
        %7313 = vmatpush.msra.mxu0 %v5793
        %7314 = vmatpush.msra.mxu0 %v5792
        %7315 = vmatpush.msra.mxu0 %v5791
        %7316 = vmatpush.msra.mxu0 %v5790
        %7317 = vmatmul.f32.gmra.mxu0 %v7256
        %v7318 = vpop.f32.mrf.mxu0
        %v7319 = vadd.f32 %v7290, %v7318
        %7320 = vmatmul.f32.gmra.mxu0 %v7257
        %v7321 = vpop.f32.mrf.mxu0
        %v7322 = vadd.f32 %v7293, %v7321
        %7323 = vmatmul.f32.gmra.mxu0 %v7258
        %v7324 = vpop.f32.mrf.mxu0
        %v7325 = vadd.f32 %v7296, %v7324
        %7326 = vmatmul.f32.gmra.mxu0 %v7259
        %v7327 = vpop.f32.mrf.mxu0
        %v7328 = vadd.f32 %v7299, %v7327
        %7329 = vdwg.mxu0
        %v7330 = vadd.f32 %v6353, %v7319
        %v7331 = vadd.f32 %v6354, %v7322
        %v7332 = vadd.f32 %v6355, %v7325
        %v7333 = vadd.f32 %v6356, %v7328
        %7334 = vst.msk [vmem:[%s6352] sm:$0xff] %vm2321, %v7330
        %7335 = vst.msk [vmem:[%s6352 + $0x8] sm:$0xff] %vm2321, %v7331
        %7336 = vst.msk [vmem:[%s6352 + $0x10] sm:$0xff] %vm2321, %v7332
        %7337 = vst.msk [vmem:[%s6352 + $0x18] sm:$0xff] %vm2321, %v7333
        %7370 = vrot.lane.b32.xlu0 %v3824, 32
        %v7371 = vpop.permute.xlu0 %7370
        %7372 = vrot.lane.b32.xlu0 %v3825, 32
        %v7373 = vpop.permute.xlu0 %7372
        %7374 = vrot.lane.b32.xlu0 %v3826, 32
        %v7375 = vpop.permute.xlu0 %7374
        %7376 = vrot.lane.b32.xlu0 %v3827, 32
        %v7377 = vpop.permute.xlu0 %7376
        %7378 = vrot.lane.b32.xlu0 %v3828, 32
        %v7379 = vpop.permute.xlu0 %7378
        %7380 = vrot.lane.b32.xlu0 %v3829, 32
        %v7381 = vpop.permute.xlu0 %7380
        %7382 = vrot.lane.b32.xlu0 %v3830, 32
        %v7383 = vpop.permute.xlu0 %7382
        %7384 = vrot.lane.b32.xlu0 %v3831, 32
        %v7385 = vpop.permute.xlu0 %7384
        %7386 = vrot.lane.b32.xlu0 %v3832, 32
        %v7387 = vpop.permute.xlu0 %7386
        %7388 = vrot.lane.b32.xlu0 %v3833, 32
        %v7389 = vpop.permute.xlu0 %7388
        %7390 = vrot.lane.b32.xlu0 %v3834, 32
        %v7391 = vpop.permute.xlu0 %7390
        %7392 = vrot.lane.b32.xlu0 %v3835, 32
        %v7393 = vpop.permute.xlu0 %7392
        %7394 = vrot.lane.b32.xlu0 %v3836, 32
        %v7395 = vpop.permute.xlu0 %7394
        %7396 = vrot.lane.b32.xlu0 %v3837, 32
        %v7397 = vpop.permute.xlu0 %7396
        %7398 = vrot.lane.b32.xlu0 %v3838, 32
        %v7399 = vpop.permute.xlu0 %7398
        %7400 = vrot.lane.b32.xlu0 %v3839, 32
        %v7401 = vpop.permute.xlu0 %7400
        %7402 = vrot.lane.b32.xlu0 %v3840, 32
        %v7403 = vpop.permute.xlu0 %7402
        %7404 = vrot.lane.b32.xlu0 %v3841, 32
        %v7405 = vpop.permute.xlu0 %7404
        %7406 = vrot.lane.b32.xlu0 %v3842, 32
        %v7407 = vpop.permute.xlu0 %7406
        %7408 = vrot.lane.b32.xlu0 %v3843, 32
        %v7409 = vpop.permute.xlu0 %7408
        %7410 = vrot.lane.b32.xlu0 %v3844, 32
        %v7411 = vpop.permute.xlu0 %7410
        %7412 = vrot.lane.b32.xlu0 %v3845, 32
        %v7413 = vpop.permute.xlu0 %7412
        %7414 = vrot.lane.b32.xlu0 %v3846, 32
        %v7415 = vpop.permute.xlu0 %7414
        %7416 = vrot.lane.b32.xlu0 %v3847, 32
        %v7417 = vpop.permute.xlu0 %7416
        %7418 = vrot.lane.b32.xlu0 %v3848, 32
        %v7419 = vpop.permute.xlu0 %7418
        %7420 = vrot.lane.b32.xlu0 %v3849, 32
        %v7421 = vpop.permute.xlu0 %7420
        %7422 = vrot.lane.b32.xlu0 %v3850, 32
        %v7423 = vpop.permute.xlu0 %7422
        %7424 = vrot.lane.b32.xlu0 %v3851, 32
        %v7425 = vpop.permute.xlu0 %7424
        %7426 = vrot.lane.b32.xlu0 %v3852, 32
        %v7427 = vpop.permute.xlu0 %7426
        %7428 = vrot.lane.b32.xlu0 %v3853, 32
        %v7429 = vpop.permute.xlu0 %7428
        %7430 = vrot.lane.b32.xlu0 %v3854, 32
        %v7431 = vpop.permute.xlu0 %7430
        %7432 = vrot.lane.b32.xlu0 %v3855, 32
        %v7433 = vpop.permute.xlu0 %7432
        %7498 = vrot.lane.b32.xlu0 %v5484, 64
        %v7499 = vpop.permute.xlu0 %7498
        %7500 = vrot.lane.b32.xlu0 %v5485, 64
        %v7501 = vpop.permute.xlu0 %7500
        %7502 = vrot.lane.b32.xlu0 %v5486, 64
        %v7503 = vpop.permute.xlu0 %7502
        %7504 = vrot.lane.b32.xlu0 %v5487, 64
        %v7505 = vpop.permute.xlu0 %7504
        %7506 = vrot.lane.b32.xlu0 %v5488, 64
        %v7507 = vpop.permute.xlu0 %7506
        %7508 = vrot.lane.b32.xlu0 %v5489, 64
        %v7509 = vpop.permute.xlu0 %7508
        %7510 = vrot.lane.b32.xlu0 %v5490, 64
        %v7511 = vpop.permute.xlu0 %7510
        %7512 = vrot.lane.b32.xlu0 %v5491, 64
        %v7513 = vpop.permute.xlu0 %7512
        %7514 = vrot.lane.b32.xlu0 %v5492, 64
        %v7515 = vpop.permute.xlu0 %7514
        %7516 = vrot.lane.b32.xlu0 %v5493, 64
        %v7517 = vpop.permute.xlu0 %7516
        %7518 = vrot.lane.b32.xlu0 %v5494, 64
        %v7519 = vpop.permute.xlu0 %7518
        %7520 = vrot.lane.b32.xlu0 %v5495, 64
        %v7521 = vpop.permute.xlu0 %7520
        %7522 = vrot.lane.b32.xlu0 %v5496, 64
        %v7523 = vpop.permute.xlu0 %7522
        %7524 = vrot.lane.b32.xlu0 %v5497, 64
        %v7525 = vpop.permute.xlu0 %7524
        %7526 = vrot.lane.b32.xlu0 %v5498, 64
        %v7527 = vpop.permute.xlu0 %7526
        %7528 = vrot.lane.b32.xlu0 %v5499, 64
        %v7529 = vpop.permute.xlu0 %7528
        %7530 = vrot.lane.b32.xlu0 %v5500, 64
        %v7531 = vpop.permute.xlu0 %7530
        %7532 = vrot.lane.b32.xlu0 %v5501, 64
        %v7533 = vpop.permute.xlu0 %7532
        %7534 = vrot.lane.b32.xlu0 %v5502, 64
        %v7535 = vpop.permute.xlu0 %7534
        %7536 = vrot.lane.b32.xlu0 %v5503, 64
        %v7537 = vpop.permute.xlu0 %7536
        %7538 = vrot.lane.b32.xlu0 %v5504, 64
        %v7539 = vpop.permute.xlu0 %7538
        %7540 = vrot.lane.b32.xlu0 %v5505, 64
        %v7541 = vpop.permute.xlu0 %7540
        %7542 = vrot.lane.b32.xlu0 %v5506, 64
        %v7543 = vpop.permute.xlu0 %7542
        %7544 = vrot.lane.b32.xlu0 %v5507, 64
        %v7545 = vpop.permute.xlu0 %7544
        %7546 = vrot.lane.b32.xlu0 %v5508, 64
        %v7547 = vpop.permute.xlu0 %7546
        %7548 = vrot.lane.b32.xlu0 %v5509, 64
        %v7549 = vpop.permute.xlu0 %7548
        %7550 = vrot.lane.b32.xlu0 %v5510, 64
        %v7551 = vpop.permute.xlu0 %7550
        %7552 = vrot.lane.b32.xlu0 %v5511, 64
        %v7553 = vpop.permute.xlu0 %7552
        %7554 = vrot.lane.b32.xlu0 %v5512, 64
        %v7555 = vpop.permute.xlu0 %7554
        %7556 = vrot.lane.b32.xlu0 %v5513, 64
        %v7557 = vpop.permute.xlu0 %7556
        %7558 = vrot.lane.b32.xlu0 %v5514, 64
        %v7559 = vpop.permute.xlu0 %7558
        %7560 = vrot.lane.b32.xlu0 %v5515, 64
        %v7561 = vpop.permute.xlu0 %7560
        %7626 = vrot.lane.b32.xlu0 %v7144, 96
        %v7627 = vpop.permute.xlu0 %7626
        %7628 = vrot.lane.b32.xlu0 %v7145, 96
        %v7629 = vpop.permute.xlu0 %7628
        %7630 = vrot.lane.b32.xlu0 %v7146, 96
        %v7631 = vpop.permute.xlu0 %7630
        %7632 = vrot.lane.b32.xlu0 %v7147, 96
        %v7633 = vpop.permute.xlu0 %7632
        %7634 = vrot.lane.b32.xlu0 %v7148, 96
        %v7635 = vpop.permute.xlu0 %7634
        %7636 = vrot.lane.b32.xlu0 %v7149, 96
        %v7637 = vpop.permute.xlu0 %7636
        %7638 = vrot.lane.b32.xlu0 %v7150, 96
        %v7639 = vpop.permute.xlu0 %7638
        %7640 = vrot.lane.b32.xlu0 %v7151, 96
        %v7641 = vpop.permute.xlu0 %7640
        %7642 = vrot.lane.b32.xlu0 %v7152, 96
        %v7643 = vpop.permute.xlu0 %7642
        %7644 = vrot.lane.b32.xlu0 %v7153, 96
        %v7645 = vpop.permute.xlu0 %7644
        %7646 = vrot.lane.b32.xlu0 %v7154, 96
        %v7647 = vpop.permute.xlu0 %7646
        %7648 = vrot.lane.b32.xlu0 %v7155, 96
        %v7649 = vpop.permute.xlu0 %7648
        %7650 = vrot.lane.b32.xlu0 %v7156, 96
        %v7651 = vpop.permute.xlu0 %7650
        %7652 = vrot.lane.b32.xlu0 %v7157, 96
        %v7653 = vpop.permute.xlu0 %7652
        %7654 = vrot.lane.b32.xlu0 %v7158, 96
        %v7655 = vpop.permute.xlu0 %7654
        %7656 = vrot.lane.b32.xlu0 %v7159, 96
        %v7657 = vpop.permute.xlu0 %7656
        %7658 = vrot.lane.b32.xlu0 %v7160, 96
        %v7659 = vpop.permute.xlu0 %7658
        %7660 = vrot.lane.b32.xlu0 %v7161, 96
        %v7661 = vpop.permute.xlu0 %7660
        %7662 = vrot.lane.b32.xlu0 %v7162, 96
        %v7663 = vpop.permute.xlu0 %7662
        %7664 = vrot.lane.b32.xlu0 %v7163, 96
        %v7665 = vpop.permute.xlu0 %7664
        %7666 = vrot.lane.b32.xlu0 %v7164, 96
        %v7667 = vpop.permute.xlu0 %7666
        %7668 = vrot.lane.b32.xlu0 %v7165, 96
        %v7669 = vpop.permute.xlu0 %7668
        %7670 = vrot.lane.b32.xlu0 %v7166, 96
        %v7671 = vpop.permute.xlu0 %7670
        %7672 = vrot.lane.b32.xlu0 %v7167, 96
        %v7673 = vpop.permute.xlu0 %7672
        %7674 = vrot.lane.b32.xlu0 %v7168, 96
        %v7675 = vpop.permute.xlu0 %7674
        %7676 = vrot.lane.b32.xlu0 %v7169, 96
        %v7677 = vpop.permute.xlu0 %7676
        %7678 = vrot.lane.b32.xlu0 %v7170, 96
        %v7679 = vpop.permute.xlu0 %7678
        %7680 = vrot.lane.b32.xlu0 %v7171, 96
        %v7681 = vpop.permute.xlu0 %7680
        %7682 = vrot.lane.b32.xlu0 %v7172, 96
        %v7683 = vpop.permute.xlu0 %7682
        %7684 = vrot.lane.b32.xlu0 %v7173, 96
        %v7685 = vpop.permute.xlu0 %7684
        %7686 = vrot.lane.b32.xlu0 %v7174, 96
        %v7687 = vpop.permute.xlu0 %7686
        %7688 = vrot.lane.b32.xlu0 %v7175, 96
        %v7689 = vpop.permute.xlu0 %7688
        %v7722 = vsel %vm857, %v2163, %v7371
        %v7723 = vsel %vm857, %v2164, %v7373
        %v7724 = vsel %vm857, %v2165, %v7375
        %v7725 = vsel %vm857, %v2166, %v7377
        %v7726 = vsel %vm857, %v2167, %v7379
        %v7727 = vsel %vm857, %v2168, %v7381
        %v7728 = vsel %vm857, %v2169, %v7383
        %v7729 = vsel %vm857, %v2170, %v7385
        %v7730 = vsel %vm857, %v2171, %v7387
        %v7731 = vsel %vm857, %v2172, %v7389
        %v7732 = vsel %vm857, %v2173, %v7391
        %v7733 = vsel %vm857, %v2174, %v7393
        %v7734 = vsel %vm857, %v2175, %v7395
        %v7735 = vsel %vm857, %v2176, %v7397
        %v7736 = vsel %vm857, %v2177, %v7399
        %v7737 = vsel %vm857, %v2178, %v7401
        %v7738 = vsel %vm857, %v2179, %v7403
        %v7739 = vsel %vm857, %v2180, %v7405
        %v7740 = vsel %vm857, %v2181, %v7407
        %v7741 = vsel %vm857, %v2182, %v7409
        %v7742 = vsel %vm857, %v2183, %v7411
        %v7743 = vsel %vm857, %v2184, %v7413
        %v7744 = vsel %vm857, %v2185, %v7415
        %v7745 = vsel %vm857, %v2186, %v7417
        %v7746 = vsel %vm857, %v2187, %v7419
        %v7747 = vsel %vm857, %v2188, %v7421
        %v7748 = vsel %vm857, %v2189, %v7423
        %v7749 = vsel %vm857, %v2190, %v7425
        %v7750 = vsel %vm857, %v2191, %v7427
        %v7751 = vsel %vm857, %v2192, %v7429
        %v7752 = vsel %vm857, %v2193, %v7431
        %v7753 = vsel %vm857, %v2194, %v7433
        %vm7754 = vcmask 523264
        %v7755 = vsel %vm7754, %v7722, %v7499
        %v7756 = vsel %vm7754, %v7723, %v7501
        %v7757 = vsel %vm7754, %v7724, %v7503
        %v7758 = vsel %vm7754, %v7725, %v7505
        %v7759 = vsel %vm7754, %v7726, %v7507
        %v7760 = vsel %vm7754, %v7727, %v7509
        %v7761 = vsel %vm7754, %v7728, %v7511
        %v7762 = vsel %vm7754, %v7729, %v7513
        %v7763 = vsel %vm7754, %v7730, %v7515
        %v7764 = vsel %vm7754, %v7731, %v7517
        %v7765 = vsel %vm7754, %v7732, %v7519
        %v7766 = vsel %vm7754, %v7733, %v7521
        %v7767 = vsel %vm7754, %v7734, %v7523
        %v7768 = vsel %vm7754, %v7735, %v7525
        %v7769 = vsel %vm7754, %v7736, %v7527
        %v7770 = vsel %vm7754, %v7737, %v7529
        %v7771 = vsel %vm7754, %v7738, %v7531
        %v7772 = vsel %vm7754, %v7739, %v7533
        %v7773 = vsel %vm7754, %v7740, %v7535
        %v7774 = vsel %vm7754, %v7741, %v7537
        %v7775 = vsel %vm7754, %v7742, %v7539
        %v7776 = vsel %vm7754, %v7743, %v7541
        %v7777 = vsel %vm7754, %v7744, %v7543
        %v7778 = vsel %vm7754, %v7745, %v7545
        %v7779 = vsel %vm7754, %v7746, %v7547
        %v7780 = vsel %vm7754, %v7747, %v7549
        %v7781 = vsel %vm7754, %v7748, %v7551
        %v7782 = vsel %vm7754, %v7749, %v7553
        %v7783 = vsel %vm7754, %v7750, %v7555
        %v7784 = vsel %vm7754, %v7751, %v7557
        %v7785 = vsel %vm7754, %v7752, %v7559
        %v7786 = vsel %vm7754, %v7753, %v7561
        %vm7787 = vcmask 785408
        %v7788 = vsel %vm7787, %v7755, %v7627
        %v7789 = vsel %vm7787, %v7756, %v7629
        %v7790 = vsel %vm7787, %v7757, %v7631
        %v7791 = vsel %vm7787, %v7758, %v7633
        %v7792 = vsel %vm7787, %v7759, %v7635
        %v7793 = vsel %vm7787, %v7760, %v7637
        %v7794 = vsel %vm7787, %v7761, %v7639
        %v7795 = vsel %vm7787, %v7762, %v7641
        %v7796 = vsel %vm7787, %v7763, %v7643
        %v7797 = vsel %vm7787, %v7764, %v7645
        %v7798 = vsel %vm7787, %v7765, %v7647
        %v7799 = vsel %vm7787, %v7766, %v7649
        %v7800 = vsel %vm7787, %v7767, %v7651
        %v7801 = vsel %vm7787, %v7768, %v7653
        %v7802 = vsel %vm7787, %v7769, %v7655
        %v7803 = vsel %vm7787, %v7770, %v7657
        %v7804 = vsel %vm7787, %v7771, %v7659
        %v7805 = vsel %vm7787, %v7772, %v7661
        %v7806 = vsel %vm7787, %v7773, %v7663
        %v7807 = vsel %vm7787, %v7774, %v7665
        %v7808 = vsel %vm7787, %v7775, %v7667
        %v7809 = vsel %vm7787, %v7776, %v7669
        %v7810 = vsel %vm7787, %v7777, %v7671
        %v7811 = vsel %vm7787, %v7778, %v7673
        %v7812 = vsel %vm7787, %v7779, %v7675
        %v7813 = vsel %vm7787, %v7780, %v7677
        %v7814 = vsel %vm7787, %v7781, %v7679
        %v7815 = vsel %vm7787, %v7782, %v7681
        %v7816 = vsel %vm7787, %v7783, %v7683
        %v7817 = vsel %vm7787, %v7784, %v7685
        %v7818 = vsel %vm7787, %v7785, %v7687
        %v7819 = vsel %vm7787, %v7786, %v7689
        %7820 = vst [vmem:[%s315] sm:$0xff] %v7788
        %7821 = vst [vmem:[%s315 + $0x8] sm:$0xff] %v7789
        %7822 = vst [vmem:[%s315 + $0x10] sm:$0xff] %v7790
        %7823 = vst [vmem:[%s315 + $0x18] sm:$0xff] %v7791
        %7824 = vst [vmem:[%s315 + $0x20] sm:$0xff] %v7792
        %7825 = vst [vmem:[%s315 + $0x28] sm:$0xff] %v7793
        %7826 = vst [vmem:[%s315 + $0x30] sm:$0xff] %v7794
        %7827 = vst [vmem:[%s315 + $0x38] sm:$0xff] %v7795
        %7828 = vst [vmem:[%s315 + $0x40] sm:$0xff] %v7796
        %7829 = vst [vmem:[%s315 + $0x48] sm:$0xff] %v7797
        %7830 = vst [vmem:[%s315 + $0x50] sm:$0xff] %v7798
        %7831 = vst [vmem:[%s315 + $0x58] sm:$0xff] %v7799
        %7832 = vst [vmem:[%s315 + $0x60] sm:$0xff] %v7800
        %7833 = vst [vmem:[%s315 + $0x68] sm:$0xff] %v7801
        %7834 = vst [vmem:[%s315 + $0x70] sm:$0xff] %v7802
        %7835 = vst [vmem:[%s315 + $0x78] sm:$0xff] %v7803
        %7836 = vst [vmem:[%s315 + $0x80] sm:$0xff] %v7804
        %7837 = vst [vmem:[%s315 + $0x88] sm:$0xff] %v7805
        %7838 = vst [vmem:[%s315 + $0x90] sm:$0xff] %v7806
        %7839 = vst [vmem:[%s315 + $0x98] sm:$0xff] %v7807
        %7840 = vst [vmem:[%s315 + $0xa0] sm:$0xff] %v7808
        %7841 = vst [vmem:[%s315 + $0xa8] sm:$0xff] %v7809
        %7842 = vst [vmem:[%s315 + $0xb0] sm:$0xff] %v7810
        %7843 = vst [vmem:[%s315 + $0xb8] sm:$0xff] %v7811
        %7844 = vst [vmem:[%s315 + $0xc0] sm:$0xff] %v7812
        %7845 = vst [vmem:[%s315 + $0xc8] sm:$0xff] %v7813
        %7846 = vst [vmem:[%s315 + $0xd0] sm:$0xff] %v7814
        %7847 = vst [vmem:[%s315 + $0xd8] sm:$0xff] %v7815
        %7848 = vst [vmem:[%s315 + $0xe0] sm:$0xff] %v7816
        %7849 = vst [vmem:[%s315 + $0xe8] sm:$0xff] %v7817
        %7850 = vst [vmem:[%s315 + $0xf0] sm:$0xff] %v7818
        %7851 = vst [vmem:[%s315 + $0xf8] sm:$0xff] %v7819
        %s7852 = sand.u32 %s144, 1
        %s7853 = scalar_lea.sflag [#allocation5], %s7852
        %s7854 = sand.u32 %s144, 1
        %s7855 = smul.addr %s7854, 256
        %s7856 = scalar_lea.vmem [#allocation9], %s7855
        // Predicated region
        $region49: #{tpu_custom_call.1} parent=31 // pred_check
          %p7857 = pneg %p154
        $region50: #{tpu_custom_call.1} parent=31 // pred_check_branch
          %7859 = sbr.rel (%p7857) target = $region52
        $region51: #{tpu_custom_call.1} parent=31 // pred_region
          %s7860 = smul.u32 32, %s30
          %7862 = vsyncadd %s7853, 0
          %s7863 = sadd.s32 %s29, %s7860
          %s7864 = smul.addr %s28, 32
          %s7865 = sadd.s32 %s7863, %s7864
          %s7866 = smul.addr %s7865, 8
          %s7867 = scalar_lea.hbm %s3, %s7866
          %s7868 = sshll.u32 %s7856, 4
          %s7869 = int_to_ptr.vmem [resolvable:$true] %s7868
          %s7870 = sshll.u32 %s7867, 4
          %s7871 = int_to_ptr.hbm [resolvable:$true] %s7870
          %7876 = dma.vmem_to_hbm [thread:$0]  %s7869, 4096, %s7871, %s7853, 128, 128, 8
        $region52: #{tpu_custom_call.1} parent=31 // pred_fallthru
          _
      $region32: #{tpu_custom_call.1} parent=5 // pred_fallthru
        _
      %p7877 = scmp.le.s32.totalorder 2, %s18
      // Predicated region
      $region53: #{tpu_custom_call.1} parent=5 // pred_check
        %p7878 = pneg %p7877
      $region54: #{tpu_custom_call.1} parent=5 // pred_check_branch
        %7880 = sbr.rel (%p7878) target = $region56
      $region55: #{tpu_custom_call.1} parent=5 // pred_region
        %s7881 = ssub.s32 %s18, 2
        // Predicated region
        $region57: #{tpu_custom_call.1} parent=55 // pred_check
          %p7882 = pneg %p160
        $region58: #{tpu_custom_call.1} parent=55 // pred_check_branch
          %7884 = sbr.rel (%p7882) target = $region60
        $region59: #{tpu_custom_call.1} parent=55 // pred_region
          %s7885 = sand.u32 %s145, 1
          %s7886 = scalar_lea.sflag [#allocation5], %s7885
          %s7887 = sand.u32 %s145, 1
          %s7888 = smul.addr %s7887, 256
          %s7889 = scalar_lea.vmem [#allocation9], %s7888
          %7891 = dma.done %s7886, 4096
        $region60: #{tpu_custom_call.1} parent=55 // pred_fallthru
          _
      $region56: #{tpu_custom_call.1} parent=5 // pred_fallthru
        _
    $region6: #{tpu_custom_call.1} parent=1 // loop_footer
      %s22 = sadd.s32 1, %s18
    $region7: #{tpu_custom_call.1} parent=1 // loop_footer_branch
      %17 = sbr.rel target = $region3
    $region8: #{tpu_custom_call.1} parent=1 // loop_exit
      _
    %7892 = vsyncpa [#allocation4], 1
    %s7893 = scalar_lea.sflag [#allocation4], 1
    %7894 = vsyncpa %s7893, 1
    %7895 = vsyncpa [#allocation7], 1
    %s7896 = scalar_lea.sflag [#allocation7], 1
    %7897 = vsyncpa %s7896, 1
    %7898 = vsyncpa [#allocation5], 1
    %s7899 = scalar_lea.sflag [#allocation5], 1
    %7900 = vsyncpa %s7899, 1

</llo_original>
